<compile_context>
chip_gen: v7x
topology: tpu7x:2x2x1
jax: 0.10.0
libtpu: 0.0.40
codegen_flags: <defaults>
</compile_context>

<pallas_src>
import functools

import jax
import jax.numpy as jnp
from jax import lax
from jax.experimental import pallas as pl
from jax.experimental.pallas import tpu as pltpu


def _round_up(x, m):
    return -(-x // m) * m


def _buf_bytes(shape, dtype):
    """Rough VMEM footprint of one block buffer (lane / sublane padded)."""
    s = list(shape)
    if len(s) >= 1:
        s[-1] = _round_up(s[-1], 128)
    if len(s) >= 2:
        s[-2] = _round_up(s[-2], 8)
    n = 1
    for v in s:
        n *= int(v)
    return n * jnp.dtype(dtype).itemsize


@functools.partial(jax.jit, static_argnames=("padding", "dilation"))
def conv3d_z_valid(x, weight, bias, *, padding, dilation):
    """Forward of Conv3D_z_valid: Conv3d (padding/dilation on all dims), then
    the z-valid crop on dim 3 (H) with z_pad = z_kernel_size // 2."""
    N, C_in, D, H, W = x.shape
    C_out, C_in_w, kD, kH, kW = weight.shape
    assert C_in_w == C_in
    pD = pH = pW = int(padding)
    dD = dH = dW = int(dilation)

    D_out = D + 2 * pD - dD * (kD - 1)
    H_out = H + 2 * pH - dH * (kH - 1)
    W_out = W + 2 * pW - dW * (kW - 1)
    assert D_out > 0 and H_out > 0 and W_out > 0
    z_pad = kW // 2                      # z_kernel_size // 2 (module semantics)

    if z_pad == 0:
        # PyTorch's x[:, :, :, 0:-0, :] is an *empty* slice along dim 3.
        return jnp.zeros((N, C_out, D_out, 0, W_out), dtype=x.dtype)

    H_valid = H_out - 2 * z_pad          # rows along dim 3 that survive the crop
    assert H_valid > 0

    # Lane / sublane friendly padded extents.
    W_pad = _round_up(W_out, 8)          # row-block W extent (multiple of 8)
    Cin_p = _round_up(C_in, 8)           # per-tap contraction chunk
    Cout_p = _round_up(C_out, 128)       # output lane dim -> unmasked stores
    T = kD * kH * kW
    K = T * Cin_p                        # fused contraction depth
    Kp = _round_up(K, 128)
    itemsize = jnp.dtype(x.dtype).itemsize

    # d_block: target ~512-1024 im2col rows per step; no divisibility needed.
    rows_per_d = H_valid * W_pad
    d_block = max(1, min(D_out, max(1, 1024 // rows_per_d)))
    while d_block > 1 and d_block * rows_per_d * Kp * itemsize > (8 << 20):
        d_block -= 1
    rows_blk = d_block * rows_per_d
    n_dc = -(-D_out // d_block)          # ceil-div (grid may have a tail block)
    extra_D = n_dc * d_block - D_out     # zero-pad D so tail blocks stay in bounds

    # Channels-last, spatially padded input (compact in HBM, one DMA per
    # sample per core).
    xcl = jnp.transpose(x, (0, 2, 3, 4, 1))                     # (N, D, H, W, C)
    xp = jnp.pad(xcl, ((0, 0),
                       (pD, pD + extra_D),
                       (pH, pH),
                       (pW, pW + (W_pad - W_out)),
                       (0, Cin_p - C_in)))
    Dp = D + 2 * pD + extra_D
    Hp = H + 2 * pH
    Wp = W + 2 * pW + (W_pad - W_out)

    # Single fused weight matrix (Kp, Cout_p): rows ordered (kd, kh, kw, c),
    # zero rows for channel / K padding, zero columns for C_out padding.
    # Kept in the input dtype so bf16 inputs stay on the fast MXU path.
    wt = jnp.transpose(weight, (2, 3, 4, 1, 0)).reshape(T, C_in, C_out)
    wt = jnp.pad(wt, ((0, 0), (0, Cin_p - C_in), (0, Cout_p - C_out)))
    w2 = wt.reshape(K, Cout_p)
    w2 = jnp.pad(w2, ((0, Kp - K), (0, 0))).astype(x.dtype)
    b2 = jnp.pad(bias.reshape(1, C_out).astype(jnp.float32),
                 ((0, 0), (0, Cout_p - C_out)))

    out_dtype = x.dtype

    def kernel(x_ref, w_ref, b_ref, o_ref, col_ref):
        # x_ref: (Dp, Hp, Wp, Cin_p)   whole padded sample (resident per n)
        # w_ref: (Kp, Cout_p)          fused tap weights
        # b_ref: (1, Cout_p)
        # o_ref: (rows_blk, Cout_p)
        # col_ref: (rows_blk, Kp)      im2col scratch (VMEM)
        dc = pl.program_id(1)
        d0 = pl.multiple_of(dc * d_block, d_block)

        # Zero the K-padding columns so uninitialized VMEM can never leak
        # NaNs through the (zero) padded weight rows.
        if Kp > K:
            col_ref[:, K:Kp] = jnp.zeros((rows_blk, Kp - K), col_ref.dtype)

        # im2col fill: one (rows_blk, Cin_p) column strip per tap.  The slab
        # reshape only collapses leading dims (trailing dim preserved), so it
        # is layout-trivial.
        for kd in range(kD):
            for kh in range(kH):
                for kw in range(kW):
                    t = (kd * kH + kh) * kW + kw
                    slab = x_ref[pl.ds(d0 + kd * dD, d_block),
                                 pl.ds(z_pad + kh * dH, H_valid),
                                 pl.ds(kw * dW, W_pad), :]
                    col_ref[:, t * Cin_p:(t + 1) * Cin_p] = \
                        slab.reshape(rows_blk, Cin_p)

        # Single MXU matmul per step: contraction depth Kp (>=128), output
        # block written exactly once.
        acc = jnp.dot(col_ref[...], w_ref[...],
                      preferred_element_type=jnp.float32)
        o_ref[...] = (acc + b_ref[...]).astype(o_ref.dtype)

    # Advisory cost estimate (true, un-padded work).
    flops = int(2 * N * D_out * H_valid * W_out * C_out * C_in * T)
    bytes_accessed = int(
        x.size * itemsize
        + weight.size * jnp.dtype(weight.dtype).itemsize
        + bias.size * jnp.dtype(bias.dtype).itemsize
        + N * D_out * H_valid * W_out * C_out * itemsize)

    # Explicit scoped-VMEM budget from the actual (lane-padded) buffers.
    xb = _buf_bytes((Dp, Hp, Wp, Cin_p), x.dtype)
    wb = _buf_bytes((Kp, Cout_p), x.dtype)
    bb = _buf_bytes((1, Cout_p), jnp.float32)
    ob = _buf_bytes((rows_blk, Cout_p), out_dtype)
    cb = _buf_bytes((rows_blk, Kp), x.dtype)
    need = 2 * (xb + wb + bb + ob) + cb          # double-buffered I/O + scratch
    vmem_limit = int(min(64 << 20, max(16 << 20, 2 * need)))

    y = pl.pallas_call(
        kernel,
        out_shape=jax.ShapeDtypeStruct((N, n_dc * rows_blk, Cout_p), out_dtype),
        grid_spec=pltpu.PrefetchScalarGridSpec(
            num_scalar_prefetch=0,
            grid=(N, n_dc),
            in_specs=[
                # Whole padded sample; block index changes only with n.
                pl.BlockSpec((None, Dp, Hp, Wp, Cin_p),
                             lambda n, dc: (n, 0, 0, 0, 0)),
                pl.BlockSpec((Kp, Cout_p), lambda n, dc: (0, 0)),
                pl.BlockSpec((1, Cout_p), lambda n, dc: (0, 0)),
            ],
            out_specs=pl.BlockSpec((None, rows_blk, Cout_p),
                                   lambda n, dc: (n, dc, 0)),
            scratch_shapes=[pltpu.VMEM((rows_blk, Kp), x.dtype)],
        ),
        compiler_params=pltpu.CompilerParams(
            dimension_semantics=("parallel", "parallel"),
            vmem_limit_bytes=vmem_limit),
        cost_estimate=pl.CostEstimate(flops=flops, transcendentals=0,
                                      bytes_accessed=bytes_accessed),
    )(xp, w2, b2)

    # Un-pad and return NCDHW with the z-valid crop already applied.
    y = y.reshape(N, n_dc * d_block, H_valid, W_pad, Cout_p)
    y = y[:, :D_out, :, :W_out, :C_out]
    y = jnp.transpose(y, (0, 4, 1, 2, 3))    # (N, C_out, D_out, H_valid, W_out)
    return y


if __name__ == "__main__":
    key = jax.random.PRNGKey(0)
    kx, kw_key, kb_key = jax.random.split(key, 3)

    # Module hyperparameters (small, deterministic).
    N, C_in, D, H, W = 2, 4, 8, 8, 8
    C_out = 8
    kernel_size, z_kernel_size = 3, 5
    padding, dilation = 1, 1

    x = jax.random.normal(kx, (N, C_in, D, H, W), dtype=jnp.float32)

    # PyTorch-style deterministic init (uniform in +-1/sqrt(fan_in)).
    fan_in = C_in * kernel_size * kernel_size * z_kernel_size
    bound = 1.0 / (fan_in ** 0.5)
    weight = jax.random.uniform(
        kw_key, (C_out, C_in, kernel_size, kernel_size, z_kernel_size),
        dtype=jnp.float32, minval=-bound, maxval=bound)
    bias = jax.random.uniform(
        kb_key, (C_out,), dtype=jnp.float32, minval=-bound, maxval=bound)

    out = conv3d_z_valid(x, weight, bias, padding=padding, dilation=dilation)
    out = jax.block_until_ready(out)

    # Reference: XLA conv + bias + identical crop on dim 3.
    ref = lax.conv_general_dilated(
        x, weight, window_strides=(1, 1, 1),
        padding=[(padding, padding)] * 3,
        rhs_dilation=(dilation, dilation, dilation),
        dimension_numbers=("NCDHW", "OIDHW", "NCDHW"),
        precision=lax.Precision.HIGHEST)
    ref = ref + bias[None, :, None, None, None]
    z_pad = z_kernel_size // 2
    ref = ref[:, :, :, z_pad:-z_pad, :]

    assert out.shape == ref.shape, (out.shape, ref.shape)
    assert jnp.allclose(out, ref, atol=1e-3, rtol=1e-3), \
        float(jnp.max(jnp.abs(out - ref)))
    print("KERNEL_OK")
</pallas_src>

<mosaic_0001>
module attributes {stable_mosaic.version = 11 : i64} {
  func.func @kernel(%arg0: i32, %arg1: i32, %arg2: memref<1x10x10x12x8xf32, #tpu.memory_space<vmem>>, %arg3: memref<384x128xf32, #tpu.memory_space<vmem>>, %arg4: memref<1x128xf32, #tpu.memory_space<vmem>>, %arg5: memref<1x256x128xf32, #tpu.memory_space<vmem>>, %arg6: memref<256x384xf32, #tpu.memory_space<vmem>>) attributes {dimension_semantics = [#tpu.dimension_semantics<parallel>, #tpu.dimension_semantics<parallel>], iteration_bounds = array<i64: 2, 1>, scalar_prefetch = 0 : i64, scratch_operands = 1 : i64, tpu.core_type = #tpu.core_type<tc>, window_params = [{transform_indices = @transform_0, window_bounds = array<i64: 1, 10, 10, 12, 8>}, {pipeline_mode = #tpu.pipeline_mode<synchronous>, transform_indices = @transform_1, window_bounds = array<i64: 384, 128>}, {pipeline_mode = #tpu.pipeline_mode<synchronous>, transform_indices = @transform_2, window_bounds = array<i64: 1, 128>}, {transform_indices = @transform_3, window_bounds = array<i64: 1, 256, 128>}]} {
    %c8_i32 = arith.constant 8 : i32
    %0 = arith.muli %arg1, %c8_i32 : i32
    %1 = tpu.assume_multiple %0, 8 : i32
    %cst = arith.constant 0.000000e+00 : f32
    %2 = vector.broadcast %cst : f32 to vector<256x24xf32>
    %c0 = arith.constant 0 : index
    %c360 = arith.constant 360 : index
    %3 = vector.load %arg6[%c0, %c360] : memref<256x384xf32, #tpu.memory_space<vmem>>, vector<256x24xf32>
    tpu.vector_store %arg6[%c0, %c360], %2 {strides = array<i32>} : memref<256x384xf32, #tpu.memory_space<vmem>>, vector<256x24xf32>,
    %c0_i32 = arith.constant 0 : i32
    %4 = arith.addi %1, %c0_i32 : i32
    %c0_0 = arith.constant 0 : index
    %5 = arith.index_cast %4 : i32 to index
    %c2 = arith.constant 2 : index
    %c0_1 = arith.constant 0 : index
    %c0_2 = arith.constant 0 : index
    %6 = vector.load %arg2[%c0_0, %5, %c2, %c0_1, %c0_2] : memref<1x10x10x12x8xf32, #tpu.memory_space<vmem>>, vector<1x8x4x8x8xf32>
    %7 = vector.shape_cast %6 : vector<1x8x4x8x8xf32> to vector<8x4x8x8xf32>
    %8 = vector.shape_cast %7 : vector<8x4x8x8xf32> to vector<256x8xf32>
    %c0_3 = arith.constant 0 : index
    %c0_4 = arith.constant 0 : index
    %9 = vector.load %arg6[%c0_3, %c0_4] : memref<256x384xf32, #tpu.memory_space<vmem>>, vector<256x8xf32>
    tpu.vector_store %arg6[%c0_3, %c0_4], %8 {strides = array<i32>} : memref<256x384xf32, #tpu.memory_space<vmem>>, vector<256x8xf32>,
    %c0_i32_5 = arith.constant 0 : i32
    %10 = arith.addi %1, %c0_i32_5 : i32
    %c0_6 = arith.constant 0 : index
    %11 = arith.index_cast %10 : i32 to index
    %c2_7 = arith.constant 2 : index
    %c1 = arith.constant 1 : index
    %c0_8 = arith.constant 0 : index
    %12 = vector.load %arg2[%c0_6, %11, %c2_7, %c1, %c0_8] : memref<1x10x10x12x8xf32, #tpu.memory_space<vmem>>, vector<1x8x4x8x8xf32>
    %13 = vector.shape_cast %12 : vector<1x8x4x8x8xf32> to vector<8x4x8x8xf32>
    %14 = vector.shape_cast %13 : vector<8x4x8x8xf32> to vector<256x8xf32>
    %c0_9 = arith.constant 0 : index
    %c8 = arith.constant 8 : index
    %15 = vector.load %arg6[%c0_9, %c8] : memref<256x384xf32, #tpu.memory_space<vmem>>, vector<256x8xf32>
    tpu.vector_store %arg6[%c0_9, %c8], %14 {strides = array<i32>} : memref<256x384xf32, #tpu.memory_space<vmem>>, vector<256x8xf32>,
    %c0_i32_10 = arith.constant 0 : i32
    %16 = arith.addi %1, %c0_i32_10 : i32
    %c0_11 = arith.constant 0 : index
    %17 = arith.index_cast %16 : i32 to index
    %c2_12 = arith.constant 2 : index
    %c2_13 = arith.constant 2 : index
    %c0_14 = arith.constant 0 : index
    %18 = vector.load %arg2[%c0_11, %17, %c2_12, %c2_13, %c0_14] : memref<1x10x10x12x8xf32, #tpu.memory_space<vmem>>, vector<1x8x4x8x8xf32>
    %19 = vector.shape_cast %18 : vector<1x8x4x8x8xf32> to vector<8x4x8x8xf32>
    %20 = vector.shape_cast %19 : vector<8x4x8x8xf32> to vector<256x8xf32>
    %c0_15 = arith.constant 0 : index
    %c16 = arith.constant 16 : index
    %21 = vector.load %arg6[%c0_15, %c16] : memref<256x384xf32, #tpu.memory_space<vmem>>, vector<256x8xf32>
    tpu.vector_store %arg6[%c0_15, %c16], %20 {strides = array<i32>} : memref<256x384xf32, #tpu.memory_space<vmem>>, vector<256x8xf32>,
    %c0_i32_16 = arith.constant 0 : i32
    %22 = arith.addi %1, %c0_i32_16 : i32
    %c0_17 = arith.constant 0 : index
    %23 = arith.index_cast %22 : i32 to index
    %c2_18 = arith.constant 2 : index
    %c3 = arith.constant 3 : index
    %c0_19 = arith.constant 0 : index
    %24 = vector.load %arg2[%c0_17, %23, %c2_18, %c3, %c0_19] : memref<1x10x10x12x8xf32, #tpu.memory_space<vmem>>, vector<1x8x4x8x8xf32>
    %25 = vector.shape_cast %24 : vector<1x8x4x8x8xf32> to vector<8x4x8x8xf32>
    %26 = vector.shape_cast %25 : vector<8x4x8x8xf32> to vector<256x8xf32>
    %c0_20 = arith.constant 0 : index
    %c24 = arith.constant 24 : index
    %27 = vector.load %arg6[%c0_20, %c24] : memref<256x384xf32, #tpu.memory_space<vmem>>, vector<256x8xf32>
    tpu.vector_store %arg6[%c0_20, %c24], %26 {strides = array<i32>} : memref<256x384xf32, #tpu.memory_space<vmem>>, vector<256x8xf32>,
    %c0_i32_21 = arith.constant 0 : i32
    %28 = arith.addi %1, %c0_i32_21 : i32
    %c0_22 = arith.constant 0 : index
    %29 = arith.index_cast %28 : i32 to index
    %c2_23 = arith.constant 2 : index
    %c4 = arith.constant 4 : index
    %c0_24 = arith.constant 0 : index
    %30 = vector.load %arg2[%c0_22, %29, %c2_23, %c4, %c0_24] : memref<1x10x10x12x8xf32, #tpu.memory_space<vmem>>, vector<1x8x4x8x8xf32>
    %31 = vector.shape_cast %30 : vector<1x8x4x8x8xf32> to vector<8x4x8x8xf32>
    %32 = vector.shape_cast %31 : vector<8x4x8x8xf32> to vector<256x8xf32>
    %c0_25 = arith.constant 0 : index
    %c32 = arith.constant 32 : index
    %33 = vector.load %arg6[%c0_25, %c32] : memref<256x384xf32, #tpu.memory_space<vmem>>, vector<256x8xf32>
    tpu.vector_store %arg6[%c0_25, %c32], %32 {strides = array<i32>} : memref<256x384xf32, #tpu.memory_space<vmem>>, vector<256x8xf32>,
    %c0_i32_26 = arith.constant 0 : i32
    %34 = arith.addi %1, %c0_i32_26 : i32
    %c0_27 = arith.constant 0 : index
    %35 = arith.index_cast %34 : i32 to index
    %c3_28 = arith.constant 3 : index
    %c0_29 = arith.constant 0 : index
    %c0_30 = arith.constant 0 : index
    %36 = vector.load %arg2[%c0_27, %35, %c3_28, %c0_29, %c0_30] : memref<1x10x10x12x8xf32, #tpu.memory_space<vmem>>, vector<1x8x4x8x8xf32>
    %37 = vector.shape_cast %36 : vector<1x8x4x8x8xf32> to vector<8x4x8x8xf32>
    %38 = vector.shape_cast %37 : vector<8x4x8x8xf32> to vector<256x8xf32>
    %c0_31 = arith.constant 0 : index
    %c40 = arith.constant 40 : index
    %39 = vector.load %arg6[%c0_31, %c40] : memref<256x384xf32, #tpu.memory_space<vmem>>, vector<256x8xf32>
    tpu.vector_store %arg6[%c0_31, %c40], %38 {strides = array<i32>} : memref<256x384xf32, #tpu.memory_space<vmem>>, vector<256x8xf32>,
    %c0_i32_32 = arith.constant 0 : i32
    %40 = arith.addi %1, %c0_i32_32 : i32
    %c0_33 = arith.constant 0 : index
    %41 = arith.index_cast %40 : i32 to index
    %c3_34 = arith.constant 3 : index
    %c1_35 = arith.constant 1 : index
    %c0_36 = arith.constant 0 : index
    %42 = vector.load %arg2[%c0_33, %41, %c3_34, %c1_35, %c0_36] : memref<1x10x10x12x8xf32, #tpu.memory_space<vmem>>, vector<1x8x4x8x8xf32>
    %43 = vector.shape_cast %42 : vector<1x8x4x8x8xf32> to vector<8x4x8x8xf32>
    %44 = vector.shape_cast %43 : vector<8x4x8x8xf32> to vector<256x8xf32>
    %c0_37 = arith.constant 0 : index
    %c48 = arith.constant 48 : index
    %45 = vector.load %arg6[%c0_37, %c48] : memref<256x384xf32, #tpu.memory_space<vmem>>, vector<256x8xf32>
    tpu.vector_store %arg6[%c0_37, %c48], %44 {strides = array<i32>} : memref<256x384xf32, #tpu.memory_space<vmem>>, vector<256x8xf32>,
    %c0_i32_38 = arith.constant 0 : i32
    %46 = arith.addi %1, %c0_i32_38 : i32
    %c0_39 = arith.constant 0 : index
    %47 = arith.index_cast %46 : i32 to index
    %c3_40 = arith.constant 3 : index
    %c2_41 = arith.constant 2 : index
    %c0_42 = arith.constant 0 : index
    %48 = vector.load %arg2[%c0_39, %47, %c3_40, %c2_41, %c0_42] : memref<1x10x10x12x8xf32, #tpu.memory_space<vmem>>, vector<1x8x4x8x8xf32>
    %49 = vector.shape_cast %48 : vector<1x8x4x8x8xf32> to vector<8x4x8x8xf32>
    %50 = vector.shape_cast %49 : vector<8x4x8x8xf32> to vector<256x8xf32>
    %c0_43 = arith.constant 0 : index
    %c56 = arith.constant 56 : index
    %51 = vector.load %arg6[%c0_43, %c56] : memref<256x384xf32, #tpu.memory_space<vmem>>, vector<256x8xf32>
    tpu.vector_store %arg6[%c0_43, %c56], %50 {strides = array<i32>} : memref<256x384xf32, #tpu.memory_space<vmem>>, vector<256x8xf32>,
    %c0_i32_44 = arith.constant 0 : i32
    %52 = arith.addi %1, %c0_i32_44 : i32
    %c0_45 = arith.constant 0 : index
    %53 = arith.index_cast %52 : i32 to index
    %c3_46 = arith.constant 3 : index
    %c3_47 = arith.constant 3 : index
    %c0_48 = arith.constant 0 : index
    %54 = vector.load %arg2[%c0_45, %53, %c3_46, %c3_47, %c0_48] : memref<1x10x10x12x8xf32, #tpu.memory_space<vmem>>, vector<1x8x4x8x8xf32>
    %55 = vector.shape_cast %54 : vector<1x8x4x8x8xf32> to vector<8x4x8x8xf32>
    %56 = vector.shape_cast %55 : vector<8x4x8x8xf32> to vector<256x8xf32>
    %c0_49 = arith.constant 0 : index
    %c64 = arith.constant 64 : index
    %57 = vector.load %arg6[%c0_49, %c64] : memref<256x384xf32, #tpu.memory_space<vmem>>, vector<256x8xf32>
    tpu.vector_store %arg6[%c0_49, %c64], %56 {strides = array<i32>} : memref<256x384xf32, #tpu.memory_space<vmem>>, vector<256x8xf32>,
    %c0_i32_50 = arith.constant 0 : i32
    %58 = arith.addi %1, %c0_i32_50 : i32
    %c0_51 = arith.constant 0 : index
    %59 = arith.index_cast %58 : i32 to index
    %c3_52 = arith.constant 3 : index
    %c4_53 = arith.constant 4 : index
    %c0_54 = arith.constant 0 : index
    %60 = vector.load %arg2[%c0_51, %59, %c3_52, %c4_53, %c0_54] : memref<1x10x10x12x8xf32, #tpu.memory_space<vmem>>, vector<1x8x4x8x8xf32>
    %61 = vector.shape_cast %60 : vector<1x8x4x8x8xf32> to vector<8x4x8x8xf32>
    %62 = vector.shape_cast %61 : vector<8x4x8x8xf32> to vector<256x8xf32>
    %c0_55 = arith.constant 0 : index
    %c72 = arith.constant 72 : index
    %63 = vector.load %arg6[%c0_55, %c72] : memref<256x384xf32, #tpu.memory_space<vmem>>, vector<256x8xf32>
    tpu.vector_store %arg6[%c0_55, %c72], %62 {strides = array<i32>} : memref<256x384xf32, #tpu.memory_space<vmem>>, vector<256x8xf32>,
    %c0_i32_56 = arith.constant 0 : i32
    %64 = arith.addi %1, %c0_i32_56 : i32
    %c0_57 = arith.constant 0 : index
    %65 = arith.index_cast %64 : i32 to index
    %c4_58 = arith.constant 4 : index
    %c0_59 = arith.constant 0 : index
    %c0_60 = arith.constant 0 : index
    %66 = vector.load %arg2[%c0_57, %65, %c4_58, %c0_59, %c0_60] : memref<1x10x10x12x8xf32, #tpu.memory_space<vmem>>, vector<1x8x4x8x8xf32>
    %67 = vector.shape_cast %66 : vector<1x8x4x8x8xf32> to vector<8x4x8x8xf32>
    %68 = vector.shape_cast %67 : vector<8x4x8x8xf32> to vector<256x8xf32>
    %c0_61 = arith.constant 0 : index
    %c80 = arith.constant 80 : index
    %69 = vector.load %arg6[%c0_61, %c80] : memref<256x384xf32, #tpu.memory_space<vmem>>, vector<256x8xf32>
    tpu.vector_store %arg6[%c0_61, %c80], %68 {strides = array<i32>} : memref<256x384xf32, #tpu.memory_space<vmem>>, vector<256x8xf32>,
    %c0_i32_62 = arith.constant 0 : i32
    %70 = arith.addi %1, %c0_i32_62 : i32
    %c0_63 = arith.constant 0 : index
    %71 = arith.index_cast %70 : i32 to index
    %c4_64 = arith.constant 4 : index
    %c1_65 = arith.constant 1 : index
    %c0_66 = arith.constant 0 : index
    %72 = vector.load %arg2[%c0_63, %71, %c4_64, %c1_65, %c0_66] : memref<1x10x10x12x8xf32, #tpu.memory_space<vmem>>, vector<1x8x4x8x8xf32>
    %73 = vector.shape_cast %72 : vector<1x8x4x8x8xf32> to vector<8x4x8x8xf32>
    %74 = vector.shape_cast %73 : vector<8x4x8x8xf32> to vector<256x8xf32>
    %c0_67 = arith.constant 0 : index
    %c88 = arith.constant 88 : index
    %75 = vector.load %arg6[%c0_67, %c88] : memref<256x384xf32, #tpu.memory_space<vmem>>, vector<256x8xf32>
    tpu.vector_store %arg6[%c0_67, %c88], %74 {strides = array<i32>} : memref<256x384xf32, #tpu.memory_space<vmem>>, vector<256x8xf32>,
    %c0_i32_68 = arith.constant 0 : i32
    %76 = arith.addi %1, %c0_i32_68 : i32
    %c0_69 = arith.constant 0 : index
    %77 = arith.index_cast %76 : i32 to index
    %c4_70 = arith.constant 4 : index
    %c2_71 = arith.constant 2 : index
    %c0_72 = arith.constant 0 : index
    %78 = vector.load %arg2[%c0_69, %77, %c4_70, %c2_71, %c0_72] : memref<1x10x10x12x8xf32, #tpu.memory_space<vmem>>, vector<1x8x4x8x8xf32>
    %79 = vector.shape_cast %78 : vector<1x8x4x8x8xf32> to vector<8x4x8x8xf32>
    %80 = vector.shape_cast %79 : vector<8x4x8x8xf32> to vector<256x8xf32>
    %c0_73 = arith.constant 0 : index
    %c96 = arith.constant 96 : index
    %81 = vector.load %arg6[%c0_73, %c96] : memref<256x384xf32, #tpu.memory_space<vmem>>, vector<256x8xf32>
    tpu.vector_store %arg6[%c0_73, %c96], %80 {strides = array<i32>} : memref<256x384xf32, #tpu.memory_space<vmem>>, vector<256x8xf32>,
    %c0_i32_74 = arith.constant 0 : i32
    %82 = arith.addi %1, %c0_i32_74 : i32
    %c0_75 = arith.constant 0 : index
    %83 = arith.index_cast %82 : i32 to index
    %c4_76 = arith.constant 4 : index
    %c3_77 = arith.constant 3 : index
    %c0_78 = arith.constant 0 : index
    %84 = vector.load %arg2[%c0_75, %83, %c4_76, %c3_77, %c0_78] : memref<1x10x10x12x8xf32, #tpu.memory_space<vmem>>, vector<1x8x4x8x8xf32>
    %85 = vector.shape_cast %84 : vector<1x8x4x8x8xf32> to vector<8x4x8x8xf32>
    %86 = vector.shape_cast %85 : vector<8x4x8x8xf32> to vector<256x8xf32>
    %c0_79 = arith.constant 0 : index
    %c104 = arith.constant 104 : index
    %87 = vector.load %arg6[%c0_79, %c104] : memref<256x384xf32, #tpu.memory_space<vmem>>, vector<256x8xf32>
    tpu.vector_store %arg6[%c0_79, %c104], %86 {strides = array<i32>} : memref<256x384xf32, #tpu.memory_space<vmem>>, vector<256x8xf32>,
    %c0_i32_80 = arith.constant 0 : i32
    %88 = arith.addi %1, %c0_i32_80 : i32
    %c0_81 = arith.constant 0 : index
    %89 = arith.index_cast %88 : i32 to index
    %c4_82 = arith.constant 4 : index
    %c4_83 = arith.constant 4 : index
    %c0_84 = arith.constant 0 : index
    %90 = vector.load %arg2[%c0_81, %89, %c4_82, %c4_83, %c0_84] : memref<1x10x10x12x8xf32, #tpu.memory_space<vmem>>, vector<1x8x4x8x8xf32>
    %91 = vector.shape_cast %90 : vector<1x8x4x8x8xf32> to vector<8x4x8x8xf32>
    %92 = vector.shape_cast %91 : vector<8x4x8x8xf32> to vector<256x8xf32>
    %c0_85 = arith.constant 0 : index
    %c112 = arith.constant 112 : index
    %93 = vector.load %arg6[%c0_85, %c112] : memref<256x384xf32, #tpu.memory_space<vmem>>, vector<256x8xf32>
    tpu.vector_store %arg6[%c0_85, %c112], %92 {strides = array<i32>} : memref<256x384xf32, #tpu.memory_space<vmem>>, vector<256x8xf32>,
    %c1_i32 = arith.constant 1 : i32
    %94 = arith.addi %1, %c1_i32 : i32
    %c0_86 = arith.constant 0 : index
    %95 = arith.index_cast %94 : i32 to index
    %c2_87 = arith.constant 2 : index
    %c0_88 = arith.constant 0 : index
    %c0_89 = arith.constant 0 : index
    %96 = vector.load %arg2[%c0_86, %95, %c2_87, %c0_88, %c0_89] : memref<1x10x10x12x8xf32, #tpu.memory_space<vmem>>, vector<1x8x4x8x8xf32>
    %97 = vector.shape_cast %96 : vector<1x8x4x8x8xf32> to vector<8x4x8x8xf32>
    %98 = vector.shape_cast %97 : vector<8x4x8x8xf32> to vector<256x8xf32>
    %c0_90 = arith.constant 0 : index
    %c120 = arith.constant 120 : index
    %99 = vector.load %arg6[%c0_90, %c120] : memref<256x384xf32, #tpu.memory_space<vmem>>, vector<256x8xf32>
    tpu.vector_store %arg6[%c0_90, %c120], %98 {strides = array<i32>} : memref<256x384xf32, #tpu.memory_space<vmem>>, vector<256x8xf32>,
    %c1_i32_91 = arith.constant 1 : i32
    %100 = arith.addi %1, %c1_i32_91 : i32
    %c0_92 = arith.constant 0 : index
    %101 = arith.index_cast %100 : i32 to index
    %c2_93 = arith.constant 2 : index
    %c1_94 = arith.constant 1 : index
    %c0_95 = arith.constant 0 : index
    %102 = vector.load %arg2[%c0_92, %101, %c2_93, %c1_94, %c0_95] : memref<1x10x10x12x8xf32, #tpu.memory_space<vmem>>, vector<1x8x4x8x8xf32>
    %103 = vector.shape_cast %102 : vector<1x8x4x8x8xf32> to vector<8x4x8x8xf32>
    %104 = vector.shape_cast %103 : vector<8x4x8x8xf32> to vector<256x8xf32>
    %c0_96 = arith.constant 0 : index
    %c128 = arith.constant 128 : index
    %105 = vector.load %arg6[%c0_96, %c128] : memref<256x384xf32, #tpu.memory_space<vmem>>, vector<256x8xf32>
    tpu.vector_store %arg6[%c0_96, %c128], %104 {strides = array<i32>} : memref<256x384xf32, #tpu.memory_space<vmem>>, vector<256x8xf32>,
    %c1_i32_97 = arith.constant 1 : i32
    %106 = arith.addi %1, %c1_i32_97 : i32
    %c0_98 = arith.constant 0 : index
    %107 = arith.index_cast %106 : i32 to index
    %c2_99 = arith.constant 2 : index
    %c2_100 = arith.constant 2 : index
    %c0_101 = arith.constant 0 : index
    %108 = vector.load %arg2[%c0_98, %107, %c2_99, %c2_100, %c0_101] : memref<1x10x10x12x8xf32, #tpu.memory_space<vmem>>, vector<1x8x4x8x8xf32>
    %109 = vector.shape_cast %108 : vector<1x8x4x8x8xf32> to vector<8x4x8x8xf32>
    %110 = vector.shape_cast %109 : vector<8x4x8x8xf32> to vector<256x8xf32>
    %c0_102 = arith.constant 0 : index
    %c136 = arith.constant 136 : index
    %111 = vector.load %arg6[%c0_102, %c136] : memref<256x384xf32, #tpu.memory_space<vmem>>, vector<256x8xf32>
    tpu.vector_store %arg6[%c0_102, %c136], %110 {strides = array<i32>} : memref<256x384xf32, #tpu.memory_space<vmem>>, vector<256x8xf32>,
    %c1_i32_103 = arith.constant 1 : i32
    %112 = arith.addi %1, %c1_i32_103 : i32
    %c0_104 = arith.constant 0 : index
    %113 = arith.index_cast %112 : i32 to index
    %c2_105 = arith.constant 2 : index
    %c3_106 = arith.constant 3 : index
    %c0_107 = arith.constant 0 : index
    %114 = vector.load %arg2[%c0_104, %113, %c2_105, %c3_106, %c0_107] : memref<1x10x10x12x8xf32, #tpu.memory_space<vmem>>, vector<1x8x4x8x8xf32>
    %115 = vector.shape_cast %114 : vector<1x8x4x8x8xf32> to vector<8x4x8x8xf32>
    %116 = vector.shape_cast %115 : vector<8x4x8x8xf32> to vector<256x8xf32>
    %c0_108 = arith.constant 0 : index
    %c144 = arith.constant 144 : index
    %117 = vector.load %arg6[%c0_108, %c144] : memref<256x384xf32, #tpu.memory_space<vmem>>, vector<256x8xf32>
    tpu.vector_store %arg6[%c0_108, %c144], %116 {strides = array<i32>} : memref<256x384xf32, #tpu.memory_space<vmem>>, vector<256x8xf32>,
    %c1_i32_109 = arith.constant 1 : i32
    %118 = arith.addi %1, %c1_i32_109 : i32
    %c0_110 = arith.constant 0 : index
    %119 = arith.index_cast %118 : i32 to index
    %c2_111 = arith.constant 2 : index
    %c4_112 = arith.constant 4 : index
    %c0_113 = arith.constant 0 : index
    %120 = vector.load %arg2[%c0_110, %119, %c2_111, %c4_112, %c0_113] : memref<1x10x10x12x8xf32, #tpu.memory_space<vmem>>, vector<1x8x4x8x8xf32>
    %121 = vector.shape_cast %120 : vector<1x8x4x8x8xf32> to vector<8x4x8x8xf32>
    %122 = vector.shape_cast %121 : vector<8x4x8x8xf32> to vector<256x8xf32>
    %c0_114 = arith.constant 0 : index
    %c152 = arith.constant 152 : index
    %123 = vector.load %arg6[%c0_114, %c152] : memref<256x384xf32, #tpu.memory_space<vmem>>, vector<256x8xf32>
    tpu.vector_store %arg6[%c0_114, %c152], %122 {strides = array<i32>} : memref<256x384xf32, #tpu.memory_space<vmem>>, vector<256x8xf32>,
    %c1_i32_115 = arith.constant 1 : i32
    %124 = arith.addi %1, %c1_i32_115 : i32
    %c0_116 = arith.constant 0 : index
    %125 = arith.index_cast %124 : i32 to index
    %c3_117 = arith.constant 3 : index
    %c0_118 = arith.constant 0 : index
    %c0_119 = arith.constant 0 : index
    %126 = vector.load %arg2[%c0_116, %125, %c3_117, %c0_118, %c0_119] : memref<1x10x10x12x8xf32, #tpu.memory_space<vmem>>, vector<1x8x4x8x8xf32>
    %127 = vector.shape_cast %126 : vector<1x8x4x8x8xf32> to vector<8x4x8x8xf32>
    %128 = vector.shape_cast %127 : vector<8x4x8x8xf32> to vector<256x8xf32>
    %c0_120 = arith.constant 0 : index
    %c160 = arith.constant 160 : index
    %129 = vector.load %arg6[%c0_120, %c160] : memref<256x384xf32, #tpu.memory_space<vmem>>, vector<256x8xf32>
    tpu.vector_store %arg6[%c0_120, %c160], %128 {strides = array<i32>} : memref<256x384xf32, #tpu.memory_space<vmem>>, vector<256x8xf32>,
    %c1_i32_121 = arith.constant 1 : i32
    %130 = arith.addi %1, %c1_i32_121 : i32
    %c0_122 = arith.constant 0 : index
    %131 = arith.index_cast %130 : i32 to index
    %c3_123 = arith.constant 3 : index
    %c1_124 = arith.constant 1 : index
    %c0_125 = arith.constant 0 : index
    %132 = vector.load %arg2[%c0_122, %131, %c3_123, %c1_124, %c0_125] : memref<1x10x10x12x8xf32, #tpu.memory_space<vmem>>, vector<1x8x4x8x8xf32>
    %133 = vector.shape_cast %132 : vector<1x8x4x8x8xf32> to vector<8x4x8x8xf32>
    %134 = vector.shape_cast %133 : vector<8x4x8x8xf32> to vector<256x8xf32>
    %c0_126 = arith.constant 0 : index
    %c168 = arith.constant 168 : index
    %135 = vector.load %arg6[%c0_126, %c168] : memref<256x384xf32, #tpu.memory_space<vmem>>, vector<256x8xf32>
    tpu.vector_store %arg6[%c0_126, %c168], %134 {strides = array<i32>} : memref<256x384xf32, #tpu.memory_space<vmem>>, vector<256x8xf32>,
    %c1_i32_127 = arith.constant 1 : i32
    %136 = arith.addi %1, %c1_i32_127 : i32
    %c0_128 = arith.constant 0 : index
    %137 = arith.index_cast %136 : i32 to index
    %c3_129 = arith.constant 3 : index
    %c2_130 = arith.constant 2 : index
    %c0_131 = arith.constant 0 : index
    %138 = vector.load %arg2[%c0_128, %137, %c3_129, %c2_130, %c0_131] : memref<1x10x10x12x8xf32, #tpu.memory_space<vmem>>, vector<1x8x4x8x8xf32>
    %139 = vector.shape_cast %138 : vector<1x8x4x8x8xf32> to vector<8x4x8x8xf32>
    %140 = vector.shape_cast %139 : vector<8x4x8x8xf32> to vector<256x8xf32>
    %c0_132 = arith.constant 0 : index
    %c176 = arith.constant 176 : index
    %141 = vector.load %arg6[%c0_132, %c176] : memref<256x384xf32, #tpu.memory_space<vmem>>, vector<256x8xf32>
    tpu.vector_store %arg6[%c0_132, %c176], %140 {strides = array<i32>} : memref<256x384xf32, #tpu.memory_space<vmem>>, vector<256x8xf32>,
    %c1_i32_133 = arith.constant 1 : i32
    %142 = arith.addi %1, %c1_i32_133 : i32
    %c0_134 = arith.constant 0 : index
    %143 = arith.index_cast %142 : i32 to index
    %c3_135 = arith.constant 3 : index
    %c3_136 = arith.constant 3 : index
    %c0_137 = arith.constant 0 : index
    %144 = vector.load %arg2[%c0_134, %143, %c3_135, %c3_136, %c0_137] : memref<1x10x10x12x8xf32, #tpu.memory_space<vmem>>, vector<1x8x4x8x8xf32>
    %145 = vector.shape_cast %144 : vector<1x8x4x8x8xf32> to vector<8x4x8x8xf32>
    %146 = vector.shape_cast %145 : vector<8x4x8x8xf32> to vector<256x8xf32>
    %c0_138 = arith.constant 0 : index
    %c184 = arith.constant 184 : index
    %147 = vector.load %arg6[%c0_138, %c184] : memref<256x384xf32, #tpu.memory_space<vmem>>, vector<256x8xf32>
    tpu.vector_store %arg6[%c0_138, %c184], %146 {strides = array<i32>} : memref<256x384xf32, #tpu.memory_space<vmem>>, vector<256x8xf32>,
    %c1_i32_139 = arith.constant 1 : i32
    %148 = arith.addi %1, %c1_i32_139 : i32
    %c0_140 = arith.constant 0 : index
    %149 = arith.index_cast %148 : i32 to index
    %c3_141 = arith.constant 3 : index
    %c4_142 = arith.constant 4 : index
    %c0_143 = arith.constant 0 : index
    %150 = vector.load %arg2[%c0_140, %149, %c3_141, %c4_142, %c0_143] : memref<1x10x10x12x8xf32, #tpu.memory_space<vmem>>, vector<1x8x4x8x8xf32>
    %151 = vector.shape_cast %150 : vector<1x8x4x8x8xf32> to vector<8x4x8x8xf32>
    %152 = vector.shape_cast %151 : vector<8x4x8x8xf32> to vector<256x8xf32>
    %c0_144 = arith.constant 0 : index
    %c192 = arith.constant 192 : index
    %153 = vector.load %arg6[%c0_144, %c192] : memref<256x384xf32, #tpu.memory_space<vmem>>, vector<256x8xf32>
    tpu.vector_store %arg6[%c0_144, %c192], %152 {strides = array<i32>} : memref<256x384xf32, #tpu.memory_space<vmem>>, vector<256x8xf32>,
    %c1_i32_145 = arith.constant 1 : i32
    %154 = arith.addi %1, %c1_i32_145 : i32
    %c0_146 = arith.constant 0 : index
    %155 = arith.index_cast %154 : i32 to index
    %c4_147 = arith.constant 4 : index
    %c0_148 = arith.constant 0 : index
    %c0_149 = arith.constant 0 : index
    %156 = vector.load %arg2[%c0_146, %155, %c4_147, %c0_148, %c0_149] : memref<1x10x10x12x8xf32, #tpu.memory_space<vmem>>, vector<1x8x4x8x8xf32>
    %157 = vector.shape_cast %156 : vector<1x8x4x8x8xf32> to vector<8x4x8x8xf32>
    %158 = vector.shape_cast %157 : vector<8x4x8x8xf32> to vector<256x8xf32>
    %c0_150 = arith.constant 0 : index
    %c200 = arith.constant 200 : index
    %159 = vector.load %arg6[%c0_150, %c200] : memref<256x384xf32, #tpu.memory_space<vmem>>, vector<256x8xf32>
    tpu.vector_store %arg6[%c0_150, %c200], %158 {strides = array<i32>} : memref<256x384xf32, #tpu.memory_space<vmem>>, vector<256x8xf32>,
    %c1_i32_151 = arith.constant 1 : i32
    %160 = arith.addi %1, %c1_i32_151 : i32
    %c0_152 = arith.constant 0 : index
    %161 = arith.index_cast %160 : i32 to index
    %c4_153 = arith.constant 4 : index
    %c1_154 = arith.constant 1 : index
    %c0_155 = arith.constant 0 : index
    %162 = vector.load %arg2[%c0_152, %161, %c4_153, %c1_154, %c0_155] : memref<1x10x10x12x8xf32, #tpu.memory_space<vmem>>, vector<1x8x4x8x8xf32>
    %163 = vector.shape_cast %162 : vector<1x8x4x8x8xf32> to vector<8x4x8x8xf32>
    %164 = vector.shape_cast %163 : vector<8x4x8x8xf32> to vector<256x8xf32>
    %c0_156 = arith.constant 0 : index
    %c208 = arith.constant 208 : index
    %165 = vector.load %arg6[%c0_156, %c208] : memref<256x384xf32, #tpu.memory_space<vmem>>, vector<256x8xf32>
    tpu.vector_store %arg6[%c0_156, %c208], %164 {strides = array<i32>} : memref<256x384xf32, #tpu.memory_space<vmem>>, vector<256x8xf32>,
    %c1_i32_157 = arith.constant 1 : i32
    %166 = arith.addi %1, %c1_i32_157 : i32
    %c0_158 = arith.constant 0 : index
    %167 = arith.index_cast %166 : i32 to index
    %c4_159 = arith.constant 4 : index
    %c2_160 = arith.constant 2 : index
    %c0_161 = arith.constant 0 : index
    %168 = vector.load %arg2[%c0_158, %167, %c4_159, %c2_160, %c0_161] : memref<1x10x10x12x8xf32, #tpu.memory_space<vmem>>, vector<1x8x4x8x8xf32>
    %169 = vector.shape_cast %168 : vector<1x8x4x8x8xf32> to vector<8x4x8x8xf32>
    %170 = vector.shape_cast %169 : vector<8x4x8x8xf32> to vector<256x8xf32>
    %c0_162 = arith.constant 0 : index
    %c216 = arith.constant 216 : index
    %171 = vector.load %arg6[%c0_162, %c216] : memref<256x384xf32, #tpu.memory_space<vmem>>, vector<256x8xf32>
    tpu.vector_store %arg6[%c0_162, %c216], %170 {strides = array<i32>} : memref<256x384xf32, #tpu.memory_space<vmem>>, vector<256x8xf32>,
    %c1_i32_163 = arith.constant 1 : i32
    %172 = arith.addi %1, %c1_i32_163 : i32
    %c0_164 = arith.constant 0 : index
    %173 = arith.index_cast %172 : i32 to index
    %c4_165 = arith.constant 4 : index
    %c3_166 = arith.constant 3 : index
    %c0_167 = arith.constant 0 : index
    %174 = vector.load %arg2[%c0_164, %173, %c4_165, %c3_166, %c0_167] : memref<1x10x10x12x8xf32, #tpu.memory_space<vmem>>, vector<1x8x4x8x8xf32>
    %175 = vector.shape_cast %174 : vector<1x8x4x8x8xf32> to vector<8x4x8x8xf32>
    %176 = vector.shape_cast %175 : vector<8x4x8x8xf32> to vector<256x8xf32>
    %c0_168 = arith.constant 0 : index
    %c224 = arith.constant 224 : index
    %177 = vector.load %arg6[%c0_168, %c224] : memref<256x384xf32, #tpu.memory_space<vmem>>, vector<256x8xf32>
    tpu.vector_store %arg6[%c0_168, %c224], %176 {strides = array<i32>} : memref<256x384xf32, #tpu.memory_space<vmem>>, vector<256x8xf32>,
    %c1_i32_169 = arith.constant 1 : i32
    %178 = arith.addi %1, %c1_i32_169 : i32
    %c0_170 = arith.constant 0 : index
    %179 = arith.index_cast %178 : i32 to index
    %c4_171 = arith.constant 4 : index
    %c4_172 = arith.constant 4 : index
    %c0_173 = arith.constant 0 : index
    %180 = vector.load %arg2[%c0_170, %179, %c4_171, %c4_172, %c0_173] : memref<1x10x10x12x8xf32, #tpu.memory_space<vmem>>, vector<1x8x4x8x8xf32>
    %181 = vector.shape_cast %180 : vector<1x8x4x8x8xf32> to vector<8x4x8x8xf32>
    %182 = vector.shape_cast %181 : vector<8x4x8x8xf32> to vector<256x8xf32>
    %c0_174 = arith.constant 0 : index
    %c232 = arith.constant 232 : index
    %183 = vector.load %arg6[%c0_174, %c232] : memref<256x384xf32, #tpu.memory_space<vmem>>, vector<256x8xf32>
    tpu.vector_store %arg6[%c0_174, %c232], %182 {strides = array<i32>} : memref<256x384xf32, #tpu.memory_space<vmem>>, vector<256x8xf32>,
    %c2_i32 = arith.constant 2 : i32
    %184 = arith.addi %1, %c2_i32 : i32
    %c0_175 = arith.constant 0 : index
    %185 = arith.index_cast %184 : i32 to index
    %c2_176 = arith.constant 2 : index
    %c0_177 = arith.constant 0 : index
    %c0_178 = arith.constant 0 : index
    %186 = vector.load %arg2[%c0_175, %185, %c2_176, %c0_177, %c0_178] : memref<1x10x10x12x8xf32, #tpu.memory_space<vmem>>, vector<1x8x4x8x8xf32>
    %187 = vector.shape_cast %186 : vector<1x8x4x8x8xf32> to vector<8x4x8x8xf32>
    %188 = vector.shape_cast %187 : vector<8x4x8x8xf32> to vector<256x8xf32>
    %c0_179 = arith.constant 0 : index
    %c240 = arith.constant 240 : index
    %189 = vector.load %arg6[%c0_179, %c240] : memref<256x384xf32, #tpu.memory_space<vmem>>, vector<256x8xf32>
    tpu.vector_store %arg6[%c0_179, %c240], %188 {strides = array<i32>} : memref<256x384xf32, #tpu.memory_space<vmem>>, vector<256x8xf32>,
    %c2_i32_180 = arith.constant 2 : i32
    %190 = arith.addi %1, %c2_i32_180 : i32
    %c0_181 = arith.constant 0 : index
    %191 = arith.index_cast %190 : i32 to index
    %c2_182 = arith.constant 2 : index
    %c1_183 = arith.constant 1 : index
    %c0_184 = arith.constant 0 : index
    %192 = vector.load %arg2[%c0_181, %191, %c2_182, %c1_183, %c0_184] : memref<1x10x10x12x8xf32, #tpu.memory_space<vmem>>, vector<1x8x4x8x8xf32>
    %193 = vector.shape_cast %192 : vector<1x8x4x8x8xf32> to vector<8x4x8x8xf32>
    %194 = vector.shape_cast %193 : vector<8x4x8x8xf32> to vector<256x8xf32>
    %c0_185 = arith.constant 0 : index
    %c248 = arith.constant 248 : index
    %195 = vector.load %arg6[%c0_185, %c248] : memref<256x384xf32, #tpu.memory_space<vmem>>, vector<256x8xf32>
    tpu.vector_store %arg6[%c0_185, %c248], %194 {strides = array<i32>} : memref<256x384xf32, #tpu.memory_space<vmem>>, vector<256x8xf32>,
    %c2_i32_186 = arith.constant 2 : i32
    %196 = arith.addi %1, %c2_i32_186 : i32
    %c0_187 = arith.constant 0 : index
    %197 = arith.index_cast %196 : i32 to index
    %c2_188 = arith.constant 2 : index
    %c2_189 = arith.constant 2 : index
    %c0_190 = arith.constant 0 : index
    %198 = vector.load %arg2[%c0_187, %197, %c2_188, %c2_189, %c0_190] : memref<1x10x10x12x8xf32, #tpu.memory_space<vmem>>, vector<1x8x4x8x8xf32>
    %199 = vector.shape_cast %198 : vector<1x8x4x8x8xf32> to vector<8x4x8x8xf32>
    %200 = vector.shape_cast %199 : vector<8x4x8x8xf32> to vector<256x8xf32>
    %c0_191 = arith.constant 0 : index
    %c256 = arith.constant 256 : index
    %201 = vector.load %arg6[%c0_191, %c256] : memref<256x384xf32, #tpu.memory_space<vmem>>, vector<256x8xf32>
    tpu.vector_store %arg6[%c0_191, %c256], %200 {strides = array<i32>} : memref<256x384xf32, #tpu.memory_space<vmem>>, vector<256x8xf32>,
    %c2_i32_192 = arith.constant 2 : i32
    %202 = arith.addi %1, %c2_i32_192 : i32
    %c0_193 = arith.constant 0 : index
    %203 = arith.index_cast %202 : i32 to index
    %c2_194 = arith.constant 2 : index
    %c3_195 = arith.constant 3 : index
    %c0_196 = arith.constant 0 : index
    %204 = vector.load %arg2[%c0_193, %203, %c2_194, %c3_195, %c0_196] : memref<1x10x10x12x8xf32, #tpu.memory_space<vmem>>, vector<1x8x4x8x8xf32>
    %205 = vector.shape_cast %204 : vector<1x8x4x8x8xf32> to vector<8x4x8x8xf32>
    %206 = vector.shape_cast %205 : vector<8x4x8x8xf32> to vector<256x8xf32>
    %c0_197 = arith.constant 0 : index
    %c264 = arith.constant 264 : index
    %207 = vector.load %arg6[%c0_197, %c264] : memref<256x384xf32, #tpu.memory_space<vmem>>, vector<256x8xf32>
    tpu.vector_store %arg6[%c0_197, %c264], %206 {strides = array<i32>} : memref<256x384xf32, #tpu.memory_space<vmem>>, vector<256x8xf32>,
    %c2_i32_198 = arith.constant 2 : i32
    %208 = arith.addi %1, %c2_i32_198 : i32
    %c0_199 = arith.constant 0 : index
    %209 = arith.index_cast %208 : i32 to index
    %c2_200 = arith.constant 2 : index
    %c4_201 = arith.constant 4 : index
    %c0_202 = arith.constant 0 : index
    %210 = vector.load %arg2[%c0_199, %209, %c2_200, %c4_201, %c0_202] : memref<1x10x10x12x8xf32, #tpu.memory_space<vmem>>, vector<1x8x4x8x8xf32>
    %211 = vector.shape_cast %210 : vector<1x8x4x8x8xf32> to vector<8x4x8x8xf32>
    %212 = vector.shape_cast %211 : vector<8x4x8x8xf32> to vector<256x8xf32>
    %c0_203 = arith.constant 0 : index
    %c272 = arith.constant 272 : index
    %213 = vector.load %arg6[%c0_203, %c272] : memref<256x384xf32, #tpu.memory_space<vmem>>, vector<256x8xf32>
    tpu.vector_store %arg6[%c0_203, %c272], %212 {strides = array<i32>} : memref<256x384xf32, #tpu.memory_space<vmem>>, vector<256x8xf32>,
    %c2_i32_204 = arith.constant 2 : i32
    %214 = arith.addi %1, %c2_i32_204 : i32
    %c0_205 = arith.constant 0 : index
    %215 = arith.index_cast %214 : i32 to index
    %c3_206 = arith.constant 3 : index
    %c0_207 = arith.constant 0 : index
    %c0_208 = arith.constant 0 : index
    %216 = vector.load %arg2[%c0_205, %215, %c3_206, %c0_207, %c0_208] : memref<1x10x10x12x8xf32, #tpu.memory_space<vmem>>, vector<1x8x4x8x8xf32>
    %217 = vector.shape_cast %216 : vector<1x8x4x8x8xf32> to vector<8x4x8x8xf32>
    %218 = vector.shape_cast %217 : vector<8x4x8x8xf32> to vector<256x8xf32>
    %c0_209 = arith.constant 0 : index
    %c280 = arith.constant 280 : index
    %219 = vector.load %arg6[%c0_209, %c280] : memref<256x384xf32, #tpu.memory_space<vmem>>, vector<256x8xf32>
    tpu.vector_store %arg6[%c0_209, %c280], %218 {strides = array<i32>} : memref<256x384xf32, #tpu.memory_space<vmem>>, vector<256x8xf32>,
    %c2_i32_210 = arith.constant 2 : i32
    %220 = arith.addi %1, %c2_i32_210 : i32
    %c0_211 = arith.constant 0 : index
    %221 = arith.index_cast %220 : i32 to index
    %c3_212 = arith.constant 3 : index
    %c1_213 = arith.constant 1 : index
    %c0_214 = arith.constant 0 : index
    %222 = vector.load %arg2[%c0_211, %221, %c3_212, %c1_213, %c0_214] : memref<1x10x10x12x8xf32, #tpu.memory_space<vmem>>, vector<1x8x4x8x8xf32>
    %223 = vector.shape_cast %222 : vector<1x8x4x8x8xf32> to vector<8x4x8x8xf32>
    %224 = vector.shape_cast %223 : vector<8x4x8x8xf32> to vector<256x8xf32>
    %c0_215 = arith.constant 0 : index
    %c288 = arith.constant 288 : index
    %225 = vector.load %arg6[%c0_215, %c288] : memref<256x384xf32, #tpu.memory_space<vmem>>, vector<256x8xf32>
    tpu.vector_store %arg6[%c0_215, %c288], %224 {strides = array<i32>} : memref<256x384xf32, #tpu.memory_space<vmem>>, vector<256x8xf32>,
    %c2_i32_216 = arith.constant 2 : i32
    %226 = arith.addi %1, %c2_i32_216 : i32
    %c0_217 = arith.constant 0 : index
    %227 = arith.index_cast %226 : i32 to index
    %c3_218 = arith.constant 3 : index
    %c2_219 = arith.constant 2 : index
    %c0_220 = arith.constant 0 : index
    %228 = vector.load %arg2[%c0_217, %227, %c3_218, %c2_219, %c0_220] : memref<1x10x10x12x8xf32, #tpu.memory_space<vmem>>, vector<1x8x4x8x8xf32>
    %229 = vector.shape_cast %228 : vector<1x8x4x8x8xf32> to vector<8x4x8x8xf32>
    %230 = vector.shape_cast %229 : vector<8x4x8x8xf32> to vector<256x8xf32>
    %c0_221 = arith.constant 0 : index
    %c296 = arith.constant 296 : index
    %231 = vector.load %arg6[%c0_221, %c296] : memref<256x384xf32, #tpu.memory_space<vmem>>, vector<256x8xf32>
    tpu.vector_store %arg6[%c0_221, %c296], %230 {strides = array<i32>} : memref<256x384xf32, #tpu.memory_space<vmem>>, vector<256x8xf32>,
    %c2_i32_222 = arith.constant 2 : i32
    %232 = arith.addi %1, %c2_i32_222 : i32
    %c0_223 = arith.constant 0 : index
    %233 = arith.index_cast %232 : i32 to index
    %c3_224 = arith.constant 3 : index
    %c3_225 = arith.constant 3 : index
    %c0_226 = arith.constant 0 : index
    %234 = vector.load %arg2[%c0_223, %233, %c3_224, %c3_225, %c0_226] : memref<1x10x10x12x8xf32, #tpu.memory_space<vmem>>, vector<1x8x4x8x8xf32>
    %235 = vector.shape_cast %234 : vector<1x8x4x8x8xf32> to vector<8x4x8x8xf32>
    %236 = vector.shape_cast %235 : vector<8x4x8x8xf32> to vector<256x8xf32>
    %c0_227 = arith.constant 0 : index
    %c304 = arith.constant 304 : index
    %237 = vector.load %arg6[%c0_227, %c304] : memref<256x384xf32, #tpu.memory_space<vmem>>, vector<256x8xf32>
    tpu.vector_store %arg6[%c0_227, %c304], %236 {strides = array<i32>} : memref<256x384xf32, #tpu.memory_space<vmem>>, vector<256x8xf32>,
    %c2_i32_228 = arith.constant 2 : i32
    %238 = arith.addi %1, %c2_i32_228 : i32
    %c0_229 = arith.constant 0 : index
    %239 = arith.index_cast %238 : i32 to index
    %c3_230 = arith.constant 3 : index
    %c4_231 = arith.constant 4 : index
    %c0_232 = arith.constant 0 : index
    %240 = vector.load %arg2[%c0_229, %239, %c3_230, %c4_231, %c0_232] : memref<1x10x10x12x8xf32, #tpu.memory_space<vmem>>, vector<1x8x4x8x8xf32>
    %241 = vector.shape_cast %240 : vector<1x8x4x8x8xf32> to vector<8x4x8x8xf32>
    %242 = vector.shape_cast %241 : vector<8x4x8x8xf32> to vector<256x8xf32>
    %c0_233 = arith.constant 0 : index
    %c312 = arith.constant 312 : index
    %243 = vector.load %arg6[%c0_233, %c312] : memref<256x384xf32, #tpu.memory_space<vmem>>, vector<256x8xf32>
    tpu.vector_store %arg6[%c0_233, %c312], %242 {strides = array<i32>} : memref<256x384xf32, #tpu.memory_space<vmem>>, vector<256x8xf32>,
    %c2_i32_234 = arith.constant 2 : i32
    %244 = arith.addi %1, %c2_i32_234 : i32
    %c0_235 = arith.constant 0 : index
    %245 = arith.index_cast %244 : i32 to index
    %c4_236 = arith.constant 4 : index
    %c0_237 = arith.constant 0 : index
    %c0_238 = arith.constant 0 : index
    %246 = vector.load %arg2[%c0_235, %245, %c4_236, %c0_237, %c0_238] : memref<1x10x10x12x8xf32, #tpu.memory_space<vmem>>, vector<1x8x4x8x8xf32>
    %247 = vector.shape_cast %246 : vector<1x8x4x8x8xf32> to vector<8x4x8x8xf32>
    %248 = vector.shape_cast %247 : vector<8x4x8x8xf32> to vector<256x8xf32>
    %c0_239 = arith.constant 0 : index
    %c320 = arith.constant 320 : index
    %249 = vector.load %arg6[%c0_239, %c320] : memref<256x384xf32, #tpu.memory_space<vmem>>, vector<256x8xf32>
    tpu.vector_store %arg6[%c0_239, %c320], %248 {strides = array<i32>} : memref<256x384xf32, #tpu.memory_space<vmem>>, vector<256x8xf32>,
    %c2_i32_240 = arith.constant 2 : i32
    %250 = arith.addi %1, %c2_i32_240 : i32
    %c0_241 = arith.constant 0 : index
    %251 = arith.index_cast %250 : i32 to index
    %c4_242 = arith.constant 4 : index
    %c1_243 = arith.constant 1 : index
    %c0_244 = arith.constant 0 : index
    %252 = vector.load %arg2[%c0_241, %251, %c4_242, %c1_243, %c0_244] : memref<1x10x10x12x8xf32, #tpu.memory_space<vmem>>, vector<1x8x4x8x8xf32>
    %253 = vector.shape_cast %252 : vector<1x8x4x8x8xf32> to vector<8x4x8x8xf32>
    %254 = vector.shape_cast %253 : vector<8x4x8x8xf32> to vector<256x8xf32>
    %c0_245 = arith.constant 0 : index
    %c328 = arith.constant 328 : index
    %255 = vector.load %arg6[%c0_245, %c328] : memref<256x384xf32, #tpu.memory_space<vmem>>, vector<256x8xf32>
    tpu.vector_store %arg6[%c0_245, %c328], %254 {strides = array<i32>} : memref<256x384xf32, #tpu.memory_space<vmem>>, vector<256x8xf32>,
    %c2_i32_246 = arith.constant 2 : i32
    %256 = arith.addi %1, %c2_i32_246 : i32
    %c0_247 = arith.constant 0 : index
    %257 = arith.index_cast %256 : i32 to index
    %c4_248 = arith.constant 4 : index
    %c2_249 = arith.constant 2 : index
    %c0_250 = arith.constant 0 : index
    %258 = vector.load %arg2[%c0_247, %257, %c4_248, %c2_249, %c0_250] : memref<1x10x10x12x8xf32, #tpu.memory_space<vmem>>, vector<1x8x4x8x8xf32>
    %259 = vector.shape_cast %258 : vector<1x8x4x8x8xf32> to vector<8x4x8x8xf32>
    %260 = vector.shape_cast %259 : vector<8x4x8x8xf32> to vector<256x8xf32>
    %c0_251 = arith.constant 0 : index
    %c336 = arith.constant 336 : index
    %261 = vector.load %arg6[%c0_251, %c336] : memref<256x384xf32, #tpu.memory_space<vmem>>, vector<256x8xf32>
    tpu.vector_store %arg6[%c0_251, %c336], %260 {strides = array<i32>} : memref<256x384xf32, #tpu.memory_space<vmem>>, vector<256x8xf32>,
    %c2_i32_252 = arith.constant 2 : i32
    %262 = arith.addi %1, %c2_i32_252 : i32
    %c0_253 = arith.constant 0 : index
    %263 = arith.index_cast %262 : i32 to index
    %c4_254 = arith.constant 4 : index
    %c3_255 = arith.constant 3 : index
    %c0_256 = arith.constant 0 : index
    %264 = vector.load %arg2[%c0_253, %263, %c4_254, %c3_255, %c0_256] : memref<1x10x10x12x8xf32, #tpu.memory_space<vmem>>, vector<1x8x4x8x8xf32>
    %265 = vector.shape_cast %264 : vector<1x8x4x8x8xf32> to vector<8x4x8x8xf32>
    %266 = vector.shape_cast %265 : vector<8x4x8x8xf32> to vector<256x8xf32>
    %c0_257 = arith.constant 0 : index
    %c344 = arith.constant 344 : index
    %267 = vector.load %arg6[%c0_257, %c344] : memref<256x384xf32, #tpu.memory_space<vmem>>, vector<256x8xf32>
    tpu.vector_store %arg6[%c0_257, %c344], %266 {strides = array<i32>} : memref<256x384xf32, #tpu.memory_space<vmem>>, vector<256x8xf32>,
    %c2_i32_258 = arith.constant 2 : i32
    %268 = arith.addi %1, %c2_i32_258 : i32
    %c0_259 = arith.constant 0 : index
    %269 = arith.index_cast %268 : i32 to index
    %c4_260 = arith.constant 4 : index
    %c4_261 = arith.constant 4 : index
    %c0_262 = arith.constant 0 : index
    %270 = vector.load %arg2[%c0_259, %269, %c4_260, %c4_261, %c0_262] : memref<1x10x10x12x8xf32, #tpu.memory_space<vmem>>, vector<1x8x4x8x8xf32>
    %271 = vector.shape_cast %270 : vector<1x8x4x8x8xf32> to vector<8x4x8x8xf32>
    %272 = vector.shape_cast %271 : vector<8x4x8x8xf32> to vector<256x8xf32>
    %c0_263 = arith.constant 0 : index
    %c352 = arith.constant 352 : index
    %273 = vector.load %arg6[%c0_263, %c352] : memref<256x384xf32, #tpu.memory_space<vmem>>, vector<256x8xf32>
    tpu.vector_store %arg6[%c0_263, %c352], %272 {strides = array<i32>} : memref<256x384xf32, #tpu.memory_space<vmem>>, vector<256x8xf32>,
    %c0_264 = arith.constant 0 : index
    %c0_265 = arith.constant 0 : index
    %274 = vector.load %arg6[%c0_264, %c0_265] : memref<256x384xf32, #tpu.memory_space<vmem>>, vector<256x384xf32>
    %c0_266 = arith.constant 0 : index
    %c0_267 = arith.constant 0 : index
    %275 = vector.load %arg3[%c0_266, %c0_267] : memref<384x128xf32, #tpu.memory_space<vmem>>, vector<384x128xf32>
    %cst_268 = arith.constant dense<0.000000e+00> : vector<256x128xf32>
    %276 = tpu.matmul %274, %275, %cst_268 {dimension_numbers = #tpu.dot_dimension_numbers<[1], [0], [0], [1], [0, 0, 1, 1], [], []>} : vector<256x384xf32>, vector<384x128xf32>, vector<256x128xf32> -> vector<256x128xf32>
    %c0_269 = arith.constant 0 : index
    %c0_270 = arith.constant 0 : index
    %277 = vector.load %arg4[%c0_269, %c0_270] : memref<1x128xf32, #tpu.memory_space<vmem>>, vector<1x128xf32>
    %278 = vector.broadcast %277 : vector<1x128xf32> to vector<256x128xf32>
    %279 = arith.addf %276, %278 : vector<256x128xf32>
    %c0_271 = arith.constant 0 : index
    %c0_272 = arith.constant 0 : index
    %c0_273 = arith.constant 0 : index
    %280 = vector.load %arg5[%c0_271, %c0_272, %c0_273] : memref<1x256x128xf32, #tpu.memory_space<vmem>>, vector<1x256x128xf32>
    %281 = vector.shape_cast %280 : vector<1x256x128xf32> to vector<256x128xf32>
    %282 = vector.shape_cast %279 : vector<256x128xf32> to vector<1x256x128xf32>
    tpu.vector_store %arg5[%c0_271, %c0_272, %c0_273], %282 {strides = array<i32>} : memref<1x256x128xf32, #tpu.memory_space<vmem>>, vector<1x256x128xf32>,
    return
  }
  func.func @transform_0(%arg0: i32, %arg1: i32) -> (i32, i32, i32, i32, i32) {
    %c0_i32 = arith.constant 0 : i32
    %c0_i32_0 = arith.constant 0 : i32
    %c0_i32_1 = arith.constant 0 : i32
    %c0_i32_2 = arith.constant 0 : i32
    %c0_i32_3 = arith.constant 0 : i32
    return %arg0, %c0_i32, %c0_i32_0, %c0_i32_1, %c0_i32_2 : i32, i32, i32, i32, i32
  }
  func.func @transform_1(%arg0: i32, %arg1: i32) -> (i32, i32) {
    %c0_i32 = arith.constant 0 : i32
    %c0_i32_0 = arith.constant 0 : i32
    %c0_i32_1 = arith.constant 0 : i32
    return %c0_i32, %c0_i32_0 : i32, i32
  }
  func.func @transform_2(%arg0: i32, %arg1: i32) -> (i32, i32) {
    %c0_i32 = arith.constant 0 : i32
    %c0_i32_0 = arith.constant 0 : i32
    %c0_i32_1 = arith.constant 0 : i32
    return %c0_i32, %c0_i32_0 : i32, i32
  }
  func.func @transform_3(%arg0: i32, %arg1: i32) -> (i32, i32, i32) {
    %c0_i32 = arith.constant 0 : i32
    %c0_i32_0 = arith.constant 0 : i32
    return %arg0, %arg1, %c0_i32 : i32, i32, i32
  }
}

</mosaic_0001>

<llo_original>
// kernel: conv3d_z_valid.1
$region0: #{conv3d_z_valid.1}
  #allocation0 [shape = 'u32[]', space=smem, size = 0x4, offset = 0x4, fixed_abs, tag = 'smem constant byte address 0x4 - core index']
  #allocation1 [shape = 'u32[144,128]{1,0:T(1,128)}', space=vmem, size = 0x12000, scoped, tag = 'internal scratch']
  #allocation2 [shape = 'f32[256,384]{1,0:T(8,128)}', space=vmem, size = 0x60000, scoped, tag = 'scratch operand']
  %s0 = inlined_call_operand.vmem [shape: f32[2,10,10,12,8], index: 0, kind: input, shape index: {}]
  %s1 = inlined_call_operand.vmem [shape: f32[384,128], index: 1, kind: input, shape index: {}]
  %s2 = inlined_call_operand.vmem [shape: f32[1,128], index: 2, kind: input, shape index: {}]
  %s3 = inlined_call_operand.vmem [shape: f32[2,256,128], index: 3, kind: output, shape index: {}]
  %s4 = sld [smem:[#allocation0]]
  $region45: #{conv3d_z_valid.1} parent=0
    _
  %s6 = ssub.s32 1, %s4
  %s7 = scalar_select 0, %s6, %s4
  loop: start=0, step=1, limit=4
  $region2: #{conv3d_z_valid.1} parent=0 // loop_pre_header
    _
  $region3: #{conv3d_z_valid.1} parent=0 // loop_header
    %s9 = sphi 0, %s13
    %p10 = scmp.ge.s32.totalorder %s9, 4
    %s16 = sphi 0, %s28
    %s17 = sphi 0, %s24
    %s18 = sphi 0, %s16
    %s19 = sphi 0, %s17
    %s20 = sphi 0, %s18
    %s21 = sphi 0, %s19
    %s31 = sphi 0, %s33
    %s34 = sphi 0, %s31
    %s35 = sphi 0, %s34
    %s51 = sphi 0, %s35
    %s55 = sphi 0, %s55
    %s57 = sphi 0, %s55
    %s58 = sphi 0, %s57
    %s72 = sphi 0, %s58
    %s76 = sphi 0, %s76
    %s78 = sphi 0, %s76
    %s79 = sphi 0, %s78
    %s93 = sphi 0, %s79
    %s101 = sphi 0, %s103
    %s104 = sphi 0, %s101
    %s105 = sphi 0, %s104
    %s121 = sphi 0, %s105
  $region4: #{conv3d_z_valid.1} parent=0 // loop_header_branch
    %12 = sbr.rel (%p10) target = $region8
  $region5: #{conv3d_z_valid.1} parent=0 // loop_body
    %s14 = ssub.s32 %s9, 1
    %s15 = ssub.s32 %s9, 2
    %s22 = sadd.s32 1, %s17
    %p23 = scmp.ge.s32.totalorder %s22, 1
    %s24 = scalar_select %p23, 0, %s22
    %s25 = sadd.s32 1, %s16
    %s26 = scalar_select %p23, %s25, %s16
    %p27 = scmp.ge.s32.totalorder %s26, 2
    %s28 = scalar_select %p27, 0, %s26
    %s29 = ssub.s32 %s16, %s28
    %p30 = scmp.eq.s32.totalorder %s29, 0
    %s32 = sadd.s32 %s31, 1
    %s33 = scalar_select %p30, %s31, %s32
    %p36 = pneg %p30
    %p37 = scmp.eq.s32.totalorder %s9, 1
    %p38 = por %p36, %p37
    %p39 = scmp.ne.s32.totalorder %s31, %s34
    %p40 = scmp.eq.s32.totalorder %s9, 0
    %p41 = por %p39, %p40
    %p42 = scmp.ne.s32.totalorder %s31, %s34
    %p43 = scmp.eq.s32.totalorder %s14, 1
    %p44 = por %p42, %p43
    %p45 = scmp.ne.s32.totalorder %s34, %s35
    %p46 = scmp.eq.s32.totalorder %s14, 0
    %p47 = por %p45, %p46
    %p48 = scmp.ne.s32.totalorder %s34, %s35
    %p49 = scmp.eq.s32.totalorder %s15, 1
    %p50 = por %p48, %p49
    %p52 = scmp.ne.s32.totalorder %s35, %s51
    %p53 = scmp.eq.s32.totalorder %s15, 0
    %p54 = por %p52, %p53
    %s56 = sadd.s32 %s55, 1
    %p59 = scmp.eq.s32.totalorder %s9, 1
    %p60 = scmp.ne.s32.totalorder %s55, %s57
    %p61 = scmp.eq.s32.totalorder %s9, 0
    %p62 = por %p60, %p61
    %p63 = scmp.ne.s32.totalorder %s55, %s57
    %p64 = scmp.eq.s32.totalorder %s14, 1
    %p65 = por %p63, %p64
    %p66 = scmp.ne.s32.totalorder %s57, %s58
    %p67 = scmp.eq.s32.totalorder %s14, 0
    %p68 = por %p66, %p67
    %p69 = scmp.ne.s32.totalorder %s57, %s58
    %p70 = scmp.eq.s32.totalorder %s15, 1
    %p71 = por %p69, %p70
    %p73 = scmp.ne.s32.totalorder %s58, %s72
    %p74 = scmp.eq.s32.totalorder %s15, 0
    %p75 = por %p73, %p74
    %s77 = sadd.s32 %s76, 1
    %p80 = scmp.eq.s32.totalorder %s9, 1
    %p81 = scmp.ne.s32.totalorder %s76, %s78
    %p82 = scmp.eq.s32.totalorder %s9, 0
    %p83 = por %p81, %p82
    %p84 = scmp.ne.s32.totalorder %s76, %s78
    %p85 = scmp.eq.s32.totalorder %s14, 1
    %p86 = por %p84, %p85
    %p87 = scmp.ne.s32.totalorder %s78, %s79
    %p88 = scmp.eq.s32.totalorder %s14, 0
    %p89 = por %p87, %p88
    %p90 = scmp.ne.s32.totalorder %s78, %s79
    %p91 = scmp.eq.s32.totalorder %s15, 1
    %p92 = por %p90, %p91
    %p94 = scmp.ne.s32.totalorder %s79, %s93
    %p95 = scmp.eq.s32.totalorder %s15, 0
    %p96 = por %p94, %p95
    %s97 = ssub.s32 %s16, %s28
    %s98 = ssub.s32 %s17, %s24
    %s99 = sor.u32 %s97, %s98
    %p100 = scmp.eq.s32.totalorder %s99, 0
    %s102 = sadd.s32 %s101, 1
    %s103 = scalar_select %p100, %s101, %s102
    %p106 = pneg %p100
    %p107 = scmp.eq.s32.totalorder %s9, 1
    %p108 = por %p106, %p107
    %p109 = scmp.ne.s32.totalorder %s101, %s104
    %p110 = scmp.eq.s32.totalorder %s9, 0
    %p111 = por %p109, %p110
    %p112 = scmp.ne.s32.totalorder %s101, %s104
    %p113 = scmp.eq.s32.totalorder %s14, 1
    %p114 = por %p112, %p113
    %p115 = scmp.ne.s32.totalorder %s104, %s105
    %p116 = scmp.eq.s32.totalorder %s14, 0
    %p117 = por %p115, %p116
    %p118 = scmp.ne.s32.totalorder %s104, %s105
    %p119 = scmp.eq.s32.totalorder %s15, 1
    %p120 = por %p118, %p119
    %p122 = scmp.ne.s32.totalorder %s105, %s121
    %p123 = scmp.eq.s32.totalorder %s15, 0
    %p124 = por %p122, %p123
    %p125 = scmp.le.s32.totalorder 1, %s9
    %p126 = scmp.lt.s32.totalorder %s9, 3
    %p127 = pnand %p125, %p126
    %p128 = pneg %p127
    // Predicated region
    $region9: #{conv3d_z_valid.1} parent=5 // pred_check
      _
    $region10: #{conv3d_z_valid.1} parent=5 // pred_check_branch
      %130 = sbr.rel (%p127) target = $region12
    $region11: #{conv3d_z_valid.1} parent=5 // pred_region
      %s131 = ssub.s32 %s9, 1
      // Predicated region
      $region13: #{conv3d_z_valid.1} parent=11 // pred_check
        %p132 = pneg %p68
      $region14: #{conv3d_z_valid.1} parent=11 // pred_check_branch
        %134 = sbr.rel (%p132) target = $region16
      $region15: #{conv3d_z_valid.1} parent=11 // pred_region
        _
      $region16: #{conv3d_z_valid.1} parent=11 // pred_fallthru
        _
      // Predicated region
      $region17: #{conv3d_z_valid.1} parent=11 // pred_check
        %p135 = pneg %p89
      $region18: #{conv3d_z_valid.1} parent=11 // pred_check_branch
        %137 = sbr.rel (%p135) target = $region20
      $region19: #{conv3d_z_valid.1} parent=11 // pred_region
        _
      $region20: #{conv3d_z_valid.1} parent=11 // pred_fallthru
        _
    $region12: #{conv3d_z_valid.1} parent=5 // pred_fallthru
      _
    %p138 = scmp.lt.s32.totalorder %s9, 2
    // Predicated region
    $region21: #{conv3d_z_valid.1} parent=5 // pred_check
      %p139 = pneg %p138
    $region22: #{conv3d_z_valid.1} parent=5 // pred_check_branch
      %141 = sbr.rel (%p139) target = $region24
    $region23: #{conv3d_z_valid.1} parent=5 // pred_region
      // Predicated region
      $region25: #{conv3d_z_valid.1} parent=23 // pred_check
        %p142 = pneg %p41
      $region26: #{conv3d_z_valid.1} parent=23 // pred_check_branch
        %144 = sbr.rel (%p142) target = $region28
      $region27: #{conv3d_z_valid.1} parent=23 // pred_region
        %p145 = scmp.lt.s32.totalorder %s16, 1
        %s146 = scalar_select %p145, %s16, 1
        %s147 = smul.addr %s146, 200
        %s148 = smul.addr %s147, 8
        %s149 = scalar_lea.vmem %s0, %s148
      $region28: #{conv3d_z_valid.1} parent=23 // pred_fallthru
        _
    $region24: #{conv3d_z_valid.1} parent=5 // pred_fallthru
      _
    %p150 = scmp.le.s32.totalorder 1, %s9
    %p151 = scmp.lt.s32.totalorder %s9, 3
    %p152 = pnand %p150, %p151
    %p153 = pneg %p152
    // Predicated region
    $region29: #{conv3d_z_valid.1} parent=5 // pred_check
      _
    $region30: #{conv3d_z_valid.1} parent=5 // pred_check_branch
      %155 = sbr.rel (%p152) target = $region32
    $region31: #{conv3d_z_valid.1} parent=5 // pred_region
      %s156 = ssub.s32 %s9, 1
      %p157 = scmp.lt.s32.totalorder %s18, 1
      %s158 = scalar_select %p157, %s18, 1
      %s159 = smul.addr %s158, 200
      %s160 = smul.addr %s159, 8
      %s161 = scalar_lea.vmem %s0, %s160
      %p162 = pneg %p47
      %p163 = pneg %p44
      %p164 = pneg %p68
      %p165 = pneg %p65
      %p166 = pneg %p89
      %p167 = pneg %p86
      %p168 = pneg %p117
      %p169 = pneg %p114
      %s170 = smul.u32 32, %s19
      %p171 = scmp.lt.s32.totalorder %s18, 1
      %s172 = scalar_select %p171, %s18, 1
      %p173 = scmp.lt.s32.totalorder %s170, 31
      %s174 = scalar_select %p173, %s170, 31
      %s175 = smul.addr %s172, 32
      %s176 = sadd.s32 %s174, %s175
      %s177 = smul.addr %s176, 8
      %s178 = scalar_lea.vmem %s3, %s177
      %p179 = scmp.lt.s32.totalorder %s18, 1
      %s180 = scalar_select %p179, %s18, 1
      %s181 = smul.addr %s180, 200
      %s182 = smul.addr %s181, 8
      %s183 = scalar_lea.vmem %s0, %s182
      %s184 = smul.u32 32, %s19
      %p185 = scmp.lt.s32.totalorder %s18, 1
      %s186 = scalar_select %p185, %s18, 1
      %p187 = scmp.lt.s32.totalorder %s184, 31
      %s188 = scalar_select %p187, %s184, 31
      %s189 = smul.addr %s186, 32
      %s190 = sadd.s32 %s188, %s189
      %s191 = smul.addr %s190, 8
      %s192 = scalar_lea.vmem %s3, %s191
      %s193 = smul.u32 32, %s19
      %s194 = smul.u32 %s19, 8
      %vm195 = vcmask 1048384
      %196 = vst.msk [vmem:[#allocation2 + $0x10] sm:$0xff] %vm195, 0.0
      %197 = vst.msk [vmem:[#allocation2 + $0x28] sm:$0xff] %vm195, 0.0
      %198 = vst.msk [vmem:[#allocation2 + $0x40] sm:$0xff] %vm195, 0.0
      %199 = vst.msk [vmem:[#allocation2 + $0x58] sm:$0xff] %vm195, 0.0
      %200 = vst.msk [vmem:[#allocation2 + $0x70] sm:$0xff] %vm195, 0.0
      %201 = vst.msk [vmem:[#allocation2 + $0x88] sm:$0xff] %vm195, 0.0
      %202 = vst.msk [vmem:[#allocation2 + $0xa0] sm:$0xff] %vm195, 0.0
      %203 = vst.msk [vmem:[#allocation2 + $0xb8] sm:$0xff] %vm195, 0.0
      %204 = vst.msk [vmem:[#allocation2 + $0xd0] sm:$0xff] %vm195, 0.0
      %205 = vst.msk [vmem:[#allocation2 + $0xe8] sm:$0xff] %vm195, 0.0
      %206 = vst.msk [vmem:[#allocation2 + $0x100] sm:$0xff] %vm195, 0.0
      %207 = vst.msk [vmem:[#allocation2 + $0x118] sm:$0xff] %vm195, 0.0
      %208 = vst.msk [vmem:[#allocation2 + $0x130] sm:$0xff] %vm195, 0.0
      %209 = vst.msk [vmem:[#allocation2 + $0x148] sm:$0xff] %vm195, 0.0
      %210 = vst.msk [vmem:[#allocation2 + $0x160] sm:$0xff] %vm195, 0.0
      %211 = vst.msk [vmem:[#allocation2 + $0x178] sm:$0xff] %vm195, 0.0
      %212 = vst.msk [vmem:[#allocation2 + $0x190] sm:$0xff] %vm195, 0.0
      %213 = vst.msk [vmem:[#allocation2 + $0x1a8] sm:$0xff] %vm195, 0.0
      %214 = vst.msk [vmem:[#allocation2 + $0x1c0] sm:$0xff] %vm195, 0.0
      %215 = vst.msk [vmem:[#allocation2 + $0x1d8] sm:$0xff] %vm195, 0.0
      %216 = vst.msk [vmem:[#allocation2 + $0x1f0] sm:$0xff] %vm195, 0.0
      %217 = vst.msk [vmem:[#allocation2 + $0x208] sm:$0xff] %vm195, 0.0
      %218 = vst.msk [vmem:[#allocation2 + $0x220] sm:$0xff] %vm195, 0.0
      %219 = vst.msk [vmem:[#allocation2 + $0x238] sm:$0xff] %vm195, 0.0
      %220 = vst.msk [vmem:[#allocation2 + $0x250] sm:$0xff] %vm195, 0.0
      %221 = vst.msk [vmem:[#allocation2 + $0x268] sm:$0xff] %vm195, 0.0
      %222 = vst.msk [vmem:[#allocation2 + $0x280] sm:$0xff] %vm195, 0.0
      %223 = vst.msk [vmem:[#allocation2 + $0x298] sm:$0xff] %vm195, 0.0
      %224 = vst.msk [vmem:[#allocation2 + $0x2b0] sm:$0xff] %vm195, 0.0
      %225 = vst.msk [vmem:[#allocation2 + $0x2c8] sm:$0xff] %vm195, 0.0
      %226 = vst.msk [vmem:[#allocation2 + $0x2e0] sm:$0xff] %vm195, 0.0
      %227 = vst.msk [vmem:[#allocation2 + $0x2f8] sm:$0xff] %vm195, 0.0
      %s228 = smul.u32 %s194, 160
      %s229 = sadd.s32 32, %s228
      %s230 = scalar_lea.vmem %s183, %s229
      %v231 = vld [vmem:[%s230] sm:$0xff]
      %v232 = vld [vmem:[%s230 + $0x10] sm:$0xff]
      %v233 = vld [vmem:[%s230 + $0x20] sm:$0xff]
      %v234 = vld [vmem:[%s230 + $0x30] sm:$0xff]
      %v235 = vld [vmem:[%s230 + $0xa0] sm:$0xff]
      %v236 = vld [vmem:[%s230 + $0xb0] sm:$0xff]
      %v237 = vld [vmem:[%s230 + $0xc0] sm:$0xff]
      %v238 = vld [vmem:[%s230 + $0xd0] sm:$0xff]
      %v239 = vld [vmem:[%s230 + $0x140] sm:$0xff]
      %v240 = vld [vmem:[%s230 + $0x150] sm:$0xff]
      %v241 = vld [vmem:[%s230 + $0x160] sm:$0xff]
      %v242 = vld [vmem:[%s230 + $0x170] sm:$0xff]
      %v243 = vld [vmem:[%s230 + $0x1e0] sm:$0xff]
      %v244 = vld [vmem:[%s230 + $0x1f0] sm:$0xff]
      %v245 = vld [vmem:[%s230 + $0x200] sm:$0xff]
      %v246 = vld [vmem:[%s230 + $0x210] sm:$0xff]
      %v247 = vld [vmem:[%s230 + $0x280] sm:$0xff]
      %v248 = vld [vmem:[%s230 + $0x290] sm:$0xff]
      %v249 = vld [vmem:[%s230 + $0x2a0] sm:$0xff]
      %v250 = vld [vmem:[%s230 + $0x2b0] sm:$0xff]
      %v251 = vld [vmem:[%s230 + $0x320] sm:$0xff]
      %v252 = vld [vmem:[%s230 + $0x330] sm:$0xff]
      %v253 = vld [vmem:[%s230 + $0x340] sm:$0xff]
      %v254 = vld [vmem:[%s230 + $0x350] sm:$0xff]
      %v255 = vld [vmem:[%s230 + $0x3c0] sm:$0xff]
      %v256 = vld [vmem:[%s230 + $0x3d0] sm:$0xff]
      %v257 = vld [vmem:[%s230 + $0x3e0] sm:$0xff]
      %v258 = vld [vmem:[%s230 + $0x3f0] sm:$0xff]
      %v259 = vld [vmem:[%s230 + $0x460] sm:$0xff]
      %v260 = vld [vmem:[%s230 + $0x470] sm:$0xff]
      %v261 = vld [vmem:[%s230 + $0x480] sm:$0xff]
      %v262 = vld [vmem:[%s230 + $0x490] sm:$0xff]
      %vm263 = vcmask 64512
      %264 = vst.msk [vmem:[#allocation2] sm:$0xff] %vm263, %v231
      %265 = vst.msk [vmem:[#allocation2 + $0x18] sm:$0xff] %vm263, %v232
      %266 = vst.msk [vmem:[#allocation2 + $0x30] sm:$0xff] %vm263, %v233
      %267 = vst.msk [vmem:[#allocation2 + $0x48] sm:$0xff] %vm263, %v234
      %268 = vst.msk [vmem:[#allocation2 + $0x60] sm:$0xff] %vm263, %v235
      %269 = vst.msk [vmem:[#allocation2 + $0x78] sm:$0xff] %vm263, %v236
      %270 = vst.msk [vmem:[#allocation2 + $0x90] sm:$0xff] %vm263, %v237
      %271 = vst.msk [vmem:[#allocation2 + $0xa8] sm:$0xff] %vm263, %v238
      %272 = vst.msk [vmem:[#allocation2 + $0xc0] sm:$0xff] %vm263, %v239
      %273 = vst.msk [vmem:[#allocation2 + $0xd8] sm:$0xff] %vm263, %v240
      %274 = vst.msk [vmem:[#allocation2 + $0xf0] sm:$0xff] %vm263, %v241
      %275 = vst.msk [vmem:[#allocation2 + $0x108] sm:$0xff] %vm263, %v242
      %276 = vst.msk [vmem:[#allocation2 + $0x120] sm:$0xff] %vm263, %v243
      %277 = vst.msk [vmem:[#allocation2 + $0x138] sm:$0xff] %vm263, %v244
      %278 = vst.msk [vmem:[#allocation2 + $0x150] sm:$0xff] %vm263, %v245
      %279 = vst.msk [vmem:[#allocation2 + $0x168] sm:$0xff] %vm263, %v246
      %280 = vst.msk [vmem:[#allocation2 + $0x180] sm:$0xff] %vm263, %v247
      %281 = vst.msk [vmem:[#allocation2 + $0x198] sm:$0xff] %vm263, %v248
      %282 = vst.msk [vmem:[#allocation2 + $0x1b0] sm:$0xff] %vm263, %v249
      %283 = vst.msk [vmem:[#allocation2 + $0x1c8] sm:$0xff] %vm263, %v250
      %284 = vst.msk [vmem:[#allocation2 + $0x1e0] sm:$0xff] %vm263, %v251
      %285 = vst.msk [vmem:[#allocation2 + $0x1f8] sm:$0xff] %vm263, %v252
      %286 = vst.msk [vmem:[#allocation2 + $0x210] sm:$0xff] %vm263, %v253
      %287 = vst.msk [vmem:[#allocation2 + $0x228] sm:$0xff] %vm263, %v254
      %288 = vst.msk [vmem:[#allocation2 + $0x240] sm:$0xff] %vm263, %v255
      %289 = vst.msk [vmem:[#allocation2 + $0x258] sm:$0xff] %vm263, %v256
      %290 = vst.msk [vmem:[#allocation2 + $0x270] sm:$0xff] %vm263, %v257
      %291 = vst.msk [vmem:[#allocation2 + $0x288] sm:$0xff] %vm263, %v258
      %292 = vst.msk [vmem:[#allocation2 + $0x2a0] sm:$0xff] %vm263, %v259
      %293 = vst.msk [vmem:[#allocation2 + $0x2b8] sm:$0xff] %vm263, %v260
      %294 = vst.msk [vmem:[#allocation2 + $0x2d0] sm:$0xff] %vm263, %v261
      %295 = vst.msk [vmem:[#allocation2 + $0x2e8] sm:$0xff] %vm263, %v262
      %v296 = vld [vmem:[%s230 + $0x1] sm:$0xff]
      %v297 = vld [vmem:[%s230 + $0x11] sm:$0xff]
      %v298 = vld [vmem:[%s230 + $0x21] sm:$0xff]
      %v299 = vld [vmem:[%s230 + $0x31] sm:$0xff]
      %v300 = vld [vmem:[%s230 + $0xa1] sm:$0xff]
      %v301 = vld [vmem:[%s230 + $0xb1] sm:$0xff]
      %v302 = vld [vmem:[%s230 + $0xc1] sm:$0xff]
      %v303 = vld [vmem:[%s230 + $0xd1] sm:$0xff]
      %v304 = vld [vmem:[%s230 + $0x141] sm:$0xff]
      %v305 = vld [vmem:[%s230 + $0x151] sm:$0xff]
      %v306 = vld [vmem:[%s230 + $0x161] sm:$0xff]
      %v307 = vld [vmem:[%s230 + $0x171] sm:$0xff]
      %v308 = vld [vmem:[%s230 + $0x1e1] sm:$0xff]
      %v309 = vld [vmem:[%s230 + $0x1f1] sm:$0xff]
      %v310 = vld [vmem:[%s230 + $0x201] sm:$0xff]
      %v311 = vld [vmem:[%s230 + $0x211] sm:$0xff]
      %v312 = vld [vmem:[%s230 + $0x281] sm:$0xff]
      %v313 = vld [vmem:[%s230 + $0x291] sm:$0xff]
      %v314 = vld [vmem:[%s230 + $0x2a1] sm:$0xff]
      %v315 = vld [vmem:[%s230 + $0x2b1] sm:$0xff]
      %v316 = vld [vmem:[%s230 + $0x321] sm:$0xff]
      %v317 = vld [vmem:[%s230 + $0x331] sm:$0xff]
      %v318 = vld [vmem:[%s230 + $0x341] sm:$0xff]
      %v319 = vld [vmem:[%s230 + $0x351] sm:$0xff]
      %v320 = vld [vmem:[%s230 + $0x3c1] sm:$0xff]
      %v321 = vld [vmem:[%s230 + $0x3d1] sm:$0xff]
      %v322 = vld [vmem:[%s230 + $0x3e1] sm:$0xff]
      %v323 = vld [vmem:[%s230 + $0x3f1] sm:$0xff]
      %v324 = vld [vmem:[%s230 + $0x461] sm:$0xff]
      %v325 = vld [vmem:[%s230 + $0x471] sm:$0xff]
      %v326 = vld [vmem:[%s230 + $0x481] sm:$0xff]
      %v327 = vld [vmem:[%s230 + $0x491] sm:$0xff]
      %360 = vrot.lane.b32.xlu0 %v296, 8
      %v361 = vpop.permute.xlu0 %360
      %362 = vrot.lane.b32.xlu0 %v297, 8
      %v363 = vpop.permute.xlu0 %362
      %364 = vrot.lane.b32.xlu0 %v298, 8
      %v365 = vpop.permute.xlu0 %364
      %366 = vrot.lane.b32.xlu0 %v299, 8
      %v367 = vpop.permute.xlu0 %366
      %368 = vrot.lane.b32.xlu0 %v300, 8
      %v369 = vpop.permute.xlu0 %368
      %370 = vrot.lane.b32.xlu0 %v301, 8
      %v371 = vpop.permute.xlu0 %370
      %372 = vrot.lane.b32.xlu0 %v302, 8
      %v373 = vpop.permute.xlu0 %372
      %374 = vrot.lane.b32.xlu0 %v303, 8
      %v375 = vpop.permute.xlu0 %374
      %376 = vrot.lane.b32.xlu0 %v304, 8
      %v377 = vpop.permute.xlu0 %376
      %378 = vrot.lane.b32.xlu0 %v305, 8
      %v379 = vpop.permute.xlu0 %378
      %380 = vrot.lane.b32.xlu0 %v306, 8
      %v381 = vpop.permute.xlu0 %380
      %382 = vrot.lane.b32.xlu0 %v307, 8
      %v383 = vpop.permute.xlu0 %382
      %384 = vrot.lane.b32.xlu0 %v308, 8
      %v385 = vpop.permute.xlu0 %384
      %386 = vrot.lane.b32.xlu0 %v309, 8
      %v387 = vpop.permute.xlu0 %386
      %388 = vrot.lane.b32.xlu0 %v310, 8
      %v389 = vpop.permute.xlu0 %388
      %390 = vrot.lane.b32.xlu0 %v311, 8
      %v391 = vpop.permute.xlu0 %390
      %392 = vrot.lane.b32.xlu0 %v312, 8
      %v393 = vpop.permute.xlu0 %392
      %394 = vrot.lane.b32.xlu0 %v313, 8
      %v395 = vpop.permute.xlu0 %394
      %396 = vrot.lane.b32.xlu0 %v314, 8
      %v397 = vpop.permute.xlu0 %396
      %398 = vrot.lane.b32.xlu0 %v315, 8
      %v399 = vpop.permute.xlu0 %398
      %400 = vrot.lane.b32.xlu0 %v316, 8
      %v401 = vpop.permute.xlu0 %400
      %402 = vrot.lane.b32.xlu0 %v317, 8
      %v403 = vpop.permute.xlu0 %402
      %404 = vrot.lane.b32.xlu0 %v318, 8
      %v405 = vpop.permute.xlu0 %404
      %406 = vrot.lane.b32.xlu0 %v319, 8
      %v407 = vpop.permute.xlu0 %406
      %408 = vrot.lane.b32.xlu0 %v320, 8
      %v409 = vpop.permute.xlu0 %408
      %410 = vrot.lane.b32.xlu0 %v321, 8
      %v411 = vpop.permute.xlu0 %410
      %412 = vrot.lane.b32.xlu0 %v322, 8
      %v413 = vpop.permute.xlu0 %412
      %414 = vrot.lane.b32.xlu0 %v323, 8
      %v415 = vpop.permute.xlu0 %414
      %416 = vrot.lane.b32.xlu0 %v324, 8
      %v417 = vpop.permute.xlu0 %416
      %418 = vrot.lane.b32.xlu0 %v325, 8
      %v419 = vpop.permute.xlu0 %418
      %420 = vrot.lane.b32.xlu0 %v326, 8
      %v421 = vpop.permute.xlu0 %420
      %422 = vrot.lane.b32.xlu0 %v327, 8
      %v423 = vpop.permute.xlu0 %422
      %vm456 = vcmask 130112
      %457 = vst.msk [vmem:[#allocation2] sm:$0xff] %vm456, %v361
      %458 = vst.msk [vmem:[#allocation2 + $0x18] sm:$0xff] %vm456, %v363
      %459 = vst.msk [vmem:[#allocation2 + $0x30] sm:$0xff] %vm456, %v365
      %460 = vst.msk [vmem:[#allocation2 + $0x48] sm:$0xff] %vm456, %v367
      %461 = vst.msk [vmem:[#allocation2 + $0x60] sm:$0xff] %vm456, %v369
      %462 = vst.msk [vmem:[#allocation2 + $0x78] sm:$0xff] %vm456, %v371
      %463 = vst.msk [vmem:[#allocation2 + $0x90] sm:$0xff] %vm456, %v373
      %464 = vst.msk [vmem:[#allocation2 + $0xa8] sm:$0xff] %vm456, %v375
      %465 = vst.msk [vmem:[#allocation2 + $0xc0] sm:$0xff] %vm456, %v377
      %466 = vst.msk [vmem:[#allocation2 + $0xd8] sm:$0xff] %vm456, %v379
      %467 = vst.msk [vmem:[#allocation2 + $0xf0] sm:$0xff] %vm456, %v381
      %468 = vst.msk [vmem:[#allocation2 + $0x108] sm:$0xff] %vm456, %v383
      %469 = vst.msk [vmem:[#allocation2 + $0x120] sm:$0xff] %vm456, %v385
      %470 = vst.msk [vmem:[#allocation2 + $0x138] sm:$0xff] %vm456, %v387
      %471 = vst.msk [vmem:[#allocation2 + $0x150] sm:$0xff] %vm456, %v389
      %472 = vst.msk [vmem:[#allocation2 + $0x168] sm:$0xff] %vm456, %v391
      %473 = vst.msk [vmem:[#allocation2 + $0x180] sm:$0xff] %vm456, %v393
      %474 = vst.msk [vmem:[#allocation2 + $0x198] sm:$0xff] %vm456, %v395
      %475 = vst.msk [vmem:[#allocation2 + $0x1b0] sm:$0xff] %vm456, %v397
      %476 = vst.msk [vmem:[#allocation2 + $0x1c8] sm:$0xff] %vm456, %v399
      %477 = vst.msk [vmem:[#allocation2 + $0x1e0] sm:$0xff] %vm456, %v401
      %478 = vst.msk [vmem:[#allocation2 + $0x1f8] sm:$0xff] %vm456, %v403
      %479 = vst.msk [vmem:[#allocation2 + $0x210] sm:$0xff] %vm456, %v405
      %480 = vst.msk [vmem:[#allocation2 + $0x228] sm:$0xff] %vm456, %v407
      %481 = vst.msk [vmem:[#allocation2 + $0x240] sm:$0xff] %vm456, %v409
      %482 = vst.msk [vmem:[#allocation2 + $0x258] sm:$0xff] %vm456, %v411
      %483 = vst.msk [vmem:[#allocation2 + $0x270] sm:$0xff] %vm456, %v413
      %484 = vst.msk [vmem:[#allocation2 + $0x288] sm:$0xff] %vm456, %v415
      %485 = vst.msk [vmem:[#allocation2 + $0x2a0] sm:$0xff] %vm456, %v417
      %486 = vst.msk [vmem:[#allocation2 + $0x2b8] sm:$0xff] %vm456, %v419
      %487 = vst.msk [vmem:[#allocation2 + $0x2d0] sm:$0xff] %vm456, %v421
      %488 = vst.msk [vmem:[#allocation2 + $0x2e8] sm:$0xff] %vm456, %v423
      %v489 = vld [vmem:[%s230 + $0x2] sm:$0xff]
      %v490 = vld [vmem:[%s230 + $0x12] sm:$0xff]
      %v491 = vld [vmem:[%s230 + $0x22] sm:$0xff]
      %v492 = vld [vmem:[%s230 + $0x32] sm:$0xff]
      %v493 = vld [vmem:[%s230 + $0xa2] sm:$0xff]
      %v494 = vld [vmem:[%s230 + $0xb2] sm:$0xff]
      %v495 = vld [vmem:[%s230 + $0xc2] sm:$0xff]
      %v496 = vld [vmem:[%s230 + $0xd2] sm:$0xff]
      %v497 = vld [vmem:[%s230 + $0x142] sm:$0xff]
      %v498 = vld [vmem:[%s230 + $0x152] sm:$0xff]
      %v499 = vld [vmem:[%s230 + $0x162] sm:$0xff]
      %v500 = vld [vmem:[%s230 + $0x172] sm:$0xff]
      %v501 = vld [vmem:[%s230 + $0x1e2] sm:$0xff]
      %v502 = vld [vmem:[%s230 + $0x1f2] sm:$0xff]
      %v503 = vld [vmem:[%s230 + $0x202] sm:$0xff]
      %v504 = vld [vmem:[%s230 + $0x212] sm:$0xff]
      %v505 = vld [vmem:[%s230 + $0x282] sm:$0xff]
      %v506 = vld [vmem:[%s230 + $0x292] sm:$0xff]
      %v507 = vld [vmem:[%s230 + $0x2a2] sm:$0xff]
      %v508 = vld [vmem:[%s230 + $0x2b2] sm:$0xff]
      %v509 = vld [vmem:[%s230 + $0x322] sm:$0xff]
      %v510 = vld [vmem:[%s230 + $0x332] sm:$0xff]
      %v511 = vld [vmem:[%s230 + $0x342] sm:$0xff]
      %v512 = vld [vmem:[%s230 + $0x352] sm:$0xff]
      %v513 = vld [vmem:[%s230 + $0x3c2] sm:$0xff]
      %v514 = vld [vmem:[%s230 + $0x3d2] sm:$0xff]
      %v515 = vld [vmem:[%s230 + $0x3e2] sm:$0xff]
      %v516 = vld [vmem:[%s230 + $0x3f2] sm:$0xff]
      %v517 = vld [vmem:[%s230 + $0x462] sm:$0xff]
      %v518 = vld [vmem:[%s230 + $0x472] sm:$0xff]
      %v519 = vld [vmem:[%s230 + $0x482] sm:$0xff]
      %v520 = vld [vmem:[%s230 + $0x492] sm:$0xff]
      %553 = vrot.lane.b32.xlu0 %v489, 16
      %v554 = vpop.permute.xlu0 %553
      %555 = vrot.lane.b32.xlu0 %v490, 16
      %v556 = vpop.permute.xlu0 %555
      %557 = vrot.lane.b32.xlu0 %v491, 16
      %v558 = vpop.permute.xlu0 %557
      %559 = vrot.lane.b32.xlu0 %v492, 16
      %v560 = vpop.permute.xlu0 %559
      %561 = vrot.lane.b32.xlu0 %v493, 16
      %v562 = vpop.permute.xlu0 %561
      %563 = vrot.lane.b32.xlu0 %v494, 16
      %v564 = vpop.permute.xlu0 %563
      %565 = vrot.lane.b32.xlu0 %v495, 16
      %v566 = vpop.permute.xlu0 %565
      %567 = vrot.lane.b32.xlu0 %v496, 16
      %v568 = vpop.permute.xlu0 %567
      %569 = vrot.lane.b32.xlu0 %v497, 16
      %v570 = vpop.permute.xlu0 %569
      %571 = vrot.lane.b32.xlu0 %v498, 16
      %v572 = vpop.permute.xlu0 %571
      %573 = vrot.lane.b32.xlu0 %v499, 16
      %v574 = vpop.permute.xlu0 %573
      %575 = vrot.lane.b32.xlu0 %v500, 16
      %v576 = vpop.permute.xlu0 %575
      %577 = vrot.lane.b32.xlu0 %v501, 16
      %v578 = vpop.permute.xlu0 %577
      %579 = vrot.lane.b32.xlu0 %v502, 16
      %v580 = vpop.permute.xlu0 %579
      %581 = vrot.lane.b32.xlu0 %v503, 16
      %v582 = vpop.permute.xlu0 %581
      %583 = vrot.lane.b32.xlu0 %v504, 16
      %v584 = vpop.permute.xlu0 %583
      %585 = vrot.lane.b32.xlu0 %v505, 16
      %v586 = vpop.permute.xlu0 %585
      %587 = vrot.lane.b32.xlu0 %v506, 16
      %v588 = vpop.permute.xlu0 %587
      %589 = vrot.lane.b32.xlu0 %v507, 16
      %v590 = vpop.permute.xlu0 %589
      %591 = vrot.lane.b32.xlu0 %v508, 16
      %v592 = vpop.permute.xlu0 %591
      %593 = vrot.lane.b32.xlu0 %v509, 16
      %v594 = vpop.permute.xlu0 %593
      %595 = vrot.lane.b32.xlu0 %v510, 16
      %v596 = vpop.permute.xlu0 %595
      %597 = vrot.lane.b32.xlu0 %v511, 16
      %v598 = vpop.permute.xlu0 %597
      %599 = vrot.lane.b32.xlu0 %v512, 16
      %v600 = vpop.permute.xlu0 %599
      %601 = vrot.lane.b32.xlu0 %v513, 16
      %v602 = vpop.permute.xlu0 %601
      %603 = vrot.lane.b32.xlu0 %v514, 16
      %v604 = vpop.permute.xlu0 %603
      %605 = vrot.lane.b32.xlu0 %v515, 16
      %v606 = vpop.permute.xlu0 %605
      %607 = vrot.lane.b32.xlu0 %v516, 16
      %v608 = vpop.permute.xlu0 %607
      %609 = vrot.lane.b32.xlu0 %v517, 16
      %v610 = vpop.permute.xlu0 %609
      %611 = vrot.lane.b32.xlu0 %v518, 16
      %v612 = vpop.permute.xlu0 %611
      %613 = vrot.lane.b32.xlu0 %v519, 16
      %v614 = vpop.permute.xlu0 %613
      %615 = vrot.lane.b32.xlu0 %v520, 16
      %v616 = vpop.permute.xlu0 %615
      %vm649 = vcmask 195712
      %650 = vst.msk [vmem:[#allocation2] sm:$0xff] %vm649, %v554
      %651 = vst.msk [vmem:[#allocation2 + $0x18] sm:$0xff] %vm649, %v556
      %652 = vst.msk [vmem:[#allocation2 + $0x30] sm:$0xff] %vm649, %v558
      %653 = vst.msk [vmem:[#allocation2 + $0x48] sm:$0xff] %vm649, %v560
      %654 = vst.msk [vmem:[#allocation2 + $0x60] sm:$0xff] %vm649, %v562
      %655 = vst.msk [vmem:[#allocation2 + $0x78] sm:$0xff] %vm649, %v564
      %656 = vst.msk [vmem:[#allocation2 + $0x90] sm:$0xff] %vm649, %v566
      %657 = vst.msk [vmem:[#allocation2 + $0xa8] sm:$0xff] %vm649, %v568
      %658 = vst.msk [vmem:[#allocation2 + $0xc0] sm:$0xff] %vm649, %v570
      %659 = vst.msk [vmem:[#allocation2 + $0xd8] sm:$0xff] %vm649, %v572
      %660 = vst.msk [vmem:[#allocation2 + $0xf0] sm:$0xff] %vm649, %v574
      %661 = vst.msk [vmem:[#allocation2 + $0x108] sm:$0xff] %vm649, %v576
      %662 = vst.msk [vmem:[#allocation2 + $0x120] sm:$0xff] %vm649, %v578
      %663 = vst.msk [vmem:[#allocation2 + $0x138] sm:$0xff] %vm649, %v580
      %664 = vst.msk [vmem:[#allocation2 + $0x150] sm:$0xff] %vm649, %v582
      %665 = vst.msk [vmem:[#allocation2 + $0x168] sm:$0xff] %vm649, %v584
      %666 = vst.msk [vmem:[#allocation2 + $0x180] sm:$0xff] %vm649, %v586
      %667 = vst.msk [vmem:[#allocation2 + $0x198] sm:$0xff] %vm649, %v588
      %668 = vst.msk [vmem:[#allocation2 + $0x1b0] sm:$0xff] %vm649, %v590
      %669 = vst.msk [vmem:[#allocation2 + $0x1c8] sm:$0xff] %vm649, %v592
      %670 = vst.msk [vmem:[#allocation2 + $0x1e0] sm:$0xff] %vm649, %v594
      %671 = vst.msk [vmem:[#allocation2 + $0x1f8] sm:$0xff] %vm649, %v596
      %672 = vst.msk [vmem:[#allocation2 + $0x210] sm:$0xff] %vm649, %v598
      %673 = vst.msk [vmem:[#allocation2 + $0x228] sm:$0xff] %vm649, %v600
      %674 = vst.msk [vmem:[#allocation2 + $0x240] sm:$0xff] %vm649, %v602
      %675 = vst.msk [vmem:[#allocation2 + $0x258] sm:$0xff] %vm649, %v604
      %676 = vst.msk [vmem:[#allocation2 + $0x270] sm:$0xff] %vm649, %v606
      %677 = vst.msk [vmem:[#allocation2 + $0x288] sm:$0xff] %vm649, %v608
      %678 = vst.msk [vmem:[#allocation2 + $0x2a0] sm:$0xff] %vm649, %v610
      %679 = vst.msk [vmem:[#allocation2 + $0x2b8] sm:$0xff] %vm649, %v612
      %680 = vst.msk [vmem:[#allocation2 + $0x2d0] sm:$0xff] %vm649, %v614
      %681 = vst.msk [vmem:[#allocation2 + $0x2e8] sm:$0xff] %vm649, %v616
      %v682 = vld [vmem:[%s230 + $0x3] sm:$0xff]
      %v683 = vld [vmem:[%s230 + $0x13] sm:$0xff]
      %v684 = vld [vmem:[%s230 + $0x23] sm:$0xff]
      %v685 = vld [vmem:[%s230 + $0x33] sm:$0xff]
      %v686 = vld [vmem:[%s230 + $0xa3] sm:$0xff]
      %v687 = vld [vmem:[%s230 + $0xb3] sm:$0xff]
      %v688 = vld [vmem:[%s230 + $0xc3] sm:$0xff]
      %v689 = vld [vmem:[%s230 + $0xd3] sm:$0xff]
      %v690 = vld [vmem:[%s230 + $0x143] sm:$0xff]
      %v691 = vld [vmem:[%s230 + $0x153] sm:$0xff]
      %v692 = vld [vmem:[%s230 + $0x163] sm:$0xff]
      %v693 = vld [vmem:[%s230 + $0x173] sm:$0xff]
      %v694 = vld [vmem:[%s230 + $0x1e3] sm:$0xff]
      %v695 = vld [vmem:[%s230 + $0x1f3] sm:$0xff]
      %v696 = vld [vmem:[%s230 + $0x203] sm:$0xff]
      %v697 = vld [vmem:[%s230 + $0x213] sm:$0xff]
      %v698 = vld [vmem:[%s230 + $0x283] sm:$0xff]
      %v699 = vld [vmem:[%s230 + $0x293] sm:$0xff]
      %v700 = vld [vmem:[%s230 + $0x2a3] sm:$0xff]
      %v701 = vld [vmem:[%s230 + $0x2b3] sm:$0xff]
      %v702 = vld [vmem:[%s230 + $0x323] sm:$0xff]
      %v703 = vld [vmem:[%s230 + $0x333] sm:$0xff]
      %v704 = vld [vmem:[%s230 + $0x343] sm:$0xff]
      %v705 = vld [vmem:[%s230 + $0x353] sm:$0xff]
      %v706 = vld [vmem:[%s230 + $0x3c3] sm:$0xff]
      %v707 = vld [vmem:[%s230 + $0x3d3] sm:$0xff]
      %v708 = vld [vmem:[%s230 + $0x3e3] sm:$0xff]
      %v709 = vld [vmem:[%s230 + $0x3f3] sm:$0xff]
      %v710 = vld [vmem:[%s230 + $0x463] sm:$0xff]
      %v711 = vld [vmem:[%s230 + $0x473] sm:$0xff]
      %v712 = vld [vmem:[%s230 + $0x483] sm:$0xff]
      %v713 = vld [vmem:[%s230 + $0x493] sm:$0xff]
      %746 = vrot.lane.b32.xlu0 %v682, 24
      %v747 = vpop.permute.xlu0 %746
      %748 = vrot.lane.b32.xlu0 %v683, 24
      %v749 = vpop.permute.xlu0 %748
      %750 = vrot.lane.b32.xlu0 %v684, 24
      %v751 = vpop.permute.xlu0 %750
      %752 = vrot.lane.b32.xlu0 %v685, 24
      %v753 = vpop.permute.xlu0 %752
      %754 = vrot.lane.b32.xlu0 %v686, 24
      %v755 = vpop.permute.xlu0 %754
      %756 = vrot.lane.b32.xlu0 %v687, 24
      %v757 = vpop.permute.xlu0 %756
      %758 = vrot.lane.b32.xlu0 %v688, 24
      %v759 = vpop.permute.xlu0 %758
      %760 = vrot.lane.b32.xlu0 %v689, 24
      %v761 = vpop.permute.xlu0 %760
      %762 = vrot.lane.b32.xlu0 %v690, 24
      %v763 = vpop.permute.xlu0 %762
      %764 = vrot.lane.b32.xlu0 %v691, 24
      %v765 = vpop.permute.xlu0 %764
      %766 = vrot.lane.b32.xlu0 %v692, 24
      %v767 = vpop.permute.xlu0 %766
      %768 = vrot.lane.b32.xlu0 %v693, 24
      %v769 = vpop.permute.xlu0 %768
      %770 = vrot.lane.b32.xlu0 %v694, 24
      %v771 = vpop.permute.xlu0 %770
      %772 = vrot.lane.b32.xlu0 %v695, 24
      %v773 = vpop.permute.xlu0 %772
      %774 = vrot.lane.b32.xlu0 %v696, 24
      %v775 = vpop.permute.xlu0 %774
      %776 = vrot.lane.b32.xlu0 %v697, 24
      %v777 = vpop.permute.xlu0 %776
      %778 = vrot.lane.b32.xlu0 %v698, 24
      %v779 = vpop.permute.xlu0 %778
      %780 = vrot.lane.b32.xlu0 %v699, 24
      %v781 = vpop.permute.xlu0 %780
      %782 = vrot.lane.b32.xlu0 %v700, 24
      %v783 = vpop.permute.xlu0 %782
      %784 = vrot.lane.b32.xlu0 %v701, 24
      %v785 = vpop.permute.xlu0 %784
      %786 = vrot.lane.b32.xlu0 %v702, 24
      %v787 = vpop.permute.xlu0 %786
      %788 = vrot.lane.b32.xlu0 %v703, 24
      %v789 = vpop.permute.xlu0 %788
      %790 = vrot.lane.b32.xlu0 %v704, 24
      %v791 = vpop.permute.xlu0 %790
      %792 = vrot.lane.b32.xlu0 %v705, 24
      %v793 = vpop.permute.xlu0 %792
      %794 = vrot.lane.b32.xlu0 %v706, 24
      %v795 = vpop.permute.xlu0 %794
      %796 = vrot.lane.b32.xlu0 %v707, 24
      %v797 = vpop.permute.xlu0 %796
      %798 = vrot.lane.b32.xlu0 %v708, 24
      %v799 = vpop.permute.xlu0 %798
      %800 = vrot.lane.b32.xlu0 %v709, 24
      %v801 = vpop.permute.xlu0 %800
      %802 = vrot.lane.b32.xlu0 %v710, 24
      %v803 = vpop.permute.xlu0 %802
      %804 = vrot.lane.b32.xlu0 %v711, 24
      %v805 = vpop.permute.xlu0 %804
      %806 = vrot.lane.b32.xlu0 %v712, 24
      %v807 = vpop.permute.xlu0 %806
      %808 = vrot.lane.b32.xlu0 %v713, 24
      %v809 = vpop.permute.xlu0 %808
      %vm842 = vcmask 261312
      %843 = vst.msk [vmem:[#allocation2] sm:$0xff] %vm842, %v747
      %844 = vst.msk [vmem:[#allocation2 + $0x18] sm:$0xff] %vm842, %v749
      %845 = vst.msk [vmem:[#allocation2 + $0x30] sm:$0xff] %vm842, %v751
      %846 = vst.msk [vmem:[#allocation2 + $0x48] sm:$0xff] %vm842, %v753
      %847 = vst.msk [vmem:[#allocation2 + $0x60] sm:$0xff] %vm842, %v755
      %848 = vst.msk [vmem:[#allocation2 + $0x78] sm:$0xff] %vm842, %v757
      %849 = vst.msk [vmem:[#allocation2 + $0x90] sm:$0xff] %vm842, %v759
      %850 = vst.msk [vmem:[#allocation2 + $0xa8] sm:$0xff] %vm842, %v761
      %851 = vst.msk [vmem:[#allocation2 + $0xc0] sm:$0xff] %vm842, %v763
      %852 = vst.msk [vmem:[#allocation2 + $0xd8] sm:$0xff] %vm842, %v765
      %853 = vst.msk [vmem:[#allocation2 + $0xf0] sm:$0xff] %vm842, %v767
      %854 = vst.msk [vmem:[#allocation2 + $0x108] sm:$0xff] %vm842, %v769
      %855 = vst.msk [vmem:[#allocation2 + $0x120] sm:$0xff] %vm842, %v771
      %856 = vst.msk [vmem:[#allocation2 + $0x138] sm:$0xff] %vm842, %v773
      %857 = vst.msk [vmem:[#allocation2 + $0x150] sm:$0xff] %vm842, %v775
      %858 = vst.msk [vmem:[#allocation2 + $0x168] sm:$0xff] %vm842, %v777
      %859 = vst.msk [vmem:[#allocation2 + $0x180] sm:$0xff] %vm842, %v779
      %860 = vst.msk [vmem:[#allocation2 + $0x198] sm:$0xff] %vm842, %v781
      %861 = vst.msk [vmem:[#allocation2 + $0x1b0] sm:$0xff] %vm842, %v783
      %862 = vst.msk [vmem:[#allocation2 + $0x1c8] sm:$0xff] %vm842, %v785
      %863 = vst.msk [vmem:[#allocation2 + $0x1e0] sm:$0xff] %vm842, %v787
      %864 = vst.msk [vmem:[#allocation2 + $0x1f8] sm:$0xff] %vm842, %v789
      %865 = vst.msk [vmem:[#allocation2 + $0x210] sm:$0xff] %vm842, %v791
      %866 = vst.msk [vmem:[#allocation2 + $0x228] sm:$0xff] %vm842, %v793
      %867 = vst.msk [vmem:[#allocation2 + $0x240] sm:$0xff] %vm842, %v795
      %868 = vst.msk [vmem:[#allocation2 + $0x258] sm:$0xff] %vm842, %v797
      %869 = vst.msk [vmem:[#allocation2 + $0x270] sm:$0xff] %vm842, %v799
      %870 = vst.msk [vmem:[#allocation2 + $0x288] sm:$0xff] %vm842, %v801
      %871 = vst.msk [vmem:[#allocation2 + $0x2a0] sm:$0xff] %vm842, %v803
      %872 = vst.msk [vmem:[#allocation2 + $0x2b8] sm:$0xff] %vm842, %v805
      %873 = vst.msk [vmem:[#allocation2 + $0x2d0] sm:$0xff] %vm842, %v807
      %874 = vst.msk [vmem:[#allocation2 + $0x2e8] sm:$0xff] %vm842, %v809
      %v875 = vld [vmem:[%s230 + $0x4] sm:$0xff]
      %v876 = vld [vmem:[%s230 + $0x14] sm:$0xff]
      %v877 = vld [vmem:[%s230 + $0x24] sm:$0xff]
      %v878 = vld [vmem:[%s230 + $0x34] sm:$0xff]
      %v879 = vld [vmem:[%s230 + $0xa4] sm:$0xff]
      %v880 = vld [vmem:[%s230 + $0xb4] sm:$0xff]
      %v881 = vld [vmem:[%s230 + $0xc4] sm:$0xff]
      %v882 = vld [vmem:[%s230 + $0xd4] sm:$0xff]
      %v883 = vld [vmem:[%s230 + $0x144] sm:$0xff]
      %v884 = vld [vmem:[%s230 + $0x154] sm:$0xff]
      %v885 = vld [vmem:[%s230 + $0x164] sm:$0xff]
      %v886 = vld [vmem:[%s230 + $0x174] sm:$0xff]
      %v887 = vld [vmem:[%s230 + $0x1e4] sm:$0xff]
      %v888 = vld [vmem:[%s230 + $0x1f4] sm:$0xff]
      %v889 = vld [vmem:[%s230 + $0x204] sm:$0xff]
      %v890 = vld [vmem:[%s230 + $0x214] sm:$0xff]
      %v891 = vld [vmem:[%s230 + $0x284] sm:$0xff]
      %v892 = vld [vmem:[%s230 + $0x294] sm:$0xff]
      %v893 = vld [vmem:[%s230 + $0x2a4] sm:$0xff]
      %v894 = vld [vmem:[%s230 + $0x2b4] sm:$0xff]
      %v895 = vld [vmem:[%s230 + $0x324] sm:$0xff]
      %v896 = vld [vmem:[%s230 + $0x334] sm:$0xff]
      %v897 = vld [vmem:[%s230 + $0x344] sm:$0xff]
      %v898 = vld [vmem:[%s230 + $0x354] sm:$0xff]
      %v899 = vld [vmem:[%s230 + $0x3c4] sm:$0xff]
      %v900 = vld [vmem:[%s230 + $0x3d4] sm:$0xff]
      %v901 = vld [vmem:[%s230 + $0x3e4] sm:$0xff]
      %v902 = vld [vmem:[%s230 + $0x3f4] sm:$0xff]
      %v903 = vld [vmem:[%s230 + $0x464] sm:$0xff]
      %v904 = vld [vmem:[%s230 + $0x474] sm:$0xff]
      %v905 = vld [vmem:[%s230 + $0x484] sm:$0xff]
      %v906 = vld [vmem:[%s230 + $0x494] sm:$0xff]
      %939 = vrot.lane.b32.xlu0 %v875, 32
      %v940 = vpop.permute.xlu0 %939
      %941 = vrot.lane.b32.xlu0 %v876, 32
      %v942 = vpop.permute.xlu0 %941
      %943 = vrot.lane.b32.xlu0 %v877, 32
      %v944 = vpop.permute.xlu0 %943
      %945 = vrot.lane.b32.xlu0 %v878, 32
      %v946 = vpop.permute.xlu0 %945
      %947 = vrot.lane.b32.xlu0 %v879, 32
      %v948 = vpop.permute.xlu0 %947
      %949 = vrot.lane.b32.xlu0 %v880, 32
      %v950 = vpop.permute.xlu0 %949
      %951 = vrot.lane.b32.xlu0 %v881, 32
      %v952 = vpop.permute.xlu0 %951
      %953 = vrot.lane.b32.xlu0 %v882, 32
      %v954 = vpop.permute.xlu0 %953
      %955 = vrot.lane.b32.xlu0 %v883, 32
      %v956 = vpop.permute.xlu0 %955
      %957 = vrot.lane.b32.xlu0 %v884, 32
      %v958 = vpop.permute.xlu0 %957
      %959 = vrot.lane.b32.xlu0 %v885, 32
      %v960 = vpop.permute.xlu0 %959
      %961 = vrot.lane.b32.xlu0 %v886, 32
      %v962 = vpop.permute.xlu0 %961
      %963 = vrot.lane.b32.xlu0 %v887, 32
      %v964 = vpop.permute.xlu0 %963
      %965 = vrot.lane.b32.xlu0 %v888, 32
      %v966 = vpop.permute.xlu0 %965
      %967 = vrot.lane.b32.xlu0 %v889, 32
      %v968 = vpop.permute.xlu0 %967
      %969 = vrot.lane.b32.xlu0 %v890, 32
      %v970 = vpop.permute.xlu0 %969
      %971 = vrot.lane.b32.xlu0 %v891, 32
      %v972 = vpop.permute.xlu0 %971
      %973 = vrot.lane.b32.xlu0 %v892, 32
      %v974 = vpop.permute.xlu0 %973
      %975 = vrot.lane.b32.xlu0 %v893, 32
      %v976 = vpop.permute.xlu0 %975
      %977 = vrot.lane.b32.xlu0 %v894, 32
      %v978 = vpop.permute.xlu0 %977
      %979 = vrot.lane.b32.xlu0 %v895, 32
      %v980 = vpop.permute.xlu0 %979
      %981 = vrot.lane.b32.xlu0 %v896, 32
      %v982 = vpop.permute.xlu0 %981
      %983 = vrot.lane.b32.xlu0 %v897, 32
      %v984 = vpop.permute.xlu0 %983
      %985 = vrot.lane.b32.xlu0 %v898, 32
      %v986 = vpop.permute.xlu0 %985
      %987 = vrot.lane.b32.xlu0 %v899, 32
      %v988 = vpop.permute.xlu0 %987
      %989 = vrot.lane.b32.xlu0 %v900, 32
      %v990 = vpop.permute.xlu0 %989
      %991 = vrot.lane.b32.xlu0 %v901, 32
      %v992 = vpop.permute.xlu0 %991
      %993 = vrot.lane.b32.xlu0 %v902, 32
      %v994 = vpop.permute.xlu0 %993
      %995 = vrot.lane.b32.xlu0 %v903, 32
      %v996 = vpop.permute.xlu0 %995
      %997 = vrot.lane.b32.xlu0 %v904, 32
      %v998 = vpop.permute.xlu0 %997
      %999 = vrot.lane.b32.xlu0 %v905, 32
      %v1000 = vpop.permute.xlu0 %999
      %1001 = vrot.lane.b32.xlu0 %v906, 32
      %v1002 = vpop.permute.xlu0 %1001
      %vm1035 = vcmask 326912
      %1036 = vst.msk [vmem:[#allocation2] sm:$0xff] %vm1035, %v940
      %1037 = vst.msk [vmem:[#allocation2 + $0x18] sm:$0xff] %vm1035, %v942
      %1038 = vst.msk [vmem:[#allocation2 + $0x30] sm:$0xff] %vm1035, %v944
      %1039 = vst.msk [vmem:[#allocation2 + $0x48] sm:$0xff] %vm1035, %v946
      %1040 = vst.msk [vmem:[#allocation2 + $0x60] sm:$0xff] %vm1035, %v948
      %1041 = vst.msk [vmem:[#allocation2 + $0x78] sm:$0xff] %vm1035, %v950
      %1042 = vst.msk [vmem:[#allocation2 + $0x90] sm:$0xff] %vm1035, %v952
      %1043 = vst.msk [vmem:[#allocation2 + $0xa8] sm:$0xff] %vm1035, %v954
      %1044 = vst.msk [vmem:[#allocation2 + $0xc0] sm:$0xff] %vm1035, %v956
      %1045 = vst.msk [vmem:[#allocation2 + $0xd8] sm:$0xff] %vm1035, %v958
      %1046 = vst.msk [vmem:[#allocation2 + $0xf0] sm:$0xff] %vm1035, %v960
      %1047 = vst.msk [vmem:[#allocation2 + $0x108] sm:$0xff] %vm1035, %v962
      %1048 = vst.msk [vmem:[#allocation2 + $0x120] sm:$0xff] %vm1035, %v964
      %1049 = vst.msk [vmem:[#allocation2 + $0x138] sm:$0xff] %vm1035, %v966
      %1050 = vst.msk [vmem:[#allocation2 + $0x150] sm:$0xff] %vm1035, %v968
      %1051 = vst.msk [vmem:[#allocation2 + $0x168] sm:$0xff] %vm1035, %v970
      %1052 = vst.msk [vmem:[#allocation2 + $0x180] sm:$0xff] %vm1035, %v972
      %1053 = vst.msk [vmem:[#allocation2 + $0x198] sm:$0xff] %vm1035, %v974
      %1054 = vst.msk [vmem:[#allocation2 + $0x1b0] sm:$0xff] %vm1035, %v976
      %1055 = vst.msk [vmem:[#allocation2 + $0x1c8] sm:$0xff] %vm1035, %v978
      %1056 = vst.msk [vmem:[#allocation2 + $0x1e0] sm:$0xff] %vm1035, %v980
      %1057 = vst.msk [vmem:[#allocation2 + $0x1f8] sm:$0xff] %vm1035, %v982
      %1058 = vst.msk [vmem:[#allocation2 + $0x210] sm:$0xff] %vm1035, %v984
      %1059 = vst.msk [vmem:[#allocation2 + $0x228] sm:$0xff] %vm1035, %v986
      %1060 = vst.msk [vmem:[#allocation2 + $0x240] sm:$0xff] %vm1035, %v988
      %1061 = vst.msk [vmem:[#allocation2 + $0x258] sm:$0xff] %vm1035, %v990
      %1062 = vst.msk [vmem:[#allocation2 + $0x270] sm:$0xff] %vm1035, %v992
      %1063 = vst.msk [vmem:[#allocation2 + $0x288] sm:$0xff] %vm1035, %v994
      %1064 = vst.msk [vmem:[#allocation2 + $0x2a0] sm:$0xff] %vm1035, %v996
      %1065 = vst.msk [vmem:[#allocation2 + $0x2b8] sm:$0xff] %vm1035, %v998
      %1066 = vst.msk [vmem:[#allocation2 + $0x2d0] sm:$0xff] %vm1035, %v1000
      %1067 = vst.msk [vmem:[#allocation2 + $0x2e8] sm:$0xff] %vm1035, %v1002
      %s1068 = sadd.s32 48, %s228
      %s1069 = scalar_lea.vmem %s183, %s1068
      %v1070 = vld [vmem:[%s1069] sm:$0xff]
      %v1071 = vld [vmem:[%s1069 + $0x10] sm:$0xff]
      %v1072 = vld [vmem:[%s1069 + $0x20] sm:$0xff]
      %v1073 = vld [vmem:[%s1069 + $0x30] sm:$0xff]
      %v1074 = vld [vmem:[%s1069 + $0xa0] sm:$0xff]
      %v1075 = vld [vmem:[%s1069 + $0xb0] sm:$0xff]
      %v1076 = vld [vmem:[%s1069 + $0xc0] sm:$0xff]
      %v1077 = vld [vmem:[%s1069 + $0xd0] sm:$0xff]
      %v1078 = vld [vmem:[%s1069 + $0x140] sm:$0xff]
      %v1079 = vld [vmem:[%s1069 + $0x150] sm:$0xff]
      %v1080 = vld [vmem:[%s1069 + $0x160] sm:$0xff]
      %v1081 = vld [vmem:[%s1069 + $0x170] sm:$0xff]
      %v1082 = vld [vmem:[%s1069 + $0x1e0] sm:$0xff]
      %v1083 = vld [vmem:[%s1069 + $0x1f0] sm:$0xff]
      %v1084 = vld [vmem:[%s1069 + $0x200] sm:$0xff]
      %v1085 = vld [vmem:[%s1069 + $0x210] sm:$0xff]
      %v1086 = vld [vmem:[%s1069 + $0x280] sm:$0xff]
      %v1087 = vld [vmem:[%s1069 + $0x290] sm:$0xff]
      %v1088 = vld [vmem:[%s1069 + $0x2a0] sm:$0xff]
      %v1089 = vld [vmem:[%s1069 + $0x2b0] sm:$0xff]
      %v1090 = vld [vmem:[%s1069 + $0x320] sm:$0xff]
      %v1091 = vld [vmem:[%s1069 + $0x330] sm:$0xff]
      %v1092 = vld [vmem:[%s1069 + $0x340] sm:$0xff]
      %v1093 = vld [vmem:[%s1069 + $0x350] sm:$0xff]
      %v1094 = vld [vmem:[%s1069 + $0x3c0] sm:$0xff]
      %v1095 = vld [vmem:[%s1069 + $0x3d0] sm:$0xff]
      %v1096 = vld [vmem:[%s1069 + $0x3e0] sm:$0xff]
      %v1097 = vld [vmem:[%s1069 + $0x3f0] sm:$0xff]
      %v1098 = vld [vmem:[%s1069 + $0x460] sm:$0xff]
      %v1099 = vld [vmem:[%s1069 + $0x470] sm:$0xff]
      %v1100 = vld [vmem:[%s1069 + $0x480] sm:$0xff]
      %v1101 = vld [vmem:[%s1069 + $0x490] sm:$0xff]
      %1134 = vrot.lane.b32.xlu0 %v1070, 40
      %v1135 = vpop.permute.xlu0 %1134
      %1136 = vrot.lane.b32.xlu0 %v1071, 40
      %v1137 = vpop.permute.xlu0 %1136
      %1138 = vrot.lane.b32.xlu0 %v1072, 40
      %v1139 = vpop.permute.xlu0 %1138
      %1140 = vrot.lane.b32.xlu0 %v1073, 40
      %v1141 = vpop.permute.xlu0 %1140
      %1142 = vrot.lane.b32.xlu0 %v1074, 40
      %v1143 = vpop.permute.xlu0 %1142
      %1144 = vrot.lane.b32.xlu0 %v1075, 40
      %v1145 = vpop.permute.xlu0 %1144
      %1146 = vrot.lane.b32.xlu0 %v1076, 40
      %v1147 = vpop.permute.xlu0 %1146
      %1148 = vrot.lane.b32.xlu0 %v1077, 40
      %v1149 = vpop.permute.xlu0 %1148
      %1150 = vrot.lane.b32.xlu0 %v1078, 40
      %v1151 = vpop.permute.xlu0 %1150
      %1152 = vrot.lane.b32.xlu0 %v1079, 40
      %v1153 = vpop.permute.xlu0 %1152
      %1154 = vrot.lane.b32.xlu0 %v1080, 40
      %v1155 = vpop.permute.xlu0 %1154
      %1156 = vrot.lane.b32.xlu0 %v1081, 40
      %v1157 = vpop.permute.xlu0 %1156
      %1158 = vrot.lane.b32.xlu0 %v1082, 40
      %v1159 = vpop.permute.xlu0 %1158
      %1160 = vrot.lane.b32.xlu0 %v1083, 40
      %v1161 = vpop.permute.xlu0 %1160
      %1162 = vrot.lane.b32.xlu0 %v1084, 40
      %v1163 = vpop.permute.xlu0 %1162
      %1164 = vrot.lane.b32.xlu0 %v1085, 40
      %v1165 = vpop.permute.xlu0 %1164
      %1166 = vrot.lane.b32.xlu0 %v1086, 40
      %v1167 = vpop.permute.xlu0 %1166
      %1168 = vrot.lane.b32.xlu0 %v1087, 40
      %v1169 = vpop.permute.xlu0 %1168
      %1170 = vrot.lane.b32.xlu0 %v1088, 40
      %v1171 = vpop.permute.xlu0 %1170
      %1172 = vrot.lane.b32.xlu0 %v1089, 40
      %v1173 = vpop.permute.xlu0 %1172
      %1174 = vrot.lane.b32.xlu0 %v1090, 40
      %v1175 = vpop.permute.xlu0 %1174
      %1176 = vrot.lane.b32.xlu0 %v1091, 40
      %v1177 = vpop.permute.xlu0 %1176
      %1178 = vrot.lane.b32.xlu0 %v1092, 40
      %v1179 = vpop.permute.xlu0 %1178
      %1180 = vrot.lane.b32.xlu0 %v1093, 40
      %v1181 = vpop.permute.xlu0 %1180
      %1182 = vrot.lane.b32.xlu0 %v1094, 40
      %v1183 = vpop.permute.xlu0 %1182
      %1184 = vrot.lane.b32.xlu0 %v1095, 40
      %v1185 = vpop.permute.xlu0 %1184
      %1186 = vrot.lane.b32.xlu0 %v1096, 40
      %v1187 = vpop.permute.xlu0 %1186
      %1188 = vrot.lane.b32.xlu0 %v1097, 40
      %v1189 = vpop.permute.xlu0 %1188
      %1190 = vrot.lane.b32.xlu0 %v1098, 40
      %v1191 = vpop.permute.xlu0 %1190
      %1192 = vrot.lane.b32.xlu0 %v1099, 40
      %v1193 = vpop.permute.xlu0 %1192
      %1194 = vrot.lane.b32.xlu0 %v1100, 40
      %v1195 = vpop.permute.xlu0 %1194
      %1196 = vrot.lane.b32.xlu0 %v1101, 40
      %v1197 = vpop.permute.xlu0 %1196
      %vm1230 = vcmask 392512
      %1231 = vst.msk [vmem:[#allocation2] sm:$0xff] %vm1230, %v1135
      %1232 = vst.msk [vmem:[#allocation2 + $0x18] sm:$0xff] %vm1230, %v1137
      %1233 = vst.msk [vmem:[#allocation2 + $0x30] sm:$0xff] %vm1230, %v1139
      %1234 = vst.msk [vmem:[#allocation2 + $0x48] sm:$0xff] %vm1230, %v1141
      %1235 = vst.msk [vmem:[#allocation2 + $0x60] sm:$0xff] %vm1230, %v1143
      %1236 = vst.msk [vmem:[#allocation2 + $0x78] sm:$0xff] %vm1230, %v1145
      %1237 = vst.msk [vmem:[#allocation2 + $0x90] sm:$0xff] %vm1230, %v1147
      %1238 = vst.msk [vmem:[#allocation2 + $0xa8] sm:$0xff] %vm1230, %v1149
      %1239 = vst.msk [vmem:[#allocation2 + $0xc0] sm:$0xff] %vm1230, %v1151
      %1240 = vst.msk [vmem:[#allocation2 + $0xd8] sm:$0xff] %vm1230, %v1153
      %1241 = vst.msk [vmem:[#allocation2 + $0xf0] sm:$0xff] %vm1230, %v1155
      %1242 = vst.msk [vmem:[#allocation2 + $0x108] sm:$0xff] %vm1230, %v1157
      %1243 = vst.msk [vmem:[#allocation2 + $0x120] sm:$0xff] %vm1230, %v1159
      %1244 = vst.msk [vmem:[#allocation2 + $0x138] sm:$0xff] %vm1230, %v1161
      %1245 = vst.msk [vmem:[#allocation2 + $0x150] sm:$0xff] %vm1230, %v1163
      %1246 = vst.msk [vmem:[#allocation2 + $0x168] sm:$0xff] %vm1230, %v1165
      %1247 = vst.msk [vmem:[#allocation2 + $0x180] sm:$0xff] %vm1230, %v1167
      %1248 = vst.msk [vmem:[#allocation2 + $0x198] sm:$0xff] %vm1230, %v1169
      %1249 = vst.msk [vmem:[#allocation2 + $0x1b0] sm:$0xff] %vm1230, %v1171
      %1250 = vst.msk [vmem:[#allocation2 + $0x1c8] sm:$0xff] %vm1230, %v1173
      %1251 = vst.msk [vmem:[#allocation2 + $0x1e0] sm:$0xff] %vm1230, %v1175
      %1252 = vst.msk [vmem:[#allocation2 + $0x1f8] sm:$0xff] %vm1230, %v1177
      %1253 = vst.msk [vmem:[#allocation2 + $0x210] sm:$0xff] %vm1230, %v1179
      %1254 = vst.msk [vmem:[#allocation2 + $0x228] sm:$0xff] %vm1230, %v1181
      %1255 = vst.msk [vmem:[#allocation2 + $0x240] sm:$0xff] %vm1230, %v1183
      %1256 = vst.msk [vmem:[#allocation2 + $0x258] sm:$0xff] %vm1230, %v1185
      %1257 = vst.msk [vmem:[#allocation2 + $0x270] sm:$0xff] %vm1230, %v1187
      %1258 = vst.msk [vmem:[#allocation2 + $0x288] sm:$0xff] %vm1230, %v1189
      %1259 = vst.msk [vmem:[#allocation2 + $0x2a0] sm:$0xff] %vm1230, %v1191
      %1260 = vst.msk [vmem:[#allocation2 + $0x2b8] sm:$0xff] %vm1230, %v1193
      %1261 = vst.msk [vmem:[#allocation2 + $0x2d0] sm:$0xff] %vm1230, %v1195
      %1262 = vst.msk [vmem:[#allocation2 + $0x2e8] sm:$0xff] %vm1230, %v1197
      %v1263 = vld [vmem:[%s1069 + $0x1] sm:$0xff]
      %v1264 = vld [vmem:[%s1069 + $0x11] sm:$0xff]
      %v1265 = vld [vmem:[%s1069 + $0x21] sm:$0xff]
      %v1266 = vld [vmem:[%s1069 + $0x31] sm:$0xff]
      %v1267 = vld [vmem:[%s1069 + $0xa1] sm:$0xff]
      %v1268 = vld [vmem:[%s1069 + $0xb1] sm:$0xff]
      %v1269 = vld [vmem:[%s1069 + $0xc1] sm:$0xff]
      %v1270 = vld [vmem:[%s1069 + $0xd1] sm:$0xff]
      %v1271 = vld [vmem:[%s1069 + $0x141] sm:$0xff]
      %v1272 = vld [vmem:[%s1069 + $0x151] sm:$0xff]
      %v1273 = vld [vmem:[%s1069 + $0x161] sm:$0xff]
      %v1274 = vld [vmem:[%s1069 + $0x171] sm:$0xff]
      %v1275 = vld [vmem:[%s1069 + $0x1e1] sm:$0xff]
      %v1276 = vld [vmem:[%s1069 + $0x1f1] sm:$0xff]
      %v1277 = vld [vmem:[%s1069 + $0x201] sm:$0xff]
      %v1278 = vld [vmem:[%s1069 + $0x211] sm:$0xff]
      %v1279 = vld [vmem:[%s1069 + $0x281] sm:$0xff]
      %v1280 = vld [vmem:[%s1069 + $0x291] sm:$0xff]
      %v1281 = vld [vmem:[%s1069 + $0x2a1] sm:$0xff]
      %v1282 = vld [vmem:[%s1069 + $0x2b1] sm:$0xff]
      %v1283 = vld [vmem:[%s1069 + $0x321] sm:$0xff]
      %v1284 = vld [vmem:[%s1069 + $0x331] sm:$0xff]
      %v1285 = vld [vmem:[%s1069 + $0x341] sm:$0xff]
      %v1286 = vld [vmem:[%s1069 + $0x351] sm:$0xff]
      %v1287 = vld [vmem:[%s1069 + $0x3c1] sm:$0xff]
      %v1288 = vld [vmem:[%s1069 + $0x3d1] sm:$0xff]
      %v1289 = vld [vmem:[%s1069 + $0x3e1] sm:$0xff]
      %v1290 = vld [vmem:[%s1069 + $0x3f1] sm:$0xff]
      %v1291 = vld [vmem:[%s1069 + $0x461] sm:$0xff]
      %v1292 = vld [vmem:[%s1069 + $0x471] sm:$0xff]
      %v1293 = vld [vmem:[%s1069 + $0x481] sm:$0xff]
      %v1294 = vld [vmem:[%s1069 + $0x491] sm:$0xff]
      %1327 = vrot.lane.b32.xlu0 %v1263, 48
      %v1328 = vpop.permute.xlu0 %1327
      %1329 = vrot.lane.b32.xlu0 %v1264, 48
      %v1330 = vpop.permute.xlu0 %1329
      %1331 = vrot.lane.b32.xlu0 %v1265, 48
      %v1332 = vpop.permute.xlu0 %1331
      %1333 = vrot.lane.b32.xlu0 %v1266, 48
      %v1334 = vpop.permute.xlu0 %1333
      %1335 = vrot.lane.b32.xlu0 %v1267, 48
      %v1336 = vpop.permute.xlu0 %1335
      %1337 = vrot.lane.b32.xlu0 %v1268, 48
      %v1338 = vpop.permute.xlu0 %1337
      %1339 = vrot.lane.b32.xlu0 %v1269, 48
      %v1340 = vpop.permute.xlu0 %1339
      %1341 = vrot.lane.b32.xlu0 %v1270, 48
      %v1342 = vpop.permute.xlu0 %1341
      %1343 = vrot.lane.b32.xlu0 %v1271, 48
      %v1344 = vpop.permute.xlu0 %1343
      %1345 = vrot.lane.b32.xlu0 %v1272, 48
      %v1346 = vpop.permute.xlu0 %1345
      %1347 = vrot.lane.b32.xlu0 %v1273, 48
      %v1348 = vpop.permute.xlu0 %1347
      %1349 = vrot.lane.b32.xlu0 %v1274, 48
      %v1350 = vpop.permute.xlu0 %1349
      %1351 = vrot.lane.b32.xlu0 %v1275, 48
      %v1352 = vpop.permute.xlu0 %1351
      %1353 = vrot.lane.b32.xlu0 %v1276, 48
      %v1354 = vpop.permute.xlu0 %1353
      %1355 = vrot.lane.b32.xlu0 %v1277, 48
      %v1356 = vpop.permute.xlu0 %1355
      %1357 = vrot.lane.b32.xlu0 %v1278, 48
      %v1358 = vpop.permute.xlu0 %1357
      %1359 = vrot.lane.b32.xlu0 %v1279, 48
      %v1360 = vpop.permute.xlu0 %1359
      %1361 = vrot.lane.b32.xlu0 %v1280, 48
      %v1362 = vpop.permute.xlu0 %1361
      %1363 = vrot.lane.b32.xlu0 %v1281, 48
      %v1364 = vpop.permute.xlu0 %1363
      %1365 = vrot.lane.b32.xlu0 %v1282, 48
      %v1366 = vpop.permute.xlu0 %1365
      %1367 = vrot.lane.b32.xlu0 %v1283, 48
      %v1368 = vpop.permute.xlu0 %1367
      %1369 = vrot.lane.b32.xlu0 %v1284, 48
      %v1370 = vpop.permute.xlu0 %1369
      %1371 = vrot.lane.b32.xlu0 %v1285, 48
      %v1372 = vpop.permute.xlu0 %1371
      %1373 = vrot.lane.b32.xlu0 %v1286, 48
      %v1374 = vpop.permute.xlu0 %1373
      %1375 = vrot.lane.b32.xlu0 %v1287, 48
      %v1376 = vpop.permute.xlu0 %1375
      %1377 = vrot.lane.b32.xlu0 %v1288, 48
      %v1378 = vpop.permute.xlu0 %1377
      %1379 = vrot.lane.b32.xlu0 %v1289, 48
      %v1380 = vpop.permute.xlu0 %1379
      %1381 = vrot.lane.b32.xlu0 %v1290, 48
      %v1382 = vpop.permute.xlu0 %1381
      %1383 = vrot.lane.b32.xlu0 %v1291, 48
      %v1384 = vpop.permute.xlu0 %1383
      %1385 = vrot.lane.b32.xlu0 %v1292, 48
      %v1386 = vpop.permute.xlu0 %1385
      %1387 = vrot.lane.b32.xlu0 %v1293, 48
      %v1388 = vpop.permute.xlu0 %1387
      %1389 = vrot.lane.b32.xlu0 %v1294, 48
      %v1390 = vpop.permute.xlu0 %1389
      %vm1423 = vcmask 458112
      %1424 = vst.msk [vmem:[#allocation2] sm:$0xff] %vm1423, %v1328
      %1425 = vst.msk [vmem:[#allocation2 + $0x18] sm:$0xff] %vm1423, %v1330
      %1426 = vst.msk [vmem:[#allocation2 + $0x30] sm:$0xff] %vm1423, %v1332
      %1427 = vst.msk [vmem:[#allocation2 + $0x48] sm:$0xff] %vm1423, %v1334
      %1428 = vst.msk [vmem:[#allocation2 + $0x60] sm:$0xff] %vm1423, %v1336
      %1429 = vst.msk [vmem:[#allocation2 + $0x78] sm:$0xff] %vm1423, %v1338
      %1430 = vst.msk [vmem:[#allocation2 + $0x90] sm:$0xff] %vm1423, %v1340
      %1431 = vst.msk [vmem:[#allocation2 + $0xa8] sm:$0xff] %vm1423, %v1342
      %1432 = vst.msk [vmem:[#allocation2 + $0xc0] sm:$0xff] %vm1423, %v1344
      %1433 = vst.msk [vmem:[#allocation2 + $0xd8] sm:$0xff] %vm1423, %v1346
      %1434 = vst.msk [vmem:[#allocation2 + $0xf0] sm:$0xff] %vm1423, %v1348
      %1435 = vst.msk [vmem:[#allocation2 + $0x108] sm:$0xff] %vm1423, %v1350
      %1436 = vst.msk [vmem:[#allocation2 + $0x120] sm:$0xff] %vm1423, %v1352
      %1437 = vst.msk [vmem:[#allocation2 + $0x138] sm:$0xff] %vm1423, %v1354
      %1438 = vst.msk [vmem:[#allocation2 + $0x150] sm:$0xff] %vm1423, %v1356
      %1439 = vst.msk [vmem:[#allocation2 + $0x168] sm:$0xff] %vm1423, %v1358
      %1440 = vst.msk [vmem:[#allocation2 + $0x180] sm:$0xff] %vm1423, %v1360
      %1441 = vst.msk [vmem:[#allocation2 + $0x198] sm:$0xff] %vm1423, %v1362
      %1442 = vst.msk [vmem:[#allocation2 + $0x1b0] sm:$0xff] %vm1423, %v1364
      %1443 = vst.msk [vmem:[#allocation2 + $0x1c8] sm:$0xff] %vm1423, %v1366
      %1444 = vst.msk [vmem:[#allocation2 + $0x1e0] sm:$0xff] %vm1423, %v1368
      %1445 = vst.msk [vmem:[#allocation2 + $0x1f8] sm:$0xff] %vm1423, %v1370
      %1446 = vst.msk [vmem:[#allocation2 + $0x210] sm:$0xff] %vm1423, %v1372
      %1447 = vst.msk [vmem:[#allocation2 + $0x228] sm:$0xff] %vm1423, %v1374
      %1448 = vst.msk [vmem:[#allocation2 + $0x240] sm:$0xff] %vm1423, %v1376
      %1449 = vst.msk [vmem:[#allocation2 + $0x258] sm:$0xff] %vm1423, %v1378
      %1450 = vst.msk [vmem:[#allocation2 + $0x270] sm:$0xff] %vm1423, %v1380
      %1451 = vst.msk [vmem:[#allocation2 + $0x288] sm:$0xff] %vm1423, %v1382
      %1452 = vst.msk [vmem:[#allocation2 + $0x2a0] sm:$0xff] %vm1423, %v1384
      %1453 = vst.msk [vmem:[#allocation2 + $0x2b8] sm:$0xff] %vm1423, %v1386
      %1454 = vst.msk [vmem:[#allocation2 + $0x2d0] sm:$0xff] %vm1423, %v1388
      %1455 = vst.msk [vmem:[#allocation2 + $0x2e8] sm:$0xff] %vm1423, %v1390
      %v1456 = vld [vmem:[%s1069 + $0x2] sm:$0xff]
      %v1457 = vld [vmem:[%s1069 + $0x12] sm:$0xff]
      %v1458 = vld [vmem:[%s1069 + $0x22] sm:$0xff]
      %v1459 = vld [vmem:[%s1069 + $0x32] sm:$0xff]
      %v1460 = vld [vmem:[%s1069 + $0xa2] sm:$0xff]
      %v1461 = vld [vmem:[%s1069 + $0xb2] sm:$0xff]
      %v1462 = vld [vmem:[%s1069 + $0xc2] sm:$0xff]
      %v1463 = vld [vmem:[%s1069 + $0xd2] sm:$0xff]
      %v1464 = vld [vmem:[%s1069 + $0x142] sm:$0xff]
      %v1465 = vld [vmem:[%s1069 + $0x152] sm:$0xff]
      %v1466 = vld [vmem:[%s1069 + $0x162] sm:$0xff]
      %v1467 = vld [vmem:[%s1069 + $0x172] sm:$0xff]
      %v1468 = vld [vmem:[%s1069 + $0x1e2] sm:$0xff]
      %v1469 = vld [vmem:[%s1069 + $0x1f2] sm:$0xff]
      %v1470 = vld [vmem:[%s1069 + $0x202] sm:$0xff]
      %v1471 = vld [vmem:[%s1069 + $0x212] sm:$0xff]
      %v1472 = vld [vmem:[%s1069 + $0x282] sm:$0xff]
      %v1473 = vld [vmem:[%s1069 + $0x292] sm:$0xff]
      %v1474 = vld [vmem:[%s1069 + $0x2a2] sm:$0xff]
      %v1475 = vld [vmem:[%s1069 + $0x2b2] sm:$0xff]
      %v1476 = vld [vmem:[%s1069 + $0x322] sm:$0xff]
      %v1477 = vld [vmem:[%s1069 + $0x332] sm:$0xff]
      %v1478 = vld [vmem:[%s1069 + $0x342] sm:$0xff]
      %v1479 = vld [vmem:[%s1069 + $0x352] sm:$0xff]
      %v1480 = vld [vmem:[%s1069 + $0x3c2] sm:$0xff]
      %v1481 = vld [vmem:[%s1069 + $0x3d2] sm:$0xff]
      %v1482 = vld [vmem:[%s1069 + $0x3e2] sm:$0xff]
      %v1483 = vld [vmem:[%s1069 + $0x3f2] sm:$0xff]
      %v1484 = vld [vmem:[%s1069 + $0x462] sm:$0xff]
      %v1485 = vld [vmem:[%s1069 + $0x472] sm:$0xff]
      %v1486 = vld [vmem:[%s1069 + $0x482] sm:$0xff]
      %v1487 = vld [vmem:[%s1069 + $0x492] sm:$0xff]
      %1520 = vrot.lane.b32.xlu0 %v1456, 56
      %v1521 = vpop.permute.xlu0 %1520
      %1522 = vrot.lane.b32.xlu0 %v1457, 56
      %v1523 = vpop.permute.xlu0 %1522
      %1524 = vrot.lane.b32.xlu0 %v1458, 56
      %v1525 = vpop.permute.xlu0 %1524
      %1526 = vrot.lane.b32.xlu0 %v1459, 56
      %v1527 = vpop.permute.xlu0 %1526
      %1528 = vrot.lane.b32.xlu0 %v1460, 56
      %v1529 = vpop.permute.xlu0 %1528
      %1530 = vrot.lane.b32.xlu0 %v1461, 56
      %v1531 = vpop.permute.xlu0 %1530
      %1532 = vrot.lane.b32.xlu0 %v1462, 56
      %v1533 = vpop.permute.xlu0 %1532
      %1534 = vrot.lane.b32.xlu0 %v1463, 56
      %v1535 = vpop.permute.xlu0 %1534
      %1536 = vrot.lane.b32.xlu0 %v1464, 56
      %v1537 = vpop.permute.xlu0 %1536
      %1538 = vrot.lane.b32.xlu0 %v1465, 56
      %v1539 = vpop.permute.xlu0 %1538
      %1540 = vrot.lane.b32.xlu0 %v1466, 56
      %v1541 = vpop.permute.xlu0 %1540
      %1542 = vrot.lane.b32.xlu0 %v1467, 56
      %v1543 = vpop.permute.xlu0 %1542
      %1544 = vrot.lane.b32.xlu0 %v1468, 56
      %v1545 = vpop.permute.xlu0 %1544
      %1546 = vrot.lane.b32.xlu0 %v1469, 56
      %v1547 = vpop.permute.xlu0 %1546
      %1548 = vrot.lane.b32.xlu0 %v1470, 56
      %v1549 = vpop.permute.xlu0 %1548
      %1550 = vrot.lane.b32.xlu0 %v1471, 56
      %v1551 = vpop.permute.xlu0 %1550
      %1552 = vrot.lane.b32.xlu0 %v1472, 56
      %v1553 = vpop.permute.xlu0 %1552
      %1554 = vrot.lane.b32.xlu0 %v1473, 56
      %v1555 = vpop.permute.xlu0 %1554
      %1556 = vrot.lane.b32.xlu0 %v1474, 56
      %v1557 = vpop.permute.xlu0 %1556
      %1558 = vrot.lane.b32.xlu0 %v1475, 56
      %v1559 = vpop.permute.xlu0 %1558
      %1560 = vrot.lane.b32.xlu0 %v1476, 56
      %v1561 = vpop.permute.xlu0 %1560
      %1562 = vrot.lane.b32.xlu0 %v1477, 56
      %v1563 = vpop.permute.xlu0 %1562
      %1564 = vrot.lane.b32.xlu0 %v1478, 56
      %v1565 = vpop.permute.xlu0 %1564
      %1566 = vrot.lane.b32.xlu0 %v1479, 56
      %v1567 = vpop.permute.xlu0 %1566
      %1568 = vrot.lane.b32.xlu0 %v1480, 56
      %v1569 = vpop.permute.xlu0 %1568
      %1570 = vrot.lane.b32.xlu0 %v1481, 56
      %v1571 = vpop.permute.xlu0 %1570
      %1572 = vrot.lane.b32.xlu0 %v1482, 56
      %v1573 = vpop.permute.xlu0 %1572
      %1574 = vrot.lane.b32.xlu0 %v1483, 56
      %v1575 = vpop.permute.xlu0 %1574
      %1576 = vrot.lane.b32.xlu0 %v1484, 56
      %v1577 = vpop.permute.xlu0 %1576
      %1578 = vrot.lane.b32.xlu0 %v1485, 56
      %v1579 = vpop.permute.xlu0 %1578
      %1580 = vrot.lane.b32.xlu0 %v1486, 56
      %v1581 = vpop.permute.xlu0 %1580
      %1582 = vrot.lane.b32.xlu0 %v1487, 56
      %v1583 = vpop.permute.xlu0 %1582
      %vm1616 = vcmask 523712
      %1617 = vst.msk [vmem:[#allocation2] sm:$0xff] %vm1616, %v1521
      %1618 = vst.msk [vmem:[#allocation2 + $0x18] sm:$0xff] %vm1616, %v1523
      %1619 = vst.msk [vmem:[#allocation2 + $0x30] sm:$0xff] %vm1616, %v1525
      %1620 = vst.msk [vmem:[#allocation2 + $0x48] sm:$0xff] %vm1616, %v1527
      %1621 = vst.msk [vmem:[#allocation2 + $0x60] sm:$0xff] %vm1616, %v1529
      %1622 = vst.msk [vmem:[#allocation2 + $0x78] sm:$0xff] %vm1616, %v1531
      %1623 = vst.msk [vmem:[#allocation2 + $0x90] sm:$0xff] %vm1616, %v1533
      %1624 = vst.msk [vmem:[#allocation2 + $0xa8] sm:$0xff] %vm1616, %v1535
      %1625 = vst.msk [vmem:[#allocation2 + $0xc0] sm:$0xff] %vm1616, %v1537
      %1626 = vst.msk [vmem:[#allocation2 + $0xd8] sm:$0xff] %vm1616, %v1539
      %1627 = vst.msk [vmem:[#allocation2 + $0xf0] sm:$0xff] %vm1616, %v1541
      %1628 = vst.msk [vmem:[#allocation2 + $0x108] sm:$0xff] %vm1616, %v1543
      %1629 = vst.msk [vmem:[#allocation2 + $0x120] sm:$0xff] %vm1616, %v1545
      %1630 = vst.msk [vmem:[#allocation2 + $0x138] sm:$0xff] %vm1616, %v1547
      %1631 = vst.msk [vmem:[#allocation2 + $0x150] sm:$0xff] %vm1616, %v1549
      %1632 = vst.msk [vmem:[#allocation2 + $0x168] sm:$0xff] %vm1616, %v1551
      %1633 = vst.msk [vmem:[#allocation2 + $0x180] sm:$0xff] %vm1616, %v1553
      %1634 = vst.msk [vmem:[#allocation2 + $0x198] sm:$0xff] %vm1616, %v1555
      %1635 = vst.msk [vmem:[#allocation2 + $0x1b0] sm:$0xff] %vm1616, %v1557
      %1636 = vst.msk [vmem:[#allocation2 + $0x1c8] sm:$0xff] %vm1616, %v1559
      %1637 = vst.msk [vmem:[#allocation2 + $0x1e0] sm:$0xff] %vm1616, %v1561
      %1638 = vst.msk [vmem:[#allocation2 + $0x1f8] sm:$0xff] %vm1616, %v1563
      %1639 = vst.msk [vmem:[#allocation2 + $0x210] sm:$0xff] %vm1616, %v1565
      %1640 = vst.msk [vmem:[#allocation2 + $0x228] sm:$0xff] %vm1616, %v1567
      %1641 = vst.msk [vmem:[#allocation2 + $0x240] sm:$0xff] %vm1616, %v1569
      %1642 = vst.msk [vmem:[#allocation2 + $0x258] sm:$0xff] %vm1616, %v1571
      %1643 = vst.msk [vmem:[#allocation2 + $0x270] sm:$0xff] %vm1616, %v1573
      %1644 = vst.msk [vmem:[#allocation2 + $0x288] sm:$0xff] %vm1616, %v1575
      %1645 = vst.msk [vmem:[#allocation2 + $0x2a0] sm:$0xff] %vm1616, %v1577
      %1646 = vst.msk [vmem:[#allocation2 + $0x2b8] sm:$0xff] %vm1616, %v1579
      %1647 = vst.msk [vmem:[#allocation2 + $0x2d0] sm:$0xff] %vm1616, %v1581
      %1648 = vst.msk [vmem:[#allocation2 + $0x2e8] sm:$0xff] %vm1616, %v1583
      %v1649 = vld [vmem:[%s1069 + $0x3] sm:$0xff]
      %v1650 = vld [vmem:[%s1069 + $0x13] sm:$0xff]
      %v1651 = vld [vmem:[%s1069 + $0x23] sm:$0xff]
      %v1652 = vld [vmem:[%s1069 + $0x33] sm:$0xff]
      %v1653 = vld [vmem:[%s1069 + $0xa3] sm:$0xff]
      %v1654 = vld [vmem:[%s1069 + $0xb3] sm:$0xff]
      %v1655 = vld [vmem:[%s1069 + $0xc3] sm:$0xff]
      %v1656 = vld [vmem:[%s1069 + $0xd3] sm:$0xff]
      %v1657 = vld [vmem:[%s1069 + $0x143] sm:$0xff]
      %v1658 = vld [vmem:[%s1069 + $0x153] sm:$0xff]
      %v1659 = vld [vmem:[%s1069 + $0x163] sm:$0xff]
      %v1660 = vld [vmem:[%s1069 + $0x173] sm:$0xff]
      %v1661 = vld [vmem:[%s1069 + $0x1e3] sm:$0xff]
      %v1662 = vld [vmem:[%s1069 + $0x1f3] sm:$0xff]
      %v1663 = vld [vmem:[%s1069 + $0x203] sm:$0xff]
      %v1664 = vld [vmem:[%s1069 + $0x213] sm:$0xff]
      %v1665 = vld [vmem:[%s1069 + $0x283] sm:$0xff]
      %v1666 = vld [vmem:[%s1069 + $0x293] sm:$0xff]
      %v1667 = vld [vmem:[%s1069 + $0x2a3] sm:$0xff]
      %v1668 = vld [vmem:[%s1069 + $0x2b3] sm:$0xff]
      %v1669 = vld [vmem:[%s1069 + $0x323] sm:$0xff]
      %v1670 = vld [vmem:[%s1069 + $0x333] sm:$0xff]
      %v1671 = vld [vmem:[%s1069 + $0x343] sm:$0xff]
      %v1672 = vld [vmem:[%s1069 + $0x353] sm:$0xff]
      %v1673 = vld [vmem:[%s1069 + $0x3c3] sm:$0xff]
      %v1674 = vld [vmem:[%s1069 + $0x3d3] sm:$0xff]
      %v1675 = vld [vmem:[%s1069 + $0x3e3] sm:$0xff]
      %v1676 = vld [vmem:[%s1069 + $0x3f3] sm:$0xff]
      %v1677 = vld [vmem:[%s1069 + $0x463] sm:$0xff]
      %v1678 = vld [vmem:[%s1069 + $0x473] sm:$0xff]
      %v1679 = vld [vmem:[%s1069 + $0x483] sm:$0xff]
      %v1680 = vld [vmem:[%s1069 + $0x493] sm:$0xff]
      %1713 = vrot.lane.b32.xlu0 %v1649, 64
      %v1714 = vpop.permute.xlu0 %1713
      %1715 = vrot.lane.b32.xlu0 %v1650, 64
      %v1716 = vpop.permute.xlu0 %1715
      %1717 = vrot.lane.b32.xlu0 %v1651, 64
      %v1718 = vpop.permute.xlu0 %1717
      %1719 = vrot.lane.b32.xlu0 %v1652, 64
      %v1720 = vpop.permute.xlu0 %1719
      %1721 = vrot.lane.b32.xlu0 %v1653, 64
      %v1722 = vpop.permute.xlu0 %1721
      %1723 = vrot.lane.b32.xlu0 %v1654, 64
      %v1724 = vpop.permute.xlu0 %1723
      %1725 = vrot.lane.b32.xlu0 %v1655, 64
      %v1726 = vpop.permute.xlu0 %1725
      %1727 = vrot.lane.b32.xlu0 %v1656, 64
      %v1728 = vpop.permute.xlu0 %1727
      %1729 = vrot.lane.b32.xlu0 %v1657, 64
      %v1730 = vpop.permute.xlu0 %1729
      %1731 = vrot.lane.b32.xlu0 %v1658, 64
      %v1732 = vpop.permute.xlu0 %1731
      %1733 = vrot.lane.b32.xlu0 %v1659, 64
      %v1734 = vpop.permute.xlu0 %1733
      %1735 = vrot.lane.b32.xlu0 %v1660, 64
      %v1736 = vpop.permute.xlu0 %1735
      %1737 = vrot.lane.b32.xlu0 %v1661, 64
      %v1738 = vpop.permute.xlu0 %1737
      %1739 = vrot.lane.b32.xlu0 %v1662, 64
      %v1740 = vpop.permute.xlu0 %1739
      %1741 = vrot.lane.b32.xlu0 %v1663, 64
      %v1742 = vpop.permute.xlu0 %1741
      %1743 = vrot.lane.b32.xlu0 %v1664, 64
      %v1744 = vpop.permute.xlu0 %1743
      %1745 = vrot.lane.b32.xlu0 %v1665, 64
      %v1746 = vpop.permute.xlu0 %1745
      %1747 = vrot.lane.b32.xlu0 %v1666, 64
      %v1748 = vpop.permute.xlu0 %1747
      %1749 = vrot.lane.b32.xlu0 %v1667, 64
      %v1750 = vpop.permute.xlu0 %1749
      %1751 = vrot.lane.b32.xlu0 %v1668, 64
      %v1752 = vpop.permute.xlu0 %1751
      %1753 = vrot.lane.b32.xlu0 %v1669, 64
      %v1754 = vpop.permute.xlu0 %1753
      %1755 = vrot.lane.b32.xlu0 %v1670, 64
      %v1756 = vpop.permute.xlu0 %1755
      %1757 = vrot.lane.b32.xlu0 %v1671, 64
      %v1758 = vpop.permute.xlu0 %1757
      %1759 = vrot.lane.b32.xlu0 %v1672, 64
      %v1760 = vpop.permute.xlu0 %1759
      %1761 = vrot.lane.b32.xlu0 %v1673, 64
      %v1762 = vpop.permute.xlu0 %1761
      %1763 = vrot.lane.b32.xlu0 %v1674, 64
      %v1764 = vpop.permute.xlu0 %1763
      %1765 = vrot.lane.b32.xlu0 %v1675, 64
      %v1766 = vpop.permute.xlu0 %1765
      %1767 = vrot.lane.b32.xlu0 %v1676, 64
      %v1768 = vpop.permute.xlu0 %1767
      %1769 = vrot.lane.b32.xlu0 %v1677, 64
      %v1770 = vpop.permute.xlu0 %1769
      %1771 = vrot.lane.b32.xlu0 %v1678, 64
      %v1772 = vpop.permute.xlu0 %1771
      %1773 = vrot.lane.b32.xlu0 %v1679, 64
      %v1774 = vpop.permute.xlu0 %1773
      %1775 = vrot.lane.b32.xlu0 %v1680, 64
      %v1776 = vpop.permute.xlu0 %1775
      %vm1809 = vcmask 589312
      %1810 = vst.msk [vmem:[#allocation2] sm:$0xff] %vm1809, %v1714
      %1811 = vst.msk [vmem:[#allocation2 + $0x18] sm:$0xff] %vm1809, %v1716
      %1812 = vst.msk [vmem:[#allocation2 + $0x30] sm:$0xff] %vm1809, %v1718
      %1813 = vst.msk [vmem:[#allocation2 + $0x48] sm:$0xff] %vm1809, %v1720
      %1814 = vst.msk [vmem:[#allocation2 + $0x60] sm:$0xff] %vm1809, %v1722
      %1815 = vst.msk [vmem:[#allocation2 + $0x78] sm:$0xff] %vm1809, %v1724
      %1816 = vst.msk [vmem:[#allocation2 + $0x90] sm:$0xff] %vm1809, %v1726
      %1817 = vst.msk [vmem:[#allocation2 + $0xa8] sm:$0xff] %vm1809, %v1728
      %1818 = vst.msk [vmem:[#allocation2 + $0xc0] sm:$0xff] %vm1809, %v1730
      %1819 = vst.msk [vmem:[#allocation2 + $0xd8] sm:$0xff] %vm1809, %v1732
      %1820 = vst.msk [vmem:[#allocation2 + $0xf0] sm:$0xff] %vm1809, %v1734
      %1821 = vst.msk [vmem:[#allocation2 + $0x108] sm:$0xff] %vm1809, %v1736
      %1822 = vst.msk [vmem:[#allocation2 + $0x120] sm:$0xff] %vm1809, %v1738
      %1823 = vst.msk [vmem:[#allocation2 + $0x138] sm:$0xff] %vm1809, %v1740
      %1824 = vst.msk [vmem:[#allocation2 + $0x150] sm:$0xff] %vm1809, %v1742
      %1825 = vst.msk [vmem:[#allocation2 + $0x168] sm:$0xff] %vm1809, %v1744
      %1826 = vst.msk [vmem:[#allocation2 + $0x180] sm:$0xff] %vm1809, %v1746
      %1827 = vst.msk [vmem:[#allocation2 + $0x198] sm:$0xff] %vm1809, %v1748
      %1828 = vst.msk [vmem:[#allocation2 + $0x1b0] sm:$0xff] %vm1809, %v1750
      %1829 = vst.msk [vmem:[#allocation2 + $0x1c8] sm:$0xff] %vm1809, %v1752
      %1830 = vst.msk [vmem:[#allocation2 + $0x1e0] sm:$0xff] %vm1809, %v1754
      %1831 = vst.msk [vmem:[#allocation2 + $0x1f8] sm:$0xff] %vm1809, %v1756
      %1832 = vst.msk [vmem:[#allocation2 + $0x210] sm:$0xff] %vm1809, %v1758
      %1833 = vst.msk [vmem:[#allocation2 + $0x228] sm:$0xff] %vm1809, %v1760
      %1834 = vst.msk [vmem:[#allocation2 + $0x240] sm:$0xff] %vm1809, %v1762
      %1835 = vst.msk [vmem:[#allocation2 + $0x258] sm:$0xff] %vm1809, %v1764
      %1836 = vst.msk [vmem:[#allocation2 + $0x270] sm:$0xff] %vm1809, %v1766
      %1837 = vst.msk [vmem:[#allocation2 + $0x288] sm:$0xff] %vm1809, %v1768
      %1838 = vst.msk [vmem:[#allocation2 + $0x2a0] sm:$0xff] %vm1809, %v1770
      %1839 = vst.msk [vmem:[#allocation2 + $0x2b8] sm:$0xff] %vm1809, %v1772
      %1840 = vst.msk [vmem:[#allocation2 + $0x2d0] sm:$0xff] %vm1809, %v1774
      %1841 = vst.msk [vmem:[#allocation2 + $0x2e8] sm:$0xff] %vm1809, %v1776
      %v1842 = vld [vmem:[%s1069 + $0x4] sm:$0xff]
      %v1843 = vld [vmem:[%s1069 + $0x14] sm:$0xff]
      %v1844 = vld [vmem:[%s1069 + $0x24] sm:$0xff]
      %v1845 = vld [vmem:[%s1069 + $0x34] sm:$0xff]
      %v1846 = vld [vmem:[%s1069 + $0xa4] sm:$0xff]
      %v1847 = vld [vmem:[%s1069 + $0xb4] sm:$0xff]
      %v1848 = vld [vmem:[%s1069 + $0xc4] sm:$0xff]
      %v1849 = vld [vmem:[%s1069 + $0xd4] sm:$0xff]
      %v1850 = vld [vmem:[%s1069 + $0x144] sm:$0xff]
      %v1851 = vld [vmem:[%s1069 + $0x154] sm:$0xff]
      %v1852 = vld [vmem:[%s1069 + $0x164] sm:$0xff]
      %v1853 = vld [vmem:[%s1069 + $0x174] sm:$0xff]
      %v1854 = vld [vmem:[%s1069 + $0x1e4] sm:$0xff]
      %v1855 = vld [vmem:[%s1069 + $0x1f4] sm:$0xff]
      %v1856 = vld [vmem:[%s1069 + $0x204] sm:$0xff]
      %v1857 = vld [vmem:[%s1069 + $0x214] sm:$0xff]
      %v1858 = vld [vmem:[%s1069 + $0x284] sm:$0xff]
      %v1859 = vld [vmem:[%s1069 + $0x294] sm:$0xff]
      %v1860 = vld [vmem:[%s1069 + $0x2a4] sm:$0xff]
      %v1861 = vld [vmem:[%s1069 + $0x2b4] sm:$0xff]
      %v1862 = vld [vmem:[%s1069 + $0x324] sm:$0xff]
      %v1863 = vld [vmem:[%s1069 + $0x334] sm:$0xff]
      %v1864 = vld [vmem:[%s1069 + $0x344] sm:$0xff]
      %v1865 = vld [vmem:[%s1069 + $0x354] sm:$0xff]
      %v1866 = vld [vmem:[%s1069 + $0x3c4] sm:$0xff]
      %v1867 = vld [vmem:[%s1069 + $0x3d4] sm:$0xff]
      %v1868 = vld [vmem:[%s1069 + $0x3e4] sm:$0xff]
      %v1869 = vld [vmem:[%s1069 + $0x3f4] sm:$0xff]
      %v1870 = vld [vmem:[%s1069 + $0x464] sm:$0xff]
      %v1871 = vld [vmem:[%s1069 + $0x474] sm:$0xff]
      %v1872 = vld [vmem:[%s1069 + $0x484] sm:$0xff]
      %v1873 = vld [vmem:[%s1069 + $0x494] sm:$0xff]
      %1906 = vrot.lane.b32.xlu0 %v1842, 72
      %v1907 = vpop.permute.xlu0 %1906
      %1908 = vrot.lane.b32.xlu0 %v1843, 72
      %v1909 = vpop.permute.xlu0 %1908
      %1910 = vrot.lane.b32.xlu0 %v1844, 72
      %v1911 = vpop.permute.xlu0 %1910
      %1912 = vrot.lane.b32.xlu0 %v1845, 72
      %v1913 = vpop.permute.xlu0 %1912
      %1914 = vrot.lane.b32.xlu0 %v1846, 72
      %v1915 = vpop.permute.xlu0 %1914
      %1916 = vrot.lane.b32.xlu0 %v1847, 72
      %v1917 = vpop.permute.xlu0 %1916
      %1918 = vrot.lane.b32.xlu0 %v1848, 72
      %v1919 = vpop.permute.xlu0 %1918
      %1920 = vrot.lane.b32.xlu0 %v1849, 72
      %v1921 = vpop.permute.xlu0 %1920
      %1922 = vrot.lane.b32.xlu0 %v1850, 72
      %v1923 = vpop.permute.xlu0 %1922
      %1924 = vrot.lane.b32.xlu0 %v1851, 72
      %v1925 = vpop.permute.xlu0 %1924
      %1926 = vrot.lane.b32.xlu0 %v1852, 72
      %v1927 = vpop.permute.xlu0 %1926
      %1928 = vrot.lane.b32.xlu0 %v1853, 72
      %v1929 = vpop.permute.xlu0 %1928
      %1930 = vrot.lane.b32.xlu0 %v1854, 72
      %v1931 = vpop.permute.xlu0 %1930
      %1932 = vrot.lane.b32.xlu0 %v1855, 72
      %v1933 = vpop.permute.xlu0 %1932
      %1934 = vrot.lane.b32.xlu0 %v1856, 72
      %v1935 = vpop.permute.xlu0 %1934
      %1936 = vrot.lane.b32.xlu0 %v1857, 72
      %v1937 = vpop.permute.xlu0 %1936
      %1938 = vrot.lane.b32.xlu0 %v1858, 72
      %v1939 = vpop.permute.xlu0 %1938
      %1940 = vrot.lane.b32.xlu0 %v1859, 72
      %v1941 = vpop.permute.xlu0 %1940
      %1942 = vrot.lane.b32.xlu0 %v1860, 72
      %v1943 = vpop.permute.xlu0 %1942
      %1944 = vrot.lane.b32.xlu0 %v1861, 72
      %v1945 = vpop.permute.xlu0 %1944
      %1946 = vrot.lane.b32.xlu0 %v1862, 72
      %v1947 = vpop.permute.xlu0 %1946
      %1948 = vrot.lane.b32.xlu0 %v1863, 72
      %v1949 = vpop.permute.xlu0 %1948
      %1950 = vrot.lane.b32.xlu0 %v1864, 72
      %v1951 = vpop.permute.xlu0 %1950
      %1952 = vrot.lane.b32.xlu0 %v1865, 72
      %v1953 = vpop.permute.xlu0 %1952
      %1954 = vrot.lane.b32.xlu0 %v1866, 72
      %v1955 = vpop.permute.xlu0 %1954
      %1956 = vrot.lane.b32.xlu0 %v1867, 72
      %v1957 = vpop.permute.xlu0 %1956
      %1958 = vrot.lane.b32.xlu0 %v1868, 72
      %v1959 = vpop.permute.xlu0 %1958
      %1960 = vrot.lane.b32.xlu0 %v1869, 72
      %v1961 = vpop.permute.xlu0 %1960
      %1962 = vrot.lane.b32.xlu0 %v1870, 72
      %v1963 = vpop.permute.xlu0 %1962
      %1964 = vrot.lane.b32.xlu0 %v1871, 72
      %v1965 = vpop.permute.xlu0 %1964
      %1966 = vrot.lane.b32.xlu0 %v1872, 72
      %v1967 = vpop.permute.xlu0 %1966
      %1968 = vrot.lane.b32.xlu0 %v1873, 72
      %v1969 = vpop.permute.xlu0 %1968
      %vm2002 = vcmask 654912
      %2003 = vst.msk [vmem:[#allocation2] sm:$0xff] %vm2002, %v1907
      %2004 = vst.msk [vmem:[#allocation2 + $0x18] sm:$0xff] %vm2002, %v1909
      %2005 = vst.msk [vmem:[#allocation2 + $0x30] sm:$0xff] %vm2002, %v1911
      %2006 = vst.msk [vmem:[#allocation2 + $0x48] sm:$0xff] %vm2002, %v1913
      %2007 = vst.msk [vmem:[#allocation2 + $0x60] sm:$0xff] %vm2002, %v1915
      %2008 = vst.msk [vmem:[#allocation2 + $0x78] sm:$0xff] %vm2002, %v1917
      %2009 = vst.msk [vmem:[#allocation2 + $0x90] sm:$0xff] %vm2002, %v1919
      %2010 = vst.msk [vmem:[#allocation2 + $0xa8] sm:$0xff] %vm2002, %v1921
      %2011 = vst.msk [vmem:[#allocation2 + $0xc0] sm:$0xff] %vm2002, %v1923
      %2012 = vst.msk [vmem:[#allocation2 + $0xd8] sm:$0xff] %vm2002, %v1925
      %2013 = vst.msk [vmem:[#allocation2 + $0xf0] sm:$0xff] %vm2002, %v1927
      %2014 = vst.msk [vmem:[#allocation2 + $0x108] sm:$0xff] %vm2002, %v1929
      %2015 = vst.msk [vmem:[#allocation2 + $0x120] sm:$0xff] %vm2002, %v1931
      %2016 = vst.msk [vmem:[#allocation2 + $0x138] sm:$0xff] %vm2002, %v1933
      %2017 = vst.msk [vmem:[#allocation2 + $0x150] sm:$0xff] %vm2002, %v1935
      %2018 = vst.msk [vmem:[#allocation2 + $0x168] sm:$0xff] %vm2002, %v1937
      %2019 = vst.msk [vmem:[#allocation2 + $0x180] sm:$0xff] %vm2002, %v1939
      %2020 = vst.msk [vmem:[#allocation2 + $0x198] sm:$0xff] %vm2002, %v1941
      %2021 = vst.msk [vmem:[#allocation2 + $0x1b0] sm:$0xff] %vm2002, %v1943
      %2022 = vst.msk [vmem:[#allocation2 + $0x1c8] sm:$0xff] %vm2002, %v1945
      %2023 = vst.msk [vmem:[#allocation2 + $0x1e0] sm:$0xff] %vm2002, %v1947
      %2024 = vst.msk [vmem:[#allocation2 + $0x1f8] sm:$0xff] %vm2002, %v1949
      %2025 = vst.msk [vmem:[#allocation2 + $0x210] sm:$0xff] %vm2002, %v1951
      %2026 = vst.msk [vmem:[#allocation2 + $0x228] sm:$0xff] %vm2002, %v1953
      %2027 = vst.msk [vmem:[#allocation2 + $0x240] sm:$0xff] %vm2002, %v1955
      %2028 = vst.msk [vmem:[#allocation2 + $0x258] sm:$0xff] %vm2002, %v1957
      %2029 = vst.msk [vmem:[#allocation2 + $0x270] sm:$0xff] %vm2002, %v1959
      %2030 = vst.msk [vmem:[#allocation2 + $0x288] sm:$0xff] %vm2002, %v1961
      %2031 = vst.msk [vmem:[#allocation2 + $0x2a0] sm:$0xff] %vm2002, %v1963
      %2032 = vst.msk [vmem:[#allocation2 + $0x2b8] sm:$0xff] %vm2002, %v1965
      %2033 = vst.msk [vmem:[#allocation2 + $0x2d0] sm:$0xff] %vm2002, %v1967
      %2034 = vst.msk [vmem:[#allocation2 + $0x2e8] sm:$0xff] %vm2002, %v1969
      %s2035 = sadd.s32 64, %s228
      %s2036 = scalar_lea.vmem %s183, %s2035
      %v2037 = vld [vmem:[%s2036] sm:$0xff]
      %v2038 = vld [vmem:[%s2036 + $0x10] sm:$0xff]
      %v2039 = vld [vmem:[%s2036 + $0x20] sm:$0xff]
      %v2040 = vld [vmem:[%s2036 + $0x30] sm:$0xff]
      %v2041 = vld [vmem:[%s2036 + $0xa0] sm:$0xff]
      %v2042 = vld [vmem:[%s2036 + $0xb0] sm:$0xff]
      %v2043 = vld [vmem:[%s2036 + $0xc0] sm:$0xff]
      %v2044 = vld [vmem:[%s2036 + $0xd0] sm:$0xff]
      %v2045 = vld [vmem:[%s2036 + $0x140] sm:$0xff]
      %v2046 = vld [vmem:[%s2036 + $0x150] sm:$0xff]
      %v2047 = vld [vmem:[%s2036 + $0x160] sm:$0xff]
      %v2048 = vld [vmem:[%s2036 + $0x170] sm:$0xff]
      %v2049 = vld [vmem:[%s2036 + $0x1e0] sm:$0xff]
      %v2050 = vld [vmem:[%s2036 + $0x1f0] sm:$0xff]
      %v2051 = vld [vmem:[%s2036 + $0x200] sm:$0xff]
      %v2052 = vld [vmem:[%s2036 + $0x210] sm:$0xff]
      %v2053 = vld [vmem:[%s2036 + $0x280] sm:$0xff]
      %v2054 = vld [vmem:[%s2036 + $0x290] sm:$0xff]
      %v2055 = vld [vmem:[%s2036 + $0x2a0] sm:$0xff]
      %v2056 = vld [vmem:[%s2036 + $0x2b0] sm:$0xff]
      %v2057 = vld [vmem:[%s2036 + $0x320] sm:$0xff]
      %v2058 = vld [vmem:[%s2036 + $0x330] sm:$0xff]
      %v2059 = vld [vmem:[%s2036 + $0x340] sm:$0xff]
      %v2060 = vld [vmem:[%s2036 + $0x350] sm:$0xff]
      %v2061 = vld [vmem:[%s2036 + $0x3c0] sm:$0xff]
      %v2062 = vld [vmem:[%s2036 + $0x3d0] sm:$0xff]
      %v2063 = vld [vmem:[%s2036 + $0x3e0] sm:$0xff]
      %v2064 = vld [vmem:[%s2036 + $0x3f0] sm:$0xff]
      %v2065 = vld [vmem:[%s2036 + $0x460] sm:$0xff]
      %v2066 = vld [vmem:[%s2036 + $0x470] sm:$0xff]
      %v2067 = vld [vmem:[%s2036 + $0x480] sm:$0xff]
      %v2068 = vld [vmem:[%s2036 + $0x490] sm:$0xff]
      %2101 = vrot.lane.b32.xlu0 %v2037, 80
      %v2102 = vpop.permute.xlu0 %2101
      %2103 = vrot.lane.b32.xlu0 %v2038, 80
      %v2104 = vpop.permute.xlu0 %2103
      %2105 = vrot.lane.b32.xlu0 %v2039, 80
      %v2106 = vpop.permute.xlu0 %2105
      %2107 = vrot.lane.b32.xlu0 %v2040, 80
      %v2108 = vpop.permute.xlu0 %2107
      %2109 = vrot.lane.b32.xlu0 %v2041, 80
      %v2110 = vpop.permute.xlu0 %2109
      %2111 = vrot.lane.b32.xlu0 %v2042, 80
      %v2112 = vpop.permute.xlu0 %2111
      %2113 = vrot.lane.b32.xlu0 %v2043, 80
      %v2114 = vpop.permute.xlu0 %2113
      %2115 = vrot.lane.b32.xlu0 %v2044, 80
      %v2116 = vpop.permute.xlu0 %2115
      %2117 = vrot.lane.b32.xlu0 %v2045, 80
      %v2118 = vpop.permute.xlu0 %2117
      %2119 = vrot.lane.b32.xlu0 %v2046, 80
      %v2120 = vpop.permute.xlu0 %2119
      %2121 = vrot.lane.b32.xlu0 %v2047, 80
      %v2122 = vpop.permute.xlu0 %2121
      %2123 = vrot.lane.b32.xlu0 %v2048, 80
      %v2124 = vpop.permute.xlu0 %2123
      %2125 = vrot.lane.b32.xlu0 %v2049, 80
      %v2126 = vpop.permute.xlu0 %2125
      %2127 = vrot.lane.b32.xlu0 %v2050, 80
      %v2128 = vpop.permute.xlu0 %2127
      %2129 = vrot.lane.b32.xlu0 %v2051, 80
      %v2130 = vpop.permute.xlu0 %2129
      %2131 = vrot.lane.b32.xlu0 %v2052, 80
      %v2132 = vpop.permute.xlu0 %2131
      %2133 = vrot.lane.b32.xlu0 %v2053, 80
      %v2134 = vpop.permute.xlu0 %2133
      %2135 = vrot.lane.b32.xlu0 %v2054, 80
      %v2136 = vpop.permute.xlu0 %2135
      %2137 = vrot.lane.b32.xlu0 %v2055, 80
      %v2138 = vpop.permute.xlu0 %2137
      %2139 = vrot.lane.b32.xlu0 %v2056, 80
      %v2140 = vpop.permute.xlu0 %2139
      %2141 = vrot.lane.b32.xlu0 %v2057, 80
      %v2142 = vpop.permute.xlu0 %2141
      %2143 = vrot.lane.b32.xlu0 %v2058, 80
      %v2144 = vpop.permute.xlu0 %2143
      %2145 = vrot.lane.b32.xlu0 %v2059, 80
      %v2146 = vpop.permute.xlu0 %2145
      %2147 = vrot.lane.b32.xlu0 %v2060, 80
      %v2148 = vpop.permute.xlu0 %2147
      %2149 = vrot.lane.b32.xlu0 %v2061, 80
      %v2150 = vpop.permute.xlu0 %2149
      %2151 = vrot.lane.b32.xlu0 %v2062, 80
      %v2152 = vpop.permute.xlu0 %2151
      %2153 = vrot.lane.b32.xlu0 %v2063, 80
      %v2154 = vpop.permute.xlu0 %2153
      %2155 = vrot.lane.b32.xlu0 %v2064, 80
      %v2156 = vpop.permute.xlu0 %2155
      %2157 = vrot.lane.b32.xlu0 %v2065, 80
      %v2158 = vpop.permute.xlu0 %2157
      %2159 = vrot.lane.b32.xlu0 %v2066, 80
      %v2160 = vpop.permute.xlu0 %2159
      %2161 = vrot.lane.b32.xlu0 %v2067, 80
      %v2162 = vpop.permute.xlu0 %2161
      %2163 = vrot.lane.b32.xlu0 %v2068, 80
      %v2164 = vpop.permute.xlu0 %2163
      %vm2197 = vcmask 720512
      %2198 = vst.msk [vmem:[#allocation2] sm:$0xff] %vm2197, %v2102
      %2199 = vst.msk [vmem:[#allocation2 + $0x18] sm:$0xff] %vm2197, %v2104
      %2200 = vst.msk [vmem:[#allocation2 + $0x30] sm:$0xff] %vm2197, %v2106
      %2201 = vst.msk [vmem:[#allocation2 + $0x48] sm:$0xff] %vm2197, %v2108
      %2202 = vst.msk [vmem:[#allocation2 + $0x60] sm:$0xff] %vm2197, %v2110
      %2203 = vst.msk [vmem:[#allocation2 + $0x78] sm:$0xff] %vm2197, %v2112
      %2204 = vst.msk [vmem:[#allocation2 + $0x90] sm:$0xff] %vm2197, %v2114
      %2205 = vst.msk [vmem:[#allocation2 + $0xa8] sm:$0xff] %vm2197, %v2116
      %2206 = vst.msk [vmem:[#allocation2 + $0xc0] sm:$0xff] %vm2197, %v2118
      %2207 = vst.msk [vmem:[#allocation2 + $0xd8] sm:$0xff] %vm2197, %v2120
      %2208 = vst.msk [vmem:[#allocation2 + $0xf0] sm:$0xff] %vm2197, %v2122
      %2209 = vst.msk [vmem:[#allocation2 + $0x108] sm:$0xff] %vm2197, %v2124
      %2210 = vst.msk [vmem:[#allocation2 + $0x120] sm:$0xff] %vm2197, %v2126
      %2211 = vst.msk [vmem:[#allocation2 + $0x138] sm:$0xff] %vm2197, %v2128
      %2212 = vst.msk [vmem:[#allocation2 + $0x150] sm:$0xff] %vm2197, %v2130
      %2213 = vst.msk [vmem:[#allocation2 + $0x168] sm:$0xff] %vm2197, %v2132
      %2214 = vst.msk [vmem:[#allocation2 + $0x180] sm:$0xff] %vm2197, %v2134
      %2215 = vst.msk [vmem:[#allocation2 + $0x198] sm:$0xff] %vm2197, %v2136
      %2216 = vst.msk [vmem:[#allocation2 + $0x1b0] sm:$0xff] %vm2197, %v2138
      %2217 = vst.msk [vmem:[#allocation2 + $0x1c8] sm:$0xff] %vm2197, %v2140
      %2218 = vst.msk [vmem:[#allocation2 + $0x1e0] sm:$0xff] %vm2197, %v2142
      %2219 = vst.msk [vmem:[#allocation2 + $0x1f8] sm:$0xff] %vm2197, %v2144
      %2220 = vst.msk [vmem:[#allocation2 + $0x210] sm:$0xff] %vm2197, %v2146
      %2221 = vst.msk [vmem:[#allocation2 + $0x228] sm:$0xff] %vm2197, %v2148
      %2222 = vst.msk [vmem:[#allocation2 + $0x240] sm:$0xff] %vm2197, %v2150
      %2223 = vst.msk [vmem:[#allocation2 + $0x258] sm:$0xff] %vm2197, %v2152
      %2224 = vst.msk [vmem:[#allocation2 + $0x270] sm:$0xff] %vm2197, %v2154
      %2225 = vst.msk [vmem:[#allocation2 + $0x288] sm:$0xff] %vm2197, %v2156
      %2226 = vst.msk [vmem:[#allocation2 + $0x2a0] sm:$0xff] %vm2197, %v2158
      %2227 = vst.msk [vmem:[#allocation2 + $0x2b8] sm:$0xff] %vm2197, %v2160
      %2228 = vst.msk [vmem:[#allocation2 + $0x2d0] sm:$0xff] %vm2197, %v2162
      %2229 = vst.msk [vmem:[#allocation2 + $0x2e8] sm:$0xff] %vm2197, %v2164
      %v2230 = vld [vmem:[%s2036 + $0x1] sm:$0xff]
      %v2231 = vld [vmem:[%s2036 + $0x11] sm:$0xff]
      %v2232 = vld [vmem:[%s2036 + $0x21] sm:$0xff]
      %v2233 = vld [vmem:[%s2036 + $0x31] sm:$0xff]
      %v2234 = vld [vmem:[%s2036 + $0xa1] sm:$0xff]
      %v2235 = vld [vmem:[%s2036 + $0xb1] sm:$0xff]
      %v2236 = vld [vmem:[%s2036 + $0xc1] sm:$0xff]
      %v2237 = vld [vmem:[%s2036 + $0xd1] sm:$0xff]
      %v2238 = vld [vmem:[%s2036 + $0x141] sm:$0xff]
      %v2239 = vld [vmem:[%s2036 + $0x151] sm:$0xff]
      %v2240 = vld [vmem:[%s2036 + $0x161] sm:$0xff]
      %v2241 = vld [vmem:[%s2036 + $0x171] sm:$0xff]
      %v2242 = vld [vmem:[%s2036 + $0x1e1] sm:$0xff]
      %v2243 = vld [vmem:[%s2036 + $0x1f1] sm:$0xff]
      %v2244 = vld [vmem:[%s2036 + $0x201] sm:$0xff]
      %v2245 = vld [vmem:[%s2036 + $0x211] sm:$0xff]
      %v2246 = vld [vmem:[%s2036 + $0x281] sm:$0xff]
      %v2247 = vld [vmem:[%s2036 + $0x291] sm:$0xff]
      %v2248 = vld [vmem:[%s2036 + $0x2a1] sm:$0xff]
      %v2249 = vld [vmem:[%s2036 + $0x2b1] sm:$0xff]
      %v2250 = vld [vmem:[%s2036 + $0x321] sm:$0xff]
      %v2251 = vld [vmem:[%s2036 + $0x331] sm:$0xff]
      %v2252 = vld [vmem:[%s2036 + $0x341] sm:$0xff]
      %v2253 = vld [vmem:[%s2036 + $0x351] sm:$0xff]
      %v2254 = vld [vmem:[%s2036 + $0x3c1] sm:$0xff]
      %v2255 = vld [vmem:[%s2036 + $0x3d1] sm:$0xff]
      %v2256 = vld [vmem:[%s2036 + $0x3e1] sm:$0xff]
      %v2257 = vld [vmem:[%s2036 + $0x3f1] sm:$0xff]
      %v2258 = vld [vmem:[%s2036 + $0x461] sm:$0xff]
      %v2259 = vld [vmem:[%s2036 + $0x471] sm:$0xff]
      %v2260 = vld [vmem:[%s2036 + $0x481] sm:$0xff]
      %v2261 = vld [vmem:[%s2036 + $0x491] sm:$0xff]
      %2294 = vrot.lane.b32.xlu0 %v2230, 88
      %v2295 = vpop.permute.xlu0 %2294
      %2296 = vrot.lane.b32.xlu0 %v2231, 88
      %v2297 = vpop.permute.xlu0 %2296
      %2298 = vrot.lane.b32.xlu0 %v2232, 88
      %v2299 = vpop.permute.xlu0 %2298
      %2300 = vrot.lane.b32.xlu0 %v2233, 88
      %v2301 = vpop.permute.xlu0 %2300
      %2302 = vrot.lane.b32.xlu0 %v2234, 88
      %v2303 = vpop.permute.xlu0 %2302
      %2304 = vrot.lane.b32.xlu0 %v2235, 88
      %v2305 = vpop.permute.xlu0 %2304
      %2306 = vrot.lane.b32.xlu0 %v2236, 88
      %v2307 = vpop.permute.xlu0 %2306
      %2308 = vrot.lane.b32.xlu0 %v2237, 88
      %v2309 = vpop.permute.xlu0 %2308
      %2310 = vrot.lane.b32.xlu0 %v2238, 88
      %v2311 = vpop.permute.xlu0 %2310
      %2312 = vrot.lane.b32.xlu0 %v2239, 88
      %v2313 = vpop.permute.xlu0 %2312
      %2314 = vrot.lane.b32.xlu0 %v2240, 88
      %v2315 = vpop.permute.xlu0 %2314
      %2316 = vrot.lane.b32.xlu0 %v2241, 88
      %v2317 = vpop.permute.xlu0 %2316
      %2318 = vrot.lane.b32.xlu0 %v2242, 88
      %v2319 = vpop.permute.xlu0 %2318
      %2320 = vrot.lane.b32.xlu0 %v2243, 88
      %v2321 = vpop.permute.xlu0 %2320
      %2322 = vrot.lane.b32.xlu0 %v2244, 88
      %v2323 = vpop.permute.xlu0 %2322
      %2324 = vrot.lane.b32.xlu0 %v2245, 88
      %v2325 = vpop.permute.xlu0 %2324
      %2326 = vrot.lane.b32.xlu0 %v2246, 88
      %v2327 = vpop.permute.xlu0 %2326
      %2328 = vrot.lane.b32.xlu0 %v2247, 88
      %v2329 = vpop.permute.xlu0 %2328
      %2330 = vrot.lane.b32.xlu0 %v2248, 88
      %v2331 = vpop.permute.xlu0 %2330
      %2332 = vrot.lane.b32.xlu0 %v2249, 88
      %v2333 = vpop.permute.xlu0 %2332
      %2334 = vrot.lane.b32.xlu0 %v2250, 88
      %v2335 = vpop.permute.xlu0 %2334
      %2336 = vrot.lane.b32.xlu0 %v2251, 88
      %v2337 = vpop.permute.xlu0 %2336
      %2338 = vrot.lane.b32.xlu0 %v2252, 88
      %v2339 = vpop.permute.xlu0 %2338
      %2340 = vrot.lane.b32.xlu0 %v2253, 88
      %v2341 = vpop.permute.xlu0 %2340
      %2342 = vrot.lane.b32.xlu0 %v2254, 88
      %v2343 = vpop.permute.xlu0 %2342
      %2344 = vrot.lane.b32.xlu0 %v2255, 88
      %v2345 = vpop.permute.xlu0 %2344
      %2346 = vrot.lane.b32.xlu0 %v2256, 88
      %v2347 = vpop.permute.xlu0 %2346
      %2348 = vrot.lane.b32.xlu0 %v2257, 88
      %v2349 = vpop.permute.xlu0 %2348
      %2350 = vrot.lane.b32.xlu0 %v2258, 88
      %v2351 = vpop.permute.xlu0 %2350
      %2352 = vrot.lane.b32.xlu0 %v2259, 88
      %v2353 = vpop.permute.xlu0 %2352
      %2354 = vrot.lane.b32.xlu0 %v2260, 88
      %v2355 = vpop.permute.xlu0 %2354
      %2356 = vrot.lane.b32.xlu0 %v2261, 88
      %v2357 = vpop.permute.xlu0 %2356
      %vm2390 = vcmask 786112
      %2391 = vst.msk [vmem:[#allocation2] sm:$0xff] %vm2390, %v2295
      %2392 = vst.msk [vmem:[#allocation2 + $0x18] sm:$0xff] %vm2390, %v2297
      %2393 = vst.msk [vmem:[#allocation2 + $0x30] sm:$0xff] %vm2390, %v2299
      %2394 = vst.msk [vmem:[#allocation2 + $0x48] sm:$0xff] %vm2390, %v2301
      %2395 = vst.msk [vmem:[#allocation2 + $0x60] sm:$0xff] %vm2390, %v2303
      %2396 = vst.msk [vmem:[#allocation2 + $0x78] sm:$0xff] %vm2390, %v2305
      %2397 = vst.msk [vmem:[#allocation2 + $0x90] sm:$0xff] %vm2390, %v2307
      %2398 = vst.msk [vmem:[#allocation2 + $0xa8] sm:$0xff] %vm2390, %v2309
      %2399 = vst.msk [vmem:[#allocation2 + $0xc0] sm:$0xff] %vm2390, %v2311
      %2400 = vst.msk [vmem:[#allocation2 + $0xd8] sm:$0xff] %vm2390, %v2313
      %2401 = vst.msk [vmem:[#allocation2 + $0xf0] sm:$0xff] %vm2390, %v2315
      %2402 = vst.msk [vmem:[#allocation2 + $0x108] sm:$0xff] %vm2390, %v2317
      %2403 = vst.msk [vmem:[#allocation2 + $0x120] sm:$0xff] %vm2390, %v2319
      %2404 = vst.msk [vmem:[#allocation2 + $0x138] sm:$0xff] %vm2390, %v2321
      %2405 = vst.msk [vmem:[#allocation2 + $0x150] sm:$0xff] %vm2390, %v2323
      %2406 = vst.msk [vmem:[#allocation2 + $0x168] sm:$0xff] %vm2390, %v2325
      %2407 = vst.msk [vmem:[#allocation2 + $0x180] sm:$0xff] %vm2390, %v2327
      %2408 = vst.msk [vmem:[#allocation2 + $0x198] sm:$0xff] %vm2390, %v2329
      %2409 = vst.msk [vmem:[#allocation2 + $0x1b0] sm:$0xff] %vm2390, %v2331
      %2410 = vst.msk [vmem:[#allocation2 + $0x1c8] sm:$0xff] %vm2390, %v2333
      %2411 = vst.msk [vmem:[#allocation2 + $0x1e0] sm:$0xff] %vm2390, %v2335
      %2412 = vst.msk [vmem:[#allocation2 + $0x1f8] sm:$0xff] %vm2390, %v2337
      %2413 = vst.msk [vmem:[#allocation2 + $0x210] sm:$0xff] %vm2390, %v2339
      %2414 = vst.msk [vmem:[#allocation2 + $0x228] sm:$0xff] %vm2390, %v2341
      %2415 = vst.msk [vmem:[#allocation2 + $0x240] sm:$0xff] %vm2390, %v2343
      %2416 = vst.msk [vmem:[#allocation2 + $0x258] sm:$0xff] %vm2390, %v2345
      %2417 = vst.msk [vmem:[#allocation2 + $0x270] sm:$0xff] %vm2390, %v2347
      %2418 = vst.msk [vmem:[#allocation2 + $0x288] sm:$0xff] %vm2390, %v2349
      %2419 = vst.msk [vmem:[#allocation2 + $0x2a0] sm:$0xff] %vm2390, %v2351
      %2420 = vst.msk [vmem:[#allocation2 + $0x2b8] sm:$0xff] %vm2390, %v2353
      %2421 = vst.msk [vmem:[#allocation2 + $0x2d0] sm:$0xff] %vm2390, %v2355
      %2422 = vst.msk [vmem:[#allocation2 + $0x2e8] sm:$0xff] %vm2390, %v2357
      %v2423 = vld [vmem:[%s2036 + $0x2] sm:$0xff]
      %v2424 = vld [vmem:[%s2036 + $0x12] sm:$0xff]
      %v2425 = vld [vmem:[%s2036 + $0x22] sm:$0xff]
      %v2426 = vld [vmem:[%s2036 + $0x32] sm:$0xff]
      %v2427 = vld [vmem:[%s2036 + $0xa2] sm:$0xff]
      %v2428 = vld [vmem:[%s2036 + $0xb2] sm:$0xff]
      %v2429 = vld [vmem:[%s2036 + $0xc2] sm:$0xff]
      %v2430 = vld [vmem:[%s2036 + $0xd2] sm:$0xff]
      %v2431 = vld [vmem:[%s2036 + $0x142] sm:$0xff]
      %v2432 = vld [vmem:[%s2036 + $0x152] sm:$0xff]
      %v2433 = vld [vmem:[%s2036 + $0x162] sm:$0xff]
      %v2434 = vld [vmem:[%s2036 + $0x172] sm:$0xff]
      %v2435 = vld [vmem:[%s2036 + $0x1e2] sm:$0xff]
      %v2436 = vld [vmem:[%s2036 + $0x1f2] sm:$0xff]
      %v2437 = vld [vmem:[%s2036 + $0x202] sm:$0xff]
      %v2438 = vld [vmem:[%s2036 + $0x212] sm:$0xff]
      %v2439 = vld [vmem:[%s2036 + $0x282] sm:$0xff]
      %v2440 = vld [vmem:[%s2036 + $0x292] sm:$0xff]
      %v2441 = vld [vmem:[%s2036 + $0x2a2] sm:$0xff]
      %v2442 = vld [vmem:[%s2036 + $0x2b2] sm:$0xff]
      %v2443 = vld [vmem:[%s2036 + $0x322] sm:$0xff]
      %v2444 = vld [vmem:[%s2036 + $0x332] sm:$0xff]
      %v2445 = vld [vmem:[%s2036 + $0x342] sm:$0xff]
      %v2446 = vld [vmem:[%s2036 + $0x352] sm:$0xff]
      %v2447 = vld [vmem:[%s2036 + $0x3c2] sm:$0xff]
      %v2448 = vld [vmem:[%s2036 + $0x3d2] sm:$0xff]
      %v2449 = vld [vmem:[%s2036 + $0x3e2] sm:$0xff]
      %v2450 = vld [vmem:[%s2036 + $0x3f2] sm:$0xff]
      %v2451 = vld [vmem:[%s2036 + $0x462] sm:$0xff]
      %v2452 = vld [vmem:[%s2036 + $0x472] sm:$0xff]
      %v2453 = vld [vmem:[%s2036 + $0x482] sm:$0xff]
      %v2454 = vld [vmem:[%s2036 + $0x492] sm:$0xff]
      %2487 = vrot.lane.b32.xlu0 %v2423, 96
      %v2488 = vpop.permute.xlu0 %2487
      %2489 = vrot.lane.b32.xlu0 %v2424, 96
      %v2490 = vpop.permute.xlu0 %2489
      %2491 = vrot.lane.b32.xlu0 %v2425, 96
      %v2492 = vpop.permute.xlu0 %2491
      %2493 = vrot.lane.b32.xlu0 %v2426, 96
      %v2494 = vpop.permute.xlu0 %2493
      %2495 = vrot.lane.b32.xlu0 %v2427, 96
      %v2496 = vpop.permute.xlu0 %2495
      %2497 = vrot.lane.b32.xlu0 %v2428, 96
      %v2498 = vpop.permute.xlu0 %2497
      %2499 = vrot.lane.b32.xlu0 %v2429, 96
      %v2500 = vpop.permute.xlu0 %2499
      %2501 = vrot.lane.b32.xlu0 %v2430, 96
      %v2502 = vpop.permute.xlu0 %2501
      %2503 = vrot.lane.b32.xlu0 %v2431, 96
      %v2504 = vpop.permute.xlu0 %2503
      %2505 = vrot.lane.b32.xlu0 %v2432, 96
      %v2506 = vpop.permute.xlu0 %2505
      %2507 = vrot.lane.b32.xlu0 %v2433, 96
      %v2508 = vpop.permute.xlu0 %2507
      %2509 = vrot.lane.b32.xlu0 %v2434, 96
      %v2510 = vpop.permute.xlu0 %2509
      %2511 = vrot.lane.b32.xlu0 %v2435, 96
      %v2512 = vpop.permute.xlu0 %2511
      %2513 = vrot.lane.b32.xlu0 %v2436, 96
      %v2514 = vpop.permute.xlu0 %2513
      %2515 = vrot.lane.b32.xlu0 %v2437, 96
      %v2516 = vpop.permute.xlu0 %2515
      %2517 = vrot.lane.b32.xlu0 %v2438, 96
      %v2518 = vpop.permute.xlu0 %2517
      %2519 = vrot.lane.b32.xlu0 %v2439, 96
      %v2520 = vpop.permute.xlu0 %2519
      %2521 = vrot.lane.b32.xlu0 %v2440, 96
      %v2522 = vpop.permute.xlu0 %2521
      %2523 = vrot.lane.b32.xlu0 %v2441, 96
      %v2524 = vpop.permute.xlu0 %2523
      %2525 = vrot.lane.b32.xlu0 %v2442, 96
      %v2526 = vpop.permute.xlu0 %2525
      %2527 = vrot.lane.b32.xlu0 %v2443, 96
      %v2528 = vpop.permute.xlu0 %2527
      %2529 = vrot.lane.b32.xlu0 %v2444, 96
      %v2530 = vpop.permute.xlu0 %2529
      %2531 = vrot.lane.b32.xlu0 %v2445, 96
      %v2532 = vpop.permute.xlu0 %2531
      %2533 = vrot.lane.b32.xlu0 %v2446, 96
      %v2534 = vpop.permute.xlu0 %2533
      %2535 = vrot.lane.b32.xlu0 %v2447, 96
      %v2536 = vpop.permute.xlu0 %2535
      %2537 = vrot.lane.b32.xlu0 %v2448, 96
      %v2538 = vpop.permute.xlu0 %2537
      %2539 = vrot.lane.b32.xlu0 %v2449, 96
      %v2540 = vpop.permute.xlu0 %2539
      %2541 = vrot.lane.b32.xlu0 %v2450, 96
      %v2542 = vpop.permute.xlu0 %2541
      %2543 = vrot.lane.b32.xlu0 %v2451, 96
      %v2544 = vpop.permute.xlu0 %2543
      %2545 = vrot.lane.b32.xlu0 %v2452, 96
      %v2546 = vpop.permute.xlu0 %2545
      %2547 = vrot.lane.b32.xlu0 %v2453, 96
      %v2548 = vpop.permute.xlu0 %2547
      %2549 = vrot.lane.b32.xlu0 %v2454, 96
      %v2550 = vpop.permute.xlu0 %2549
      %vm2583 = vcmask 851712
      %2584 = vst.msk [vmem:[#allocation2] sm:$0xff] %vm2583, %v2488
      %2585 = vst.msk [vmem:[#allocation2 + $0x18] sm:$0xff] %vm2583, %v2490
      %2586 = vst.msk [vmem:[#allocation2 + $0x30] sm:$0xff] %vm2583, %v2492
      %2587 = vst.msk [vmem:[#allocation2 + $0x48] sm:$0xff] %vm2583, %v2494
      %2588 = vst.msk [vmem:[#allocation2 + $0x60] sm:$0xff] %vm2583, %v2496
      %2589 = vst.msk [vmem:[#allocation2 + $0x78] sm:$0xff] %vm2583, %v2498
      %2590 = vst.msk [vmem:[#allocation2 + $0x90] sm:$0xff] %vm2583, %v2500
      %2591 = vst.msk [vmem:[#allocation2 + $0xa8] sm:$0xff] %vm2583, %v2502
      %2592 = vst.msk [vmem:[#allocation2 + $0xc0] sm:$0xff] %vm2583, %v2504
      %2593 = vst.msk [vmem:[#allocation2 + $0xd8] sm:$0xff] %vm2583, %v2506
      %2594 = vst.msk [vmem:[#allocation2 + $0xf0] sm:$0xff] %vm2583, %v2508
      %2595 = vst.msk [vmem:[#allocation2 + $0x108] sm:$0xff] %vm2583, %v2510
      %2596 = vst.msk [vmem:[#allocation2 + $0x120] sm:$0xff] %vm2583, %v2512
      %2597 = vst.msk [vmem:[#allocation2 + $0x138] sm:$0xff] %vm2583, %v2514
      %2598 = vst.msk [vmem:[#allocation2 + $0x150] sm:$0xff] %vm2583, %v2516
      %2599 = vst.msk [vmem:[#allocation2 + $0x168] sm:$0xff] %vm2583, %v2518
      %2600 = vst.msk [vmem:[#allocation2 + $0x180] sm:$0xff] %vm2583, %v2520
      %2601 = vst.msk [vmem:[#allocation2 + $0x198] sm:$0xff] %vm2583, %v2522
      %2602 = vst.msk [vmem:[#allocation2 + $0x1b0] sm:$0xff] %vm2583, %v2524
      %2603 = vst.msk [vmem:[#allocation2 + $0x1c8] sm:$0xff] %vm2583, %v2526
      %2604 = vst.msk [vmem:[#allocation2 + $0x1e0] sm:$0xff] %vm2583, %v2528
      %2605 = vst.msk [vmem:[#allocation2 + $0x1f8] sm:$0xff] %vm2583, %v2530
      %2606 = vst.msk [vmem:[#allocation2 + $0x210] sm:$0xff] %vm2583, %v2532
      %2607 = vst.msk [vmem:[#allocation2 + $0x228] sm:$0xff] %vm2583, %v2534
      %2608 = vst.msk [vmem:[#allocation2 + $0x240] sm:$0xff] %vm2583, %v2536
      %2609 = vst.msk [vmem:[#allocation2 + $0x258] sm:$0xff] %vm2583, %v2538
      %2610 = vst.msk [vmem:[#allocation2 + $0x270] sm:$0xff] %vm2583, %v2540
      %2611 = vst.msk [vmem:[#allocation2 + $0x288] sm:$0xff] %vm2583, %v2542
      %2612 = vst.msk [vmem:[#allocation2 + $0x2a0] sm:$0xff] %vm2583, %v2544
      %2613 = vst.msk [vmem:[#allocation2 + $0x2b8] sm:$0xff] %vm2583, %v2546
      %2614 = vst.msk [vmem:[#allocation2 + $0x2d0] sm:$0xff] %vm2583, %v2548
      %2615 = vst.msk [vmem:[#allocation2 + $0x2e8] sm:$0xff] %vm2583, %v2550
      %v2616 = vld [vmem:[%s2036 + $0x3] sm:$0xff]
      %v2617 = vld [vmem:[%s2036 + $0x13] sm:$0xff]
      %v2618 = vld [vmem:[%s2036 + $0x23] sm:$0xff]
      %v2619 = vld [vmem:[%s2036 + $0x33] sm:$0xff]
      %v2620 = vld [vmem:[%s2036 + $0xa3] sm:$0xff]
      %v2621 = vld [vmem:[%s2036 + $0xb3] sm:$0xff]
      %v2622 = vld [vmem:[%s2036 + $0xc3] sm:$0xff]
      %v2623 = vld [vmem:[%s2036 + $0xd3] sm:$0xff]
      %v2624 = vld [vmem:[%s2036 + $0x143] sm:$0xff]
      %v2625 = vld [vmem:[%s2036 + $0x153] sm:$0xff]
      %v2626 = vld [vmem:[%s2036 + $0x163] sm:$0xff]
      %v2627 = vld [vmem:[%s2036 + $0x173] sm:$0xff]
      %v2628 = vld [vmem:[%s2036 + $0x1e3] sm:$0xff]
      %v2629 = vld [vmem:[%s2036 + $0x1f3] sm:$0xff]
      %v2630 = vld [vmem:[%s2036 + $0x203] sm:$0xff]
      %v2631 = vld [vmem:[%s2036 + $0x213] sm:$0xff]
      %v2632 = vld [vmem:[%s2036 + $0x283] sm:$0xff]
      %v2633 = vld [vmem:[%s2036 + $0x293] sm:$0xff]
      %v2634 = vld [vmem:[%s2036 + $0x2a3] sm:$0xff]
      %v2635 = vld [vmem:[%s2036 + $0x2b3] sm:$0xff]
      %v2636 = vld [vmem:[%s2036 + $0x323] sm:$0xff]
      %v2637 = vld [vmem:[%s2036 + $0x333] sm:$0xff]
      %v2638 = vld [vmem:[%s2036 + $0x343] sm:$0xff]
      %v2639 = vld [vmem:[%s2036 + $0x353] sm:$0xff]
      %v2640 = vld [vmem:[%s2036 + $0x3c3] sm:$0xff]
      %v2641 = vld [vmem:[%s2036 + $0x3d3] sm:$0xff]
      %v2642 = vld [vmem:[%s2036 + $0x3e3] sm:$0xff]
      %v2643 = vld [vmem:[%s2036 + $0x3f3] sm:$0xff]
      %v2644 = vld [vmem:[%s2036 + $0x463] sm:$0xff]
      %v2645 = vld [vmem:[%s2036 + $0x473] sm:$0xff]
      %v2646 = vld [vmem:[%s2036 + $0x483] sm:$0xff]
      %v2647 = vld [vmem:[%s2036 + $0x493] sm:$0xff]
      %2680 = vrot.lane.b32.xlu0 %v2616, 104
      %v2681 = vpop.permute.xlu0 %2680
      %2682 = vrot.lane.b32.xlu0 %v2617, 104
      %v2683 = vpop.permute.xlu0 %2682
      %2684 = vrot.lane.b32.xlu0 %v2618, 104
      %v2685 = vpop.permute.xlu0 %2684
      %2686 = vrot.lane.b32.xlu0 %v2619, 104
      %v2687 = vpop.permute.xlu0 %2686
      %2688 = vrot.lane.b32.xlu0 %v2620, 104
      %v2689 = vpop.permute.xlu0 %2688
      %2690 = vrot.lane.b32.xlu0 %v2621, 104
      %v2691 = vpop.permute.xlu0 %2690
      %2692 = vrot.lane.b32.xlu0 %v2622, 104
      %v2693 = vpop.permute.xlu0 %2692
      %2694 = vrot.lane.b32.xlu0 %v2623, 104
      %v2695 = vpop.permute.xlu0 %2694
      %2696 = vrot.lane.b32.xlu0 %v2624, 104
      %v2697 = vpop.permute.xlu0 %2696
      %2698 = vrot.lane.b32.xlu0 %v2625, 104
      %v2699 = vpop.permute.xlu0 %2698
      %2700 = vrot.lane.b32.xlu0 %v2626, 104
      %v2701 = vpop.permute.xlu0 %2700
      %2702 = vrot.lane.b32.xlu0 %v2627, 104
      %v2703 = vpop.permute.xlu0 %2702
      %2704 = vrot.lane.b32.xlu0 %v2628, 104
      %v2705 = vpop.permute.xlu0 %2704
      %2706 = vrot.lane.b32.xlu0 %v2629, 104
      %v2707 = vpop.permute.xlu0 %2706
      %2708 = vrot.lane.b32.xlu0 %v2630, 104
      %v2709 = vpop.permute.xlu0 %2708
      %2710 = vrot.lane.b32.xlu0 %v2631, 104
      %v2711 = vpop.permute.xlu0 %2710
      %2712 = vrot.lane.b32.xlu0 %v2632, 104
      %v2713 = vpop.permute.xlu0 %2712
      %2714 = vrot.lane.b32.xlu0 %v2633, 104
      %v2715 = vpop.permute.xlu0 %2714
      %2716 = vrot.lane.b32.xlu0 %v2634, 104
      %v2717 = vpop.permute.xlu0 %2716
      %2718 = vrot.lane.b32.xlu0 %v2635, 104
      %v2719 = vpop.permute.xlu0 %2718
      %2720 = vrot.lane.b32.xlu0 %v2636, 104
      %v2721 = vpop.permute.xlu0 %2720
      %2722 = vrot.lane.b32.xlu0 %v2637, 104
      %v2723 = vpop.permute.xlu0 %2722
      %2724 = vrot.lane.b32.xlu0 %v2638, 104
      %v2725 = vpop.permute.xlu0 %2724
      %2726 = vrot.lane.b32.xlu0 %v2639, 104
      %v2727 = vpop.permute.xlu0 %2726
      %2728 = vrot.lane.b32.xlu0 %v2640, 104
      %v2729 = vpop.permute.xlu0 %2728
      %2730 = vrot.lane.b32.xlu0 %v2641, 104
      %v2731 = vpop.permute.xlu0 %2730
      %2732 = vrot.lane.b32.xlu0 %v2642, 104
      %v2733 = vpop.permute.xlu0 %2732
      %2734 = vrot.lane.b32.xlu0 %v2643, 104
      %v2735 = vpop.permute.xlu0 %2734
      %2736 = vrot.lane.b32.xlu0 %v2644, 104
      %v2737 = vpop.permute.xlu0 %2736
      %2738 = vrot.lane.b32.xlu0 %v2645, 104
      %v2739 = vpop.permute.xlu0 %2738
      %2740 = vrot.lane.b32.xlu0 %v2646, 104
      %v2741 = vpop.permute.xlu0 %2740
      %2742 = vrot.lane.b32.xlu0 %v2647, 104
      %v2743 = vpop.permute.xlu0 %2742
      %vm2776 = vcmask 917312
      %2777 = vst.msk [vmem:[#allocation2] sm:$0xff] %vm2776, %v2681
      %2778 = vst.msk [vmem:[#allocation2 + $0x18] sm:$0xff] %vm2776, %v2683
      %2779 = vst.msk [vmem:[#allocation2 + $0x30] sm:$0xff] %vm2776, %v2685
      %2780 = vst.msk [vmem:[#allocation2 + $0x48] sm:$0xff] %vm2776, %v2687
      %2781 = vst.msk [vmem:[#allocation2 + $0x60] sm:$0xff] %vm2776, %v2689
      %2782 = vst.msk [vmem:[#allocation2 + $0x78] sm:$0xff] %vm2776, %v2691
      %2783 = vst.msk [vmem:[#allocation2 + $0x90] sm:$0xff] %vm2776, %v2693
      %2784 = vst.msk [vmem:[#allocation2 + $0xa8] sm:$0xff] %vm2776, %v2695
      %2785 = vst.msk [vmem:[#allocation2 + $0xc0] sm:$0xff] %vm2776, %v2697
      %2786 = vst.msk [vmem:[#allocation2 + $0xd8] sm:$0xff] %vm2776, %v2699
      %2787 = vst.msk [vmem:[#allocation2 + $0xf0] sm:$0xff] %vm2776, %v2701
      %2788 = vst.msk [vmem:[#allocation2 + $0x108] sm:$0xff] %vm2776, %v2703
      %2789 = vst.msk [vmem:[#allocation2 + $0x120] sm:$0xff] %vm2776, %v2705
      %2790 = vst.msk [vmem:[#allocation2 + $0x138] sm:$0xff] %vm2776, %v2707
      %2791 = vst.msk [vmem:[#allocation2 + $0x150] sm:$0xff] %vm2776, %v2709
      %2792 = vst.msk [vmem:[#allocation2 + $0x168] sm:$0xff] %vm2776, %v2711
      %2793 = vst.msk [vmem:[#allocation2 + $0x180] sm:$0xff] %vm2776, %v2713
      %2794 = vst.msk [vmem:[#allocation2 + $0x198] sm:$0xff] %vm2776, %v2715
      %2795 = vst.msk [vmem:[#allocation2 + $0x1b0] sm:$0xff] %vm2776, %v2717
      %2796 = vst.msk [vmem:[#allocation2 + $0x1c8] sm:$0xff] %vm2776, %v2719
      %2797 = vst.msk [vmem:[#allocation2 + $0x1e0] sm:$0xff] %vm2776, %v2721
      %2798 = vst.msk [vmem:[#allocation2 + $0x1f8] sm:$0xff] %vm2776, %v2723
      %2799 = vst.msk [vmem:[#allocation2 + $0x210] sm:$0xff] %vm2776, %v2725
      %2800 = vst.msk [vmem:[#allocation2 + $0x228] sm:$0xff] %vm2776, %v2727
      %2801 = vst.msk [vmem:[#allocation2 + $0x240] sm:$0xff] %vm2776, %v2729
      %2802 = vst.msk [vmem:[#allocation2 + $0x258] sm:$0xff] %vm2776, %v2731
      %2803 = vst.msk [vmem:[#allocation2 + $0x270] sm:$0xff] %vm2776, %v2733
      %2804 = vst.msk [vmem:[#allocation2 + $0x288] sm:$0xff] %vm2776, %v2735
      %2805 = vst.msk [vmem:[#allocation2 + $0x2a0] sm:$0xff] %vm2776, %v2737
      %2806 = vst.msk [vmem:[#allocation2 + $0x2b8] sm:$0xff] %vm2776, %v2739
      %2807 = vst.msk [vmem:[#allocation2 + $0x2d0] sm:$0xff] %vm2776, %v2741
      %2808 = vst.msk [vmem:[#allocation2 + $0x2e8] sm:$0xff] %vm2776, %v2743
      %v2809 = vld [vmem:[%s2036 + $0x4] sm:$0xff]
      %v2810 = vld [vmem:[%s2036 + $0x14] sm:$0xff]
      %v2811 = vld [vmem:[%s2036 + $0x24] sm:$0xff]
      %v2812 = vld [vmem:[%s2036 + $0x34] sm:$0xff]
      %v2813 = vld [vmem:[%s2036 + $0xa4] sm:$0xff]
      %v2814 = vld [vmem:[%s2036 + $0xb4] sm:$0xff]
      %v2815 = vld [vmem:[%s2036 + $0xc4] sm:$0xff]
      %v2816 = vld [vmem:[%s2036 + $0xd4] sm:$0xff]
      %v2817 = vld [vmem:[%s2036 + $0x144] sm:$0xff]
      %v2818 = vld [vmem:[%s2036 + $0x154] sm:$0xff]
      %v2819 = vld [vmem:[%s2036 + $0x164] sm:$0xff]
      %v2820 = vld [vmem:[%s2036 + $0x174] sm:$0xff]
      %v2821 = vld [vmem:[%s2036 + $0x1e4] sm:$0xff]
      %v2822 = vld [vmem:[%s2036 + $0x1f4] sm:$0xff]
      %v2823 = vld [vmem:[%s2036 + $0x204] sm:$0xff]
      %v2824 = vld [vmem:[%s2036 + $0x214] sm:$0xff]
      %v2825 = vld [vmem:[%s2036 + $0x284] sm:$0xff]
      %v2826 = vld [vmem:[%s2036 + $0x294] sm:$0xff]
      %v2827 = vld [vmem:[%s2036 + $0x2a4] sm:$0xff]
      %v2828 = vld [vmem:[%s2036 + $0x2b4] sm:$0xff]
      %v2829 = vld [vmem:[%s2036 + $0x324] sm:$0xff]
      %v2830 = vld [vmem:[%s2036 + $0x334] sm:$0xff]
      %v2831 = vld [vmem:[%s2036 + $0x344] sm:$0xff]
      %v2832 = vld [vmem:[%s2036 + $0x354] sm:$0xff]
      %v2833 = vld [vmem:[%s2036 + $0x3c4] sm:$0xff]
      %v2834 = vld [vmem:[%s2036 + $0x3d4] sm:$0xff]
      %v2835 = vld [vmem:[%s2036 + $0x3e4] sm:$0xff]
      %v2836 = vld [vmem:[%s2036 + $0x3f4] sm:$0xff]
      %v2837 = vld [vmem:[%s2036 + $0x464] sm:$0xff]
      %v2838 = vld [vmem:[%s2036 + $0x474] sm:$0xff]
      %v2839 = vld [vmem:[%s2036 + $0x484] sm:$0xff]
      %v2840 = vld [vmem:[%s2036 + $0x494] sm:$0xff]
      %2873 = vrot.lane.b32.xlu0 %v2809, 112
      %v2874 = vpop.permute.xlu0 %2873
      %2875 = vrot.lane.b32.xlu0 %v2810, 112
      %v2876 = vpop.permute.xlu0 %2875
      %2877 = vrot.lane.b32.xlu0 %v2811, 112
      %v2878 = vpop.permute.xlu0 %2877
      %2879 = vrot.lane.b32.xlu0 %v2812, 112
      %v2880 = vpop.permute.xlu0 %2879
      %2881 = vrot.lane.b32.xlu0 %v2813, 112
      %v2882 = vpop.permute.xlu0 %2881
      %2883 = vrot.lane.b32.xlu0 %v2814, 112
      %v2884 = vpop.permute.xlu0 %2883
      %2885 = vrot.lane.b32.xlu0 %v2815, 112
      %v2886 = vpop.permute.xlu0 %2885
      %2887 = vrot.lane.b32.xlu0 %v2816, 112
      %v2888 = vpop.permute.xlu0 %2887
      %2889 = vrot.lane.b32.xlu0 %v2817, 112
      %v2890 = vpop.permute.xlu0 %2889
      %2891 = vrot.lane.b32.xlu0 %v2818, 112
      %v2892 = vpop.permute.xlu0 %2891
      %2893 = vrot.lane.b32.xlu0 %v2819, 112
      %v2894 = vpop.permute.xlu0 %2893
      %2895 = vrot.lane.b32.xlu0 %v2820, 112
      %v2896 = vpop.permute.xlu0 %2895
      %2897 = vrot.lane.b32.xlu0 %v2821, 112
      %v2898 = vpop.permute.xlu0 %2897
      %2899 = vrot.lane.b32.xlu0 %v2822, 112
      %v2900 = vpop.permute.xlu0 %2899
      %2901 = vrot.lane.b32.xlu0 %v2823, 112
      %v2902 = vpop.permute.xlu0 %2901
      %2903 = vrot.lane.b32.xlu0 %v2824, 112
      %v2904 = vpop.permute.xlu0 %2903
      %2905 = vrot.lane.b32.xlu0 %v2825, 112
      %v2906 = vpop.permute.xlu0 %2905
      %2907 = vrot.lane.b32.xlu0 %v2826, 112
      %v2908 = vpop.permute.xlu0 %2907
      %2909 = vrot.lane.b32.xlu0 %v2827, 112
      %v2910 = vpop.permute.xlu0 %2909
      %2911 = vrot.lane.b32.xlu0 %v2828, 112
      %v2912 = vpop.permute.xlu0 %2911
      %2913 = vrot.lane.b32.xlu0 %v2829, 112
      %v2914 = vpop.permute.xlu0 %2913
      %2915 = vrot.lane.b32.xlu0 %v2830, 112
      %v2916 = vpop.permute.xlu0 %2915
      %2917 = vrot.lane.b32.xlu0 %v2831, 112
      %v2918 = vpop.permute.xlu0 %2917
      %2919 = vrot.lane.b32.xlu0 %v2832, 112
      %v2920 = vpop.permute.xlu0 %2919
      %2921 = vrot.lane.b32.xlu0 %v2833, 112
      %v2922 = vpop.permute.xlu0 %2921
      %2923 = vrot.lane.b32.xlu0 %v2834, 112
      %v2924 = vpop.permute.xlu0 %2923
      %2925 = vrot.lane.b32.xlu0 %v2835, 112
      %v2926 = vpop.permute.xlu0 %2925
      %2927 = vrot.lane.b32.xlu0 %v2836, 112
      %v2928 = vpop.permute.xlu0 %2927
      %2929 = vrot.lane.b32.xlu0 %v2837, 112
      %v2930 = vpop.permute.xlu0 %2929
      %2931 = vrot.lane.b32.xlu0 %v2838, 112
      %v2932 = vpop.permute.xlu0 %2931
      %2933 = vrot.lane.b32.xlu0 %v2839, 112
      %v2934 = vpop.permute.xlu0 %2933
      %2935 = vrot.lane.b32.xlu0 %v2840, 112
      %v2936 = vpop.permute.xlu0 %2935
      %vm2969 = vcmask 982912
      %2970 = vst.msk [vmem:[#allocation2] sm:$0xff] %vm2969, %v2874
      %2971 = vst.msk [vmem:[#allocation2 + $0x18] sm:$0xff] %vm2969, %v2876
      %2972 = vst.msk [vmem:[#allocation2 + $0x30] sm:$0xff] %vm2969, %v2878
      %2973 = vst.msk [vmem:[#allocation2 + $0x48] sm:$0xff] %vm2969, %v2880
      %2974 = vst.msk [vmem:[#allocation2 + $0x60] sm:$0xff] %vm2969, %v2882
      %2975 = vst.msk [vmem:[#allocation2 + $0x78] sm:$0xff] %vm2969, %v2884
      %2976 = vst.msk [vmem:[#allocation2 + $0x90] sm:$0xff] %vm2969, %v2886
      %2977 = vst.msk [vmem:[#allocation2 + $0xa8] sm:$0xff] %vm2969, %v2888
      %2978 = vst.msk [vmem:[#allocation2 + $0xc0] sm:$0xff] %vm2969, %v2890
      %2979 = vst.msk [vmem:[#allocation2 + $0xd8] sm:$0xff] %vm2969, %v2892
      %2980 = vst.msk [vmem:[#allocation2 + $0xf0] sm:$0xff] %vm2969, %v2894
      %2981 = vst.msk [vmem:[#allocation2 + $0x108] sm:$0xff] %vm2969, %v2896
      %2982 = vst.msk [vmem:[#allocation2 + $0x120] sm:$0xff] %vm2969, %v2898
      %2983 = vst.msk [vmem:[#allocation2 + $0x138] sm:$0xff] %vm2969, %v2900
      %2984 = vst.msk [vmem:[#allocation2 + $0x150] sm:$0xff] %vm2969, %v2902
      %2985 = vst.msk [vmem:[#allocation2 + $0x168] sm:$0xff] %vm2969, %v2904
      %2986 = vst.msk [vmem:[#allocation2 + $0x180] sm:$0xff] %vm2969, %v2906
      %2987 = vst.msk [vmem:[#allocation2 + $0x198] sm:$0xff] %vm2969, %v2908
      %2988 = vst.msk [vmem:[#allocation2 + $0x1b0] sm:$0xff] %vm2969, %v2910
      %2989 = vst.msk [vmem:[#allocation2 + $0x1c8] sm:$0xff] %vm2969, %v2912
      %2990 = vst.msk [vmem:[#allocation2 + $0x1e0] sm:$0xff] %vm2969, %v2914
      %2991 = vst.msk [vmem:[#allocation2 + $0x1f8] sm:$0xff] %vm2969, %v2916
      %2992 = vst.msk [vmem:[#allocation2 + $0x210] sm:$0xff] %vm2969, %v2918
      %2993 = vst.msk [vmem:[#allocation2 + $0x228] sm:$0xff] %vm2969, %v2920
      %2994 = vst.msk [vmem:[#allocation2 + $0x240] sm:$0xff] %vm2969, %v2922
      %2995 = vst.msk [vmem:[#allocation2 + $0x258] sm:$0xff] %vm2969, %v2924
      %2996 = vst.msk [vmem:[#allocation2 + $0x270] sm:$0xff] %vm2969, %v2926
      %2997 = vst.msk [vmem:[#allocation2 + $0x288] sm:$0xff] %vm2969, %v2928
      %2998 = vst.msk [vmem:[#allocation2 + $0x2a0] sm:$0xff] %vm2969, %v2930
      %2999 = vst.msk [vmem:[#allocation2 + $0x2b8] sm:$0xff] %vm2969, %v2932
      %3000 = vst.msk [vmem:[#allocation2 + $0x2d0] sm:$0xff] %vm2969, %v2934
      %3001 = vst.msk [vmem:[#allocation2 + $0x2e8] sm:$0xff] %vm2969, %v2936
      %s3002 = sadd.s32 %s194, 1
      %s3003 = smul.u32 %s3002, 160
      %s3004 = sadd.s32 32, %s3003
      %s3005 = scalar_lea.vmem %s183, %s3004
      %v3006 = vld [vmem:[%s3005] sm:$0xff]
      %v3007 = vld [vmem:[%s3005 + $0x10] sm:$0xff]
      %v3008 = vld [vmem:[%s3005 + $0x20] sm:$0xff]
      %v3009 = vld [vmem:[%s3005 + $0x30] sm:$0xff]
      %v3010 = vld [vmem:[%s3005 + $0xa0] sm:$0xff]
      %v3011 = vld [vmem:[%s3005 + $0xb0] sm:$0xff]
      %v3012 = vld [vmem:[%s3005 + $0xc0] sm:$0xff]
      %v3013 = vld [vmem:[%s3005 + $0xd0] sm:$0xff]
      %v3014 = vld [vmem:[%s3005 + $0x140] sm:$0xff]
      %v3015 = vld [vmem:[%s3005 + $0x150] sm:$0xff]
      %v3016 = vld [vmem:[%s3005 + $0x160] sm:$0xff]
      %v3017 = vld [vmem:[%s3005 + $0x170] sm:$0xff]
      %v3018 = vld [vmem:[%s3005 + $0x1e0] sm:$0xff]
      %v3019 = vld [vmem:[%s3005 + $0x1f0] sm:$0xff]
      %v3020 = vld [vmem:[%s3005 + $0x200] sm:$0xff]
      %v3021 = vld [vmem:[%s3005 + $0x210] sm:$0xff]
      %v3022 = vld [vmem:[%s3005 + $0x280] sm:$0xff]
      %v3023 = vld [vmem:[%s3005 + $0x290] sm:$0xff]
      %v3024 = vld [vmem:[%s3005 + $0x2a0] sm:$0xff]
      %v3025 = vld [vmem:[%s3005 + $0x2b0] sm:$0xff]
      %v3026 = vld [vmem:[%s3005 + $0x320] sm:$0xff]
      %v3027 = vld [vmem:[%s3005 + $0x330] sm:$0xff]
      %v3028 = vld [vmem:[%s3005 + $0x340] sm:$0xff]
      %v3029 = vld [vmem:[%s3005 + $0x350] sm:$0xff]
      %v3030 = vld [vmem:[%s3005 + $0x3c0] sm:$0xff]
      %v3031 = vld [vmem:[%s3005 + $0x3d0] sm:$0xff]
      %v3032 = vld [vmem:[%s3005 + $0x3e0] sm:$0xff]
      %v3033 = vld [vmem:[%s3005 + $0x3f0] sm:$0xff]
      %v3034 = vld [vmem:[%s3005 + $0x460] sm:$0xff]
      %v3035 = vld [vmem:[%s3005 + $0x470] sm:$0xff]
      %v3036 = vld [vmem:[%s3005 + $0x480] sm:$0xff]
      %v3037 = vld [vmem:[%s3005 + $0x490] sm:$0xff]
      %3070 = vrot.lane.b32.xlu0 %v3006, 120
      %v3071 = vpop.permute.xlu0 %3070
      %3072 = vrot.lane.b32.xlu0 %v3007, 120
      %v3073 = vpop.permute.xlu0 %3072
      %3074 = vrot.lane.b32.xlu0 %v3008, 120
      %v3075 = vpop.permute.xlu0 %3074
      %3076 = vrot.lane.b32.xlu0 %v3009, 120
      %v3077 = vpop.permute.xlu0 %3076
      %3078 = vrot.lane.b32.xlu0 %v3010, 120
      %v3079 = vpop.permute.xlu0 %3078
      %3080 = vrot.lane.b32.xlu0 %v3011, 120
      %v3081 = vpop.permute.xlu0 %3080
      %3082 = vrot.lane.b32.xlu0 %v3012, 120
      %v3083 = vpop.permute.xlu0 %3082
      %3084 = vrot.lane.b32.xlu0 %v3013, 120
      %v3085 = vpop.permute.xlu0 %3084
      %3086 = vrot.lane.b32.xlu0 %v3014, 120
      %v3087 = vpop.permute.xlu0 %3086
      %3088 = vrot.lane.b32.xlu0 %v3015, 120
      %v3089 = vpop.permute.xlu0 %3088
      %3090 = vrot.lane.b32.xlu0 %v3016, 120
      %v3091 = vpop.permute.xlu0 %3090
      %3092 = vrot.lane.b32.xlu0 %v3017, 120
      %v3093 = vpop.permute.xlu0 %3092
      %3094 = vrot.lane.b32.xlu0 %v3018, 120
      %v3095 = vpop.permute.xlu0 %3094
      %3096 = vrot.lane.b32.xlu0 %v3019, 120
      %v3097 = vpop.permute.xlu0 %3096
      %3098 = vrot.lane.b32.xlu0 %v3020, 120
      %v3099 = vpop.permute.xlu0 %3098
      %3100 = vrot.lane.b32.xlu0 %v3021, 120
      %v3101 = vpop.permute.xlu0 %3100
      %3102 = vrot.lane.b32.xlu0 %v3022, 120
      %v3103 = vpop.permute.xlu0 %3102
      %3104 = vrot.lane.b32.xlu0 %v3023, 120
      %v3105 = vpop.permute.xlu0 %3104
      %3106 = vrot.lane.b32.xlu0 %v3024, 120
      %v3107 = vpop.permute.xlu0 %3106
      %3108 = vrot.lane.b32.xlu0 %v3025, 120
      %v3109 = vpop.permute.xlu0 %3108
      %3110 = vrot.lane.b32.xlu0 %v3026, 120
      %v3111 = vpop.permute.xlu0 %3110
      %3112 = vrot.lane.b32.xlu0 %v3027, 120
      %v3113 = vpop.permute.xlu0 %3112
      %3114 = vrot.lane.b32.xlu0 %v3028, 120
      %v3115 = vpop.permute.xlu0 %3114
      %3116 = vrot.lane.b32.xlu0 %v3029, 120
      %v3117 = vpop.permute.xlu0 %3116
      %3118 = vrot.lane.b32.xlu0 %v3030, 120
      %v3119 = vpop.permute.xlu0 %3118
      %3120 = vrot.lane.b32.xlu0 %v3031, 120
      %v3121 = vpop.permute.xlu0 %3120
      %3122 = vrot.lane.b32.xlu0 %v3032, 120
      %v3123 = vpop.permute.xlu0 %3122
      %3124 = vrot.lane.b32.xlu0 %v3033, 120
      %v3125 = vpop.permute.xlu0 %3124
      %3126 = vrot.lane.b32.xlu0 %v3034, 120
      %v3127 = vpop.permute.xlu0 %3126
      %3128 = vrot.lane.b32.xlu0 %v3035, 120
      %v3129 = vpop.permute.xlu0 %3128
      %3130 = vrot.lane.b32.xlu0 %v3036, 120
      %v3131 = vpop.permute.xlu0 %3130
      %3132 = vrot.lane.b32.xlu0 %v3037, 120
      %v3133 = vpop.permute.xlu0 %3132
      %vm3166 = vcmask 1048512
      %3167 = vst.msk [vmem:[#allocation2] sm:$0xff] %vm3166, %v3071
      %3168 = vst.msk [vmem:[#allocation2 + $0x18] sm:$0xff] %vm3166, %v3073
      %3169 = vst.msk [vmem:[#allocation2 + $0x30] sm:$0xff] %vm3166, %v3075
      %3170 = vst.msk [vmem:[#allocation2 + $0x48] sm:$0xff] %vm3166, %v3077
      %3171 = vst.msk [vmem:[#allocation2 + $0x60] sm:$0xff] %vm3166, %v3079
      %3172 = vst.msk [vmem:[#allocation2 + $0x78] sm:$0xff] %vm3166, %v3081
      %3173 = vst.msk [vmem:[#allocation2 + $0x90] sm:$0xff] %vm3166, %v3083
      %3174 = vst.msk [vmem:[#allocation2 + $0xa8] sm:$0xff] %vm3166, %v3085
      %3175 = vst.msk [vmem:[#allocation2 + $0xc0] sm:$0xff] %vm3166, %v3087
      %3176 = vst.msk [vmem:[#allocation2 + $0xd8] sm:$0xff] %vm3166, %v3089
      %3177 = vst.msk [vmem:[#allocation2 + $0xf0] sm:$0xff] %vm3166, %v3091
      %3178 = vst.msk [vmem:[#allocation2 + $0x108] sm:$0xff] %vm3166, %v3093
      %3179 = vst.msk [vmem:[#allocation2 + $0x120] sm:$0xff] %vm3166, %v3095
      %3180 = vst.msk [vmem:[#allocation2 + $0x138] sm:$0xff] %vm3166, %v3097
      %3181 = vst.msk [vmem:[#allocation2 + $0x150] sm:$0xff] %vm3166, %v3099
      %3182 = vst.msk [vmem:[#allocation2 + $0x168] sm:$0xff] %vm3166, %v3101
      %3183 = vst.msk [vmem:[#allocation2 + $0x180] sm:$0xff] %vm3166, %v3103
      %3184 = vst.msk [vmem:[#allocation2 + $0x198] sm:$0xff] %vm3166, %v3105
      %3185 = vst.msk [vmem:[#allocation2 + $0x1b0] sm:$0xff] %vm3166, %v3107
      %3186 = vst.msk [vmem:[#allocation2 + $0x1c8] sm:$0xff] %vm3166, %v3109
      %3187 = vst.msk [vmem:[#allocation2 + $0x1e0] sm:$0xff] %vm3166, %v3111
      %3188 = vst.msk [vmem:[#allocation2 + $0x1f8] sm:$0xff] %vm3166, %v3113
      %3189 = vst.msk [vmem:[#allocation2 + $0x210] sm:$0xff] %vm3166, %v3115
      %3190 = vst.msk [vmem:[#allocation2 + $0x228] sm:$0xff] %vm3166, %v3117
      %3191 = vst.msk [vmem:[#allocation2 + $0x240] sm:$0xff] %vm3166, %v3119
      %3192 = vst.msk [vmem:[#allocation2 + $0x258] sm:$0xff] %vm3166, %v3121
      %3193 = vst.msk [vmem:[#allocation2 + $0x270] sm:$0xff] %vm3166, %v3123
      %3194 = vst.msk [vmem:[#allocation2 + $0x288] sm:$0xff] %vm3166, %v3125
      %3195 = vst.msk [vmem:[#allocation2 + $0x2a0] sm:$0xff] %vm3166, %v3127
      %3196 = vst.msk [vmem:[#allocation2 + $0x2b8] sm:$0xff] %vm3166, %v3129
      %3197 = vst.msk [vmem:[#allocation2 + $0x2d0] sm:$0xff] %vm3166, %v3131
      %3198 = vst.msk [vmem:[#allocation2 + $0x2e8] sm:$0xff] %vm3166, %v3133
      %v3199 = vld [vmem:[%s3005 + $0x1] sm:$0xff]
      %v3200 = vld [vmem:[%s3005 + $0x11] sm:$0xff]
      %v3201 = vld [vmem:[%s3005 + $0x21] sm:$0xff]
      %v3202 = vld [vmem:[%s3005 + $0x31] sm:$0xff]
      %v3203 = vld [vmem:[%s3005 + $0xa1] sm:$0xff]
      %v3204 = vld [vmem:[%s3005 + $0xb1] sm:$0xff]
      %v3205 = vld [vmem:[%s3005 + $0xc1] sm:$0xff]
      %v3206 = vld [vmem:[%s3005 + $0xd1] sm:$0xff]
      %v3207 = vld [vmem:[%s3005 + $0x141] sm:$0xff]
      %v3208 = vld [vmem:[%s3005 + $0x151] sm:$0xff]
      %v3209 = vld [vmem:[%s3005 + $0x161] sm:$0xff]
      %v3210 = vld [vmem:[%s3005 + $0x171] sm:$0xff]
      %v3211 = vld [vmem:[%s3005 + $0x1e1] sm:$0xff]
      %v3212 = vld [vmem:[%s3005 + $0x1f1] sm:$0xff]
      %v3213 = vld [vmem:[%s3005 + $0x201] sm:$0xff]
      %v3214 = vld [vmem:[%s3005 + $0x211] sm:$0xff]
      %v3215 = vld [vmem:[%s3005 + $0x281] sm:$0xff]
      %v3216 = vld [vmem:[%s3005 + $0x291] sm:$0xff]
      %v3217 = vld [vmem:[%s3005 + $0x2a1] sm:$0xff]
      %v3218 = vld [vmem:[%s3005 + $0x2b1] sm:$0xff]
      %v3219 = vld [vmem:[%s3005 + $0x321] sm:$0xff]
      %v3220 = vld [vmem:[%s3005 + $0x331] sm:$0xff]
      %v3221 = vld [vmem:[%s3005 + $0x341] sm:$0xff]
      %v3222 = vld [vmem:[%s3005 + $0x351] sm:$0xff]
      %v3223 = vld [vmem:[%s3005 + $0x3c1] sm:$0xff]
      %v3224 = vld [vmem:[%s3005 + $0x3d1] sm:$0xff]
      %v3225 = vld [vmem:[%s3005 + $0x3e1] sm:$0xff]
      %v3226 = vld [vmem:[%s3005 + $0x3f1] sm:$0xff]
      %v3227 = vld [vmem:[%s3005 + $0x461] sm:$0xff]
      %v3228 = vld [vmem:[%s3005 + $0x471] sm:$0xff]
      %v3229 = vld [vmem:[%s3005 + $0x481] sm:$0xff]
      %v3230 = vld [vmem:[%s3005 + $0x491] sm:$0xff]
      %3231 = vst.msk [vmem:[#allocation2 + $0x8] sm:$0xff] %vm263, %v3199
      %3232 = vst.msk [vmem:[#allocation2 + $0x20] sm:$0xff] %vm263, %v3200
      %3233 = vst.msk [vmem:[#allocation2 + $0x38] sm:$0xff] %vm263, %v3201
      %3234 = vst.msk [vmem:[#allocation2 + $0x50] sm:$0xff] %vm263, %v3202
      %3235 = vst.msk [vmem:[#allocation2 + $0x68] sm:$0xff] %vm263, %v3203
      %3236 = vst.msk [vmem:[#allocation2 + $0x80] sm:$0xff] %vm263, %v3204
      %3237 = vst.msk [vmem:[#allocation2 + $0x98] sm:$0xff] %vm263, %v3205
      %3238 = vst.msk [vmem:[#allocation2 + $0xb0] sm:$0xff] %vm263, %v3206
      %3239 = vst.msk [vmem:[#allocation2 + $0xc8] sm:$0xff] %vm263, %v3207
      %3240 = vst.msk [vmem:[#allocation2 + $0xe0] sm:$0xff] %vm263, %v3208
      %3241 = vst.msk [vmem:[#allocation2 + $0xf8] sm:$0xff] %vm263, %v3209
      %3242 = vst.msk [vmem:[#allocation2 + $0x110] sm:$0xff] %vm263, %v3210
      %3243 = vst.msk [vmem:[#allocation2 + $0x128] sm:$0xff] %vm263, %v3211
      %3244 = vst.msk [vmem:[#allocation2 + $0x140] sm:$0xff] %vm263, %v3212
      %3245 = vst.msk [vmem:[#allocation2 + $0x158] sm:$0xff] %vm263, %v3213
      %3246 = vst.msk [vmem:[#allocation2 + $0x170] sm:$0xff] %vm263, %v3214
      %3247 = vst.msk [vmem:[#allocation2 + $0x188] sm:$0xff] %vm263, %v3215
      %3248 = vst.msk [vmem:[#allocation2 + $0x1a0] sm:$0xff] %vm263, %v3216
      %3249 = vst.msk [vmem:[#allocation2 + $0x1b8] sm:$0xff] %vm263, %v3217
      %3250 = vst.msk [vmem:[#allocation2 + $0x1d0] sm:$0xff] %vm263, %v3218
      %3251 = vst.msk [vmem:[#allocation2 + $0x1e8] sm:$0xff] %vm263, %v3219
      %3252 = vst.msk [vmem:[#allocation2 + $0x200] sm:$0xff] %vm263, %v3220
      %3253 = vst.msk [vmem:[#allocation2 + $0x218] sm:$0xff] %vm263, %v3221
      %3254 = vst.msk [vmem:[#allocation2 + $0x230] sm:$0xff] %vm263, %v3222
      %3255 = vst.msk [vmem:[#allocation2 + $0x248] sm:$0xff] %vm263, %v3223
      %3256 = vst.msk [vmem:[#allocation2 + $0x260] sm:$0xff] %vm263, %v3224
      %3257 = vst.msk [vmem:[#allocation2 + $0x278] sm:$0xff] %vm263, %v3225
      %3258 = vst.msk [vmem:[#allocation2 + $0x290] sm:$0xff] %vm263, %v3226
      %3259 = vst.msk [vmem:[#allocation2 + $0x2a8] sm:$0xff] %vm263, %v3227
      %3260 = vst.msk [vmem:[#allocation2 + $0x2c0] sm:$0xff] %vm263, %v3228
      %3261 = vst.msk [vmem:[#allocation2 + $0x2d8] sm:$0xff] %vm263, %v3229
      %3262 = vst.msk [vmem:[#allocation2 + $0x2f0] sm:$0xff] %vm263, %v3230
      %v3263 = vld [vmem:[%s3005 + $0x2] sm:$0xff]
      %v3264 = vld [vmem:[%s3005 + $0x12] sm:$0xff]
      %v3265 = vld [vmem:[%s3005 + $0x22] sm:$0xff]
      %v3266 = vld [vmem:[%s3005 + $0x32] sm:$0xff]
      %v3267 = vld [vmem:[%s3005 + $0xa2] sm:$0xff]
      %v3268 = vld [vmem:[%s3005 + $0xb2] sm:$0xff]
      %v3269 = vld [vmem:[%s3005 + $0xc2] sm:$0xff]
      %v3270 = vld [vmem:[%s3005 + $0xd2] sm:$0xff]
      %v3271 = vld [vmem:[%s3005 + $0x142] sm:$0xff]
      %v3272 = vld [vmem:[%s3005 + $0x152] sm:$0xff]
      %v3273 = vld [vmem:[%s3005 + $0x162] sm:$0xff]
      %v3274 = vld [vmem:[%s3005 + $0x172] sm:$0xff]
      %v3275 = vld [vmem:[%s3005 + $0x1e2] sm:$0xff]
      %v3276 = vld [vmem:[%s3005 + $0x1f2] sm:$0xff]
      %v3277 = vld [vmem:[%s3005 + $0x202] sm:$0xff]
      %v3278 = vld [vmem:[%s3005 + $0x212] sm:$0xff]
      %v3279 = vld [vmem:[%s3005 + $0x282] sm:$0xff]
      %v3280 = vld [vmem:[%s3005 + $0x292] sm:$0xff]
      %v3281 = vld [vmem:[%s3005 + $0x2a2] sm:$0xff]
      %v3282 = vld [vmem:[%s3005 + $0x2b2] sm:$0xff]
      %v3283 = vld [vmem:[%s3005 + $0x322] sm:$0xff]
      %v3284 = vld [vmem:[%s3005 + $0x332] sm:$0xff]
      %v3285 = vld [vmem:[%s3005 + $0x342] sm:$0xff]
      %v3286 = vld [vmem:[%s3005 + $0x352] sm:$0xff]
      %v3287 = vld [vmem:[%s3005 + $0x3c2] sm:$0xff]
      %v3288 = vld [vmem:[%s3005 + $0x3d2] sm:$0xff]
      %v3289 = vld [vmem:[%s3005 + $0x3e2] sm:$0xff]
      %v3290 = vld [vmem:[%s3005 + $0x3f2] sm:$0xff]
      %v3291 = vld [vmem:[%s3005 + $0x462] sm:$0xff]
      %v3292 = vld [vmem:[%s3005 + $0x472] sm:$0xff]
      %v3293 = vld [vmem:[%s3005 + $0x482] sm:$0xff]
      %v3294 = vld [vmem:[%s3005 + $0x492] sm:$0xff]
      %3327 = vrot.lane.b32.xlu0 %v3263, 8
      %v3328 = vpop.permute.xlu0 %3327
      %3329 = vrot.lane.b32.xlu0 %v3264, 8
      %v3330 = vpop.permute.xlu0 %3329
      %3331 = vrot.lane.b32.xlu0 %v3265, 8
      %v3332 = vpop.permute.xlu0 %3331
      %3333 = vrot.lane.b32.xlu0 %v3266, 8
      %v3334 = vpop.permute.xlu0 %3333
      %3335 = vrot.lane.b32.xlu0 %v3267, 8
      %v3336 = vpop.permute.xlu0 %3335
      %3337 = vrot.lane.b32.xlu0 %v3268, 8
      %v3338 = vpop.permute.xlu0 %3337
      %3339 = vrot.lane.b32.xlu0 %v3269, 8
      %v3340 = vpop.permute.xlu0 %3339
      %3341 = vrot.lane.b32.xlu0 %v3270, 8
      %v3342 = vpop.permute.xlu0 %3341
      %3343 = vrot.lane.b32.xlu0 %v3271, 8
      %v3344 = vpop.permute.xlu0 %3343
      %3345 = vrot.lane.b32.xlu0 %v3272, 8
      %v3346 = vpop.permute.xlu0 %3345
      %3347 = vrot.lane.b32.xlu0 %v3273, 8
      %v3348 = vpop.permute.xlu0 %3347
      %3349 = vrot.lane.b32.xlu0 %v3274, 8
      %v3350 = vpop.permute.xlu0 %3349
      %3351 = vrot.lane.b32.xlu0 %v3275, 8
      %v3352 = vpop.permute.xlu0 %3351
      %3353 = vrot.lane.b32.xlu0 %v3276, 8
      %v3354 = vpop.permute.xlu0 %3353
      %3355 = vrot.lane.b32.xlu0 %v3277, 8
      %v3356 = vpop.permute.xlu0 %3355
      %3357 = vrot.lane.b32.xlu0 %v3278, 8
      %v3358 = vpop.permute.xlu0 %3357
      %3359 = vrot.lane.b32.xlu0 %v3279, 8
      %v3360 = vpop.permute.xlu0 %3359
      %3361 = vrot.lane.b32.xlu0 %v3280, 8
      %v3362 = vpop.permute.xlu0 %3361
      %3363 = vrot.lane.b32.xlu0 %v3281, 8
      %v3364 = vpop.permute.xlu0 %3363
      %3365 = vrot.lane.b32.xlu0 %v3282, 8
      %v3366 = vpop.permute.xlu0 %3365
      %3367 = vrot.lane.b32.xlu0 %v3283, 8
      %v3368 = vpop.permute.xlu0 %3367
      %3369 = vrot.lane.b32.xlu0 %v3284, 8
      %v3370 = vpop.permute.xlu0 %3369
      %3371 = vrot.lane.b32.xlu0 %v3285, 8
      %v3372 = vpop.permute.xlu0 %3371
      %3373 = vrot.lane.b32.xlu0 %v3286, 8
      %v3374 = vpop.permute.xlu0 %3373
      %3375 = vrot.lane.b32.xlu0 %v3287, 8
      %v3376 = vpop.permute.xlu0 %3375
      %3377 = vrot.lane.b32.xlu0 %v3288, 8
      %v3378 = vpop.permute.xlu0 %3377
      %3379 = vrot.lane.b32.xlu0 %v3289, 8
      %v3380 = vpop.permute.xlu0 %3379
      %3381 = vrot.lane.b32.xlu0 %v3290, 8
      %v3382 = vpop.permute.xlu0 %3381
      %3383 = vrot.lane.b32.xlu0 %v3291, 8
      %v3384 = vpop.permute.xlu0 %3383
      %3385 = vrot.lane.b32.xlu0 %v3292, 8
      %v3386 = vpop.permute.xlu0 %3385
      %3387 = vrot.lane.b32.xlu0 %v3293, 8
      %v3388 = vpop.permute.xlu0 %3387
      %3389 = vrot.lane.b32.xlu0 %v3294, 8
      %v3390 = vpop.permute.xlu0 %3389
      %3423 = vst.msk [vmem:[#allocation2 + $0x8] sm:$0xff] %vm456, %v3328
      %3424 = vst.msk [vmem:[#allocation2 + $0x20] sm:$0xff] %vm456, %v3330
      %3425 = vst.msk [vmem:[#allocation2 + $0x38] sm:$0xff] %vm456, %v3332
      %3426 = vst.msk [vmem:[#allocation2 + $0x50] sm:$0xff] %vm456, %v3334
      %3427 = vst.msk [vmem:[#allocation2 + $0x68] sm:$0xff] %vm456, %v3336
      %3428 = vst.msk [vmem:[#allocation2 + $0x80] sm:$0xff] %vm456, %v3338
      %3429 = vst.msk [vmem:[#allocation2 + $0x98] sm:$0xff] %vm456, %v3340
      %3430 = vst.msk [vmem:[#allocation2 + $0xb0] sm:$0xff] %vm456, %v3342
      %3431 = vst.msk [vmem:[#allocation2 + $0xc8] sm:$0xff] %vm456, %v3344
      %3432 = vst.msk [vmem:[#allocation2 + $0xe0] sm:$0xff] %vm456, %v3346
      %3433 = vst.msk [vmem:[#allocation2 + $0xf8] sm:$0xff] %vm456, %v3348
      %3434 = vst.msk [vmem:[#allocation2 + $0x110] sm:$0xff] %vm456, %v3350
      %3435 = vst.msk [vmem:[#allocation2 + $0x128] sm:$0xff] %vm456, %v3352
      %3436 = vst.msk [vmem:[#allocation2 + $0x140] sm:$0xff] %vm456, %v3354
      %3437 = vst.msk [vmem:[#allocation2 + $0x158] sm:$0xff] %vm456, %v3356
      %3438 = vst.msk [vmem:[#allocation2 + $0x170] sm:$0xff] %vm456, %v3358
      %3439 = vst.msk [vmem:[#allocation2 + $0x188] sm:$0xff] %vm456, %v3360
      %3440 = vst.msk [vmem:[#allocation2 + $0x1a0] sm:$0xff] %vm456, %v3362
      %3441 = vst.msk [vmem:[#allocation2 + $0x1b8] sm:$0xff] %vm456, %v3364
      %3442 = vst.msk [vmem:[#allocation2 + $0x1d0] sm:$0xff] %vm456, %v3366
      %3443 = vst.msk [vmem:[#allocation2 + $0x1e8] sm:$0xff] %vm456, %v3368
      %3444 = vst.msk [vmem:[#allocation2 + $0x200] sm:$0xff] %vm456, %v3370
      %3445 = vst.msk [vmem:[#allocation2 + $0x218] sm:$0xff] %vm456, %v3372
      %3446 = vst.msk [vmem:[#allocation2 + $0x230] sm:$0xff] %vm456, %v3374
      %3447 = vst.msk [vmem:[#allocation2 + $0x248] sm:$0xff] %vm456, %v3376
      %3448 = vst.msk [vmem:[#allocation2 + $0x260] sm:$0xff] %vm456, %v3378
      %3449 = vst.msk [vmem:[#allocation2 + $0x278] sm:$0xff] %vm456, %v3380
      %3450 = vst.msk [vmem:[#allocation2 + $0x290] sm:$0xff] %vm456, %v3382
      %3451 = vst.msk [vmem:[#allocation2 + $0x2a8] sm:$0xff] %vm456, %v3384
      %3452 = vst.msk [vmem:[#allocation2 + $0x2c0] sm:$0xff] %vm456, %v3386
      %3453 = vst.msk [vmem:[#allocation2 + $0x2d8] sm:$0xff] %vm456, %v3388
      %3454 = vst.msk [vmem:[#allocation2 + $0x2f0] sm:$0xff] %vm456, %v3390
      %v3455 = vld [vmem:[%s3005 + $0x3] sm:$0xff]
      %v3456 = vld [vmem:[%s3005 + $0x13] sm:$0xff]
      %v3457 = vld [vmem:[%s3005 + $0x23] sm:$0xff]
      %v3458 = vld [vmem:[%s3005 + $0x33] sm:$0xff]
      %v3459 = vld [vmem:[%s3005 + $0xa3] sm:$0xff]
      %v3460 = vld [vmem:[%s3005 + $0xb3] sm:$0xff]
      %v3461 = vld [vmem:[%s3005 + $0xc3] sm:$0xff]
      %v3462 = vld [vmem:[%s3005 + $0xd3] sm:$0xff]
      %v3463 = vld [vmem:[%s3005 + $0x143] sm:$0xff]
      %v3464 = vld [vmem:[%s3005 + $0x153] sm:$0xff]
      %v3465 = vld [vmem:[%s3005 + $0x163] sm:$0xff]
      %v3466 = vld [vmem:[%s3005 + $0x173] sm:$0xff]
      %v3467 = vld [vmem:[%s3005 + $0x1e3] sm:$0xff]
      %v3468 = vld [vmem:[%s3005 + $0x1f3] sm:$0xff]
      %v3469 = vld [vmem:[%s3005 + $0x203] sm:$0xff]
      %v3470 = vld [vmem:[%s3005 + $0x213] sm:$0xff]
      %v3471 = vld [vmem:[%s3005 + $0x283] sm:$0xff]
      %v3472 = vld [vmem:[%s3005 + $0x293] sm:$0xff]
      %v3473 = vld [vmem:[%s3005 + $0x2a3] sm:$0xff]
      %v3474 = vld [vmem:[%s3005 + $0x2b3] sm:$0xff]
      %v3475 = vld [vmem:[%s3005 + $0x323] sm:$0xff]
      %v3476 = vld [vmem:[%s3005 + $0x333] sm:$0xff]
      %v3477 = vld [vmem:[%s3005 + $0x343] sm:$0xff]
      %v3478 = vld [vmem:[%s3005 + $0x353] sm:$0xff]
      %v3479 = vld [vmem:[%s3005 + $0x3c3] sm:$0xff]
      %v3480 = vld [vmem:[%s3005 + $0x3d3] sm:$0xff]
      %v3481 = vld [vmem:[%s3005 + $0x3e3] sm:$0xff]
      %v3482 = vld [vmem:[%s3005 + $0x3f3] sm:$0xff]
      %v3483 = vld [vmem:[%s3005 + $0x463] sm:$0xff]
      %v3484 = vld [vmem:[%s3005 + $0x473] sm:$0xff]
      %v3485 = vld [vmem:[%s3005 + $0x483] sm:$0xff]
      %v3486 = vld [vmem:[%s3005 + $0x493] sm:$0xff]
      %3519 = vrot.lane.b32.xlu0 %v3455, 16
      %v3520 = vpop.permute.xlu0 %3519
      %3521 = vrot.lane.b32.xlu0 %v3456, 16
      %v3522 = vpop.permute.xlu0 %3521
      %3523 = vrot.lane.b32.xlu0 %v3457, 16
      %v3524 = vpop.permute.xlu0 %3523
      %3525 = vrot.lane.b32.xlu0 %v3458, 16
      %v3526 = vpop.permute.xlu0 %3525
      %3527 = vrot.lane.b32.xlu0 %v3459, 16
      %v3528 = vpop.permute.xlu0 %3527
      %3529 = vrot.lane.b32.xlu0 %v3460, 16
      %v3530 = vpop.permute.xlu0 %3529
      %3531 = vrot.lane.b32.xlu0 %v3461, 16
      %v3532 = vpop.permute.xlu0 %3531
      %3533 = vrot.lane.b32.xlu0 %v3462, 16
      %v3534 = vpop.permute.xlu0 %3533
      %3535 = vrot.lane.b32.xlu0 %v3463, 16
      %v3536 = vpop.permute.xlu0 %3535
      %3537 = vrot.lane.b32.xlu0 %v3464, 16
      %v3538 = vpop.permute.xlu0 %3537
      %3539 = vrot.lane.b32.xlu0 %v3465, 16
      %v3540 = vpop.permute.xlu0 %3539
      %3541 = vrot.lane.b32.xlu0 %v3466, 16
      %v3542 = vpop.permute.xlu0 %3541
      %3543 = vrot.lane.b32.xlu0 %v3467, 16
      %v3544 = vpop.permute.xlu0 %3543
      %3545 = vrot.lane.b32.xlu0 %v3468, 16
      %v3546 = vpop.permute.xlu0 %3545
      %3547 = vrot.lane.b32.xlu0 %v3469, 16
      %v3548 = vpop.permute.xlu0 %3547
      %3549 = vrot.lane.b32.xlu0 %v3470, 16
      %v3550 = vpop.permute.xlu0 %3549
      %3551 = vrot.lane.b32.xlu0 %v3471, 16
      %v3552 = vpop.permute.xlu0 %3551
      %3553 = vrot.lane.b32.xlu0 %v3472, 16
      %v3554 = vpop.permute.xlu0 %3553
      %3555 = vrot.lane.b32.xlu0 %v3473, 16
      %v3556 = vpop.permute.xlu0 %3555
      %3557 = vrot.lane.b32.xlu0 %v3474, 16
      %v3558 = vpop.permute.xlu0 %3557
      %3559 = vrot.lane.b32.xlu0 %v3475, 16
      %v3560 = vpop.permute.xlu0 %3559
      %3561 = vrot.lane.b32.xlu0 %v3476, 16
      %v3562 = vpop.permute.xlu0 %3561
      %3563 = vrot.lane.b32.xlu0 %v3477, 16
      %v3564 = vpop.permute.xlu0 %3563
      %3565 = vrot.lane.b32.xlu0 %v3478, 16
      %v3566 = vpop.permute.xlu0 %3565
      %3567 = vrot.lane.b32.xlu0 %v3479, 16
      %v3568 = vpop.permute.xlu0 %3567
      %3569 = vrot.lane.b32.xlu0 %v3480, 16
      %v3570 = vpop.permute.xlu0 %3569
      %3571 = vrot.lane.b32.xlu0 %v3481, 16
      %v3572 = vpop.permute.xlu0 %3571
      %3573 = vrot.lane.b32.xlu0 %v3482, 16
      %v3574 = vpop.permute.xlu0 %3573
      %3575 = vrot.lane.b32.xlu0 %v3483, 16
      %v3576 = vpop.permute.xlu0 %3575
      %3577 = vrot.lane.b32.xlu0 %v3484, 16
      %v3578 = vpop.permute.xlu0 %3577
      %3579 = vrot.lane.b32.xlu0 %v3485, 16
      %v3580 = vpop.permute.xlu0 %3579
      %3581 = vrot.lane.b32.xlu0 %v3486, 16
      %v3582 = vpop.permute.xlu0 %3581
      %3615 = vst.msk [vmem:[#allocation2 + $0x8] sm:$0xff] %vm649, %v3520
      %3616 = vst.msk [vmem:[#allocation2 + $0x20] sm:$0xff] %vm649, %v3522
      %3617 = vst.msk [vmem:[#allocation2 + $0x38] sm:$0xff] %vm649, %v3524
      %3618 = vst.msk [vmem:[#allocation2 + $0x50] sm:$0xff] %vm649, %v3526
      %3619 = vst.msk [vmem:[#allocation2 + $0x68] sm:$0xff] %vm649, %v3528
      %3620 = vst.msk [vmem:[#allocation2 + $0x80] sm:$0xff] %vm649, %v3530
      %3621 = vst.msk [vmem:[#allocation2 + $0x98] sm:$0xff] %vm649, %v3532
      %3622 = vst.msk [vmem:[#allocation2 + $0xb0] sm:$0xff] %vm649, %v3534
      %3623 = vst.msk [vmem:[#allocation2 + $0xc8] sm:$0xff] %vm649, %v3536
      %3624 = vst.msk [vmem:[#allocation2 + $0xe0] sm:$0xff] %vm649, %v3538
      %3625 = vst.msk [vmem:[#allocation2 + $0xf8] sm:$0xff] %vm649, %v3540
      %3626 = vst.msk [vmem:[#allocation2 + $0x110] sm:$0xff] %vm649, %v3542
      %3627 = vst.msk [vmem:[#allocation2 + $0x128] sm:$0xff] %vm649, %v3544
      %3628 = vst.msk [vmem:[#allocation2 + $0x140] sm:$0xff] %vm649, %v3546
      %3629 = vst.msk [vmem:[#allocation2 + $0x158] sm:$0xff] %vm649, %v3548
      %3630 = vst.msk [vmem:[#allocation2 + $0x170] sm:$0xff] %vm649, %v3550
      %3631 = vst.msk [vmem:[#allocation2 + $0x188] sm:$0xff] %vm649, %v3552
      %3632 = vst.msk [vmem:[#allocation2 + $0x1a0] sm:$0xff] %vm649, %v3554
      %3633 = vst.msk [vmem:[#allocation2 + $0x1b8] sm:$0xff] %vm649, %v3556
      %3634 = vst.msk [vmem:[#allocation2 + $0x1d0] sm:$0xff] %vm649, %v3558
      %3635 = vst.msk [vmem:[#allocation2 + $0x1e8] sm:$0xff] %vm649, %v3560
      %3636 = vst.msk [vmem:[#allocation2 + $0x200] sm:$0xff] %vm649, %v3562
      %3637 = vst.msk [vmem:[#allocation2 + $0x218] sm:$0xff] %vm649, %v3564
      %3638 = vst.msk [vmem:[#allocation2 + $0x230] sm:$0xff] %vm649, %v3566
      %3639 = vst.msk [vmem:[#allocation2 + $0x248] sm:$0xff] %vm649, %v3568
      %3640 = vst.msk [vmem:[#allocation2 + $0x260] sm:$0xff] %vm649, %v3570
      %3641 = vst.msk [vmem:[#allocation2 + $0x278] sm:$0xff] %vm649, %v3572
      %3642 = vst.msk [vmem:[#allocation2 + $0x290] sm:$0xff] %vm649, %v3574
      %3643 = vst.msk [vmem:[#allocation2 + $0x2a8] sm:$0xff] %vm649, %v3576
      %3644 = vst.msk [vmem:[#allocation2 + $0x2c0] sm:$0xff] %vm649, %v3578
      %3645 = vst.msk [vmem:[#allocation2 + $0x2d8] sm:$0xff] %vm649, %v3580
      %3646 = vst.msk [vmem:[#allocation2 + $0x2f0] sm:$0xff] %vm649, %v3582
      %v3647 = vld [vmem:[%s3005 + $0x4] sm:$0xff]
      %v3648 = vld [vmem:[%s3005 + $0x14] sm:$0xff]
      %v3649 = vld [vmem:[%s3005 + $0x24] sm:$0xff]
      %v3650 = vld [vmem:[%s3005 + $0x34] sm:$0xff]
      %v3651 = vld [vmem:[%s3005 + $0xa4] sm:$0xff]
      %v3652 = vld [vmem:[%s3005 + $0xb4] sm:$0xff]
      %v3653 = vld [vmem:[%s3005 + $0xc4] sm:$0xff]
      %v3654 = vld [vmem:[%s3005 + $0xd4] sm:$0xff]
      %v3655 = vld [vmem:[%s3005 + $0x144] sm:$0xff]
      %v3656 = vld [vmem:[%s3005 + $0x154] sm:$0xff]
      %v3657 = vld [vmem:[%s3005 + $0x164] sm:$0xff]
      %v3658 = vld [vmem:[%s3005 + $0x174] sm:$0xff]
      %v3659 = vld [vmem:[%s3005 + $0x1e4] sm:$0xff]
      %v3660 = vld [vmem:[%s3005 + $0x1f4] sm:$0xff]
      %v3661 = vld [vmem:[%s3005 + $0x204] sm:$0xff]
      %v3662 = vld [vmem:[%s3005 + $0x214] sm:$0xff]
      %v3663 = vld [vmem:[%s3005 + $0x284] sm:$0xff]
      %v3664 = vld [vmem:[%s3005 + $0x294] sm:$0xff]
      %v3665 = vld [vmem:[%s3005 + $0x2a4] sm:$0xff]
      %v3666 = vld [vmem:[%s3005 + $0x2b4] sm:$0xff]
      %v3667 = vld [vmem:[%s3005 + $0x324] sm:$0xff]
      %v3668 = vld [vmem:[%s3005 + $0x334] sm:$0xff]
      %v3669 = vld [vmem:[%s3005 + $0x344] sm:$0xff]
      %v3670 = vld [vmem:[%s3005 + $0x354] sm:$0xff]
      %v3671 = vld [vmem:[%s3005 + $0x3c4] sm:$0xff]
      %v3672 = vld [vmem:[%s3005 + $0x3d4] sm:$0xff]
      %v3673 = vld [vmem:[%s3005 + $0x3e4] sm:$0xff]
      %v3674 = vld [vmem:[%s3005 + $0x3f4] sm:$0xff]
      %v3675 = vld [vmem:[%s3005 + $0x464] sm:$0xff]
      %v3676 = vld [vmem:[%s3005 + $0x474] sm:$0xff]
      %v3677 = vld [vmem:[%s3005 + $0x484] sm:$0xff]
      %v3678 = vld [vmem:[%s3005 + $0x494] sm:$0xff]
      %3711 = vrot.lane.b32.xlu0 %v3647, 24
      %v3712 = vpop.permute.xlu0 %3711
      %3713 = vrot.lane.b32.xlu0 %v3648, 24
      %v3714 = vpop.permute.xlu0 %3713
      %3715 = vrot.lane.b32.xlu0 %v3649, 24
      %v3716 = vpop.permute.xlu0 %3715
      %3717 = vrot.lane.b32.xlu0 %v3650, 24
      %v3718 = vpop.permute.xlu0 %3717
      %3719 = vrot.lane.b32.xlu0 %v3651, 24
      %v3720 = vpop.permute.xlu0 %3719
      %3721 = vrot.lane.b32.xlu0 %v3652, 24
      %v3722 = vpop.permute.xlu0 %3721
      %3723 = vrot.lane.b32.xlu0 %v3653, 24
      %v3724 = vpop.permute.xlu0 %3723
      %3725 = vrot.lane.b32.xlu0 %v3654, 24
      %v3726 = vpop.permute.xlu0 %3725
      %3727 = vrot.lane.b32.xlu0 %v3655, 24
      %v3728 = vpop.permute.xlu0 %3727
      %3729 = vrot.lane.b32.xlu0 %v3656, 24
      %v3730 = vpop.permute.xlu0 %3729
      %3731 = vrot.lane.b32.xlu0 %v3657, 24
      %v3732 = vpop.permute.xlu0 %3731
      %3733 = vrot.lane.b32.xlu0 %v3658, 24
      %v3734 = vpop.permute.xlu0 %3733
      %3735 = vrot.lane.b32.xlu0 %v3659, 24
      %v3736 = vpop.permute.xlu0 %3735
      %3737 = vrot.lane.b32.xlu0 %v3660, 24
      %v3738 = vpop.permute.xlu0 %3737
      %3739 = vrot.lane.b32.xlu0 %v3661, 24
      %v3740 = vpop.permute.xlu0 %3739
      %3741 = vrot.lane.b32.xlu0 %v3662, 24
      %v3742 = vpop.permute.xlu0 %3741
      %3743 = vrot.lane.b32.xlu0 %v3663, 24
      %v3744 = vpop.permute.xlu0 %3743
      %3745 = vrot.lane.b32.xlu0 %v3664, 24
      %v3746 = vpop.permute.xlu0 %3745
      %3747 = vrot.lane.b32.xlu0 %v3665, 24
      %v3748 = vpop.permute.xlu0 %3747
      %3749 = vrot.lane.b32.xlu0 %v3666, 24
      %v3750 = vpop.permute.xlu0 %3749
      %3751 = vrot.lane.b32.xlu0 %v3667, 24
      %v3752 = vpop.permute.xlu0 %3751
      %3753 = vrot.lane.b32.xlu0 %v3668, 24
      %v3754 = vpop.permute.xlu0 %3753
      %3755 = vrot.lane.b32.xlu0 %v3669, 24
      %v3756 = vpop.permute.xlu0 %3755
      %3757 = vrot.lane.b32.xlu0 %v3670, 24
      %v3758 = vpop.permute.xlu0 %3757
      %3759 = vrot.lane.b32.xlu0 %v3671, 24
      %v3760 = vpop.permute.xlu0 %3759
      %3761 = vrot.lane.b32.xlu0 %v3672, 24
      %v3762 = vpop.permute.xlu0 %3761
      %3763 = vrot.lane.b32.xlu0 %v3673, 24
      %v3764 = vpop.permute.xlu0 %3763
      %3765 = vrot.lane.b32.xlu0 %v3674, 24
      %v3766 = vpop.permute.xlu0 %3765
      %3767 = vrot.lane.b32.xlu0 %v3675, 24
      %v3768 = vpop.permute.xlu0 %3767
      %3769 = vrot.lane.b32.xlu0 %v3676, 24
      %v3770 = vpop.permute.xlu0 %3769
      %3771 = vrot.lane.b32.xlu0 %v3677, 24
      %v3772 = vpop.permute.xlu0 %3771
      %3773 = vrot.lane.b32.xlu0 %v3678, 24
      %v3774 = vpop.permute.xlu0 %3773
      %3807 = vst.msk [vmem:[#allocation2 + $0x8] sm:$0xff] %vm842, %v3712
      %3808 = vst.msk [vmem:[#allocation2 + $0x20] sm:$0xff] %vm842, %v3714
      %3809 = vst.msk [vmem:[#allocation2 + $0x38] sm:$0xff] %vm842, %v3716
      %3810 = vst.msk [vmem:[#allocation2 + $0x50] sm:$0xff] %vm842, %v3718
      %3811 = vst.msk [vmem:[#allocation2 + $0x68] sm:$0xff] %vm842, %v3720
      %3812 = vst.msk [vmem:[#allocation2 + $0x80] sm:$0xff] %vm842, %v3722
      %3813 = vst.msk [vmem:[#allocation2 + $0x98] sm:$0xff] %vm842, %v3724
      %3814 = vst.msk [vmem:[#allocation2 + $0xb0] sm:$0xff] %vm842, %v3726
      %3815 = vst.msk [vmem:[#allocation2 + $0xc8] sm:$0xff] %vm842, %v3728
      %3816 = vst.msk [vmem:[#allocation2 + $0xe0] sm:$0xff] %vm842, %v3730
      %3817 = vst.msk [vmem:[#allocation2 + $0xf8] sm:$0xff] %vm842, %v3732
      %3818 = vst.msk [vmem:[#allocation2 + $0x110] sm:$0xff] %vm842, %v3734
      %3819 = vst.msk [vmem:[#allocation2 + $0x128] sm:$0xff] %vm842, %v3736
      %3820 = vst.msk [vmem:[#allocation2 + $0x140] sm:$0xff] %vm842, %v3738
      %3821 = vst.msk [vmem:[#allocation2 + $0x158] sm:$0xff] %vm842, %v3740
      %3822 = vst.msk [vmem:[#allocation2 + $0x170] sm:$0xff] %vm842, %v3742
      %3823 = vst.msk [vmem:[#allocation2 + $0x188] sm:$0xff] %vm842, %v3744
      %3824 = vst.msk [vmem:[#allocation2 + $0x1a0] sm:$0xff] %vm842, %v3746
      %3825 = vst.msk [vmem:[#allocation2 + $0x1b8] sm:$0xff] %vm842, %v3748
      %3826 = vst.msk [vmem:[#allocation2 + $0x1d0] sm:$0xff] %vm842, %v3750
      %3827 = vst.msk [vmem:[#allocation2 + $0x1e8] sm:$0xff] %vm842, %v3752
      %3828 = vst.msk [vmem:[#allocation2 + $0x200] sm:$0xff] %vm842, %v3754
      %3829 = vst.msk [vmem:[#allocation2 + $0x218] sm:$0xff] %vm842, %v3756
      %3830 = vst.msk [vmem:[#allocation2 + $0x230] sm:$0xff] %vm842, %v3758
      %3831 = vst.msk [vmem:[#allocation2 + $0x248] sm:$0xff] %vm842, %v3760
      %3832 = vst.msk [vmem:[#allocation2 + $0x260] sm:$0xff] %vm842, %v3762
      %3833 = vst.msk [vmem:[#allocation2 + $0x278] sm:$0xff] %vm842, %v3764
      %3834 = vst.msk [vmem:[#allocation2 + $0x290] sm:$0xff] %vm842, %v3766
      %3835 = vst.msk [vmem:[#allocation2 + $0x2a8] sm:$0xff] %vm842, %v3768
      %3836 = vst.msk [vmem:[#allocation2 + $0x2c0] sm:$0xff] %vm842, %v3770
      %3837 = vst.msk [vmem:[#allocation2 + $0x2d8] sm:$0xff] %vm842, %v3772
      %3838 = vst.msk [vmem:[#allocation2 + $0x2f0] sm:$0xff] %vm842, %v3774
      %s3839 = sadd.s32 48, %s3003
      %s3840 = scalar_lea.vmem %s183, %s3839
      %v3841 = vld [vmem:[%s3840] sm:$0xff]
      %v3842 = vld [vmem:[%s3840 + $0x10] sm:$0xff]
      %v3843 = vld [vmem:[%s3840 + $0x20] sm:$0xff]
      %v3844 = vld [vmem:[%s3840 + $0x30] sm:$0xff]
      %v3845 = vld [vmem:[%s3840 + $0xa0] sm:$0xff]
      %v3846 = vld [vmem:[%s3840 + $0xb0] sm:$0xff]
      %v3847 = vld [vmem:[%s3840 + $0xc0] sm:$0xff]
      %v3848 = vld [vmem:[%s3840 + $0xd0] sm:$0xff]
      %v3849 = vld [vmem:[%s3840 + $0x140] sm:$0xff]
      %v3850 = vld [vmem:[%s3840 + $0x150] sm:$0xff]
      %v3851 = vld [vmem:[%s3840 + $0x160] sm:$0xff]
      %v3852 = vld [vmem:[%s3840 + $0x170] sm:$0xff]
      %v3853 = vld [vmem:[%s3840 + $0x1e0] sm:$0xff]
      %v3854 = vld [vmem:[%s3840 + $0x1f0] sm:$0xff]
      %v3855 = vld [vmem:[%s3840 + $0x200] sm:$0xff]
      %v3856 = vld [vmem:[%s3840 + $0x210] sm:$0xff]
      %v3857 = vld [vmem:[%s3840 + $0x280] sm:$0xff]
      %v3858 = vld [vmem:[%s3840 + $0x290] sm:$0xff]
      %v3859 = vld [vmem:[%s3840 + $0x2a0] sm:$0xff]
      %v3860 = vld [vmem:[%s3840 + $0x2b0] sm:$0xff]
      %v3861 = vld [vmem:[%s3840 + $0x320] sm:$0xff]
      %v3862 = vld [vmem:[%s3840 + $0x330] sm:$0xff]
      %v3863 = vld [vmem:[%s3840 + $0x340] sm:$0xff]
      %v3864 = vld [vmem:[%s3840 + $0x350] sm:$0xff]
      %v3865 = vld [vmem:[%s3840 + $0x3c0] sm:$0xff]
      %v3866 = vld [vmem:[%s3840 + $0x3d0] sm:$0xff]
      %v3867 = vld [vmem:[%s3840 + $0x3e0] sm:$0xff]
      %v3868 = vld [vmem:[%s3840 + $0x3f0] sm:$0xff]
      %v3869 = vld [vmem:[%s3840 + $0x460] sm:$0xff]
      %v3870 = vld [vmem:[%s3840 + $0x470] sm:$0xff]
      %v3871 = vld [vmem:[%s3840 + $0x480] sm:$0xff]
      %v3872 = vld [vmem:[%s3840 + $0x490] sm:$0xff]
      %3905 = vrot.lane.b32.xlu0 %v3841, 32
      %v3906 = vpop.permute.xlu0 %3905
      %3907 = vrot.lane.b32.xlu0 %v3842, 32
      %v3908 = vpop.permute.xlu0 %3907
      %3909 = vrot.lane.b32.xlu0 %v3843, 32
      %v3910 = vpop.permute.xlu0 %3909
      %3911 = vrot.lane.b32.xlu0 %v3844, 32
      %v3912 = vpop.permute.xlu0 %3911
      %3913 = vrot.lane.b32.xlu0 %v3845, 32
      %v3914 = vpop.permute.xlu0 %3913
      %3915 = vrot.lane.b32.xlu0 %v3846, 32
      %v3916 = vpop.permute.xlu0 %3915
      %3917 = vrot.lane.b32.xlu0 %v3847, 32
      %v3918 = vpop.permute.xlu0 %3917
      %3919 = vrot.lane.b32.xlu0 %v3848, 32
      %v3920 = vpop.permute.xlu0 %3919
      %3921 = vrot.lane.b32.xlu0 %v3849, 32
      %v3922 = vpop.permute.xlu0 %3921
      %3923 = vrot.lane.b32.xlu0 %v3850, 32
      %v3924 = vpop.permute.xlu0 %3923
      %3925 = vrot.lane.b32.xlu0 %v3851, 32
      %v3926 = vpop.permute.xlu0 %3925
      %3927 = vrot.lane.b32.xlu0 %v3852, 32
      %v3928 = vpop.permute.xlu0 %3927
      %3929 = vrot.lane.b32.xlu0 %v3853, 32
      %v3930 = vpop.permute.xlu0 %3929
      %3931 = vrot.lane.b32.xlu0 %v3854, 32
      %v3932 = vpop.permute.xlu0 %3931
      %3933 = vrot.lane.b32.xlu0 %v3855, 32
      %v3934 = vpop.permute.xlu0 %3933
      %3935 = vrot.lane.b32.xlu0 %v3856, 32
      %v3936 = vpop.permute.xlu0 %3935
      %3937 = vrot.lane.b32.xlu0 %v3857, 32
      %v3938 = vpop.permute.xlu0 %3937
      %3939 = vrot.lane.b32.xlu0 %v3858, 32
      %v3940 = vpop.permute.xlu0 %3939
      %3941 = vrot.lane.b32.xlu0 %v3859, 32
      %v3942 = vpop.permute.xlu0 %3941
      %3943 = vrot.lane.b32.xlu0 %v3860, 32
      %v3944 = vpop.permute.xlu0 %3943
      %3945 = vrot.lane.b32.xlu0 %v3861, 32
      %v3946 = vpop.permute.xlu0 %3945
      %3947 = vrot.lane.b32.xlu0 %v3862, 32
      %v3948 = vpop.permute.xlu0 %3947
      %3949 = vrot.lane.b32.xlu0 %v3863, 32
      %v3950 = vpop.permute.xlu0 %3949
      %3951 = vrot.lane.b32.xlu0 %v3864, 32
      %v3952 = vpop.permute.xlu0 %3951
      %3953 = vrot.lane.b32.xlu0 %v3865, 32
      %v3954 = vpop.permute.xlu0 %3953
      %3955 = vrot.lane.b32.xlu0 %v3866, 32
      %v3956 = vpop.permute.xlu0 %3955
      %3957 = vrot.lane.b32.xlu0 %v3867, 32
      %v3958 = vpop.permute.xlu0 %3957
      %3959 = vrot.lane.b32.xlu0 %v3868, 32
      %v3960 = vpop.permute.xlu0 %3959
      %3961 = vrot.lane.b32.xlu0 %v3869, 32
      %v3962 = vpop.permute.xlu0 %3961
      %3963 = vrot.lane.b32.xlu0 %v3870, 32
      %v3964 = vpop.permute.xlu0 %3963
      %3965 = vrot.lane.b32.xlu0 %v3871, 32
      %v3966 = vpop.permute.xlu0 %3965
      %3967 = vrot.lane.b32.xlu0 %v3872, 32
      %v3968 = vpop.permute.xlu0 %3967
      %4001 = vst.msk [vmem:[#allocation2 + $0x8] sm:$0xff] %vm1035, %v3906
      %4002 = vst.msk [vmem:[#allocation2 + $0x20] sm:$0xff] %vm1035, %v3908
      %4003 = vst.msk [vmem:[#allocation2 + $0x38] sm:$0xff] %vm1035, %v3910
      %4004 = vst.msk [vmem:[#allocation2 + $0x50] sm:$0xff] %vm1035, %v3912
      %4005 = vst.msk [vmem:[#allocation2 + $0x68] sm:$0xff] %vm1035, %v3914
      %4006 = vst.msk [vmem:[#allocation2 + $0x80] sm:$0xff] %vm1035, %v3916
      %4007 = vst.msk [vmem:[#allocation2 + $0x98] sm:$0xff] %vm1035, %v3918
      %4008 = vst.msk [vmem:[#allocation2 + $0xb0] sm:$0xff] %vm1035, %v3920
      %4009 = vst.msk [vmem:[#allocation2 + $0xc8] sm:$0xff] %vm1035, %v3922
      %4010 = vst.msk [vmem:[#allocation2 + $0xe0] sm:$0xff] %vm1035, %v3924
      %4011 = vst.msk [vmem:[#allocation2 + $0xf8] sm:$0xff] %vm1035, %v3926
      %4012 = vst.msk [vmem:[#allocation2 + $0x110] sm:$0xff] %vm1035, %v3928
      %4013 = vst.msk [vmem:[#allocation2 + $0x128] sm:$0xff] %vm1035, %v3930
      %4014 = vst.msk [vmem:[#allocation2 + $0x140] sm:$0xff] %vm1035, %v3932
      %4015 = vst.msk [vmem:[#allocation2 + $0x158] sm:$0xff] %vm1035, %v3934
      %4016 = vst.msk [vmem:[#allocation2 + $0x170] sm:$0xff] %vm1035, %v3936
      %4017 = vst.msk [vmem:[#allocation2 + $0x188] sm:$0xff] %vm1035, %v3938
      %4018 = vst.msk [vmem:[#allocation2 + $0x1a0] sm:$0xff] %vm1035, %v3940
      %4019 = vst.msk [vmem:[#allocation2 + $0x1b8] sm:$0xff] %vm1035, %v3942
      %4020 = vst.msk [vmem:[#allocation2 + $0x1d0] sm:$0xff] %vm1035, %v3944
      %4021 = vst.msk [vmem:[#allocation2 + $0x1e8] sm:$0xff] %vm1035, %v3946
      %4022 = vst.msk [vmem:[#allocation2 + $0x200] sm:$0xff] %vm1035, %v3948
      %4023 = vst.msk [vmem:[#allocation2 + $0x218] sm:$0xff] %vm1035, %v3950
      %4024 = vst.msk [vmem:[#allocation2 + $0x230] sm:$0xff] %vm1035, %v3952
      %4025 = vst.msk [vmem:[#allocation2 + $0x248] sm:$0xff] %vm1035, %v3954
      %4026 = vst.msk [vmem:[#allocation2 + $0x260] sm:$0xff] %vm1035, %v3956
      %4027 = vst.msk [vmem:[#allocation2 + $0x278] sm:$0xff] %vm1035, %v3958
      %4028 = vst.msk [vmem:[#allocation2 + $0x290] sm:$0xff] %vm1035, %v3960
      %4029 = vst.msk [vmem:[#allocation2 + $0x2a8] sm:$0xff] %vm1035, %v3962
      %4030 = vst.msk [vmem:[#allocation2 + $0x2c0] sm:$0xff] %vm1035, %v3964
      %4031 = vst.msk [vmem:[#allocation2 + $0x2d8] sm:$0xff] %vm1035, %v3966
      %4032 = vst.msk [vmem:[#allocation2 + $0x2f0] sm:$0xff] %vm1035, %v3968
      %v4033 = vld [vmem:[%s3840 + $0x1] sm:$0xff]
      %v4034 = vld [vmem:[%s3840 + $0x11] sm:$0xff]
      %v4035 = vld [vmem:[%s3840 + $0x21] sm:$0xff]
      %v4036 = vld [vmem:[%s3840 + $0x31] sm:$0xff]
      %v4037 = vld [vmem:[%s3840 + $0xa1] sm:$0xff]
      %v4038 = vld [vmem:[%s3840 + $0xb1] sm:$0xff]
      %v4039 = vld [vmem:[%s3840 + $0xc1] sm:$0xff]
      %v4040 = vld [vmem:[%s3840 + $0xd1] sm:$0xff]
      %v4041 = vld [vmem:[%s3840 + $0x141] sm:$0xff]
      %v4042 = vld [vmem:[%s3840 + $0x151] sm:$0xff]
      %v4043 = vld [vmem:[%s3840 + $0x161] sm:$0xff]
      %v4044 = vld [vmem:[%s3840 + $0x171] sm:$0xff]
      %v4045 = vld [vmem:[%s3840 + $0x1e1] sm:$0xff]
      %v4046 = vld [vmem:[%s3840 + $0x1f1] sm:$0xff]
      %v4047 = vld [vmem:[%s3840 + $0x201] sm:$0xff]
      %v4048 = vld [vmem:[%s3840 + $0x211] sm:$0xff]
      %v4049 = vld [vmem:[%s3840 + $0x281] sm:$0xff]
      %v4050 = vld [vmem:[%s3840 + $0x291] sm:$0xff]
      %v4051 = vld [vmem:[%s3840 + $0x2a1] sm:$0xff]
      %v4052 = vld [vmem:[%s3840 + $0x2b1] sm:$0xff]
      %v4053 = vld [vmem:[%s3840 + $0x321] sm:$0xff]
      %v4054 = vld [vmem:[%s3840 + $0x331] sm:$0xff]
      %v4055 = vld [vmem:[%s3840 + $0x341] sm:$0xff]
      %v4056 = vld [vmem:[%s3840 + $0x351] sm:$0xff]
      %v4057 = vld [vmem:[%s3840 + $0x3c1] sm:$0xff]
      %v4058 = vld [vmem:[%s3840 + $0x3d1] sm:$0xff]
      %v4059 = vld [vmem:[%s3840 + $0x3e1] sm:$0xff]
      %v4060 = vld [vmem:[%s3840 + $0x3f1] sm:$0xff]
      %v4061 = vld [vmem:[%s3840 + $0x461] sm:$0xff]
      %v4062 = vld [vmem:[%s3840 + $0x471] sm:$0xff]
      %v4063 = vld [vmem:[%s3840 + $0x481] sm:$0xff]
      %v4064 = vld [vmem:[%s3840 + $0x491] sm:$0xff]
      %4097 = vrot.lane.b32.xlu0 %v4033, 40
      %v4098 = vpop.permute.xlu0 %4097
      %4099 = vrot.lane.b32.xlu0 %v4034, 40
      %v4100 = vpop.permute.xlu0 %4099
      %4101 = vrot.lane.b32.xlu0 %v4035, 40
      %v4102 = vpop.permute.xlu0 %4101
      %4103 = vrot.lane.b32.xlu0 %v4036, 40
      %v4104 = vpop.permute.xlu0 %4103
      %4105 = vrot.lane.b32.xlu0 %v4037, 40
      %v4106 = vpop.permute.xlu0 %4105
      %4107 = vrot.lane.b32.xlu0 %v4038, 40
      %v4108 = vpop.permute.xlu0 %4107
      %4109 = vrot.lane.b32.xlu0 %v4039, 40
      %v4110 = vpop.permute.xlu0 %4109
      %4111 = vrot.lane.b32.xlu0 %v4040, 40
      %v4112 = vpop.permute.xlu0 %4111
      %4113 = vrot.lane.b32.xlu0 %v4041, 40
      %v4114 = vpop.permute.xlu0 %4113
      %4115 = vrot.lane.b32.xlu0 %v4042, 40
      %v4116 = vpop.permute.xlu0 %4115
      %4117 = vrot.lane.b32.xlu0 %v4043, 40
      %v4118 = vpop.permute.xlu0 %4117
      %4119 = vrot.lane.b32.xlu0 %v4044, 40
      %v4120 = vpop.permute.xlu0 %4119
      %4121 = vrot.lane.b32.xlu0 %v4045, 40
      %v4122 = vpop.permute.xlu0 %4121
      %4123 = vrot.lane.b32.xlu0 %v4046, 40
      %v4124 = vpop.permute.xlu0 %4123
      %4125 = vrot.lane.b32.xlu0 %v4047, 40
      %v4126 = vpop.permute.xlu0 %4125
      %4127 = vrot.lane.b32.xlu0 %v4048, 40
      %v4128 = vpop.permute.xlu0 %4127
      %4129 = vrot.lane.b32.xlu0 %v4049, 40
      %v4130 = vpop.permute.xlu0 %4129
      %4131 = vrot.lane.b32.xlu0 %v4050, 40
      %v4132 = vpop.permute.xlu0 %4131
      %4133 = vrot.lane.b32.xlu0 %v4051, 40
      %v4134 = vpop.permute.xlu0 %4133
      %4135 = vrot.lane.b32.xlu0 %v4052, 40
      %v4136 = vpop.permute.xlu0 %4135
      %4137 = vrot.lane.b32.xlu0 %v4053, 40
      %v4138 = vpop.permute.xlu0 %4137
      %4139 = vrot.lane.b32.xlu0 %v4054, 40
      %v4140 = vpop.permute.xlu0 %4139
      %4141 = vrot.lane.b32.xlu0 %v4055, 40
      %v4142 = vpop.permute.xlu0 %4141
      %4143 = vrot.lane.b32.xlu0 %v4056, 40
      %v4144 = vpop.permute.xlu0 %4143
      %4145 = vrot.lane.b32.xlu0 %v4057, 40
      %v4146 = vpop.permute.xlu0 %4145
      %4147 = vrot.lane.b32.xlu0 %v4058, 40
      %v4148 = vpop.permute.xlu0 %4147
      %4149 = vrot.lane.b32.xlu0 %v4059, 40
      %v4150 = vpop.permute.xlu0 %4149
      %4151 = vrot.lane.b32.xlu0 %v4060, 40
      %v4152 = vpop.permute.xlu0 %4151
      %4153 = vrot.lane.b32.xlu0 %v4061, 40
      %v4154 = vpop.permute.xlu0 %4153
      %4155 = vrot.lane.b32.xlu0 %v4062, 40
      %v4156 = vpop.permute.xlu0 %4155
      %4157 = vrot.lane.b32.xlu0 %v4063, 40
      %v4158 = vpop.permute.xlu0 %4157
      %4159 = vrot.lane.b32.xlu0 %v4064, 40
      %v4160 = vpop.permute.xlu0 %4159
      %4193 = vst.msk [vmem:[#allocation2 + $0x8] sm:$0xff] %vm1230, %v4098
      %4194 = vst.msk [vmem:[#allocation2 + $0x20] sm:$0xff] %vm1230, %v4100
      %4195 = vst.msk [vmem:[#allocation2 + $0x38] sm:$0xff] %vm1230, %v4102
      %4196 = vst.msk [vmem:[#allocation2 + $0x50] sm:$0xff] %vm1230, %v4104
      %4197 = vst.msk [vmem:[#allocation2 + $0x68] sm:$0xff] %vm1230, %v4106
      %4198 = vst.msk [vmem:[#allocation2 + $0x80] sm:$0xff] %vm1230, %v4108
      %4199 = vst.msk [vmem:[#allocation2 + $0x98] sm:$0xff] %vm1230, %v4110
      %4200 = vst.msk [vmem:[#allocation2 + $0xb0] sm:$0xff] %vm1230, %v4112
      %4201 = vst.msk [vmem:[#allocation2 + $0xc8] sm:$0xff] %vm1230, %v4114
      %4202 = vst.msk [vmem:[#allocation2 + $0xe0] sm:$0xff] %vm1230, %v4116
      %4203 = vst.msk [vmem:[#allocation2 + $0xf8] sm:$0xff] %vm1230, %v4118
      %4204 = vst.msk [vmem:[#allocation2 + $0x110] sm:$0xff] %vm1230, %v4120
      %4205 = vst.msk [vmem:[#allocation2 + $0x128] sm:$0xff] %vm1230, %v4122
      %4206 = vst.msk [vmem:[#allocation2 + $0x140] sm:$0xff] %vm1230, %v4124
      %4207 = vst.msk [vmem:[#allocation2 + $0x158] sm:$0xff] %vm1230, %v4126
      %4208 = vst.msk [vmem:[#allocation2 + $0x170] sm:$0xff] %vm1230, %v4128
      %4209 = vst.msk [vmem:[#allocation2 + $0x188] sm:$0xff] %vm1230, %v4130
      %4210 = vst.msk [vmem:[#allocation2 + $0x1a0] sm:$0xff] %vm1230, %v4132
      %4211 = vst.msk [vmem:[#allocation2 + $0x1b8] sm:$0xff] %vm1230, %v4134
      %4212 = vst.msk [vmem:[#allocation2 + $0x1d0] sm:$0xff] %vm1230, %v4136
      %4213 = vst.msk [vmem:[#allocation2 + $0x1e8] sm:$0xff] %vm1230, %v4138
      %4214 = vst.msk [vmem:[#allocation2 + $0x200] sm:$0xff] %vm1230, %v4140
      %4215 = vst.msk [vmem:[#allocation2 + $0x218] sm:$0xff] %vm1230, %v4142
      %4216 = vst.msk [vmem:[#allocation2 + $0x230] sm:$0xff] %vm1230, %v4144
      %4217 = vst.msk [vmem:[#allocation2 + $0x248] sm:$0xff] %vm1230, %v4146
      %4218 = vst.msk [vmem:[#allocation2 + $0x260] sm:$0xff] %vm1230, %v4148
      %4219 = vst.msk [vmem:[#allocation2 + $0x278] sm:$0xff] %vm1230, %v4150
      %4220 = vst.msk [vmem:[#allocation2 + $0x290] sm:$0xff] %vm1230, %v4152
      %4221 = vst.msk [vmem:[#allocation2 + $0x2a8] sm:$0xff] %vm1230, %v4154
      %4222 = vst.msk [vmem:[#allocation2 + $0x2c0] sm:$0xff] %vm1230, %v4156
      %4223 = vst.msk [vmem:[#allocation2 + $0x2d8] sm:$0xff] %vm1230, %v4158
      %4224 = vst.msk [vmem:[#allocation2 + $0x2f0] sm:$0xff] %vm1230, %v4160
      %v4225 = vld [vmem:[%s3840 + $0x2] sm:$0xff]
      %v4226 = vld [vmem:[%s3840 + $0x12] sm:$0xff]
      %v4227 = vld [vmem:[%s3840 + $0x22] sm:$0xff]
      %v4228 = vld [vmem:[%s3840 + $0x32] sm:$0xff]
      %v4229 = vld [vmem:[%s3840 + $0xa2] sm:$0xff]
      %v4230 = vld [vmem:[%s3840 + $0xb2] sm:$0xff]
      %v4231 = vld [vmem:[%s3840 + $0xc2] sm:$0xff]
      %v4232 = vld [vmem:[%s3840 + $0xd2] sm:$0xff]
      %v4233 = vld [vmem:[%s3840 + $0x142] sm:$0xff]
      %v4234 = vld [vmem:[%s3840 + $0x152] sm:$0xff]
      %v4235 = vld [vmem:[%s3840 + $0x162] sm:$0xff]
      %v4236 = vld [vmem:[%s3840 + $0x172] sm:$0xff]
      %v4237 = vld [vmem:[%s3840 + $0x1e2] sm:$0xff]
      %v4238 = vld [vmem:[%s3840 + $0x1f2] sm:$0xff]
      %v4239 = vld [vmem:[%s3840 + $0x202] sm:$0xff]
      %v4240 = vld [vmem:[%s3840 + $0x212] sm:$0xff]
      %v4241 = vld [vmem:[%s3840 + $0x282] sm:$0xff]
      %v4242 = vld [vmem:[%s3840 + $0x292] sm:$0xff]
      %v4243 = vld [vmem:[%s3840 + $0x2a2] sm:$0xff]
      %v4244 = vld [vmem:[%s3840 + $0x2b2] sm:$0xff]
      %v4245 = vld [vmem:[%s3840 + $0x322] sm:$0xff]
      %v4246 = vld [vmem:[%s3840 + $0x332] sm:$0xff]
      %v4247 = vld [vmem:[%s3840 + $0x342] sm:$0xff]
      %v4248 = vld [vmem:[%s3840 + $0x352] sm:$0xff]
      %v4249 = vld [vmem:[%s3840 + $0x3c2] sm:$0xff]
      %v4250 = vld [vmem:[%s3840 + $0x3d2] sm:$0xff]
      %v4251 = vld [vmem:[%s3840 + $0x3e2] sm:$0xff]
      %v4252 = vld [vmem:[%s3840 + $0x3f2] sm:$0xff]
      %v4253 = vld [vmem:[%s3840 + $0x462] sm:$0xff]
      %v4254 = vld [vmem:[%s3840 + $0x472] sm:$0xff]
      %v4255 = vld [vmem:[%s3840 + $0x482] sm:$0xff]
      %v4256 = vld [vmem:[%s3840 + $0x492] sm:$0xff]
      %4289 = vrot.lane.b32.xlu0 %v4225, 48
      %v4290 = vpop.permute.xlu0 %4289
      %4291 = vrot.lane.b32.xlu0 %v4226, 48
      %v4292 = vpop.permute.xlu0 %4291
      %4293 = vrot.lane.b32.xlu0 %v4227, 48
      %v4294 = vpop.permute.xlu0 %4293
      %4295 = vrot.lane.b32.xlu0 %v4228, 48
      %v4296 = vpop.permute.xlu0 %4295
      %4297 = vrot.lane.b32.xlu0 %v4229, 48
      %v4298 = vpop.permute.xlu0 %4297
      %4299 = vrot.lane.b32.xlu0 %v4230, 48
      %v4300 = vpop.permute.xlu0 %4299
      %4301 = vrot.lane.b32.xlu0 %v4231, 48
      %v4302 = vpop.permute.xlu0 %4301
      %4303 = vrot.lane.b32.xlu0 %v4232, 48
      %v4304 = vpop.permute.xlu0 %4303
      %4305 = vrot.lane.b32.xlu0 %v4233, 48
      %v4306 = vpop.permute.xlu0 %4305
      %4307 = vrot.lane.b32.xlu0 %v4234, 48
      %v4308 = vpop.permute.xlu0 %4307
      %4309 = vrot.lane.b32.xlu0 %v4235, 48
      %v4310 = vpop.permute.xlu0 %4309
      %4311 = vrot.lane.b32.xlu0 %v4236, 48
      %v4312 = vpop.permute.xlu0 %4311
      %4313 = vrot.lane.b32.xlu0 %v4237, 48
      %v4314 = vpop.permute.xlu0 %4313
      %4315 = vrot.lane.b32.xlu0 %v4238, 48
      %v4316 = vpop.permute.xlu0 %4315
      %4317 = vrot.lane.b32.xlu0 %v4239, 48
      %v4318 = vpop.permute.xlu0 %4317
      %4319 = vrot.lane.b32.xlu0 %v4240, 48
      %v4320 = vpop.permute.xlu0 %4319
      %4321 = vrot.lane.b32.xlu0 %v4241, 48
      %v4322 = vpop.permute.xlu0 %4321
      %4323 = vrot.lane.b32.xlu0 %v4242, 48
      %v4324 = vpop.permute.xlu0 %4323
      %4325 = vrot.lane.b32.xlu0 %v4243, 48
      %v4326 = vpop.permute.xlu0 %4325
      %4327 = vrot.lane.b32.xlu0 %v4244, 48
      %v4328 = vpop.permute.xlu0 %4327
      %4329 = vrot.lane.b32.xlu0 %v4245, 48
      %v4330 = vpop.permute.xlu0 %4329
      %4331 = vrot.lane.b32.xlu0 %v4246, 48
      %v4332 = vpop.permute.xlu0 %4331
      %4333 = vrot.lane.b32.xlu0 %v4247, 48
      %v4334 = vpop.permute.xlu0 %4333
      %4335 = vrot.lane.b32.xlu0 %v4248, 48
      %v4336 = vpop.permute.xlu0 %4335
      %4337 = vrot.lane.b32.xlu0 %v4249, 48
      %v4338 = vpop.permute.xlu0 %4337
      %4339 = vrot.lane.b32.xlu0 %v4250, 48
      %v4340 = vpop.permute.xlu0 %4339
      %4341 = vrot.lane.b32.xlu0 %v4251, 48
      %v4342 = vpop.permute.xlu0 %4341
      %4343 = vrot.lane.b32.xlu0 %v4252, 48
      %v4344 = vpop.permute.xlu0 %4343
      %4345 = vrot.lane.b32.xlu0 %v4253, 48
      %v4346 = vpop.permute.xlu0 %4345
      %4347 = vrot.lane.b32.xlu0 %v4254, 48
      %v4348 = vpop.permute.xlu0 %4347
      %4349 = vrot.lane.b32.xlu0 %v4255, 48
      %v4350 = vpop.permute.xlu0 %4349
      %4351 = vrot.lane.b32.xlu0 %v4256, 48
      %v4352 = vpop.permute.xlu0 %4351
      %4385 = vst.msk [vmem:[#allocation2 + $0x8] sm:$0xff] %vm1423, %v4290
      %4386 = vst.msk [vmem:[#allocation2 + $0x20] sm:$0xff] %vm1423, %v4292
      %4387 = vst.msk [vmem:[#allocation2 + $0x38] sm:$0xff] %vm1423, %v4294
      %4388 = vst.msk [vmem:[#allocation2 + $0x50] sm:$0xff] %vm1423, %v4296
      %4389 = vst.msk [vmem:[#allocation2 + $0x68] sm:$0xff] %vm1423, %v4298
      %4390 = vst.msk [vmem:[#allocation2 + $0x80] sm:$0xff] %vm1423, %v4300
      %4391 = vst.msk [vmem:[#allocation2 + $0x98] sm:$0xff] %vm1423, %v4302
      %4392 = vst.msk [vmem:[#allocation2 + $0xb0] sm:$0xff] %vm1423, %v4304
      %4393 = vst.msk [vmem:[#allocation2 + $0xc8] sm:$0xff] %vm1423, %v4306
      %4394 = vst.msk [vmem:[#allocation2 + $0xe0] sm:$0xff] %vm1423, %v4308
      %4395 = vst.msk [vmem:[#allocation2 + $0xf8] sm:$0xff] %vm1423, %v4310
      %4396 = vst.msk [vmem:[#allocation2 + $0x110] sm:$0xff] %vm1423, %v4312
      %4397 = vst.msk [vmem:[#allocation2 + $0x128] sm:$0xff] %vm1423, %v4314
      %4398 = vst.msk [vmem:[#allocation2 + $0x140] sm:$0xff] %vm1423, %v4316
      %4399 = vst.msk [vmem:[#allocation2 + $0x158] sm:$0xff] %vm1423, %v4318
      %4400 = vst.msk [vmem:[#allocation2 + $0x170] sm:$0xff] %vm1423, %v4320
      %4401 = vst.msk [vmem:[#allocation2 + $0x188] sm:$0xff] %vm1423, %v4322
      %4402 = vst.msk [vmem:[#allocation2 + $0x1a0] sm:$0xff] %vm1423, %v4324
      %4403 = vst.msk [vmem:[#allocation2 + $0x1b8] sm:$0xff] %vm1423, %v4326
      %4404 = vst.msk [vmem:[#allocation2 + $0x1d0] sm:$0xff] %vm1423, %v4328
      %4405 = vst.msk [vmem:[#allocation2 + $0x1e8] sm:$0xff] %vm1423, %v4330
      %4406 = vst.msk [vmem:[#allocation2 + $0x200] sm:$0xff] %vm1423, %v4332
      %4407 = vst.msk [vmem:[#allocation2 + $0x218] sm:$0xff] %vm1423, %v4334
      %4408 = vst.msk [vmem:[#allocation2 + $0x230] sm:$0xff] %vm1423, %v4336
      %4409 = vst.msk [vmem:[#allocation2 + $0x248] sm:$0xff] %vm1423, %v4338
      %4410 = vst.msk [vmem:[#allocation2 + $0x260] sm:$0xff] %vm1423, %v4340
      %4411 = vst.msk [vmem:[#allocation2 + $0x278] sm:$0xff] %vm1423, %v4342
      %4412 = vst.msk [vmem:[#allocation2 + $0x290] sm:$0xff] %vm1423, %v4344
      %4413 = vst.msk [vmem:[#allocation2 + $0x2a8] sm:$0xff] %vm1423, %v4346
      %4414 = vst.msk [vmem:[#allocation2 + $0x2c0] sm:$0xff] %vm1423, %v4348
      %4415 = vst.msk [vmem:[#allocation2 + $0x2d8] sm:$0xff] %vm1423, %v4350
      %4416 = vst.msk [vmem:[#allocation2 + $0x2f0] sm:$0xff] %vm1423, %v4352
      %v4417 = vld [vmem:[%s3840 + $0x3] sm:$0xff]
      %v4418 = vld [vmem:[%s3840 + $0x13] sm:$0xff]
      %v4419 = vld [vmem:[%s3840 + $0x23] sm:$0xff]
      %v4420 = vld [vmem:[%s3840 + $0x33] sm:$0xff]
      %v4421 = vld [vmem:[%s3840 + $0xa3] sm:$0xff]
      %v4422 = vld [vmem:[%s3840 + $0xb3] sm:$0xff]
      %v4423 = vld [vmem:[%s3840 + $0xc3] sm:$0xff]
      %v4424 = vld [vmem:[%s3840 + $0xd3] sm:$0xff]
      %v4425 = vld [vmem:[%s3840 + $0x143] sm:$0xff]
      %v4426 = vld [vmem:[%s3840 + $0x153] sm:$0xff]
      %v4427 = vld [vmem:[%s3840 + $0x163] sm:$0xff]
      %v4428 = vld [vmem:[%s3840 + $0x173] sm:$0xff]
      %v4429 = vld [vmem:[%s3840 + $0x1e3] sm:$0xff]
      %v4430 = vld [vmem:[%s3840 + $0x1f3] sm:$0xff]
      %v4431 = vld [vmem:[%s3840 + $0x203] sm:$0xff]
      %v4432 = vld [vmem:[%s3840 + $0x213] sm:$0xff]
      %v4433 = vld [vmem:[%s3840 + $0x283] sm:$0xff]
      %v4434 = vld [vmem:[%s3840 + $0x293] sm:$0xff]
      %v4435 = vld [vmem:[%s3840 + $0x2a3] sm:$0xff]
      %v4436 = vld [vmem:[%s3840 + $0x2b3] sm:$0xff]
      %v4437 = vld [vmem:[%s3840 + $0x323] sm:$0xff]
      %v4438 = vld [vmem:[%s3840 + $0x333] sm:$0xff]
      %v4439 = vld [vmem:[%s3840 + $0x343] sm:$0xff]
      %v4440 = vld [vmem:[%s3840 + $0x353] sm:$0xff]
      %v4441 = vld [vmem:[%s3840 + $0x3c3] sm:$0xff]
      %v4442 = vld [vmem:[%s3840 + $0x3d3] sm:$0xff]
      %v4443 = vld [vmem:[%s3840 + $0x3e3] sm:$0xff]
      %v4444 = vld [vmem:[%s3840 + $0x3f3] sm:$0xff]
      %v4445 = vld [vmem:[%s3840 + $0x463] sm:$0xff]
      %v4446 = vld [vmem:[%s3840 + $0x473] sm:$0xff]
      %v4447 = vld [vmem:[%s3840 + $0x483] sm:$0xff]
      %v4448 = vld [vmem:[%s3840 + $0x493] sm:$0xff]
      %4481 = vrot.lane.b32.xlu0 %v4417, 56
      %v4482 = vpop.permute.xlu0 %4481
      %4483 = vrot.lane.b32.xlu0 %v4418, 56
      %v4484 = vpop.permute.xlu0 %4483
      %4485 = vrot.lane.b32.xlu0 %v4419, 56
      %v4486 = vpop.permute.xlu0 %4485
      %4487 = vrot.lane.b32.xlu0 %v4420, 56
      %v4488 = vpop.permute.xlu0 %4487
      %4489 = vrot.lane.b32.xlu0 %v4421, 56
      %v4490 = vpop.permute.xlu0 %4489
      %4491 = vrot.lane.b32.xlu0 %v4422, 56
      %v4492 = vpop.permute.xlu0 %4491
      %4493 = vrot.lane.b32.xlu0 %v4423, 56
      %v4494 = vpop.permute.xlu0 %4493
      %4495 = vrot.lane.b32.xlu0 %v4424, 56
      %v4496 = vpop.permute.xlu0 %4495
      %4497 = vrot.lane.b32.xlu0 %v4425, 56
      %v4498 = vpop.permute.xlu0 %4497
      %4499 = vrot.lane.b32.xlu0 %v4426, 56
      %v4500 = vpop.permute.xlu0 %4499
      %4501 = vrot.lane.b32.xlu0 %v4427, 56
      %v4502 = vpop.permute.xlu0 %4501
      %4503 = vrot.lane.b32.xlu0 %v4428, 56
      %v4504 = vpop.permute.xlu0 %4503
      %4505 = vrot.lane.b32.xlu0 %v4429, 56
      %v4506 = vpop.permute.xlu0 %4505
      %4507 = vrot.lane.b32.xlu0 %v4430, 56
      %v4508 = vpop.permute.xlu0 %4507
      %4509 = vrot.lane.b32.xlu0 %v4431, 56
      %v4510 = vpop.permute.xlu0 %4509
      %4511 = vrot.lane.b32.xlu0 %v4432, 56
      %v4512 = vpop.permute.xlu0 %4511
      %4513 = vrot.lane.b32.xlu0 %v4433, 56
      %v4514 = vpop.permute.xlu0 %4513
      %4515 = vrot.lane.b32.xlu0 %v4434, 56
      %v4516 = vpop.permute.xlu0 %4515
      %4517 = vrot.lane.b32.xlu0 %v4435, 56
      %v4518 = vpop.permute.xlu0 %4517
      %4519 = vrot.lane.b32.xlu0 %v4436, 56
      %v4520 = vpop.permute.xlu0 %4519
      %4521 = vrot.lane.b32.xlu0 %v4437, 56
      %v4522 = vpop.permute.xlu0 %4521
      %4523 = vrot.lane.b32.xlu0 %v4438, 56
      %v4524 = vpop.permute.xlu0 %4523
      %4525 = vrot.lane.b32.xlu0 %v4439, 56
      %v4526 = vpop.permute.xlu0 %4525
      %4527 = vrot.lane.b32.xlu0 %v4440, 56
      %v4528 = vpop.permute.xlu0 %4527
      %4529 = vrot.lane.b32.xlu0 %v4441, 56
      %v4530 = vpop.permute.xlu0 %4529
      %4531 = vrot.lane.b32.xlu0 %v4442, 56
      %v4532 = vpop.permute.xlu0 %4531
      %4533 = vrot.lane.b32.xlu0 %v4443, 56
      %v4534 = vpop.permute.xlu0 %4533
      %4535 = vrot.lane.b32.xlu0 %v4444, 56
      %v4536 = vpop.permute.xlu0 %4535
      %4537 = vrot.lane.b32.xlu0 %v4445, 56
      %v4538 = vpop.permute.xlu0 %4537
      %4539 = vrot.lane.b32.xlu0 %v4446, 56
      %v4540 = vpop.permute.xlu0 %4539
      %4541 = vrot.lane.b32.xlu0 %v4447, 56
      %v4542 = vpop.permute.xlu0 %4541
      %4543 = vrot.lane.b32.xlu0 %v4448, 56
      %v4544 = vpop.permute.xlu0 %4543
      %4577 = vst.msk [vmem:[#allocation2 + $0x8] sm:$0xff] %vm1616, %v4482
      %4578 = vst.msk [vmem:[#allocation2 + $0x20] sm:$0xff] %vm1616, %v4484
      %4579 = vst.msk [vmem:[#allocation2 + $0x38] sm:$0xff] %vm1616, %v4486
      %4580 = vst.msk [vmem:[#allocation2 + $0x50] sm:$0xff] %vm1616, %v4488
      %4581 = vst.msk [vmem:[#allocation2 + $0x68] sm:$0xff] %vm1616, %v4490
      %4582 = vst.msk [vmem:[#allocation2 + $0x80] sm:$0xff] %vm1616, %v4492
      %4583 = vst.msk [vmem:[#allocation2 + $0x98] sm:$0xff] %vm1616, %v4494
      %4584 = vst.msk [vmem:[#allocation2 + $0xb0] sm:$0xff] %vm1616, %v4496
      %4585 = vst.msk [vmem:[#allocation2 + $0xc8] sm:$0xff] %vm1616, %v4498
      %4586 = vst.msk [vmem:[#allocation2 + $0xe0] sm:$0xff] %vm1616, %v4500
      %4587 = vst.msk [vmem:[#allocation2 + $0xf8] sm:$0xff] %vm1616, %v4502
      %4588 = vst.msk [vmem:[#allocation2 + $0x110] sm:$0xff] %vm1616, %v4504
      %4589 = vst.msk [vmem:[#allocation2 + $0x128] sm:$0xff] %vm1616, %v4506
      %4590 = vst.msk [vmem:[#allocation2 + $0x140] sm:$0xff] %vm1616, %v4508
      %4591 = vst.msk [vmem:[#allocation2 + $0x158] sm:$0xff] %vm1616, %v4510
      %4592 = vst.msk [vmem:[#allocation2 + $0x170] sm:$0xff] %vm1616, %v4512
      %4593 = vst.msk [vmem:[#allocation2 + $0x188] sm:$0xff] %vm1616, %v4514
      %4594 = vst.msk [vmem:[#allocation2 + $0x1a0] sm:$0xff] %vm1616, %v4516
      %4595 = vst.msk [vmem:[#allocation2 + $0x1b8] sm:$0xff] %vm1616, %v4518
      %4596 = vst.msk [vmem:[#allocation2 + $0x1d0] sm:$0xff] %vm1616, %v4520
      %4597 = vst.msk [vmem:[#allocation2 + $0x1e8] sm:$0xff] %vm1616, %v4522
      %4598 = vst.msk [vmem:[#allocation2 + $0x200] sm:$0xff] %vm1616, %v4524
      %4599 = vst.msk [vmem:[#allocation2 + $0x218] sm:$0xff] %vm1616, %v4526
      %4600 = vst.msk [vmem:[#allocation2 + $0x230] sm:$0xff] %vm1616, %v4528
      %4601 = vst.msk [vmem:[#allocation2 + $0x248] sm:$0xff] %vm1616, %v4530
      %4602 = vst.msk [vmem:[#allocation2 + $0x260] sm:$0xff] %vm1616, %v4532
      %4603 = vst.msk [vmem:[#allocation2 + $0x278] sm:$0xff] %vm1616, %v4534
      %4604 = vst.msk [vmem:[#allocation2 + $0x290] sm:$0xff] %vm1616, %v4536
      %4605 = vst.msk [vmem:[#allocation2 + $0x2a8] sm:$0xff] %vm1616, %v4538
      %4606 = vst.msk [vmem:[#allocation2 + $0x2c0] sm:$0xff] %vm1616, %v4540
      %4607 = vst.msk [vmem:[#allocation2 + $0x2d8] sm:$0xff] %vm1616, %v4542
      %4608 = vst.msk [vmem:[#allocation2 + $0x2f0] sm:$0xff] %vm1616, %v4544
      %v4609 = vld [vmem:[%s3840 + $0x4] sm:$0xff]
      %v4610 = vld [vmem:[%s3840 + $0x14] sm:$0xff]
      %v4611 = vld [vmem:[%s3840 + $0x24] sm:$0xff]
      %v4612 = vld [vmem:[%s3840 + $0x34] sm:$0xff]
      %v4613 = vld [vmem:[%s3840 + $0xa4] sm:$0xff]
      %v4614 = vld [vmem:[%s3840 + $0xb4] sm:$0xff]
      %v4615 = vld [vmem:[%s3840 + $0xc4] sm:$0xff]
      %v4616 = vld [vmem:[%s3840 + $0xd4] sm:$0xff]
      %v4617 = vld [vmem:[%s3840 + $0x144] sm:$0xff]
      %v4618 = vld [vmem:[%s3840 + $0x154] sm:$0xff]
      %v4619 = vld [vmem:[%s3840 + $0x164] sm:$0xff]
      %v4620 = vld [vmem:[%s3840 + $0x174] sm:$0xff]
      %v4621 = vld [vmem:[%s3840 + $0x1e4] sm:$0xff]
      %v4622 = vld [vmem:[%s3840 + $0x1f4] sm:$0xff]
      %v4623 = vld [vmem:[%s3840 + $0x204] sm:$0xff]
      %v4624 = vld [vmem:[%s3840 + $0x214] sm:$0xff]
      %v4625 = vld [vmem:[%s3840 + $0x284] sm:$0xff]
      %v4626 = vld [vmem:[%s3840 + $0x294] sm:$0xff]
      %v4627 = vld [vmem:[%s3840 + $0x2a4] sm:$0xff]
      %v4628 = vld [vmem:[%s3840 + $0x2b4] sm:$0xff]
      %v4629 = vld [vmem:[%s3840 + $0x324] sm:$0xff]
      %v4630 = vld [vmem:[%s3840 + $0x334] sm:$0xff]
      %v4631 = vld [vmem:[%s3840 + $0x344] sm:$0xff]
      %v4632 = vld [vmem:[%s3840 + $0x354] sm:$0xff]
      %v4633 = vld [vmem:[%s3840 + $0x3c4] sm:$0xff]
      %v4634 = vld [vmem:[%s3840 + $0x3d4] sm:$0xff]
      %v4635 = vld [vmem:[%s3840 + $0x3e4] sm:$0xff]
      %v4636 = vld [vmem:[%s3840 + $0x3f4] sm:$0xff]
      %v4637 = vld [vmem:[%s3840 + $0x464] sm:$0xff]
      %v4638 = vld [vmem:[%s3840 + $0x474] sm:$0xff]
      %v4639 = vld [vmem:[%s3840 + $0x484] sm:$0xff]
      %v4640 = vld [vmem:[%s3840 + $0x494] sm:$0xff]
      %4673 = vrot.lane.b32.xlu0 %v4609, 64
      %v4674 = vpop.permute.xlu0 %4673
      %4675 = vrot.lane.b32.xlu0 %v4610, 64
      %v4676 = vpop.permute.xlu0 %4675
      %4677 = vrot.lane.b32.xlu0 %v4611, 64
      %v4678 = vpop.permute.xlu0 %4677
      %4679 = vrot.lane.b32.xlu0 %v4612, 64
      %v4680 = vpop.permute.xlu0 %4679
      %4681 = vrot.lane.b32.xlu0 %v4613, 64
      %v4682 = vpop.permute.xlu0 %4681
      %4683 = vrot.lane.b32.xlu0 %v4614, 64
      %v4684 = vpop.permute.xlu0 %4683
      %4685 = vrot.lane.b32.xlu0 %v4615, 64
      %v4686 = vpop.permute.xlu0 %4685
      %4687 = vrot.lane.b32.xlu0 %v4616, 64
      %v4688 = vpop.permute.xlu0 %4687
      %4689 = vrot.lane.b32.xlu0 %v4617, 64
      %v4690 = vpop.permute.xlu0 %4689
      %4691 = vrot.lane.b32.xlu0 %v4618, 64
      %v4692 = vpop.permute.xlu0 %4691
      %4693 = vrot.lane.b32.xlu0 %v4619, 64
      %v4694 = vpop.permute.xlu0 %4693
      %4695 = vrot.lane.b32.xlu0 %v4620, 64
      %v4696 = vpop.permute.xlu0 %4695
      %4697 = vrot.lane.b32.xlu0 %v4621, 64
      %v4698 = vpop.permute.xlu0 %4697
      %4699 = vrot.lane.b32.xlu0 %v4622, 64
      %v4700 = vpop.permute.xlu0 %4699
      %4701 = vrot.lane.b32.xlu0 %v4623, 64
      %v4702 = vpop.permute.xlu0 %4701
      %4703 = vrot.lane.b32.xlu0 %v4624, 64
      %v4704 = vpop.permute.xlu0 %4703
      %4705 = vrot.lane.b32.xlu0 %v4625, 64
      %v4706 = vpop.permute.xlu0 %4705
      %4707 = vrot.lane.b32.xlu0 %v4626, 64
      %v4708 = vpop.permute.xlu0 %4707
      %4709 = vrot.lane.b32.xlu0 %v4627, 64
      %v4710 = vpop.permute.xlu0 %4709
      %4711 = vrot.lane.b32.xlu0 %v4628, 64
      %v4712 = vpop.permute.xlu0 %4711
      %4713 = vrot.lane.b32.xlu0 %v4629, 64
      %v4714 = vpop.permute.xlu0 %4713
      %4715 = vrot.lane.b32.xlu0 %v4630, 64
      %v4716 = vpop.permute.xlu0 %4715
      %4717 = vrot.lane.b32.xlu0 %v4631, 64
      %v4718 = vpop.permute.xlu0 %4717
      %4719 = vrot.lane.b32.xlu0 %v4632, 64
      %v4720 = vpop.permute.xlu0 %4719
      %4721 = vrot.lane.b32.xlu0 %v4633, 64
      %v4722 = vpop.permute.xlu0 %4721
      %4723 = vrot.lane.b32.xlu0 %v4634, 64
      %v4724 = vpop.permute.xlu0 %4723
      %4725 = vrot.lane.b32.xlu0 %v4635, 64
      %v4726 = vpop.permute.xlu0 %4725
      %4727 = vrot.lane.b32.xlu0 %v4636, 64
      %v4728 = vpop.permute.xlu0 %4727
      %4729 = vrot.lane.b32.xlu0 %v4637, 64
      %v4730 = vpop.permute.xlu0 %4729
      %4731 = vrot.lane.b32.xlu0 %v4638, 64
      %v4732 = vpop.permute.xlu0 %4731
      %4733 = vrot.lane.b32.xlu0 %v4639, 64
      %v4734 = vpop.permute.xlu0 %4733
      %4735 = vrot.lane.b32.xlu0 %v4640, 64
      %v4736 = vpop.permute.xlu0 %4735
      %4769 = vst.msk [vmem:[#allocation2 + $0x8] sm:$0xff] %vm1809, %v4674
      %4770 = vst.msk [vmem:[#allocation2 + $0x20] sm:$0xff] %vm1809, %v4676
      %4771 = vst.msk [vmem:[#allocation2 + $0x38] sm:$0xff] %vm1809, %v4678
      %4772 = vst.msk [vmem:[#allocation2 + $0x50] sm:$0xff] %vm1809, %v4680
      %4773 = vst.msk [vmem:[#allocation2 + $0x68] sm:$0xff] %vm1809, %v4682
      %4774 = vst.msk [vmem:[#allocation2 + $0x80] sm:$0xff] %vm1809, %v4684
      %4775 = vst.msk [vmem:[#allocation2 + $0x98] sm:$0xff] %vm1809, %v4686
      %4776 = vst.msk [vmem:[#allocation2 + $0xb0] sm:$0xff] %vm1809, %v4688
      %4777 = vst.msk [vmem:[#allocation2 + $0xc8] sm:$0xff] %vm1809, %v4690
      %4778 = vst.msk [vmem:[#allocation2 + $0xe0] sm:$0xff] %vm1809, %v4692
      %4779 = vst.msk [vmem:[#allocation2 + $0xf8] sm:$0xff] %vm1809, %v4694
      %4780 = vst.msk [vmem:[#allocation2 + $0x110] sm:$0xff] %vm1809, %v4696
      %4781 = vst.msk [vmem:[#allocation2 + $0x128] sm:$0xff] %vm1809, %v4698
      %4782 = vst.msk [vmem:[#allocation2 + $0x140] sm:$0xff] %vm1809, %v4700
      %4783 = vst.msk [vmem:[#allocation2 + $0x158] sm:$0xff] %vm1809, %v4702
      %4784 = vst.msk [vmem:[#allocation2 + $0x170] sm:$0xff] %vm1809, %v4704
      %4785 = vst.msk [vmem:[#allocation2 + $0x188] sm:$0xff] %vm1809, %v4706
      %4786 = vst.msk [vmem:[#allocation2 + $0x1a0] sm:$0xff] %vm1809, %v4708
      %4787 = vst.msk [vmem:[#allocation2 + $0x1b8] sm:$0xff] %vm1809, %v4710
      %4788 = vst.msk [vmem:[#allocation2 + $0x1d0] sm:$0xff] %vm1809, %v4712
      %4789 = vst.msk [vmem:[#allocation2 + $0x1e8] sm:$0xff] %vm1809, %v4714
      %4790 = vst.msk [vmem:[#allocation2 + $0x200] sm:$0xff] %vm1809, %v4716
      %4791 = vst.msk [vmem:[#allocation2 + $0x218] sm:$0xff] %vm1809, %v4718
      %4792 = vst.msk [vmem:[#allocation2 + $0x230] sm:$0xff] %vm1809, %v4720
      %4793 = vst.msk [vmem:[#allocation2 + $0x248] sm:$0xff] %vm1809, %v4722
      %4794 = vst.msk [vmem:[#allocation2 + $0x260] sm:$0xff] %vm1809, %v4724
      %4795 = vst.msk [vmem:[#allocation2 + $0x278] sm:$0xff] %vm1809, %v4726
      %4796 = vst.msk [vmem:[#allocation2 + $0x290] sm:$0xff] %vm1809, %v4728
      %4797 = vst.msk [vmem:[#allocation2 + $0x2a8] sm:$0xff] %vm1809, %v4730
      %4798 = vst.msk [vmem:[#allocation2 + $0x2c0] sm:$0xff] %vm1809, %v4732
      %4799 = vst.msk [vmem:[#allocation2 + $0x2d8] sm:$0xff] %vm1809, %v4734
      %4800 = vst.msk [vmem:[#allocation2 + $0x2f0] sm:$0xff] %vm1809, %v4736
      %s4801 = sadd.s32 64, %s3003
      %s4802 = scalar_lea.vmem %s183, %s4801
      %v4803 = vld [vmem:[%s4802] sm:$0xff]
      %v4804 = vld [vmem:[%s4802 + $0x10] sm:$0xff]
      %v4805 = vld [vmem:[%s4802 + $0x20] sm:$0xff]
      %v4806 = vld [vmem:[%s4802 + $0x30] sm:$0xff]
      %v4807 = vld [vmem:[%s4802 + $0xa0] sm:$0xff]
      %v4808 = vld [vmem:[%s4802 + $0xb0] sm:$0xff]
      %v4809 = vld [vmem:[%s4802 + $0xc0] sm:$0xff]
      %v4810 = vld [vmem:[%s4802 + $0xd0] sm:$0xff]
      %v4811 = vld [vmem:[%s4802 + $0x140] sm:$0xff]
      %v4812 = vld [vmem:[%s4802 + $0x150] sm:$0xff]
      %v4813 = vld [vmem:[%s4802 + $0x160] sm:$0xff]
      %v4814 = vld [vmem:[%s4802 + $0x170] sm:$0xff]
      %v4815 = vld [vmem:[%s4802 + $0x1e0] sm:$0xff]
      %v4816 = vld [vmem:[%s4802 + $0x1f0] sm:$0xff]
      %v4817 = vld [vmem:[%s4802 + $0x200] sm:$0xff]
      %v4818 = vld [vmem:[%s4802 + $0x210] sm:$0xff]
      %v4819 = vld [vmem:[%s4802 + $0x280] sm:$0xff]
      %v4820 = vld [vmem:[%s4802 + $0x290] sm:$0xff]
      %v4821 = vld [vmem:[%s4802 + $0x2a0] sm:$0xff]
      %v4822 = vld [vmem:[%s4802 + $0x2b0] sm:$0xff]
      %v4823 = vld [vmem:[%s4802 + $0x320] sm:$0xff]
      %v4824 = vld [vmem:[%s4802 + $0x330] sm:$0xff]
      %v4825 = vld [vmem:[%s4802 + $0x340] sm:$0xff]
      %v4826 = vld [vmem:[%s4802 + $0x350] sm:$0xff]
      %v4827 = vld [vmem:[%s4802 + $0x3c0] sm:$0xff]
      %v4828 = vld [vmem:[%s4802 + $0x3d0] sm:$0xff]
      %v4829 = vld [vmem:[%s4802 + $0x3e0] sm:$0xff]
      %v4830 = vld [vmem:[%s4802 + $0x3f0] sm:$0xff]
      %v4831 = vld [vmem:[%s4802 + $0x460] sm:$0xff]
      %v4832 = vld [vmem:[%s4802 + $0x470] sm:$0xff]
      %v4833 = vld [vmem:[%s4802 + $0x480] sm:$0xff]
      %v4834 = vld [vmem:[%s4802 + $0x490] sm:$0xff]
      %4867 = vrot.lane.b32.xlu0 %v4803, 72
      %v4868 = vpop.permute.xlu0 %4867
      %4869 = vrot.lane.b32.xlu0 %v4804, 72
      %v4870 = vpop.permute.xlu0 %4869
      %4871 = vrot.lane.b32.xlu0 %v4805, 72
      %v4872 = vpop.permute.xlu0 %4871
      %4873 = vrot.lane.b32.xlu0 %v4806, 72
      %v4874 = vpop.permute.xlu0 %4873
      %4875 = vrot.lane.b32.xlu0 %v4807, 72
      %v4876 = vpop.permute.xlu0 %4875
      %4877 = vrot.lane.b32.xlu0 %v4808, 72
      %v4878 = vpop.permute.xlu0 %4877
      %4879 = vrot.lane.b32.xlu0 %v4809, 72
      %v4880 = vpop.permute.xlu0 %4879
      %4881 = vrot.lane.b32.xlu0 %v4810, 72
      %v4882 = vpop.permute.xlu0 %4881
      %4883 = vrot.lane.b32.xlu0 %v4811, 72
      %v4884 = vpop.permute.xlu0 %4883
      %4885 = vrot.lane.b32.xlu0 %v4812, 72
      %v4886 = vpop.permute.xlu0 %4885
      %4887 = vrot.lane.b32.xlu0 %v4813, 72
      %v4888 = vpop.permute.xlu0 %4887
      %4889 = vrot.lane.b32.xlu0 %v4814, 72
      %v4890 = vpop.permute.xlu0 %4889
      %4891 = vrot.lane.b32.xlu0 %v4815, 72
      %v4892 = vpop.permute.xlu0 %4891
      %4893 = vrot.lane.b32.xlu0 %v4816, 72
      %v4894 = vpop.permute.xlu0 %4893
      %4895 = vrot.lane.b32.xlu0 %v4817, 72
      %v4896 = vpop.permute.xlu0 %4895
      %4897 = vrot.lane.b32.xlu0 %v4818, 72
      %v4898 = vpop.permute.xlu0 %4897
      %4899 = vrot.lane.b32.xlu0 %v4819, 72
      %v4900 = vpop.permute.xlu0 %4899
      %4901 = vrot.lane.b32.xlu0 %v4820, 72
      %v4902 = vpop.permute.xlu0 %4901
      %4903 = vrot.lane.b32.xlu0 %v4821, 72
      %v4904 = vpop.permute.xlu0 %4903
      %4905 = vrot.lane.b32.xlu0 %v4822, 72
      %v4906 = vpop.permute.xlu0 %4905
      %4907 = vrot.lane.b32.xlu0 %v4823, 72
      %v4908 = vpop.permute.xlu0 %4907
      %4909 = vrot.lane.b32.xlu0 %v4824, 72
      %v4910 = vpop.permute.xlu0 %4909
      %4911 = vrot.lane.b32.xlu0 %v4825, 72
      %v4912 = vpop.permute.xlu0 %4911
      %4913 = vrot.lane.b32.xlu0 %v4826, 72
      %v4914 = vpop.permute.xlu0 %4913
      %4915 = vrot.lane.b32.xlu0 %v4827, 72
      %v4916 = vpop.permute.xlu0 %4915
      %4917 = vrot.lane.b32.xlu0 %v4828, 72
      %v4918 = vpop.permute.xlu0 %4917
      %4919 = vrot.lane.b32.xlu0 %v4829, 72
      %v4920 = vpop.permute.xlu0 %4919
      %4921 = vrot.lane.b32.xlu0 %v4830, 72
      %v4922 = vpop.permute.xlu0 %4921
      %4923 = vrot.lane.b32.xlu0 %v4831, 72
      %v4924 = vpop.permute.xlu0 %4923
      %4925 = vrot.lane.b32.xlu0 %v4832, 72
      %v4926 = vpop.permute.xlu0 %4925
      %4927 = vrot.lane.b32.xlu0 %v4833, 72
      %v4928 = vpop.permute.xlu0 %4927
      %4929 = vrot.lane.b32.xlu0 %v4834, 72
      %v4930 = vpop.permute.xlu0 %4929
      %4963 = vst.msk [vmem:[#allocation2 + $0x8] sm:$0xff] %vm2002, %v4868
      %4964 = vst.msk [vmem:[#allocation2 + $0x20] sm:$0xff] %vm2002, %v4870
      %4965 = vst.msk [vmem:[#allocation2 + $0x38] sm:$0xff] %vm2002, %v4872
      %4966 = vst.msk [vmem:[#allocation2 + $0x50] sm:$0xff] %vm2002, %v4874
      %4967 = vst.msk [vmem:[#allocation2 + $0x68] sm:$0xff] %vm2002, %v4876
      %4968 = vst.msk [vmem:[#allocation2 + $0x80] sm:$0xff] %vm2002, %v4878
      %4969 = vst.msk [vmem:[#allocation2 + $0x98] sm:$0xff] %vm2002, %v4880
      %4970 = vst.msk [vmem:[#allocation2 + $0xb0] sm:$0xff] %vm2002, %v4882
      %4971 = vst.msk [vmem:[#allocation2 + $0xc8] sm:$0xff] %vm2002, %v4884
      %4972 = vst.msk [vmem:[#allocation2 + $0xe0] sm:$0xff] %vm2002, %v4886
      %4973 = vst.msk [vmem:[#allocation2 + $0xf8] sm:$0xff] %vm2002, %v4888
      %4974 = vst.msk [vmem:[#allocation2 + $0x110] sm:$0xff] %vm2002, %v4890
      %4975 = vst.msk [vmem:[#allocation2 + $0x128] sm:$0xff] %vm2002, %v4892
      %4976 = vst.msk [vmem:[#allocation2 + $0x140] sm:$0xff] %vm2002, %v4894
      %4977 = vst.msk [vmem:[#allocation2 + $0x158] sm:$0xff] %vm2002, %v4896
      %4978 = vst.msk [vmem:[#allocation2 + $0x170] sm:$0xff] %vm2002, %v4898
      %4979 = vst.msk [vmem:[#allocation2 + $0x188] sm:$0xff] %vm2002, %v4900
      %4980 = vst.msk [vmem:[#allocation2 + $0x1a0] sm:$0xff] %vm2002, %v4902
      %4981 = vst.msk [vmem:[#allocation2 + $0x1b8] sm:$0xff] %vm2002, %v4904
      %4982 = vst.msk [vmem:[#allocation2 + $0x1d0] sm:$0xff] %vm2002, %v4906
      %4983 = vst.msk [vmem:[#allocation2 + $0x1e8] sm:$0xff] %vm2002, %v4908
      %4984 = vst.msk [vmem:[#allocation2 + $0x200] sm:$0xff] %vm2002, %v4910
      %4985 = vst.msk [vmem:[#allocation2 + $0x218] sm:$0xff] %vm2002, %v4912
      %4986 = vst.msk [vmem:[#allocation2 + $0x230] sm:$0xff] %vm2002, %v4914
      %4987 = vst.msk [vmem:[#allocation2 + $0x248] sm:$0xff] %vm2002, %v4916
      %4988 = vst.msk [vmem:[#allocation2 + $0x260] sm:$0xff] %vm2002, %v4918
      %4989 = vst.msk [vmem:[#allocation2 + $0x278] sm:$0xff] %vm2002, %v4920
      %4990 = vst.msk [vmem:[#allocation2 + $0x290] sm:$0xff] %vm2002, %v4922
      %4991 = vst.msk [vmem:[#allocation2 + $0x2a8] sm:$0xff] %vm2002, %v4924
      %4992 = vst.msk [vmem:[#allocation2 + $0x2c0] sm:$0xff] %vm2002, %v4926
      %4993 = vst.msk [vmem:[#allocation2 + $0x2d8] sm:$0xff] %vm2002, %v4928
      %4994 = vst.msk [vmem:[#allocation2 + $0x2f0] sm:$0xff] %vm2002, %v4930
      %v4995 = vld [vmem:[%s4802 + $0x1] sm:$0xff]
      %v4996 = vld [vmem:[%s4802 + $0x11] sm:$0xff]
      %v4997 = vld [vmem:[%s4802 + $0x21] sm:$0xff]
      %v4998 = vld [vmem:[%s4802 + $0x31] sm:$0xff]
      %v4999 = vld [vmem:[%s4802 + $0xa1] sm:$0xff]
      %v5000 = vld [vmem:[%s4802 + $0xb1] sm:$0xff]
      %v5001 = vld [vmem:[%s4802 + $0xc1] sm:$0xff]
      %v5002 = vld [vmem:[%s4802 + $0xd1] sm:$0xff]
      %v5003 = vld [vmem:[%s4802 + $0x141] sm:$0xff]
      %v5004 = vld [vmem:[%s4802 + $0x151] sm:$0xff]
      %v5005 = vld [vmem:[%s4802 + $0x161] sm:$0xff]
      %v5006 = vld [vmem:[%s4802 + $0x171] sm:$0xff]
      %v5007 = vld [vmem:[%s4802 + $0x1e1] sm:$0xff]
      %v5008 = vld [vmem:[%s4802 + $0x1f1] sm:$0xff]
      %v5009 = vld [vmem:[%s4802 + $0x201] sm:$0xff]
      %v5010 = vld [vmem:[%s4802 + $0x211] sm:$0xff]
      %v5011 = vld [vmem:[%s4802 + $0x281] sm:$0xff]
      %v5012 = vld [vmem:[%s4802 + $0x291] sm:$0xff]
      %v5013 = vld [vmem:[%s4802 + $0x2a1] sm:$0xff]
      %v5014 = vld [vmem:[%s4802 + $0x2b1] sm:$0xff]
      %v5015 = vld [vmem:[%s4802 + $0x321] sm:$0xff]
      %v5016 = vld [vmem:[%s4802 + $0x331] sm:$0xff]
      %v5017 = vld [vmem:[%s4802 + $0x341] sm:$0xff]
      %v5018 = vld [vmem:[%s4802 + $0x351] sm:$0xff]
      %v5019 = vld [vmem:[%s4802 + $0x3c1] sm:$0xff]
      %v5020 = vld [vmem:[%s4802 + $0x3d1] sm:$0xff]
      %v5021 = vld [vmem:[%s4802 + $0x3e1] sm:$0xff]
      %v5022 = vld [vmem:[%s4802 + $0x3f1] sm:$0xff]
      %v5023 = vld [vmem:[%s4802 + $0x461] sm:$0xff]
      %v5024 = vld [vmem:[%s4802 + $0x471] sm:$0xff]
      %v5025 = vld [vmem:[%s4802 + $0x481] sm:$0xff]
      %v5026 = vld [vmem:[%s4802 + $0x491] sm:$0xff]
      %5059 = vrot.lane.b32.xlu0 %v4995, 80
      %v5060 = vpop.permute.xlu0 %5059
      %5061 = vrot.lane.b32.xlu0 %v4996, 80
      %v5062 = vpop.permute.xlu0 %5061
      %5063 = vrot.lane.b32.xlu0 %v4997, 80
      %v5064 = vpop.permute.xlu0 %5063
      %5065 = vrot.lane.b32.xlu0 %v4998, 80
      %v5066 = vpop.permute.xlu0 %5065
      %5067 = vrot.lane.b32.xlu0 %v4999, 80
      %v5068 = vpop.permute.xlu0 %5067
      %5069 = vrot.lane.b32.xlu0 %v5000, 80
      %v5070 = vpop.permute.xlu0 %5069
      %5071 = vrot.lane.b32.xlu0 %v5001, 80
      %v5072 = vpop.permute.xlu0 %5071
      %5073 = vrot.lane.b32.xlu0 %v5002, 80
      %v5074 = vpop.permute.xlu0 %5073
      %5075 = vrot.lane.b32.xlu0 %v5003, 80
      %v5076 = vpop.permute.xlu0 %5075
      %5077 = vrot.lane.b32.xlu0 %v5004, 80
      %v5078 = vpop.permute.xlu0 %5077
      %5079 = vrot.lane.b32.xlu0 %v5005, 80
      %v5080 = vpop.permute.xlu0 %5079
      %5081 = vrot.lane.b32.xlu0 %v5006, 80
      %v5082 = vpop.permute.xlu0 %5081
      %5083 = vrot.lane.b32.xlu0 %v5007, 80
      %v5084 = vpop.permute.xlu0 %5083
      %5085 = vrot.lane.b32.xlu0 %v5008, 80
      %v5086 = vpop.permute.xlu0 %5085
      %5087 = vrot.lane.b32.xlu0 %v5009, 80
      %v5088 = vpop.permute.xlu0 %5087
      %5089 = vrot.lane.b32.xlu0 %v5010, 80
      %v5090 = vpop.permute.xlu0 %5089
      %5091 = vrot.lane.b32.xlu0 %v5011, 80
      %v5092 = vpop.permute.xlu0 %5091
      %5093 = vrot.lane.b32.xlu0 %v5012, 80
      %v5094 = vpop.permute.xlu0 %5093
      %5095 = vrot.lane.b32.xlu0 %v5013, 80
      %v5096 = vpop.permute.xlu0 %5095
      %5097 = vrot.lane.b32.xlu0 %v5014, 80
      %v5098 = vpop.permute.xlu0 %5097
      %5099 = vrot.lane.b32.xlu0 %v5015, 80
      %v5100 = vpop.permute.xlu0 %5099
      %5101 = vrot.lane.b32.xlu0 %v5016, 80
      %v5102 = vpop.permute.xlu0 %5101
      %5103 = vrot.lane.b32.xlu0 %v5017, 80
      %v5104 = vpop.permute.xlu0 %5103
      %5105 = vrot.lane.b32.xlu0 %v5018, 80
      %v5106 = vpop.permute.xlu0 %5105
      %5107 = vrot.lane.b32.xlu0 %v5019, 80
      %v5108 = vpop.permute.xlu0 %5107
      %5109 = vrot.lane.b32.xlu0 %v5020, 80
      %v5110 = vpop.permute.xlu0 %5109
      %5111 = vrot.lane.b32.xlu0 %v5021, 80
      %v5112 = vpop.permute.xlu0 %5111
      %5113 = vrot.lane.b32.xlu0 %v5022, 80
      %v5114 = vpop.permute.xlu0 %5113
      %5115 = vrot.lane.b32.xlu0 %v5023, 80
      %v5116 = vpop.permute.xlu0 %5115
      %5117 = vrot.lane.b32.xlu0 %v5024, 80
      %v5118 = vpop.permute.xlu0 %5117
      %5119 = vrot.lane.b32.xlu0 %v5025, 80
      %v5120 = vpop.permute.xlu0 %5119
      %5121 = vrot.lane.b32.xlu0 %v5026, 80
      %v5122 = vpop.permute.xlu0 %5121
      %5155 = vst.msk [vmem:[#allocation2 + $0x8] sm:$0xff] %vm2197, %v5060
      %5156 = vst.msk [vmem:[#allocation2 + $0x20] sm:$0xff] %vm2197, %v5062
      %5157 = vst.msk [vmem:[#allocation2 + $0x38] sm:$0xff] %vm2197, %v5064
      %5158 = vst.msk [vmem:[#allocation2 + $0x50] sm:$0xff] %vm2197, %v5066
      %5159 = vst.msk [vmem:[#allocation2 + $0x68] sm:$0xff] %vm2197, %v5068
      %5160 = vst.msk [vmem:[#allocation2 + $0x80] sm:$0xff] %vm2197, %v5070
      %5161 = vst.msk [vmem:[#allocation2 + $0x98] sm:$0xff] %vm2197, %v5072
      %5162 = vst.msk [vmem:[#allocation2 + $0xb0] sm:$0xff] %vm2197, %v5074
      %5163 = vst.msk [vmem:[#allocation2 + $0xc8] sm:$0xff] %vm2197, %v5076
      %5164 = vst.msk [vmem:[#allocation2 + $0xe0] sm:$0xff] %vm2197, %v5078
      %5165 = vst.msk [vmem:[#allocation2 + $0xf8] sm:$0xff] %vm2197, %v5080
      %5166 = vst.msk [vmem:[#allocation2 + $0x110] sm:$0xff] %vm2197, %v5082
      %5167 = vst.msk [vmem:[#allocation2 + $0x128] sm:$0xff] %vm2197, %v5084
      %5168 = vst.msk [vmem:[#allocation2 + $0x140] sm:$0xff] %vm2197, %v5086
      %5169 = vst.msk [vmem:[#allocation2 + $0x158] sm:$0xff] %vm2197, %v5088
      %5170 = vst.msk [vmem:[#allocation2 + $0x170] sm:$0xff] %vm2197, %v5090
      %5171 = vst.msk [vmem:[#allocation2 + $0x188] sm:$0xff] %vm2197, %v5092
      %5172 = vst.msk [vmem:[#allocation2 + $0x1a0] sm:$0xff] %vm2197, %v5094
      %5173 = vst.msk [vmem:[#allocation2 + $0x1b8] sm:$0xff] %vm2197, %v5096
      %5174 = vst.msk [vmem:[#allocation2 + $0x1d0] sm:$0xff] %vm2197, %v5098
      %5175 = vst.msk [vmem:[#allocation2 + $0x1e8] sm:$0xff] %vm2197, %v5100
      %5176 = vst.msk [vmem:[#allocation2 + $0x200] sm:$0xff] %vm2197, %v5102
      %5177 = vst.msk [vmem:[#allocation2 + $0x218] sm:$0xff] %vm2197, %v5104
      %5178 = vst.msk [vmem:[#allocation2 + $0x230] sm:$0xff] %vm2197, %v5106
      %5179 = vst.msk [vmem:[#allocation2 + $0x248] sm:$0xff] %vm2197, %v5108
      %5180 = vst.msk [vmem:[#allocation2 + $0x260] sm:$0xff] %vm2197, %v5110
      %5181 = vst.msk [vmem:[#allocation2 + $0x278] sm:$0xff] %vm2197, %v5112
      %5182 = vst.msk [vmem:[#allocation2 + $0x290] sm:$0xff] %vm2197, %v5114
      %5183 = vst.msk [vmem:[#allocation2 + $0x2a8] sm:$0xff] %vm2197, %v5116
      %5184 = vst.msk [vmem:[#allocation2 + $0x2c0] sm:$0xff] %vm2197, %v5118
      %5185 = vst.msk [vmem:[#allocation2 + $0x2d8] sm:$0xff] %vm2197, %v5120
      %5186 = vst.msk [vmem:[#allocation2 + $0x2f0] sm:$0xff] %vm2197, %v5122
      %v5187 = vld [vmem:[%s4802 + $0x2] sm:$0xff]
      %v5188 = vld [vmem:[%s4802 + $0x12] sm:$0xff]
      %v5189 = vld [vmem:[%s4802 + $0x22] sm:$0xff]
      %v5190 = vld [vmem:[%s4802 + $0x32] sm:$0xff]
      %v5191 = vld [vmem:[%s4802 + $0xa2] sm:$0xff]
      %v5192 = vld [vmem:[%s4802 + $0xb2] sm:$0xff]
      %v5193 = vld [vmem:[%s4802 + $0xc2] sm:$0xff]
      %v5194 = vld [vmem:[%s4802 + $0xd2] sm:$0xff]
      %v5195 = vld [vmem:[%s4802 + $0x142] sm:$0xff]
      %v5196 = vld [vmem:[%s4802 + $0x152] sm:$0xff]
      %v5197 = vld [vmem:[%s4802 + $0x162] sm:$0xff]
      %v5198 = vld [vmem:[%s4802 + $0x172] sm:$0xff]
      %v5199 = vld [vmem:[%s4802 + $0x1e2] sm:$0xff]
      %v5200 = vld [vmem:[%s4802 + $0x1f2] sm:$0xff]
      %v5201 = vld [vmem:[%s4802 + $0x202] sm:$0xff]
      %v5202 = vld [vmem:[%s4802 + $0x212] sm:$0xff]
      %v5203 = vld [vmem:[%s4802 + $0x282] sm:$0xff]
      %v5204 = vld [vmem:[%s4802 + $0x292] sm:$0xff]
      %v5205 = vld [vmem:[%s4802 + $0x2a2] sm:$0xff]
      %v5206 = vld [vmem:[%s4802 + $0x2b2] sm:$0xff]
      %v5207 = vld [vmem:[%s4802 + $0x322] sm:$0xff]
      %v5208 = vld [vmem:[%s4802 + $0x332] sm:$0xff]
      %v5209 = vld [vmem:[%s4802 + $0x342] sm:$0xff]
      %v5210 = vld [vmem:[%s4802 + $0x352] sm:$0xff]
      %v5211 = vld [vmem:[%s4802 + $0x3c2] sm:$0xff]
      %v5212 = vld [vmem:[%s4802 + $0x3d2] sm:$0xff]
      %v5213 = vld [vmem:[%s4802 + $0x3e2] sm:$0xff]
      %v5214 = vld [vmem:[%s4802 + $0x3f2] sm:$0xff]
      %v5215 = vld [vmem:[%s4802 + $0x462] sm:$0xff]
      %v5216 = vld [vmem:[%s4802 + $0x472] sm:$0xff]
      %v5217 = vld [vmem:[%s4802 + $0x482] sm:$0xff]
      %v5218 = vld [vmem:[%s4802 + $0x492] sm:$0xff]
      %5251 = vrot.lane.b32.xlu0 %v5187, 88
      %v5252 = vpop.permute.xlu0 %5251
      %5253 = vrot.lane.b32.xlu0 %v5188, 88
      %v5254 = vpop.permute.xlu0 %5253
      %5255 = vrot.lane.b32.xlu0 %v5189, 88
      %v5256 = vpop.permute.xlu0 %5255
      %5257 = vrot.lane.b32.xlu0 %v5190, 88
      %v5258 = vpop.permute.xlu0 %5257
      %5259 = vrot.lane.b32.xlu0 %v5191, 88
      %v5260 = vpop.permute.xlu0 %5259
      %5261 = vrot.lane.b32.xlu0 %v5192, 88
      %v5262 = vpop.permute.xlu0 %5261
      %5263 = vrot.lane.b32.xlu0 %v5193, 88
      %v5264 = vpop.permute.xlu0 %5263
      %5265 = vrot.lane.b32.xlu0 %v5194, 88
      %v5266 = vpop.permute.xlu0 %5265
      %5267 = vrot.lane.b32.xlu0 %v5195, 88
      %v5268 = vpop.permute.xlu0 %5267
      %5269 = vrot.lane.b32.xlu0 %v5196, 88
      %v5270 = vpop.permute.xlu0 %5269
      %5271 = vrot.lane.b32.xlu0 %v5197, 88
      %v5272 = vpop.permute.xlu0 %5271
      %5273 = vrot.lane.b32.xlu0 %v5198, 88
      %v5274 = vpop.permute.xlu0 %5273
      %5275 = vrot.lane.b32.xlu0 %v5199, 88
      %v5276 = vpop.permute.xlu0 %5275
      %5277 = vrot.lane.b32.xlu0 %v5200, 88
      %v5278 = vpop.permute.xlu0 %5277
      %5279 = vrot.lane.b32.xlu0 %v5201, 88
      %v5280 = vpop.permute.xlu0 %5279
      %5281 = vrot.lane.b32.xlu0 %v5202, 88
      %v5282 = vpop.permute.xlu0 %5281
      %5283 = vrot.lane.b32.xlu0 %v5203, 88
      %v5284 = vpop.permute.xlu0 %5283
      %5285 = vrot.lane.b32.xlu0 %v5204, 88
      %v5286 = vpop.permute.xlu0 %5285
      %5287 = vrot.lane.b32.xlu0 %v5205, 88
      %v5288 = vpop.permute.xlu0 %5287
      %5289 = vrot.lane.b32.xlu0 %v5206, 88
      %v5290 = vpop.permute.xlu0 %5289
      %5291 = vrot.lane.b32.xlu0 %v5207, 88
      %v5292 = vpop.permute.xlu0 %5291
      %5293 = vrot.lane.b32.xlu0 %v5208, 88
      %v5294 = vpop.permute.xlu0 %5293
      %5295 = vrot.lane.b32.xlu0 %v5209, 88
      %v5296 = vpop.permute.xlu0 %5295
      %5297 = vrot.lane.b32.xlu0 %v5210, 88
      %v5298 = vpop.permute.xlu0 %5297
      %5299 = vrot.lane.b32.xlu0 %v5211, 88
      %v5300 = vpop.permute.xlu0 %5299
      %5301 = vrot.lane.b32.xlu0 %v5212, 88
      %v5302 = vpop.permute.xlu0 %5301
      %5303 = vrot.lane.b32.xlu0 %v5213, 88
      %v5304 = vpop.permute.xlu0 %5303
      %5305 = vrot.lane.b32.xlu0 %v5214, 88
      %v5306 = vpop.permute.xlu0 %5305
      %5307 = vrot.lane.b32.xlu0 %v5215, 88
      %v5308 = vpop.permute.xlu0 %5307
      %5309 = vrot.lane.b32.xlu0 %v5216, 88
      %v5310 = vpop.permute.xlu0 %5309
      %5311 = vrot.lane.b32.xlu0 %v5217, 88
      %v5312 = vpop.permute.xlu0 %5311
      %5313 = vrot.lane.b32.xlu0 %v5218, 88
      %v5314 = vpop.permute.xlu0 %5313
      %5347 = vst.msk [vmem:[#allocation2 + $0x8] sm:$0xff] %vm2390, %v5252
      %5348 = vst.msk [vmem:[#allocation2 + $0x20] sm:$0xff] %vm2390, %v5254
      %5349 = vst.msk [vmem:[#allocation2 + $0x38] sm:$0xff] %vm2390, %v5256
      %5350 = vst.msk [vmem:[#allocation2 + $0x50] sm:$0xff] %vm2390, %v5258
      %5351 = vst.msk [vmem:[#allocation2 + $0x68] sm:$0xff] %vm2390, %v5260
      %5352 = vst.msk [vmem:[#allocation2 + $0x80] sm:$0xff] %vm2390, %v5262
      %5353 = vst.msk [vmem:[#allocation2 + $0x98] sm:$0xff] %vm2390, %v5264
      %5354 = vst.msk [vmem:[#allocation2 + $0xb0] sm:$0xff] %vm2390, %v5266
      %5355 = vst.msk [vmem:[#allocation2 + $0xc8] sm:$0xff] %vm2390, %v5268
      %5356 = vst.msk [vmem:[#allocation2 + $0xe0] sm:$0xff] %vm2390, %v5270
      %5357 = vst.msk [vmem:[#allocation2 + $0xf8] sm:$0xff] %vm2390, %v5272
      %5358 = vst.msk [vmem:[#allocation2 + $0x110] sm:$0xff] %vm2390, %v5274
      %5359 = vst.msk [vmem:[#allocation2 + $0x128] sm:$0xff] %vm2390, %v5276
      %5360 = vst.msk [vmem:[#allocation2 + $0x140] sm:$0xff] %vm2390, %v5278
      %5361 = vst.msk [vmem:[#allocation2 + $0x158] sm:$0xff] %vm2390, %v5280
      %5362 = vst.msk [vmem:[#allocation2 + $0x170] sm:$0xff] %vm2390, %v5282
      %5363 = vst.msk [vmem:[#allocation2 + $0x188] sm:$0xff] %vm2390, %v5284
      %5364 = vst.msk [vmem:[#allocation2 + $0x1a0] sm:$0xff] %vm2390, %v5286
      %5365 = vst.msk [vmem:[#allocation2 + $0x1b8] sm:$0xff] %vm2390, %v5288
      %5366 = vst.msk [vmem:[#allocation2 + $0x1d0] sm:$0xff] %vm2390, %v5290
      %5367 = vst.msk [vmem:[#allocation2 + $0x1e8] sm:$0xff] %vm2390, %v5292
      %5368 = vst.msk [vmem:[#allocation2 + $0x200] sm:$0xff] %vm2390, %v5294
      %5369 = vst.msk [vmem:[#allocation2 + $0x218] sm:$0xff] %vm2390, %v5296
      %5370 = vst.msk [vmem:[#allocation2 + $0x230] sm:$0xff] %vm2390, %v5298
      %5371 = vst.msk [vmem:[#allocation2 + $0x248] sm:$0xff] %vm2390, %v5300
      %5372 = vst.msk [vmem:[#allocation2 + $0x260] sm:$0xff] %vm2390, %v5302
      %5373 = vst.msk [vmem:[#allocation2 + $0x278] sm:$0xff] %vm2390, %v5304
      %5374 = vst.msk [vmem:[#allocation2 + $0x290] sm:$0xff] %vm2390, %v5306
      %5375 = vst.msk [vmem:[#allocation2 + $0x2a8] sm:$0xff] %vm2390, %v5308
      %5376 = vst.msk [vmem:[#allocation2 + $0x2c0] sm:$0xff] %vm2390, %v5310
      %5377 = vst.msk [vmem:[#allocation2 + $0x2d8] sm:$0xff] %vm2390, %v5312
      %5378 = vst.msk [vmem:[#allocation2 + $0x2f0] sm:$0xff] %vm2390, %v5314
      %v5379 = vld [vmem:[%s4802 + $0x3] sm:$0xff]
      %v5380 = vld [vmem:[%s4802 + $0x13] sm:$0xff]
      %v5381 = vld [vmem:[%s4802 + $0x23] sm:$0xff]
      %v5382 = vld [vmem:[%s4802 + $0x33] sm:$0xff]
      %v5383 = vld [vmem:[%s4802 + $0xa3] sm:$0xff]
      %v5384 = vld [vmem:[%s4802 + $0xb3] sm:$0xff]
      %v5385 = vld [vmem:[%s4802 + $0xc3] sm:$0xff]
      %v5386 = vld [vmem:[%s4802 + $0xd3] sm:$0xff]
      %v5387 = vld [vmem:[%s4802 + $0x143] sm:$0xff]
      %v5388 = vld [vmem:[%s4802 + $0x153] sm:$0xff]
      %v5389 = vld [vmem:[%s4802 + $0x163] sm:$0xff]
      %v5390 = vld [vmem:[%s4802 + $0x173] sm:$0xff]
      %v5391 = vld [vmem:[%s4802 + $0x1e3] sm:$0xff]
      %v5392 = vld [vmem:[%s4802 + $0x1f3] sm:$0xff]
      %v5393 = vld [vmem:[%s4802 + $0x203] sm:$0xff]
      %v5394 = vld [vmem:[%s4802 + $0x213] sm:$0xff]
      %v5395 = vld [vmem:[%s4802 + $0x283] sm:$0xff]
      %v5396 = vld [vmem:[%s4802 + $0x293] sm:$0xff]
      %v5397 = vld [vmem:[%s4802 + $0x2a3] sm:$0xff]
      %v5398 = vld [vmem:[%s4802 + $0x2b3] sm:$0xff]
      %v5399 = vld [vmem:[%s4802 + $0x323] sm:$0xff]
      %v5400 = vld [vmem:[%s4802 + $0x333] sm:$0xff]
      %v5401 = vld [vmem:[%s4802 + $0x343] sm:$0xff]
      %v5402 = vld [vmem:[%s4802 + $0x353] sm:$0xff]
      %v5403 = vld [vmem:[%s4802 + $0x3c3] sm:$0xff]
      %v5404 = vld [vmem:[%s4802 + $0x3d3] sm:$0xff]
      %v5405 = vld [vmem:[%s4802 + $0x3e3] sm:$0xff]
      %v5406 = vld [vmem:[%s4802 + $0x3f3] sm:$0xff]
      %v5407 = vld [vmem:[%s4802 + $0x463] sm:$0xff]
      %v5408 = vld [vmem:[%s4802 + $0x473] sm:$0xff]
      %v5409 = vld [vmem:[%s4802 + $0x483] sm:$0xff]
      %v5410 = vld [vmem:[%s4802 + $0x493] sm:$0xff]
      %5443 = vrot.lane.b32.xlu0 %v5379, 96
      %v5444 = vpop.permute.xlu0 %5443
      %5445 = vrot.lane.b32.xlu0 %v5380, 96
      %v5446 = vpop.permute.xlu0 %5445
      %5447 = vrot.lane.b32.xlu0 %v5381, 96
      %v5448 = vpop.permute.xlu0 %5447
      %5449 = vrot.lane.b32.xlu0 %v5382, 96
      %v5450 = vpop.permute.xlu0 %5449
      %5451 = vrot.lane.b32.xlu0 %v5383, 96
      %v5452 = vpop.permute.xlu0 %5451
      %5453 = vrot.lane.b32.xlu0 %v5384, 96
      %v5454 = vpop.permute.xlu0 %5453
      %5455 = vrot.lane.b32.xlu0 %v5385, 96
      %v5456 = vpop.permute.xlu0 %5455
      %5457 = vrot.lane.b32.xlu0 %v5386, 96
      %v5458 = vpop.permute.xlu0 %5457
      %5459 = vrot.lane.b32.xlu0 %v5387, 96
      %v5460 = vpop.permute.xlu0 %5459
      %5461 = vrot.lane.b32.xlu0 %v5388, 96
      %v5462 = vpop.permute.xlu0 %5461
      %5463 = vrot.lane.b32.xlu0 %v5389, 96
      %v5464 = vpop.permute.xlu0 %5463
      %5465 = vrot.lane.b32.xlu0 %v5390, 96
      %v5466 = vpop.permute.xlu0 %5465
      %5467 = vrot.lane.b32.xlu0 %v5391, 96
      %v5468 = vpop.permute.xlu0 %5467
      %5469 = vrot.lane.b32.xlu0 %v5392, 96
      %v5470 = vpop.permute.xlu0 %5469
      %5471 = vrot.lane.b32.xlu0 %v5393, 96
      %v5472 = vpop.permute.xlu0 %5471
      %5473 = vrot.lane.b32.xlu0 %v5394, 96
      %v5474 = vpop.permute.xlu0 %5473
      %5475 = vrot.lane.b32.xlu0 %v5395, 96
      %v5476 = vpop.permute.xlu0 %5475
      %5477 = vrot.lane.b32.xlu0 %v5396, 96
      %v5478 = vpop.permute.xlu0 %5477
      %5479 = vrot.lane.b32.xlu0 %v5397, 96
      %v5480 = vpop.permute.xlu0 %5479
      %5481 = vrot.lane.b32.xlu0 %v5398, 96
      %v5482 = vpop.permute.xlu0 %5481
      %5483 = vrot.lane.b32.xlu0 %v5399, 96
      %v5484 = vpop.permute.xlu0 %5483
      %5485 = vrot.lane.b32.xlu0 %v5400, 96
      %v5486 = vpop.permute.xlu0 %5485
      %5487 = vrot.lane.b32.xlu0 %v5401, 96
      %v5488 = vpop.permute.xlu0 %5487
      %5489 = vrot.lane.b32.xlu0 %v5402, 96
      %v5490 = vpop.permute.xlu0 %5489
      %5491 = vrot.lane.b32.xlu0 %v5403, 96
      %v5492 = vpop.permute.xlu0 %5491
      %5493 = vrot.lane.b32.xlu0 %v5404, 96
      %v5494 = vpop.permute.xlu0 %5493
      %5495 = vrot.lane.b32.xlu0 %v5405, 96
      %v5496 = vpop.permute.xlu0 %5495
      %5497 = vrot.lane.b32.xlu0 %v5406, 96
      %v5498 = vpop.permute.xlu0 %5497
      %5499 = vrot.lane.b32.xlu0 %v5407, 96
      %v5500 = vpop.permute.xlu0 %5499
      %5501 = vrot.lane.b32.xlu0 %v5408, 96
      %v5502 = vpop.permute.xlu0 %5501
      %5503 = vrot.lane.b32.xlu0 %v5409, 96
      %v5504 = vpop.permute.xlu0 %5503
      %5505 = vrot.lane.b32.xlu0 %v5410, 96
      %v5506 = vpop.permute.xlu0 %5505
      %5539 = vst.msk [vmem:[#allocation2 + $0x8] sm:$0xff] %vm2583, %v5444
      %5540 = vst.msk [vmem:[#allocation2 + $0x20] sm:$0xff] %vm2583, %v5446
      %5541 = vst.msk [vmem:[#allocation2 + $0x38] sm:$0xff] %vm2583, %v5448
      %5542 = vst.msk [vmem:[#allocation2 + $0x50] sm:$0xff] %vm2583, %v5450
      %5543 = vst.msk [vmem:[#allocation2 + $0x68] sm:$0xff] %vm2583, %v5452
      %5544 = vst.msk [vmem:[#allocation2 + $0x80] sm:$0xff] %vm2583, %v5454
      %5545 = vst.msk [vmem:[#allocation2 + $0x98] sm:$0xff] %vm2583, %v5456
      %5546 = vst.msk [vmem:[#allocation2 + $0xb0] sm:$0xff] %vm2583, %v5458
      %5547 = vst.msk [vmem:[#allocation2 + $0xc8] sm:$0xff] %vm2583, %v5460
      %5548 = vst.msk [vmem:[#allocation2 + $0xe0] sm:$0xff] %vm2583, %v5462
      %5549 = vst.msk [vmem:[#allocation2 + $0xf8] sm:$0xff] %vm2583, %v5464
      %5550 = vst.msk [vmem:[#allocation2 + $0x110] sm:$0xff] %vm2583, %v5466
      %5551 = vst.msk [vmem:[#allocation2 + $0x128] sm:$0xff] %vm2583, %v5468
      %5552 = vst.msk [vmem:[#allocation2 + $0x140] sm:$0xff] %vm2583, %v5470
      %5553 = vst.msk [vmem:[#allocation2 + $0x158] sm:$0xff] %vm2583, %v5472
      %5554 = vst.msk [vmem:[#allocation2 + $0x170] sm:$0xff] %vm2583, %v5474
      %5555 = vst.msk [vmem:[#allocation2 + $0x188] sm:$0xff] %vm2583, %v5476
      %5556 = vst.msk [vmem:[#allocation2 + $0x1a0] sm:$0xff] %vm2583, %v5478
      %5557 = vst.msk [vmem:[#allocation2 + $0x1b8] sm:$0xff] %vm2583, %v5480
      %5558 = vst.msk [vmem:[#allocation2 + $0x1d0] sm:$0xff] %vm2583, %v5482
      %5559 = vst.msk [vmem:[#allocation2 + $0x1e8] sm:$0xff] %vm2583, %v5484
      %5560 = vst.msk [vmem:[#allocation2 + $0x200] sm:$0xff] %vm2583, %v5486
      %5561 = vst.msk [vmem:[#allocation2 + $0x218] sm:$0xff] %vm2583, %v5488
      %5562 = vst.msk [vmem:[#allocation2 + $0x230] sm:$0xff] %vm2583, %v5490
      %5563 = vst.msk [vmem:[#allocation2 + $0x248] sm:$0xff] %vm2583, %v5492
      %5564 = vst.msk [vmem:[#allocation2 + $0x260] sm:$0xff] %vm2583, %v5494
      %5565 = vst.msk [vmem:[#allocation2 + $0x278] sm:$0xff] %vm2583, %v5496
      %5566 = vst.msk [vmem:[#allocation2 + $0x290] sm:$0xff] %vm2583, %v5498
      %5567 = vst.msk [vmem:[#allocation2 + $0x2a8] sm:$0xff] %vm2583, %v5500
      %5568 = vst.msk [vmem:[#allocation2 + $0x2c0] sm:$0xff] %vm2583, %v5502
      %5569 = vst.msk [vmem:[#allocation2 + $0x2d8] sm:$0xff] %vm2583, %v5504
      %5570 = vst.msk [vmem:[#allocation2 + $0x2f0] sm:$0xff] %vm2583, %v5506
      %v5571 = vld [vmem:[%s4802 + $0x4] sm:$0xff]
      %v5572 = vld [vmem:[%s4802 + $0x14] sm:$0xff]
      %v5573 = vld [vmem:[%s4802 + $0x24] sm:$0xff]
      %v5574 = vld [vmem:[%s4802 + $0x34] sm:$0xff]
      %v5575 = vld [vmem:[%s4802 + $0xa4] sm:$0xff]
      %v5576 = vld [vmem:[%s4802 + $0xb4] sm:$0xff]
      %v5577 = vld [vmem:[%s4802 + $0xc4] sm:$0xff]
      %v5578 = vld [vmem:[%s4802 + $0xd4] sm:$0xff]
      %v5579 = vld [vmem:[%s4802 + $0x144] sm:$0xff]
      %v5580 = vld [vmem:[%s4802 + $0x154] sm:$0xff]
      %v5581 = vld [vmem:[%s4802 + $0x164] sm:$0xff]
      %v5582 = vld [vmem:[%s4802 + $0x174] sm:$0xff]
      %v5583 = vld [vmem:[%s4802 + $0x1e4] sm:$0xff]
      %v5584 = vld [vmem:[%s4802 + $0x1f4] sm:$0xff]
      %v5585 = vld [vmem:[%s4802 + $0x204] sm:$0xff]
      %v5586 = vld [vmem:[%s4802 + $0x214] sm:$0xff]
      %v5587 = vld [vmem:[%s4802 + $0x284] sm:$0xff]
      %v5588 = vld [vmem:[%s4802 + $0x294] sm:$0xff]
      %v5589 = vld [vmem:[%s4802 + $0x2a4] sm:$0xff]
      %v5590 = vld [vmem:[%s4802 + $0x2b4] sm:$0xff]
      %v5591 = vld [vmem:[%s4802 + $0x324] sm:$0xff]
      %v5592 = vld [vmem:[%s4802 + $0x334] sm:$0xff]
      %v5593 = vld [vmem:[%s4802 + $0x344] sm:$0xff]
      %v5594 = vld [vmem:[%s4802 + $0x354] sm:$0xff]
      %v5595 = vld [vmem:[%s4802 + $0x3c4] sm:$0xff]
      %v5596 = vld [vmem:[%s4802 + $0x3d4] sm:$0xff]
      %v5597 = vld [vmem:[%s4802 + $0x3e4] sm:$0xff]
      %v5598 = vld [vmem:[%s4802 + $0x3f4] sm:$0xff]
      %v5599 = vld [vmem:[%s4802 + $0x464] sm:$0xff]
      %v5600 = vld [vmem:[%s4802 + $0x474] sm:$0xff]
      %v5601 = vld [vmem:[%s4802 + $0x484] sm:$0xff]
      %v5602 = vld [vmem:[%s4802 + $0x494] sm:$0xff]
      %5635 = vrot.lane.b32.xlu0 %v5571, 104
      %v5636 = vpop.permute.xlu0 %5635
      %5637 = vrot.lane.b32.xlu0 %v5572, 104
      %v5638 = vpop.permute.xlu0 %5637
      %5639 = vrot.lane.b32.xlu0 %v5573, 104
      %v5640 = vpop.permute.xlu0 %5639
      %5641 = vrot.lane.b32.xlu0 %v5574, 104
      %v5642 = vpop.permute.xlu0 %5641
      %5643 = vrot.lane.b32.xlu0 %v5575, 104
      %v5644 = vpop.permute.xlu0 %5643
      %5645 = vrot.lane.b32.xlu0 %v5576, 104
      %v5646 = vpop.permute.xlu0 %5645
      %5647 = vrot.lane.b32.xlu0 %v5577, 104
      %v5648 = vpop.permute.xlu0 %5647
      %5649 = vrot.lane.b32.xlu0 %v5578, 104
      %v5650 = vpop.permute.xlu0 %5649
      %5651 = vrot.lane.b32.xlu0 %v5579, 104
      %v5652 = vpop.permute.xlu0 %5651
      %5653 = vrot.lane.b32.xlu0 %v5580, 104
      %v5654 = vpop.permute.xlu0 %5653
      %5655 = vrot.lane.b32.xlu0 %v5581, 104
      %v5656 = vpop.permute.xlu0 %5655
      %5657 = vrot.lane.b32.xlu0 %v5582, 104
      %v5658 = vpop.permute.xlu0 %5657
      %5659 = vrot.lane.b32.xlu0 %v5583, 104
      %v5660 = vpop.permute.xlu0 %5659
      %5661 = vrot.lane.b32.xlu0 %v5584, 104
      %v5662 = vpop.permute.xlu0 %5661
      %5663 = vrot.lane.b32.xlu0 %v5585, 104
      %v5664 = vpop.permute.xlu0 %5663
      %5665 = vrot.lane.b32.xlu0 %v5586, 104
      %v5666 = vpop.permute.xlu0 %5665
      %5667 = vrot.lane.b32.xlu0 %v5587, 104
      %v5668 = vpop.permute.xlu0 %5667
      %5669 = vrot.lane.b32.xlu0 %v5588, 104
      %v5670 = vpop.permute.xlu0 %5669
      %5671 = vrot.lane.b32.xlu0 %v5589, 104
      %v5672 = vpop.permute.xlu0 %5671
      %5673 = vrot.lane.b32.xlu0 %v5590, 104
      %v5674 = vpop.permute.xlu0 %5673
      %5675 = vrot.lane.b32.xlu0 %v5591, 104
      %v5676 = vpop.permute.xlu0 %5675
      %5677 = vrot.lane.b32.xlu0 %v5592, 104
      %v5678 = vpop.permute.xlu0 %5677
      %5679 = vrot.lane.b32.xlu0 %v5593, 104
      %v5680 = vpop.permute.xlu0 %5679
      %5681 = vrot.lane.b32.xlu0 %v5594, 104
      %v5682 = vpop.permute.xlu0 %5681
      %5683 = vrot.lane.b32.xlu0 %v5595, 104
      %v5684 = vpop.permute.xlu0 %5683
      %5685 = vrot.lane.b32.xlu0 %v5596, 104
      %v5686 = vpop.permute.xlu0 %5685
      %5687 = vrot.lane.b32.xlu0 %v5597, 104
      %v5688 = vpop.permute.xlu0 %5687
      %5689 = vrot.lane.b32.xlu0 %v5598, 104
      %v5690 = vpop.permute.xlu0 %5689
      %5691 = vrot.lane.b32.xlu0 %v5599, 104
      %v5692 = vpop.permute.xlu0 %5691
      %5693 = vrot.lane.b32.xlu0 %v5600, 104
      %v5694 = vpop.permute.xlu0 %5693
      %5695 = vrot.lane.b32.xlu0 %v5601, 104
      %v5696 = vpop.permute.xlu0 %5695
      %5697 = vrot.lane.b32.xlu0 %v5602, 104
      %v5698 = vpop.permute.xlu0 %5697
      %5731 = vst.msk [vmem:[#allocation2 + $0x8] sm:$0xff] %vm2776, %v5636
      %5732 = vst.msk [vmem:[#allocation2 + $0x20] sm:$0xff] %vm2776, %v5638
      %5733 = vst.msk [vmem:[#allocation2 + $0x38] sm:$0xff] %vm2776, %v5640
      %5734 = vst.msk [vmem:[#allocation2 + $0x50] sm:$0xff] %vm2776, %v5642
      %5735 = vst.msk [vmem:[#allocation2 + $0x68] sm:$0xff] %vm2776, %v5644
      %5736 = vst.msk [vmem:[#allocation2 + $0x80] sm:$0xff] %vm2776, %v5646
      %5737 = vst.msk [vmem:[#allocation2 + $0x98] sm:$0xff] %vm2776, %v5648
      %5738 = vst.msk [vmem:[#allocation2 + $0xb0] sm:$0xff] %vm2776, %v5650
      %5739 = vst.msk [vmem:[#allocation2 + $0xc8] sm:$0xff] %vm2776, %v5652
      %5740 = vst.msk [vmem:[#allocation2 + $0xe0] sm:$0xff] %vm2776, %v5654
      %5741 = vst.msk [vmem:[#allocation2 + $0xf8] sm:$0xff] %vm2776, %v5656
      %5742 = vst.msk [vmem:[#allocation2 + $0x110] sm:$0xff] %vm2776, %v5658
      %5743 = vst.msk [vmem:[#allocation2 + $0x128] sm:$0xff] %vm2776, %v5660
      %5744 = vst.msk [vmem:[#allocation2 + $0x140] sm:$0xff] %vm2776, %v5662
      %5745 = vst.msk [vmem:[#allocation2 + $0x158] sm:$0xff] %vm2776, %v5664
      %5746 = vst.msk [vmem:[#allocation2 + $0x170] sm:$0xff] %vm2776, %v5666
      %5747 = vst.msk [vmem:[#allocation2 + $0x188] sm:$0xff] %vm2776, %v5668
      %5748 = vst.msk [vmem:[#allocation2 + $0x1a0] sm:$0xff] %vm2776, %v5670
      %5749 = vst.msk [vmem:[#allocation2 + $0x1b8] sm:$0xff] %vm2776, %v5672
      %5750 = vst.msk [vmem:[#allocation2 + $0x1d0] sm:$0xff] %vm2776, %v5674
      %5751 = vst.msk [vmem:[#allocation2 + $0x1e8] sm:$0xff] %vm2776, %v5676
      %5752 = vst.msk [vmem:[#allocation2 + $0x200] sm:$0xff] %vm2776, %v5678
      %5753 = vst.msk [vmem:[#allocation2 + $0x218] sm:$0xff] %vm2776, %v5680
      %5754 = vst.msk [vmem:[#allocation2 + $0x230] sm:$0xff] %vm2776, %v5682
      %5755 = vst.msk [vmem:[#allocation2 + $0x248] sm:$0xff] %vm2776, %v5684
      %5756 = vst.msk [vmem:[#allocation2 + $0x260] sm:$0xff] %vm2776, %v5686
      %5757 = vst.msk [vmem:[#allocation2 + $0x278] sm:$0xff] %vm2776, %v5688
      %5758 = vst.msk [vmem:[#allocation2 + $0x290] sm:$0xff] %vm2776, %v5690
      %5759 = vst.msk [vmem:[#allocation2 + $0x2a8] sm:$0xff] %vm2776, %v5692
      %5760 = vst.msk [vmem:[#allocation2 + $0x2c0] sm:$0xff] %vm2776, %v5694
      %5761 = vst.msk [vmem:[#allocation2 + $0x2d8] sm:$0xff] %vm2776, %v5696
      %5762 = vst.msk [vmem:[#allocation2 + $0x2f0] sm:$0xff] %vm2776, %v5698
      %s5763 = sadd.s32 %s194, 2
      %s5764 = smul.u32 %s5763, 160
      %s5765 = sadd.s32 32, %s5764
      %s5766 = scalar_lea.vmem %s183, %s5765
      %v5767 = vld [vmem:[%s5766] sm:$0xff]
      %v5768 = vld [vmem:[%s5766 + $0x10] sm:$0xff]
      %v5769 = vld [vmem:[%s5766 + $0x20] sm:$0xff]
      %v5770 = vld [vmem:[%s5766 + $0x30] sm:$0xff]
      %v5771 = vld [vmem:[%s5766 + $0xa0] sm:$0xff]
      %v5772 = vld [vmem:[%s5766 + $0xb0] sm:$0xff]
      %v5773 = vld [vmem:[%s5766 + $0xc0] sm:$0xff]
      %v5774 = vld [vmem:[%s5766 + $0xd0] sm:$0xff]
      %v5775 = vld [vmem:[%s5766 + $0x140] sm:$0xff]
      %v5776 = vld [vmem:[%s5766 + $0x150] sm:$0xff]
      %v5777 = vld [vmem:[%s5766 + $0x160] sm:$0xff]
      %v5778 = vld [vmem:[%s5766 + $0x170] sm:$0xff]
      %v5779 = vld [vmem:[%s5766 + $0x1e0] sm:$0xff]
      %v5780 = vld [vmem:[%s5766 + $0x1f0] sm:$0xff]
      %v5781 = vld [vmem:[%s5766 + $0x200] sm:$0xff]
      %v5782 = vld [vmem:[%s5766 + $0x210] sm:$0xff]
      %v5783 = vld [vmem:[%s5766 + $0x280] sm:$0xff]
      %v5784 = vld [vmem:[%s5766 + $0x290] sm:$0xff]
      %v5785 = vld [vmem:[%s5766 + $0x2a0] sm:$0xff]
      %v5786 = vld [vmem:[%s5766 + $0x2b0] sm:$0xff]
      %v5787 = vld [vmem:[%s5766 + $0x320] sm:$0xff]
      %v5788 = vld [vmem:[%s5766 + $0x330] sm:$0xff]
      %v5789 = vld [vmem:[%s5766 + $0x340] sm:$0xff]
      %v5790 = vld [vmem:[%s5766 + $0x350] sm:$0xff]
      %v5791 = vld [vmem:[%s5766 + $0x3c0] sm:$0xff]
      %v5792 = vld [vmem:[%s5766 + $0x3d0] sm:$0xff]
      %v5793 = vld [vmem:[%s5766 + $0x3e0] sm:$0xff]
      %v5794 = vld [vmem:[%s5766 + $0x3f0] sm:$0xff]
      %v5795 = vld [vmem:[%s5766 + $0x460] sm:$0xff]
      %v5796 = vld [vmem:[%s5766 + $0x470] sm:$0xff]
      %v5797 = vld [vmem:[%s5766 + $0x480] sm:$0xff]
      %v5798 = vld [vmem:[%s5766 + $0x490] sm:$0xff]
      %5831 = vrot.lane.b32.xlu0 %v5767, 112
      %v5832 = vpop.permute.xlu0 %5831
      %5833 = vrot.lane.b32.xlu0 %v5768, 112
      %v5834 = vpop.permute.xlu0 %5833
      %5835 = vrot.lane.b32.xlu0 %v5769, 112
      %v5836 = vpop.permute.xlu0 %5835
      %5837 = vrot.lane.b32.xlu0 %v5770, 112
      %v5838 = vpop.permute.xlu0 %5837
      %5839 = vrot.lane.b32.xlu0 %v5771, 112
      %v5840 = vpop.permute.xlu0 %5839
      %5841 = vrot.lane.b32.xlu0 %v5772, 112
      %v5842 = vpop.permute.xlu0 %5841
      %5843 = vrot.lane.b32.xlu0 %v5773, 112
      %v5844 = vpop.permute.xlu0 %5843
      %5845 = vrot.lane.b32.xlu0 %v5774, 112
      %v5846 = vpop.permute.xlu0 %5845
      %5847 = vrot.lane.b32.xlu0 %v5775, 112
      %v5848 = vpop.permute.xlu0 %5847
      %5849 = vrot.lane.b32.xlu0 %v5776, 112
      %v5850 = vpop.permute.xlu0 %5849
      %5851 = vrot.lane.b32.xlu0 %v5777, 112
      %v5852 = vpop.permute.xlu0 %5851
      %5853 = vrot.lane.b32.xlu0 %v5778, 112
      %v5854 = vpop.permute.xlu0 %5853
      %5855 = vrot.lane.b32.xlu0 %v5779, 112
      %v5856 = vpop.permute.xlu0 %5855
      %5857 = vrot.lane.b32.xlu0 %v5780, 112
      %v5858 = vpop.permute.xlu0 %5857
      %5859 = vrot.lane.b32.xlu0 %v5781, 112
      %v5860 = vpop.permute.xlu0 %5859
      %5861 = vrot.lane.b32.xlu0 %v5782, 112
      %v5862 = vpop.permute.xlu0 %5861
      %5863 = vrot.lane.b32.xlu0 %v5783, 112
      %v5864 = vpop.permute.xlu0 %5863
      %5865 = vrot.lane.b32.xlu0 %v5784, 112
      %v5866 = vpop.permute.xlu0 %5865
      %5867 = vrot.lane.b32.xlu0 %v5785, 112
      %v5868 = vpop.permute.xlu0 %5867
      %5869 = vrot.lane.b32.xlu0 %v5786, 112
      %v5870 = vpop.permute.xlu0 %5869
      %5871 = vrot.lane.b32.xlu0 %v5787, 112
      %v5872 = vpop.permute.xlu0 %5871
      %5873 = vrot.lane.b32.xlu0 %v5788, 112
      %v5874 = vpop.permute.xlu0 %5873
      %5875 = vrot.lane.b32.xlu0 %v5789, 112
      %v5876 = vpop.permute.xlu0 %5875
      %5877 = vrot.lane.b32.xlu0 %v5790, 112
      %v5878 = vpop.permute.xlu0 %5877
      %5879 = vrot.lane.b32.xlu0 %v5791, 112
      %v5880 = vpop.permute.xlu0 %5879
      %5881 = vrot.lane.b32.xlu0 %v5792, 112
      %v5882 = vpop.permute.xlu0 %5881
      %5883 = vrot.lane.b32.xlu0 %v5793, 112
      %v5884 = vpop.permute.xlu0 %5883
      %5885 = vrot.lane.b32.xlu0 %v5794, 112
      %v5886 = vpop.permute.xlu0 %5885
      %5887 = vrot.lane.b32.xlu0 %v5795, 112
      %v5888 = vpop.permute.xlu0 %5887
      %5889 = vrot.lane.b32.xlu0 %v5796, 112
      %v5890 = vpop.permute.xlu0 %5889
      %5891 = vrot.lane.b32.xlu0 %v5797, 112
      %v5892 = vpop.permute.xlu0 %5891
      %5893 = vrot.lane.b32.xlu0 %v5798, 112
      %v5894 = vpop.permute.xlu0 %5893
      %5927 = vst.msk [vmem:[#allocation2 + $0x8] sm:$0xff] %vm2969, %v5832
      %5928 = vst.msk [vmem:[#allocation2 + $0x20] sm:$0xff] %vm2969, %v5834
      %5929 = vst.msk [vmem:[#allocation2 + $0x38] sm:$0xff] %vm2969, %v5836
      %5930 = vst.msk [vmem:[#allocation2 + $0x50] sm:$0xff] %vm2969, %v5838
      %5931 = vst.msk [vmem:[#allocation2 + $0x68] sm:$0xff] %vm2969, %v5840
      %5932 = vst.msk [vmem:[#allocation2 + $0x80] sm:$0xff] %vm2969, %v5842
      %5933 = vst.msk [vmem:[#allocation2 + $0x98] sm:$0xff] %vm2969, %v5844
      %5934 = vst.msk [vmem:[#allocation2 + $0xb0] sm:$0xff] %vm2969, %v5846
      %5935 = vst.msk [vmem:[#allocation2 + $0xc8] sm:$0xff] %vm2969, %v5848
      %5936 = vst.msk [vmem:[#allocation2 + $0xe0] sm:$0xff] %vm2969, %v5850
      %5937 = vst.msk [vmem:[#allocation2 + $0xf8] sm:$0xff] %vm2969, %v5852
      %5938 = vst.msk [vmem:[#allocation2 + $0x110] sm:$0xff] %vm2969, %v5854
      %5939 = vst.msk [vmem:[#allocation2 + $0x128] sm:$0xff] %vm2969, %v5856
      %5940 = vst.msk [vmem:[#allocation2 + $0x140] sm:$0xff] %vm2969, %v5858
      %5941 = vst.msk [vmem:[#allocation2 + $0x158] sm:$0xff] %vm2969, %v5860
      %5942 = vst.msk [vmem:[#allocation2 + $0x170] sm:$0xff] %vm2969, %v5862
      %5943 = vst.msk [vmem:[#allocation2 + $0x188] sm:$0xff] %vm2969, %v5864
      %5944 = vst.msk [vmem:[#allocation2 + $0x1a0] sm:$0xff] %vm2969, %v5866
      %5945 = vst.msk [vmem:[#allocation2 + $0x1b8] sm:$0xff] %vm2969, %v5868
      %5946 = vst.msk [vmem:[#allocation2 + $0x1d0] sm:$0xff] %vm2969, %v5870
      %5947 = vst.msk [vmem:[#allocation2 + $0x1e8] sm:$0xff] %vm2969, %v5872
      %5948 = vst.msk [vmem:[#allocation2 + $0x200] sm:$0xff] %vm2969, %v5874
      %5949 = vst.msk [vmem:[#allocation2 + $0x218] sm:$0xff] %vm2969, %v5876
      %5950 = vst.msk [vmem:[#allocation2 + $0x230] sm:$0xff] %vm2969, %v5878
      %5951 = vst.msk [vmem:[#allocation2 + $0x248] sm:$0xff] %vm2969, %v5880
      %5952 = vst.msk [vmem:[#allocation2 + $0x260] sm:$0xff] %vm2969, %v5882
      %5953 = vst.msk [vmem:[#allocation2 + $0x278] sm:$0xff] %vm2969, %v5884
      %5954 = vst.msk [vmem:[#allocation2 + $0x290] sm:$0xff] %vm2969, %v5886
      %5955 = vst.msk [vmem:[#allocation2 + $0x2a8] sm:$0xff] %vm2969, %v5888
      %5956 = vst.msk [vmem:[#allocation2 + $0x2c0] sm:$0xff] %vm2969, %v5890
      %5957 = vst.msk [vmem:[#allocation2 + $0x2d8] sm:$0xff] %vm2969, %v5892
      %5958 = vst.msk [vmem:[#allocation2 + $0x2f0] sm:$0xff] %vm2969, %v5894
      %v5959 = vld [vmem:[%s5766 + $0x1] sm:$0xff]
      %v5960 = vld [vmem:[%s5766 + $0x11] sm:$0xff]
      %v5961 = vld [vmem:[%s5766 + $0x21] sm:$0xff]
      %v5962 = vld [vmem:[%s5766 + $0x31] sm:$0xff]
      %v5963 = vld [vmem:[%s5766 + $0xa1] sm:$0xff]
      %v5964 = vld [vmem:[%s5766 + $0xb1] sm:$0xff]
      %v5965 = vld [vmem:[%s5766 + $0xc1] sm:$0xff]
      %v5966 = vld [vmem:[%s5766 + $0xd1] sm:$0xff]
      %v5967 = vld [vmem:[%s5766 + $0x141] sm:$0xff]
      %v5968 = vld [vmem:[%s5766 + $0x151] sm:$0xff]
      %v5969 = vld [vmem:[%s5766 + $0x161] sm:$0xff]
      %v5970 = vld [vmem:[%s5766 + $0x171] sm:$0xff]
      %v5971 = vld [vmem:[%s5766 + $0x1e1] sm:$0xff]
      %v5972 = vld [vmem:[%s5766 + $0x1f1] sm:$0xff]
      %v5973 = vld [vmem:[%s5766 + $0x201] sm:$0xff]
      %v5974 = vld [vmem:[%s5766 + $0x211] sm:$0xff]
      %v5975 = vld [vmem:[%s5766 + $0x281] sm:$0xff]
      %v5976 = vld [vmem:[%s5766 + $0x291] sm:$0xff]
      %v5977 = vld [vmem:[%s5766 + $0x2a1] sm:$0xff]
      %v5978 = vld [vmem:[%s5766 + $0x2b1] sm:$0xff]
      %v5979 = vld [vmem:[%s5766 + $0x321] sm:$0xff]
      %v5980 = vld [vmem:[%s5766 + $0x331] sm:$0xff]
      %v5981 = vld [vmem:[%s5766 + $0x341] sm:$0xff]
      %v5982 = vld [vmem:[%s5766 + $0x351] sm:$0xff]
      %v5983 = vld [vmem:[%s5766 + $0x3c1] sm:$0xff]
      %v5984 = vld [vmem:[%s5766 + $0x3d1] sm:$0xff]
      %v5985 = vld [vmem:[%s5766 + $0x3e1] sm:$0xff]
      %v5986 = vld [vmem:[%s5766 + $0x3f1] sm:$0xff]
      %v5987 = vld [vmem:[%s5766 + $0x461] sm:$0xff]
      %v5988 = vld [vmem:[%s5766 + $0x471] sm:$0xff]
      %v5989 = vld [vmem:[%s5766 + $0x481] sm:$0xff]
      %v5990 = vld [vmem:[%s5766 + $0x491] sm:$0xff]
      %6023 = vrot.lane.b32.xlu0 %v5959, 120
      %v6024 = vpop.permute.xlu0 %6023
      %6025 = vrot.lane.b32.xlu0 %v5960, 120
      %v6026 = vpop.permute.xlu0 %6025
      %6027 = vrot.lane.b32.xlu0 %v5961, 120
      %v6028 = vpop.permute.xlu0 %6027
      %6029 = vrot.lane.b32.xlu0 %v5962, 120
      %v6030 = vpop.permute.xlu0 %6029
      %6031 = vrot.lane.b32.xlu0 %v5963, 120
      %v6032 = vpop.permute.xlu0 %6031
      %6033 = vrot.lane.b32.xlu0 %v5964, 120
      %v6034 = vpop.permute.xlu0 %6033
      %6035 = vrot.lane.b32.xlu0 %v5965, 120
      %v6036 = vpop.permute.xlu0 %6035
      %6037 = vrot.lane.b32.xlu0 %v5966, 120
      %v6038 = vpop.permute.xlu0 %6037
      %6039 = vrot.lane.b32.xlu0 %v5967, 120
      %v6040 = vpop.permute.xlu0 %6039
      %6041 = vrot.lane.b32.xlu0 %v5968, 120
      %v6042 = vpop.permute.xlu0 %6041
      %6043 = vrot.lane.b32.xlu0 %v5969, 120
      %v6044 = vpop.permute.xlu0 %6043
      %6045 = vrot.lane.b32.xlu0 %v5970, 120
      %v6046 = vpop.permute.xlu0 %6045
      %6047 = vrot.lane.b32.xlu0 %v5971, 120
      %v6048 = vpop.permute.xlu0 %6047
      %6049 = vrot.lane.b32.xlu0 %v5972, 120
      %v6050 = vpop.permute.xlu0 %6049
      %6051 = vrot.lane.b32.xlu0 %v5973, 120
      %v6052 = vpop.permute.xlu0 %6051
      %6053 = vrot.lane.b32.xlu0 %v5974, 120
      %v6054 = vpop.permute.xlu0 %6053
      %6055 = vrot.lane.b32.xlu0 %v5975, 120
      %v6056 = vpop.permute.xlu0 %6055
      %6057 = vrot.lane.b32.xlu0 %v5976, 120
      %v6058 = vpop.permute.xlu0 %6057
      %6059 = vrot.lane.b32.xlu0 %v5977, 120
      %v6060 = vpop.permute.xlu0 %6059
      %6061 = vrot.lane.b32.xlu0 %v5978, 120
      %v6062 = vpop.permute.xlu0 %6061
      %6063 = vrot.lane.b32.xlu0 %v5979, 120
      %v6064 = vpop.permute.xlu0 %6063
      %6065 = vrot.lane.b32.xlu0 %v5980, 120
      %v6066 = vpop.permute.xlu0 %6065
      %6067 = vrot.lane.b32.xlu0 %v5981, 120
      %v6068 = vpop.permute.xlu0 %6067
      %6069 = vrot.lane.b32.xlu0 %v5982, 120
      %v6070 = vpop.permute.xlu0 %6069
      %6071 = vrot.lane.b32.xlu0 %v5983, 120
      %v6072 = vpop.permute.xlu0 %6071
      %6073 = vrot.lane.b32.xlu0 %v5984, 120
      %v6074 = vpop.permute.xlu0 %6073
      %6075 = vrot.lane.b32.xlu0 %v5985, 120
      %v6076 = vpop.permute.xlu0 %6075
      %6077 = vrot.lane.b32.xlu0 %v5986, 120
      %v6078 = vpop.permute.xlu0 %6077
      %6079 = vrot.lane.b32.xlu0 %v5987, 120
      %v6080 = vpop.permute.xlu0 %6079
      %6081 = vrot.lane.b32.xlu0 %v5988, 120
      %v6082 = vpop.permute.xlu0 %6081
      %6083 = vrot.lane.b32.xlu0 %v5989, 120
      %v6084 = vpop.permute.xlu0 %6083
      %6085 = vrot.lane.b32.xlu0 %v5990, 120
      %v6086 = vpop.permute.xlu0 %6085
      %6119 = vst.msk [vmem:[#allocation2 + $0x8] sm:$0xff] %vm3166, %v6024
      %6120 = vst.msk [vmem:[#allocation2 + $0x20] sm:$0xff] %vm3166, %v6026
      %6121 = vst.msk [vmem:[#allocation2 + $0x38] sm:$0xff] %vm3166, %v6028
      %6122 = vst.msk [vmem:[#allocation2 + $0x50] sm:$0xff] %vm3166, %v6030
      %6123 = vst.msk [vmem:[#allocation2 + $0x68] sm:$0xff] %vm3166, %v6032
      %6124 = vst.msk [vmem:[#allocation2 + $0x80] sm:$0xff] %vm3166, %v6034
      %6125 = vst.msk [vmem:[#allocation2 + $0x98] sm:$0xff] %vm3166, %v6036
      %6126 = vst.msk [vmem:[#allocation2 + $0xb0] sm:$0xff] %vm3166, %v6038
      %6127 = vst.msk [vmem:[#allocation2 + $0xc8] sm:$0xff] %vm3166, %v6040
      %6128 = vst.msk [vmem:[#allocation2 + $0xe0] sm:$0xff] %vm3166, %v6042
      %6129 = vst.msk [vmem:[#allocation2 + $0xf8] sm:$0xff] %vm3166, %v6044
      %6130 = vst.msk [vmem:[#allocation2 + $0x110] sm:$0xff] %vm3166, %v6046
      %6131 = vst.msk [vmem:[#allocation2 + $0x128] sm:$0xff] %vm3166, %v6048
      %6132 = vst.msk [vmem:[#allocation2 + $0x140] sm:$0xff] %vm3166, %v6050
      %6133 = vst.msk [vmem:[#allocation2 + $0x158] sm:$0xff] %vm3166, %v6052
      %6134 = vst.msk [vmem:[#allocation2 + $0x170] sm:$0xff] %vm3166, %v6054
      %6135 = vst.msk [vmem:[#allocation2 + $0x188] sm:$0xff] %vm3166, %v6056
      %6136 = vst.msk [vmem:[#allocation2 + $0x1a0] sm:$0xff] %vm3166, %v6058
      %6137 = vst.msk [vmem:[#allocation2 + $0x1b8] sm:$0xff] %vm3166, %v6060
      %6138 = vst.msk [vmem:[#allocation2 + $0x1d0] sm:$0xff] %vm3166, %v6062
      %6139 = vst.msk [vmem:[#allocation2 + $0x1e8] sm:$0xff] %vm3166, %v6064
      %6140 = vst.msk [vmem:[#allocation2 + $0x200] sm:$0xff] %vm3166, %v6066
      %6141 = vst.msk [vmem:[#allocation2 + $0x218] sm:$0xff] %vm3166, %v6068
      %6142 = vst.msk [vmem:[#allocation2 + $0x230] sm:$0xff] %vm3166, %v6070
      %6143 = vst.msk [vmem:[#allocation2 + $0x248] sm:$0xff] %vm3166, %v6072
      %6144 = vst.msk [vmem:[#allocation2 + $0x260] sm:$0xff] %vm3166, %v6074
      %6145 = vst.msk [vmem:[#allocation2 + $0x278] sm:$0xff] %vm3166, %v6076
      %6146 = vst.msk [vmem:[#allocation2 + $0x290] sm:$0xff] %vm3166, %v6078
      %6147 = vst.msk [vmem:[#allocation2 + $0x2a8] sm:$0xff] %vm3166, %v6080
      %6148 = vst.msk [vmem:[#allocation2 + $0x2c0] sm:$0xff] %vm3166, %v6082
      %6149 = vst.msk [vmem:[#allocation2 + $0x2d8] sm:$0xff] %vm3166, %v6084
      %6150 = vst.msk [vmem:[#allocation2 + $0x2f0] sm:$0xff] %vm3166, %v6086
      %v6151 = vld [vmem:[%s5766 + $0x2] sm:$0xff]
      %v6152 = vld [vmem:[%s5766 + $0x12] sm:$0xff]
      %v6153 = vld [vmem:[%s5766 + $0x22] sm:$0xff]
      %v6154 = vld [vmem:[%s5766 + $0x32] sm:$0xff]
      %v6155 = vld [vmem:[%s5766 + $0xa2] sm:$0xff]
      %v6156 = vld [vmem:[%s5766 + $0xb2] sm:$0xff]
      %v6157 = vld [vmem:[%s5766 + $0xc2] sm:$0xff]
      %v6158 = vld [vmem:[%s5766 + $0xd2] sm:$0xff]
      %v6159 = vld [vmem:[%s5766 + $0x142] sm:$0xff]
      %v6160 = vld [vmem:[%s5766 + $0x152] sm:$0xff]
      %v6161 = vld [vmem:[%s5766 + $0x162] sm:$0xff]
      %v6162 = vld [vmem:[%s5766 + $0x172] sm:$0xff]
      %v6163 = vld [vmem:[%s5766 + $0x1e2] sm:$0xff]
      %v6164 = vld [vmem:[%s5766 + $0x1f2] sm:$0xff]
      %v6165 = vld [vmem:[%s5766 + $0x202] sm:$0xff]
      %v6166 = vld [vmem:[%s5766 + $0x212] sm:$0xff]
      %v6167 = vld [vmem:[%s5766 + $0x282] sm:$0xff]
      %v6168 = vld [vmem:[%s5766 + $0x292] sm:$0xff]
      %v6169 = vld [vmem:[%s5766 + $0x2a2] sm:$0xff]
      %v6170 = vld [vmem:[%s5766 + $0x2b2] sm:$0xff]
      %v6171 = vld [vmem:[%s5766 + $0x322] sm:$0xff]
      %v6172 = vld [vmem:[%s5766 + $0x332] sm:$0xff]
      %v6173 = vld [vmem:[%s5766 + $0x342] sm:$0xff]
      %v6174 = vld [vmem:[%s5766 + $0x352] sm:$0xff]
      %v6175 = vld [vmem:[%s5766 + $0x3c2] sm:$0xff]
      %v6176 = vld [vmem:[%s5766 + $0x3d2] sm:$0xff]
      %v6177 = vld [vmem:[%s5766 + $0x3e2] sm:$0xff]
      %v6178 = vld [vmem:[%s5766 + $0x3f2] sm:$0xff]
      %v6179 = vld [vmem:[%s5766 + $0x462] sm:$0xff]
      %v6180 = vld [vmem:[%s5766 + $0x472] sm:$0xff]
      %v6181 = vld [vmem:[%s5766 + $0x482] sm:$0xff]
      %v6182 = vld [vmem:[%s5766 + $0x492] sm:$0xff]
      %6183 = vst.msk [vmem:[#allocation2 + $0x10] sm:$0xff] %vm263, %v6151
      %6184 = vst.msk [vmem:[#allocation2 + $0x28] sm:$0xff] %vm263, %v6152
      %6185 = vst.msk [vmem:[#allocation2 + $0x40] sm:$0xff] %vm263, %v6153
      %6186 = vst.msk [vmem:[#allocation2 + $0x58] sm:$0xff] %vm263, %v6154
      %6187 = vst.msk [vmem:[#allocation2 + $0x70] sm:$0xff] %vm263, %v6155
      %6188 = vst.msk [vmem:[#allocation2 + $0x88] sm:$0xff] %vm263, %v6156
      %6189 = vst.msk [vmem:[#allocation2 + $0xa0] sm:$0xff] %vm263, %v6157
      %6190 = vst.msk [vmem:[#allocation2 + $0xb8] sm:$0xff] %vm263, %v6158
      %6191 = vst.msk [vmem:[#allocation2 + $0xd0] sm:$0xff] %vm263, %v6159
      %6192 = vst.msk [vmem:[#allocation2 + $0xe8] sm:$0xff] %vm263, %v6160
      %6193 = vst.msk [vmem:[#allocation2 + $0x100] sm:$0xff] %vm263, %v6161
      %6194 = vst.msk [vmem:[#allocation2 + $0x118] sm:$0xff] %vm263, %v6162
      %6195 = vst.msk [vmem:[#allocation2 + $0x130] sm:$0xff] %vm263, %v6163
      %6196 = vst.msk [vmem:[#allocation2 + $0x148] sm:$0xff] %vm263, %v6164
      %6197 = vst.msk [vmem:[#allocation2 + $0x160] sm:$0xff] %vm263, %v6165
      %6198 = vst.msk [vmem:[#allocation2 + $0x178] sm:$0xff] %vm263, %v6166
      %6199 = vst.msk [vmem:[#allocation2 + $0x190] sm:$0xff] %vm263, %v6167
      %6200 = vst.msk [vmem:[#allocation2 + $0x1a8] sm:$0xff] %vm263, %v6168
      %6201 = vst.msk [vmem:[#allocation2 + $0x1c0] sm:$0xff] %vm263, %v6169
      %6202 = vst.msk [vmem:[#allocation2 + $0x1d8] sm:$0xff] %vm263, %v6170
      %6203 = vst.msk [vmem:[#allocation2 + $0x1f0] sm:$0xff] %vm263, %v6171
      %6204 = vst.msk [vmem:[#allocation2 + $0x208] sm:$0xff] %vm263, %v6172
      %6205 = vst.msk [vmem:[#allocation2 + $0x220] sm:$0xff] %vm263, %v6173
      %6206 = vst.msk [vmem:[#allocation2 + $0x238] sm:$0xff] %vm263, %v6174
      %6207 = vst.msk [vmem:[#allocation2 + $0x250] sm:$0xff] %vm263, %v6175
      %6208 = vst.msk [vmem:[#allocation2 + $0x268] sm:$0xff] %vm263, %v6176
      %6209 = vst.msk [vmem:[#allocation2 + $0x280] sm:$0xff] %vm263, %v6177
      %6210 = vst.msk [vmem:[#allocation2 + $0x298] sm:$0xff] %vm263, %v6178
      %6211 = vst.msk [vmem:[#allocation2 + $0x2b0] sm:$0xff] %vm263, %v6179
      %6212 = vst.msk [vmem:[#allocation2 + $0x2c8] sm:$0xff] %vm263, %v6180
      %6213 = vst.msk [vmem:[#allocation2 + $0x2e0] sm:$0xff] %vm263, %v6181
      %6214 = vst.msk [vmem:[#allocation2 + $0x2f8] sm:$0xff] %vm263, %v6182
      %v6215 = vld [vmem:[%s5766 + $0x3] sm:$0xff]
      %v6216 = vld [vmem:[%s5766 + $0x13] sm:$0xff]
      %v6217 = vld [vmem:[%s5766 + $0x23] sm:$0xff]
      %v6218 = vld [vmem:[%s5766 + $0x33] sm:$0xff]
      %v6219 = vld [vmem:[%s5766 + $0xa3] sm:$0xff]
      %v6220 = vld [vmem:[%s5766 + $0xb3] sm:$0xff]
      %v6221 = vld [vmem:[%s5766 + $0xc3] sm:$0xff]
      %v6222 = vld [vmem:[%s5766 + $0xd3] sm:$0xff]
      %v6223 = vld [vmem:[%s5766 + $0x143] sm:$0xff]
      %v6224 = vld [vmem:[%s5766 + $0x153] sm:$0xff]
      %v6225 = vld [vmem:[%s5766 + $0x163] sm:$0xff]
      %v6226 = vld [vmem:[%s5766 + $0x173] sm:$0xff]
      %v6227 = vld [vmem:[%s5766 + $0x1e3] sm:$0xff]
      %v6228 = vld [vmem:[%s5766 + $0x1f3] sm:$0xff]
      %v6229 = vld [vmem:[%s5766 + $0x203] sm:$0xff]
      %v6230 = vld [vmem:[%s5766 + $0x213] sm:$0xff]
      %v6231 = vld [vmem:[%s5766 + $0x283] sm:$0xff]
      %v6232 = vld [vmem:[%s5766 + $0x293] sm:$0xff]
      %v6233 = vld [vmem:[%s5766 + $0x2a3] sm:$0xff]
      %v6234 = vld [vmem:[%s5766 + $0x2b3] sm:$0xff]
      %v6235 = vld [vmem:[%s5766 + $0x323] sm:$0xff]
      %v6236 = vld [vmem:[%s5766 + $0x333] sm:$0xff]
      %v6237 = vld [vmem:[%s5766 + $0x343] sm:$0xff]
      %v6238 = vld [vmem:[%s5766 + $0x353] sm:$0xff]
      %v6239 = vld [vmem:[%s5766 + $0x3c3] sm:$0xff]
      %v6240 = vld [vmem:[%s5766 + $0x3d3] sm:$0xff]
      %v6241 = vld [vmem:[%s5766 + $0x3e3] sm:$0xff]
      %v6242 = vld [vmem:[%s5766 + $0x3f3] sm:$0xff]
      %v6243 = vld [vmem:[%s5766 + $0x463] sm:$0xff]
      %v6244 = vld [vmem:[%s5766 + $0x473] sm:$0xff]
      %v6245 = vld [vmem:[%s5766 + $0x483] sm:$0xff]
      %v6246 = vld [vmem:[%s5766 + $0x493] sm:$0xff]
      %6279 = vrot.lane.b32.xlu0 %v6215, 8
      %v6280 = vpop.permute.xlu0 %6279
      %6281 = vrot.lane.b32.xlu0 %v6216, 8
      %v6282 = vpop.permute.xlu0 %6281
      %6283 = vrot.lane.b32.xlu0 %v6217, 8
      %v6284 = vpop.permute.xlu0 %6283
      %6285 = vrot.lane.b32.xlu0 %v6218, 8
      %v6286 = vpop.permute.xlu0 %6285
      %6287 = vrot.lane.b32.xlu0 %v6219, 8
      %v6288 = vpop.permute.xlu0 %6287
      %6289 = vrot.lane.b32.xlu0 %v6220, 8
      %v6290 = vpop.permute.xlu0 %6289
      %6291 = vrot.lane.b32.xlu0 %v6221, 8
      %v6292 = vpop.permute.xlu0 %6291
      %6293 = vrot.lane.b32.xlu0 %v6222, 8
      %v6294 = vpop.permute.xlu0 %6293
      %6295 = vrot.lane.b32.xlu0 %v6223, 8
      %v6296 = vpop.permute.xlu0 %6295
      %6297 = vrot.lane.b32.xlu0 %v6224, 8
      %v6298 = vpop.permute.xlu0 %6297
      %6299 = vrot.lane.b32.xlu0 %v6225, 8
      %v6300 = vpop.permute.xlu0 %6299
      %6301 = vrot.lane.b32.xlu0 %v6226, 8
      %v6302 = vpop.permute.xlu0 %6301
      %6303 = vrot.lane.b32.xlu0 %v6227, 8
      %v6304 = vpop.permute.xlu0 %6303
      %6305 = vrot.lane.b32.xlu0 %v6228, 8
      %v6306 = vpop.permute.xlu0 %6305
      %6307 = vrot.lane.b32.xlu0 %v6229, 8
      %v6308 = vpop.permute.xlu0 %6307
      %6309 = vrot.lane.b32.xlu0 %v6230, 8
      %v6310 = vpop.permute.xlu0 %6309
      %6311 = vrot.lane.b32.xlu0 %v6231, 8
      %v6312 = vpop.permute.xlu0 %6311
      %6313 = vrot.lane.b32.xlu0 %v6232, 8
      %v6314 = vpop.permute.xlu0 %6313
      %6315 = vrot.lane.b32.xlu0 %v6233, 8
      %v6316 = vpop.permute.xlu0 %6315
      %6317 = vrot.lane.b32.xlu0 %v6234, 8
      %v6318 = vpop.permute.xlu0 %6317
      %6319 = vrot.lane.b32.xlu0 %v6235, 8
      %v6320 = vpop.permute.xlu0 %6319
      %6321 = vrot.lane.b32.xlu0 %v6236, 8
      %v6322 = vpop.permute.xlu0 %6321
      %6323 = vrot.lane.b32.xlu0 %v6237, 8
      %v6324 = vpop.permute.xlu0 %6323
      %6325 = vrot.lane.b32.xlu0 %v6238, 8
      %v6326 = vpop.permute.xlu0 %6325
      %6327 = vrot.lane.b32.xlu0 %v6239, 8
      %v6328 = vpop.permute.xlu0 %6327
      %6329 = vrot.lane.b32.xlu0 %v6240, 8
      %v6330 = vpop.permute.xlu0 %6329
      %6331 = vrot.lane.b32.xlu0 %v6241, 8
      %v6332 = vpop.permute.xlu0 %6331
      %6333 = vrot.lane.b32.xlu0 %v6242, 8
      %v6334 = vpop.permute.xlu0 %6333
      %6335 = vrot.lane.b32.xlu0 %v6243, 8
      %v6336 = vpop.permute.xlu0 %6335
      %6337 = vrot.lane.b32.xlu0 %v6244, 8
      %v6338 = vpop.permute.xlu0 %6337
      %6339 = vrot.lane.b32.xlu0 %v6245, 8
      %v6340 = vpop.permute.xlu0 %6339
      %6341 = vrot.lane.b32.xlu0 %v6246, 8
      %v6342 = vpop.permute.xlu0 %6341
      %6375 = vst.msk [vmem:[#allocation2 + $0x10] sm:$0xff] %vm456, %v6280
      %6376 = vst.msk [vmem:[#allocation2 + $0x28] sm:$0xff] %vm456, %v6282
      %6377 = vst.msk [vmem:[#allocation2 + $0x40] sm:$0xff] %vm456, %v6284
      %6378 = vst.msk [vmem:[#allocation2 + $0x58] sm:$0xff] %vm456, %v6286
      %6379 = vst.msk [vmem:[#allocation2 + $0x70] sm:$0xff] %vm456, %v6288
      %6380 = vst.msk [vmem:[#allocation2 + $0x88] sm:$0xff] %vm456, %v6290
      %6381 = vst.msk [vmem:[#allocation2 + $0xa0] sm:$0xff] %vm456, %v6292
      %6382 = vst.msk [vmem:[#allocation2 + $0xb8] sm:$0xff] %vm456, %v6294
      %6383 = vst.msk [vmem:[#allocation2 + $0xd0] sm:$0xff] %vm456, %v6296
      %6384 = vst.msk [vmem:[#allocation2 + $0xe8] sm:$0xff] %vm456, %v6298
      %6385 = vst.msk [vmem:[#allocation2 + $0x100] sm:$0xff] %vm456, %v6300
      %6386 = vst.msk [vmem:[#allocation2 + $0x118] sm:$0xff] %vm456, %v6302
      %6387 = vst.msk [vmem:[#allocation2 + $0x130] sm:$0xff] %vm456, %v6304
      %6388 = vst.msk [vmem:[#allocation2 + $0x148] sm:$0xff] %vm456, %v6306
      %6389 = vst.msk [vmem:[#allocation2 + $0x160] sm:$0xff] %vm456, %v6308
      %6390 = vst.msk [vmem:[#allocation2 + $0x178] sm:$0xff] %vm456, %v6310
      %6391 = vst.msk [vmem:[#allocation2 + $0x190] sm:$0xff] %vm456, %v6312
      %6392 = vst.msk [vmem:[#allocation2 + $0x1a8] sm:$0xff] %vm456, %v6314
      %6393 = vst.msk [vmem:[#allocation2 + $0x1c0] sm:$0xff] %vm456, %v6316
      %6394 = vst.msk [vmem:[#allocation2 + $0x1d8] sm:$0xff] %vm456, %v6318
      %6395 = vst.msk [vmem:[#allocation2 + $0x1f0] sm:$0xff] %vm456, %v6320
      %6396 = vst.msk [vmem:[#allocation2 + $0x208] sm:$0xff] %vm456, %v6322
      %6397 = vst.msk [vmem:[#allocation2 + $0x220] sm:$0xff] %vm456, %v6324
      %6398 = vst.msk [vmem:[#allocation2 + $0x238] sm:$0xff] %vm456, %v6326
      %6399 = vst.msk [vmem:[#allocation2 + $0x250] sm:$0xff] %vm456, %v6328
      %6400 = vst.msk [vmem:[#allocation2 + $0x268] sm:$0xff] %vm456, %v6330
      %6401 = vst.msk [vmem:[#allocation2 + $0x280] sm:$0xff] %vm456, %v6332
      %6402 = vst.msk [vmem:[#allocation2 + $0x298] sm:$0xff] %vm456, %v6334
      %6403 = vst.msk [vmem:[#allocation2 + $0x2b0] sm:$0xff] %vm456, %v6336
      %6404 = vst.msk [vmem:[#allocation2 + $0x2c8] sm:$0xff] %vm456, %v6338
      %6405 = vst.msk [vmem:[#allocation2 + $0x2e0] sm:$0xff] %vm456, %v6340
      %6406 = vst.msk [vmem:[#allocation2 + $0x2f8] sm:$0xff] %vm456, %v6342
      %v6407 = vld [vmem:[%s5766 + $0x4] sm:$0xff]
      %v6408 = vld [vmem:[%s5766 + $0x14] sm:$0xff]
      %v6409 = vld [vmem:[%s5766 + $0x24] sm:$0xff]
      %v6410 = vld [vmem:[%s5766 + $0x34] sm:$0xff]
      %v6411 = vld [vmem:[%s5766 + $0xa4] sm:$0xff]
      %v6412 = vld [vmem:[%s5766 + $0xb4] sm:$0xff]
      %v6413 = vld [vmem:[%s5766 + $0xc4] sm:$0xff]
      %v6414 = vld [vmem:[%s5766 + $0xd4] sm:$0xff]
      %v6415 = vld [vmem:[%s5766 + $0x144] sm:$0xff]
      %v6416 = vld [vmem:[%s5766 + $0x154] sm:$0xff]
      %v6417 = vld [vmem:[%s5766 + $0x164] sm:$0xff]
      %v6418 = vld [vmem:[%s5766 + $0x174] sm:$0xff]
      %v6419 = vld [vmem:[%s5766 + $0x1e4] sm:$0xff]
      %v6420 = vld [vmem:[%s5766 + $0x1f4] sm:$0xff]
      %v6421 = vld [vmem:[%s5766 + $0x204] sm:$0xff]
      %v6422 = vld [vmem:[%s5766 + $0x214] sm:$0xff]
      %v6423 = vld [vmem:[%s5766 + $0x284] sm:$0xff]
      %v6424 = vld [vmem:[%s5766 + $0x294] sm:$0xff]
      %v6425 = vld [vmem:[%s5766 + $0x2a4] sm:$0xff]
      %v6426 = vld [vmem:[%s5766 + $0x2b4] sm:$0xff]
      %v6427 = vld [vmem:[%s5766 + $0x324] sm:$0xff]
      %v6428 = vld [vmem:[%s5766 + $0x334] sm:$0xff]
      %v6429 = vld [vmem:[%s5766 + $0x344] sm:$0xff]
      %v6430 = vld [vmem:[%s5766 + $0x354] sm:$0xff]
      %v6431 = vld [vmem:[%s5766 + $0x3c4] sm:$0xff]
      %v6432 = vld [vmem:[%s5766 + $0x3d4] sm:$0xff]
      %v6433 = vld [vmem:[%s5766 + $0x3e4] sm:$0xff]
      %v6434 = vld [vmem:[%s5766 + $0x3f4] sm:$0xff]
      %v6435 = vld [vmem:[%s5766 + $0x464] sm:$0xff]
      %v6436 = vld [vmem:[%s5766 + $0x474] sm:$0xff]
      %v6437 = vld [vmem:[%s5766 + $0x484] sm:$0xff]
      %v6438 = vld [vmem:[%s5766 + $0x494] sm:$0xff]
      %6471 = vrot.lane.b32.xlu0 %v6407, 16
      %v6472 = vpop.permute.xlu0 %6471
      %6473 = vrot.lane.b32.xlu0 %v6408, 16
      %v6474 = vpop.permute.xlu0 %6473
      %6475 = vrot.lane.b32.xlu0 %v6409, 16
      %v6476 = vpop.permute.xlu0 %6475
      %6477 = vrot.lane.b32.xlu0 %v6410, 16
      %v6478 = vpop.permute.xlu0 %6477
      %6479 = vrot.lane.b32.xlu0 %v6411, 16
      %v6480 = vpop.permute.xlu0 %6479
      %6481 = vrot.lane.b32.xlu0 %v6412, 16
      %v6482 = vpop.permute.xlu0 %6481
      %6483 = vrot.lane.b32.xlu0 %v6413, 16
      %v6484 = vpop.permute.xlu0 %6483
      %6485 = vrot.lane.b32.xlu0 %v6414, 16
      %v6486 = vpop.permute.xlu0 %6485
      %6487 = vrot.lane.b32.xlu0 %v6415, 16
      %v6488 = vpop.permute.xlu0 %6487
      %6489 = vrot.lane.b32.xlu0 %v6416, 16
      %v6490 = vpop.permute.xlu0 %6489
      %6491 = vrot.lane.b32.xlu0 %v6417, 16
      %v6492 = vpop.permute.xlu0 %6491
      %6493 = vrot.lane.b32.xlu0 %v6418, 16
      %v6494 = vpop.permute.xlu0 %6493
      %6495 = vrot.lane.b32.xlu0 %v6419, 16
      %v6496 = vpop.permute.xlu0 %6495
      %6497 = vrot.lane.b32.xlu0 %v6420, 16
      %v6498 = vpop.permute.xlu0 %6497
      %6499 = vrot.lane.b32.xlu0 %v6421, 16
      %v6500 = vpop.permute.xlu0 %6499
      %6501 = vrot.lane.b32.xlu0 %v6422, 16
      %v6502 = vpop.permute.xlu0 %6501
      %6503 = vrot.lane.b32.xlu0 %v6423, 16
      %v6504 = vpop.permute.xlu0 %6503
      %6505 = vrot.lane.b32.xlu0 %v6424, 16
      %v6506 = vpop.permute.xlu0 %6505
      %6507 = vrot.lane.b32.xlu0 %v6425, 16
      %v6508 = vpop.permute.xlu0 %6507
      %6509 = vrot.lane.b32.xlu0 %v6426, 16
      %v6510 = vpop.permute.xlu0 %6509
      %6511 = vrot.lane.b32.xlu0 %v6427, 16
      %v6512 = vpop.permute.xlu0 %6511
      %6513 = vrot.lane.b32.xlu0 %v6428, 16
      %v6514 = vpop.permute.xlu0 %6513
      %6515 = vrot.lane.b32.xlu0 %v6429, 16
      %v6516 = vpop.permute.xlu0 %6515
      %6517 = vrot.lane.b32.xlu0 %v6430, 16
      %v6518 = vpop.permute.xlu0 %6517
      %6519 = vrot.lane.b32.xlu0 %v6431, 16
      %v6520 = vpop.permute.xlu0 %6519
      %6521 = vrot.lane.b32.xlu0 %v6432, 16
      %v6522 = vpop.permute.xlu0 %6521
      %6523 = vrot.lane.b32.xlu0 %v6433, 16
      %v6524 = vpop.permute.xlu0 %6523
      %6525 = vrot.lane.b32.xlu0 %v6434, 16
      %v6526 = vpop.permute.xlu0 %6525
      %6527 = vrot.lane.b32.xlu0 %v6435, 16
      %v6528 = vpop.permute.xlu0 %6527
      %6529 = vrot.lane.b32.xlu0 %v6436, 16
      %v6530 = vpop.permute.xlu0 %6529
      %6531 = vrot.lane.b32.xlu0 %v6437, 16
      %v6532 = vpop.permute.xlu0 %6531
      %6533 = vrot.lane.b32.xlu0 %v6438, 16
      %v6534 = vpop.permute.xlu0 %6533
      %6567 = vst.msk [vmem:[#allocation2 + $0x10] sm:$0xff] %vm649, %v6472
      %6568 = vst.msk [vmem:[#allocation2 + $0x28] sm:$0xff] %vm649, %v6474
      %6569 = vst.msk [vmem:[#allocation2 + $0x40] sm:$0xff] %vm649, %v6476
      %6570 = vst.msk [vmem:[#allocation2 + $0x58] sm:$0xff] %vm649, %v6478
      %6571 = vst.msk [vmem:[#allocation2 + $0x70] sm:$0xff] %vm649, %v6480
      %6572 = vst.msk [vmem:[#allocation2 + $0x88] sm:$0xff] %vm649, %v6482
      %6573 = vst.msk [vmem:[#allocation2 + $0xa0] sm:$0xff] %vm649, %v6484
      %6574 = vst.msk [vmem:[#allocation2 + $0xb8] sm:$0xff] %vm649, %v6486
      %6575 = vst.msk [vmem:[#allocation2 + $0xd0] sm:$0xff] %vm649, %v6488
      %6576 = vst.msk [vmem:[#allocation2 + $0xe8] sm:$0xff] %vm649, %v6490
      %6577 = vst.msk [vmem:[#allocation2 + $0x100] sm:$0xff] %vm649, %v6492
      %6578 = vst.msk [vmem:[#allocation2 + $0x118] sm:$0xff] %vm649, %v6494
      %6579 = vst.msk [vmem:[#allocation2 + $0x130] sm:$0xff] %vm649, %v6496
      %6580 = vst.msk [vmem:[#allocation2 + $0x148] sm:$0xff] %vm649, %v6498
      %6581 = vst.msk [vmem:[#allocation2 + $0x160] sm:$0xff] %vm649, %v6500
      %6582 = vst.msk [vmem:[#allocation2 + $0x178] sm:$0xff] %vm649, %v6502
      %6583 = vst.msk [vmem:[#allocation2 + $0x190] sm:$0xff] %vm649, %v6504
      %6584 = vst.msk [vmem:[#allocation2 + $0x1a8] sm:$0xff] %vm649, %v6506
      %6585 = vst.msk [vmem:[#allocation2 + $0x1c0] sm:$0xff] %vm649, %v6508
      %6586 = vst.msk [vmem:[#allocation2 + $0x1d8] sm:$0xff] %vm649, %v6510
      %6587 = vst.msk [vmem:[#allocation2 + $0x1f0] sm:$0xff] %vm649, %v6512
      %6588 = vst.msk [vmem:[#allocation2 + $0x208] sm:$0xff] %vm649, %v6514
      %6589 = vst.msk [vmem:[#allocation2 + $0x220] sm:$0xff] %vm649, %v6516
      %6590 = vst.msk [vmem:[#allocation2 + $0x238] sm:$0xff] %vm649, %v6518
      %6591 = vst.msk [vmem:[#allocation2 + $0x250] sm:$0xff] %vm649, %v6520
      %6592 = vst.msk [vmem:[#allocation2 + $0x268] sm:$0xff] %vm649, %v6522
      %6593 = vst.msk [vmem:[#allocation2 + $0x280] sm:$0xff] %vm649, %v6524
      %6594 = vst.msk [vmem:[#allocation2 + $0x298] sm:$0xff] %vm649, %v6526
      %6595 = vst.msk [vmem:[#allocation2 + $0x2b0] sm:$0xff] %vm649, %v6528
      %6596 = vst.msk [vmem:[#allocation2 + $0x2c8] sm:$0xff] %vm649, %v6530
      %6597 = vst.msk [vmem:[#allocation2 + $0x2e0] sm:$0xff] %vm649, %v6532
      %6598 = vst.msk [vmem:[#allocation2 + $0x2f8] sm:$0xff] %vm649, %v6534
      %s6599 = sadd.s32 48, %s5764
      %s6600 = scalar_lea.vmem %s183, %s6599
      %v6601 = vld [vmem:[%s6600] sm:$0xff]
      %v6602 = vld [vmem:[%s6600 + $0x10] sm:$0xff]
      %v6603 = vld [vmem:[%s6600 + $0x20] sm:$0xff]
      %v6604 = vld [vmem:[%s6600 + $0x30] sm:$0xff]
      %v6605 = vld [vmem:[%s6600 + $0xa0] sm:$0xff]
      %v6606 = vld [vmem:[%s6600 + $0xb0] sm:$0xff]
      %v6607 = vld [vmem:[%s6600 + $0xc0] sm:$0xff]
      %v6608 = vld [vmem:[%s6600 + $0xd0] sm:$0xff]
      %v6609 = vld [vmem:[%s6600 + $0x140] sm:$0xff]
      %v6610 = vld [vmem:[%s6600 + $0x150] sm:$0xff]
      %v6611 = vld [vmem:[%s6600 + $0x160] sm:$0xff]
      %v6612 = vld [vmem:[%s6600 + $0x170] sm:$0xff]
      %v6613 = vld [vmem:[%s6600 + $0x1e0] sm:$0xff]
      %v6614 = vld [vmem:[%s6600 + $0x1f0] sm:$0xff]
      %v6615 = vld [vmem:[%s6600 + $0x200] sm:$0xff]
      %v6616 = vld [vmem:[%s6600 + $0x210] sm:$0xff]
      %v6617 = vld [vmem:[%s6600 + $0x280] sm:$0xff]
      %v6618 = vld [vmem:[%s6600 + $0x290] sm:$0xff]
      %v6619 = vld [vmem:[%s6600 + $0x2a0] sm:$0xff]
      %v6620 = vld [vmem:[%s6600 + $0x2b0] sm:$0xff]
      %v6621 = vld [vmem:[%s6600 + $0x320] sm:$0xff]
      %v6622 = vld [vmem:[%s6600 + $0x330] sm:$0xff]
      %v6623 = vld [vmem:[%s6600 + $0x340] sm:$0xff]
      %v6624 = vld [vmem:[%s6600 + $0x350] sm:$0xff]
      %v6625 = vld [vmem:[%s6600 + $0x3c0] sm:$0xff]
      %v6626 = vld [vmem:[%s6600 + $0x3d0] sm:$0xff]
      %v6627 = vld [vmem:[%s6600 + $0x3e0] sm:$0xff]
      %v6628 = vld [vmem:[%s6600 + $0x3f0] sm:$0xff]
      %v6629 = vld [vmem:[%s6600 + $0x460] sm:$0xff]
      %v6630 = vld [vmem:[%s6600 + $0x470] sm:$0xff]
      %v6631 = vld [vmem:[%s6600 + $0x480] sm:$0xff]
      %v6632 = vld [vmem:[%s6600 + $0x490] sm:$0xff]
      %6665 = vrot.lane.b32.xlu0 %v6601, 24
      %v6666 = vpop.permute.xlu0 %6665
      %6667 = vrot.lane.b32.xlu0 %v6602, 24
      %v6668 = vpop.permute.xlu0 %6667
      %6669 = vrot.lane.b32.xlu0 %v6603, 24
      %v6670 = vpop.permute.xlu0 %6669
      %6671 = vrot.lane.b32.xlu0 %v6604, 24
      %v6672 = vpop.permute.xlu0 %6671
      %6673 = vrot.lane.b32.xlu0 %v6605, 24
      %v6674 = vpop.permute.xlu0 %6673
      %6675 = vrot.lane.b32.xlu0 %v6606, 24
      %v6676 = vpop.permute.xlu0 %6675
      %6677 = vrot.lane.b32.xlu0 %v6607, 24
      %v6678 = vpop.permute.xlu0 %6677
      %6679 = vrot.lane.b32.xlu0 %v6608, 24
      %v6680 = vpop.permute.xlu0 %6679
      %6681 = vrot.lane.b32.xlu0 %v6609, 24
      %v6682 = vpop.permute.xlu0 %6681
      %6683 = vrot.lane.b32.xlu0 %v6610, 24
      %v6684 = vpop.permute.xlu0 %6683
      %6685 = vrot.lane.b32.xlu0 %v6611, 24
      %v6686 = vpop.permute.xlu0 %6685
      %6687 = vrot.lane.b32.xlu0 %v6612, 24
      %v6688 = vpop.permute.xlu0 %6687
      %6689 = vrot.lane.b32.xlu0 %v6613, 24
      %v6690 = vpop.permute.xlu0 %6689
      %6691 = vrot.lane.b32.xlu0 %v6614, 24
      %v6692 = vpop.permute.xlu0 %6691
      %6693 = vrot.lane.b32.xlu0 %v6615, 24
      %v6694 = vpop.permute.xlu0 %6693
      %6695 = vrot.lane.b32.xlu0 %v6616, 24
      %v6696 = vpop.permute.xlu0 %6695
      %6697 = vrot.lane.b32.xlu0 %v6617, 24
      %v6698 = vpop.permute.xlu0 %6697
      %6699 = vrot.lane.b32.xlu0 %v6618, 24
      %v6700 = vpop.permute.xlu0 %6699
      %6701 = vrot.lane.b32.xlu0 %v6619, 24
      %v6702 = vpop.permute.xlu0 %6701
      %6703 = vrot.lane.b32.xlu0 %v6620, 24
      %v6704 = vpop.permute.xlu0 %6703
      %6705 = vrot.lane.b32.xlu0 %v6621, 24
      %v6706 = vpop.permute.xlu0 %6705
      %6707 = vrot.lane.b32.xlu0 %v6622, 24
      %v6708 = vpop.permute.xlu0 %6707
      %6709 = vrot.lane.b32.xlu0 %v6623, 24
      %v6710 = vpop.permute.xlu0 %6709
      %6711 = vrot.lane.b32.xlu0 %v6624, 24
      %v6712 = vpop.permute.xlu0 %6711
      %6713 = vrot.lane.b32.xlu0 %v6625, 24
      %v6714 = vpop.permute.xlu0 %6713
      %6715 = vrot.lane.b32.xlu0 %v6626, 24
      %v6716 = vpop.permute.xlu0 %6715
      %6717 = vrot.lane.b32.xlu0 %v6627, 24
      %v6718 = vpop.permute.xlu0 %6717
      %6719 = vrot.lane.b32.xlu0 %v6628, 24
      %v6720 = vpop.permute.xlu0 %6719
      %6721 = vrot.lane.b32.xlu0 %v6629, 24
      %v6722 = vpop.permute.xlu0 %6721
      %6723 = vrot.lane.b32.xlu0 %v6630, 24
      %v6724 = vpop.permute.xlu0 %6723
      %6725 = vrot.lane.b32.xlu0 %v6631, 24
      %v6726 = vpop.permute.xlu0 %6725
      %6727 = vrot.lane.b32.xlu0 %v6632, 24
      %v6728 = vpop.permute.xlu0 %6727
      %6761 = vst.msk [vmem:[#allocation2 + $0x10] sm:$0xff] %vm842, %v6666
      %6762 = vst.msk [vmem:[#allocation2 + $0x28] sm:$0xff] %vm842, %v6668
      %6763 = vst.msk [vmem:[#allocation2 + $0x40] sm:$0xff] %vm842, %v6670
      %6764 = vst.msk [vmem:[#allocation2 + $0x58] sm:$0xff] %vm842, %v6672
      %6765 = vst.msk [vmem:[#allocation2 + $0x70] sm:$0xff] %vm842, %v6674
      %6766 = vst.msk [vmem:[#allocation2 + $0x88] sm:$0xff] %vm842, %v6676
      %6767 = vst.msk [vmem:[#allocation2 + $0xa0] sm:$0xff] %vm842, %v6678
      %6768 = vst.msk [vmem:[#allocation2 + $0xb8] sm:$0xff] %vm842, %v6680
      %6769 = vst.msk [vmem:[#allocation2 + $0xd0] sm:$0xff] %vm842, %v6682
      %6770 = vst.msk [vmem:[#allocation2 + $0xe8] sm:$0xff] %vm842, %v6684
      %6771 = vst.msk [vmem:[#allocation2 + $0x100] sm:$0xff] %vm842, %v6686
      %6772 = vst.msk [vmem:[#allocation2 + $0x118] sm:$0xff] %vm842, %v6688
      %6773 = vst.msk [vmem:[#allocation2 + $0x130] sm:$0xff] %vm842, %v6690
      %6774 = vst.msk [vmem:[#allocation2 + $0x148] sm:$0xff] %vm842, %v6692
      %6775 = vst.msk [vmem:[#allocation2 + $0x160] sm:$0xff] %vm842, %v6694
      %6776 = vst.msk [vmem:[#allocation2 + $0x178] sm:$0xff] %vm842, %v6696
      %6777 = vst.msk [vmem:[#allocation2 + $0x190] sm:$0xff] %vm842, %v6698
      %6778 = vst.msk [vmem:[#allocation2 + $0x1a8] sm:$0xff] %vm842, %v6700
      %6779 = vst.msk [vmem:[#allocation2 + $0x1c0] sm:$0xff] %vm842, %v6702
      %6780 = vst.msk [vmem:[#allocation2 + $0x1d8] sm:$0xff] %vm842, %v6704
      %6781 = vst.msk [vmem:[#allocation2 + $0x1f0] sm:$0xff] %vm842, %v6706
      %6782 = vst.msk [vmem:[#allocation2 + $0x208] sm:$0xff] %vm842, %v6708
      %6783 = vst.msk [vmem:[#allocation2 + $0x220] sm:$0xff] %vm842, %v6710
      %6784 = vst.msk [vmem:[#allocation2 + $0x238] sm:$0xff] %vm842, %v6712
      %6785 = vst.msk [vmem:[#allocation2 + $0x250] sm:$0xff] %vm842, %v6714
      %6786 = vst.msk [vmem:[#allocation2 + $0x268] sm:$0xff] %vm842, %v6716
      %6787 = vst.msk [vmem:[#allocation2 + $0x280] sm:$0xff] %vm842, %v6718
      %6788 = vst.msk [vmem:[#allocation2 + $0x298] sm:$0xff] %vm842, %v6720
      %6789 = vst.msk [vmem:[#allocation2 + $0x2b0] sm:$0xff] %vm842, %v6722
      %6790 = vst.msk [vmem:[#allocation2 + $0x2c8] sm:$0xff] %vm842, %v6724
      %6791 = vst.msk [vmem:[#allocation2 + $0x2e0] sm:$0xff] %vm842, %v6726
      %6792 = vst.msk [vmem:[#allocation2 + $0x2f8] sm:$0xff] %vm842, %v6728
      %v6793 = vld [vmem:[%s6600 + $0x1] sm:$0xff]
      %v6794 = vld [vmem:[%s6600 + $0x11] sm:$0xff]
      %v6795 = vld [vmem:[%s6600 + $0x21] sm:$0xff]
      %v6796 = vld [vmem:[%s6600 + $0x31] sm:$0xff]
      %v6797 = vld [vmem:[%s6600 + $0xa1] sm:$0xff]
      %v6798 = vld [vmem:[%s6600 + $0xb1] sm:$0xff]
      %v6799 = vld [vmem:[%s6600 + $0xc1] sm:$0xff]
      %v6800 = vld [vmem:[%s6600 + $0xd1] sm:$0xff]
      %v6801 = vld [vmem:[%s6600 + $0x141] sm:$0xff]
      %v6802 = vld [vmem:[%s6600 + $0x151] sm:$0xff]
      %v6803 = vld [vmem:[%s6600 + $0x161] sm:$0xff]
      %v6804 = vld [vmem:[%s6600 + $0x171] sm:$0xff]
      %v6805 = vld [vmem:[%s6600 + $0x1e1] sm:$0xff]
      %v6806 = vld [vmem:[%s6600 + $0x1f1] sm:$0xff]
      %v6807 = vld [vmem:[%s6600 + $0x201] sm:$0xff]
      %v6808 = vld [vmem:[%s6600 + $0x211] sm:$0xff]
      %v6809 = vld [vmem:[%s6600 + $0x281] sm:$0xff]
      %v6810 = vld [vmem:[%s6600 + $0x291] sm:$0xff]
      %v6811 = vld [vmem:[%s6600 + $0x2a1] sm:$0xff]
      %v6812 = vld [vmem:[%s6600 + $0x2b1] sm:$0xff]
      %v6813 = vld [vmem:[%s6600 + $0x321] sm:$0xff]
      %v6814 = vld [vmem:[%s6600 + $0x331] sm:$0xff]
      %v6815 = vld [vmem:[%s6600 + $0x341] sm:$0xff]
      %v6816 = vld [vmem:[%s6600 + $0x351] sm:$0xff]
      %v6817 = vld [vmem:[%s6600 + $0x3c1] sm:$0xff]
      %v6818 = vld [vmem:[%s6600 + $0x3d1] sm:$0xff]
      %v6819 = vld [vmem:[%s6600 + $0x3e1] sm:$0xff]
      %v6820 = vld [vmem:[%s6600 + $0x3f1] sm:$0xff]
      %v6821 = vld [vmem:[%s6600 + $0x461] sm:$0xff]
      %v6822 = vld [vmem:[%s6600 + $0x471] sm:$0xff]
      %v6823 = vld [vmem:[%s6600 + $0x481] sm:$0xff]
      %v6824 = vld [vmem:[%s6600 + $0x491] sm:$0xff]
      %6857 = vrot.lane.b32.xlu0 %v6793, 32
      %v6858 = vpop.permute.xlu0 %6857
      %6859 = vrot.lane.b32.xlu0 %v6794, 32
      %v6860 = vpop.permute.xlu0 %6859
      %6861 = vrot.lane.b32.xlu0 %v6795, 32
      %v6862 = vpop.permute.xlu0 %6861
      %6863 = vrot.lane.b32.xlu0 %v6796, 32
      %v6864 = vpop.permute.xlu0 %6863
      %6865 = vrot.lane.b32.xlu0 %v6797, 32
      %v6866 = vpop.permute.xlu0 %6865
      %6867 = vrot.lane.b32.xlu0 %v6798, 32
      %v6868 = vpop.permute.xlu0 %6867
      %6869 = vrot.lane.b32.xlu0 %v6799, 32
      %v6870 = vpop.permute.xlu0 %6869
      %6871 = vrot.lane.b32.xlu0 %v6800, 32
      %v6872 = vpop.permute.xlu0 %6871
      %6873 = vrot.lane.b32.xlu0 %v6801, 32
      %v6874 = vpop.permute.xlu0 %6873
      %6875 = vrot.lane.b32.xlu0 %v6802, 32
      %v6876 = vpop.permute.xlu0 %6875
      %6877 = vrot.lane.b32.xlu0 %v6803, 32
      %v6878 = vpop.permute.xlu0 %6877
      %6879 = vrot.lane.b32.xlu0 %v6804, 32
      %v6880 = vpop.permute.xlu0 %6879
      %6881 = vrot.lane.b32.xlu0 %v6805, 32
      %v6882 = vpop.permute.xlu0 %6881
      %6883 = vrot.lane.b32.xlu0 %v6806, 32
      %v6884 = vpop.permute.xlu0 %6883
      %6885 = vrot.lane.b32.xlu0 %v6807, 32
      %v6886 = vpop.permute.xlu0 %6885
      %6887 = vrot.lane.b32.xlu0 %v6808, 32
      %v6888 = vpop.permute.xlu0 %6887
      %6889 = vrot.lane.b32.xlu0 %v6809, 32
      %v6890 = vpop.permute.xlu0 %6889
      %6891 = vrot.lane.b32.xlu0 %v6810, 32
      %v6892 = vpop.permute.xlu0 %6891
      %6893 = vrot.lane.b32.xlu0 %v6811, 32
      %v6894 = vpop.permute.xlu0 %6893
      %6895 = vrot.lane.b32.xlu0 %v6812, 32
      %v6896 = vpop.permute.xlu0 %6895
      %6897 = vrot.lane.b32.xlu0 %v6813, 32
      %v6898 = vpop.permute.xlu0 %6897
      %6899 = vrot.lane.b32.xlu0 %v6814, 32
      %v6900 = vpop.permute.xlu0 %6899
      %6901 = vrot.lane.b32.xlu0 %v6815, 32
      %v6902 = vpop.permute.xlu0 %6901
      %6903 = vrot.lane.b32.xlu0 %v6816, 32
      %v6904 = vpop.permute.xlu0 %6903
      %6905 = vrot.lane.b32.xlu0 %v6817, 32
      %v6906 = vpop.permute.xlu0 %6905
      %6907 = vrot.lane.b32.xlu0 %v6818, 32
      %v6908 = vpop.permute.xlu0 %6907
      %6909 = vrot.lane.b32.xlu0 %v6819, 32
      %v6910 = vpop.permute.xlu0 %6909
      %6911 = vrot.lane.b32.xlu0 %v6820, 32
      %v6912 = vpop.permute.xlu0 %6911
      %6913 = vrot.lane.b32.xlu0 %v6821, 32
      %v6914 = vpop.permute.xlu0 %6913
      %6915 = vrot.lane.b32.xlu0 %v6822, 32
      %v6916 = vpop.permute.xlu0 %6915
      %6917 = vrot.lane.b32.xlu0 %v6823, 32
      %v6918 = vpop.permute.xlu0 %6917
      %6919 = vrot.lane.b32.xlu0 %v6824, 32
      %v6920 = vpop.permute.xlu0 %6919
      %6953 = vst.msk [vmem:[#allocation2 + $0x10] sm:$0xff] %vm1035, %v6858
      %6954 = vst.msk [vmem:[#allocation2 + $0x28] sm:$0xff] %vm1035, %v6860
      %6955 = vst.msk [vmem:[#allocation2 + $0x40] sm:$0xff] %vm1035, %v6862
      %6956 = vst.msk [vmem:[#allocation2 + $0x58] sm:$0xff] %vm1035, %v6864
      %6957 = vst.msk [vmem:[#allocation2 + $0x70] sm:$0xff] %vm1035, %v6866
      %6958 = vst.msk [vmem:[#allocation2 + $0x88] sm:$0xff] %vm1035, %v6868
      %6959 = vst.msk [vmem:[#allocation2 + $0xa0] sm:$0xff] %vm1035, %v6870
      %6960 = vst.msk [vmem:[#allocation2 + $0xb8] sm:$0xff] %vm1035, %v6872
      %6961 = vst.msk [vmem:[#allocation2 + $0xd0] sm:$0xff] %vm1035, %v6874
      %6962 = vst.msk [vmem:[#allocation2 + $0xe8] sm:$0xff] %vm1035, %v6876
      %6963 = vst.msk [vmem:[#allocation2 + $0x100] sm:$0xff] %vm1035, %v6878
      %6964 = vst.msk [vmem:[#allocation2 + $0x118] sm:$0xff] %vm1035, %v6880
      %6965 = vst.msk [vmem:[#allocation2 + $0x130] sm:$0xff] %vm1035, %v6882
      %6966 = vst.msk [vmem:[#allocation2 + $0x148] sm:$0xff] %vm1035, %v6884
      %6967 = vst.msk [vmem:[#allocation2 + $0x160] sm:$0xff] %vm1035, %v6886
      %6968 = vst.msk [vmem:[#allocation2 + $0x178] sm:$0xff] %vm1035, %v6888
      %6969 = vst.msk [vmem:[#allocation2 + $0x190] sm:$0xff] %vm1035, %v6890
      %6970 = vst.msk [vmem:[#allocation2 + $0x1a8] sm:$0xff] %vm1035, %v6892
      %6971 = vst.msk [vmem:[#allocation2 + $0x1c0] sm:$0xff] %vm1035, %v6894
      %6972 = vst.msk [vmem:[#allocation2 + $0x1d8] sm:$0xff] %vm1035, %v6896
      %6973 = vst.msk [vmem:[#allocation2 + $0x1f0] sm:$0xff] %vm1035, %v6898
      %6974 = vst.msk [vmem:[#allocation2 + $0x208] sm:$0xff] %vm1035, %v6900
      %6975 = vst.msk [vmem:[#allocation2 + $0x220] sm:$0xff] %vm1035, %v6902
      %6976 = vst.msk [vmem:[#allocation2 + $0x238] sm:$0xff] %vm1035, %v6904
      %6977 = vst.msk [vmem:[#allocation2 + $0x250] sm:$0xff] %vm1035, %v6906
      %6978 = vst.msk [vmem:[#allocation2 + $0x268] sm:$0xff] %vm1035, %v6908
      %6979 = vst.msk [vmem:[#allocation2 + $0x280] sm:$0xff] %vm1035, %v6910
      %6980 = vst.msk [vmem:[#allocation2 + $0x298] sm:$0xff] %vm1035, %v6912
      %6981 = vst.msk [vmem:[#allocation2 + $0x2b0] sm:$0xff] %vm1035, %v6914
      %6982 = vst.msk [vmem:[#allocation2 + $0x2c8] sm:$0xff] %vm1035, %v6916
      %6983 = vst.msk [vmem:[#allocation2 + $0x2e0] sm:$0xff] %vm1035, %v6918
      %6984 = vst.msk [vmem:[#allocation2 + $0x2f8] sm:$0xff] %vm1035, %v6920
      %v6985 = vld [vmem:[%s6600 + $0x2] sm:$0xff]
      %v6986 = vld [vmem:[%s6600 + $0x12] sm:$0xff]
      %v6987 = vld [vmem:[%s6600 + $0x22] sm:$0xff]
      %v6988 = vld [vmem:[%s6600 + $0x32] sm:$0xff]
      %v6989 = vld [vmem:[%s6600 + $0xa2] sm:$0xff]
      %v6990 = vld [vmem:[%s6600 + $0xb2] sm:$0xff]
      %v6991 = vld [vmem:[%s6600 + $0xc2] sm:$0xff]
      %v6992 = vld [vmem:[%s6600 + $0xd2] sm:$0xff]
      %v6993 = vld [vmem:[%s6600 + $0x142] sm:$0xff]
      %v6994 = vld [vmem:[%s6600 + $0x152] sm:$0xff]
      %v6995 = vld [vmem:[%s6600 + $0x162] sm:$0xff]
      %v6996 = vld [vmem:[%s6600 + $0x172] sm:$0xff]
      %v6997 = vld [vmem:[%s6600 + $0x1e2] sm:$0xff]
      %v6998 = vld [vmem:[%s6600 + $0x1f2] sm:$0xff]
      %v6999 = vld [vmem:[%s6600 + $0x202] sm:$0xff]
      %v7000 = vld [vmem:[%s6600 + $0x212] sm:$0xff]
      %v7001 = vld [vmem:[%s6600 + $0x282] sm:$0xff]
      %v7002 = vld [vmem:[%s6600 + $0x292] sm:$0xff]
      %v7003 = vld [vmem:[%s6600 + $0x2a2] sm:$0xff]
      %v7004 = vld [vmem:[%s6600 + $0x2b2] sm:$0xff]
      %v7005 = vld [vmem:[%s6600 + $0x322] sm:$0xff]
      %v7006 = vld [vmem:[%s6600 + $0x332] sm:$0xff]
      %v7007 = vld [vmem:[%s6600 + $0x342] sm:$0xff]
      %v7008 = vld [vmem:[%s6600 + $0x352] sm:$0xff]
      %v7009 = vld [vmem:[%s6600 + $0x3c2] sm:$0xff]
      %v7010 = vld [vmem:[%s6600 + $0x3d2] sm:$0xff]
      %v7011 = vld [vmem:[%s6600 + $0x3e2] sm:$0xff]
      %v7012 = vld [vmem:[%s6600 + $0x3f2] sm:$0xff]
      %v7013 = vld [vmem:[%s6600 + $0x462] sm:$0xff]
      %v7014 = vld [vmem:[%s6600 + $0x472] sm:$0xff]
      %v7015 = vld [vmem:[%s6600 + $0x482] sm:$0xff]
      %v7016 = vld [vmem:[%s6600 + $0x492] sm:$0xff]
      %7049 = vrot.lane.b32.xlu0 %v6985, 40
      %v7050 = vpop.permute.xlu0 %7049
      %7051 = vrot.lane.b32.xlu0 %v6986, 40
      %v7052 = vpop.permute.xlu0 %7051
      %7053 = vrot.lane.b32.xlu0 %v6987, 40
      %v7054 = vpop.permute.xlu0 %7053
      %7055 = vrot.lane.b32.xlu0 %v6988, 40
      %v7056 = vpop.permute.xlu0 %7055
      %7057 = vrot.lane.b32.xlu0 %v6989, 40
      %v7058 = vpop.permute.xlu0 %7057
      %7059 = vrot.lane.b32.xlu0 %v6990, 40
      %v7060 = vpop.permute.xlu0 %7059
      %7061 = vrot.lane.b32.xlu0 %v6991, 40
      %v7062 = vpop.permute.xlu0 %7061
      %7063 = vrot.lane.b32.xlu0 %v6992, 40
      %v7064 = vpop.permute.xlu0 %7063
      %7065 = vrot.lane.b32.xlu0 %v6993, 40
      %v7066 = vpop.permute.xlu0 %7065
      %7067 = vrot.lane.b32.xlu0 %v6994, 40
      %v7068 = vpop.permute.xlu0 %7067
      %7069 = vrot.lane.b32.xlu0 %v6995, 40
      %v7070 = vpop.permute.xlu0 %7069
      %7071 = vrot.lane.b32.xlu0 %v6996, 40
      %v7072 = vpop.permute.xlu0 %7071
      %7073 = vrot.lane.b32.xlu0 %v6997, 40
      %v7074 = vpop.permute.xlu0 %7073
      %7075 = vrot.lane.b32.xlu0 %v6998, 40
      %v7076 = vpop.permute.xlu0 %7075
      %7077 = vrot.lane.b32.xlu0 %v6999, 40
      %v7078 = vpop.permute.xlu0 %7077
      %7079 = vrot.lane.b32.xlu0 %v7000, 40
      %v7080 = vpop.permute.xlu0 %7079
      %7081 = vrot.lane.b32.xlu0 %v7001, 40
      %v7082 = vpop.permute.xlu0 %7081
      %7083 = vrot.lane.b32.xlu0 %v7002, 40
      %v7084 = vpop.permute.xlu0 %7083
      %7085 = vrot.lane.b32.xlu0 %v7003, 40
      %v7086 = vpop.permute.xlu0 %7085
      %7087 = vrot.lane.b32.xlu0 %v7004, 40
      %v7088 = vpop.permute.xlu0 %7087
      %7089 = vrot.lane.b32.xlu0 %v7005, 40
      %v7090 = vpop.permute.xlu0 %7089
      %7091 = vrot.lane.b32.xlu0 %v7006, 40
      %v7092 = vpop.permute.xlu0 %7091
      %7093 = vrot.lane.b32.xlu0 %v7007, 40
      %v7094 = vpop.permute.xlu0 %7093
      %7095 = vrot.lane.b32.xlu0 %v7008, 40
      %v7096 = vpop.permute.xlu0 %7095
      %7097 = vrot.lane.b32.xlu0 %v7009, 40
      %v7098 = vpop.permute.xlu0 %7097
      %7099 = vrot.lane.b32.xlu0 %v7010, 40
      %v7100 = vpop.permute.xlu0 %7099
      %7101 = vrot.lane.b32.xlu0 %v7011, 40
      %v7102 = vpop.permute.xlu0 %7101
      %7103 = vrot.lane.b32.xlu0 %v7012, 40
      %v7104 = vpop.permute.xlu0 %7103
      %7105 = vrot.lane.b32.xlu0 %v7013, 40
      %v7106 = vpop.permute.xlu0 %7105
      %7107 = vrot.lane.b32.xlu0 %v7014, 40
      %v7108 = vpop.permute.xlu0 %7107
      %7109 = vrot.lane.b32.xlu0 %v7015, 40
      %v7110 = vpop.permute.xlu0 %7109
      %7111 = vrot.lane.b32.xlu0 %v7016, 40
      %v7112 = vpop.permute.xlu0 %7111
      %7145 = vst.msk [vmem:[#allocation2 + $0x10] sm:$0xff] %vm1230, %v7050
      %7146 = vst.msk [vmem:[#allocation2 + $0x28] sm:$0xff] %vm1230, %v7052
      %7147 = vst.msk [vmem:[#allocation2 + $0x40] sm:$0xff] %vm1230, %v7054
      %7148 = vst.msk [vmem:[#allocation2 + $0x58] sm:$0xff] %vm1230, %v7056
      %7149 = vst.msk [vmem:[#allocation2 + $0x70] sm:$0xff] %vm1230, %v7058
      %7150 = vst.msk [vmem:[#allocation2 + $0x88] sm:$0xff] %vm1230, %v7060
      %7151 = vst.msk [vmem:[#allocation2 + $0xa0] sm:$0xff] %vm1230, %v7062
      %7152 = vst.msk [vmem:[#allocation2 + $0xb8] sm:$0xff] %vm1230, %v7064
      %7153 = vst.msk [vmem:[#allocation2 + $0xd0] sm:$0xff] %vm1230, %v7066
      %7154 = vst.msk [vmem:[#allocation2 + $0xe8] sm:$0xff] %vm1230, %v7068
      %7155 = vst.msk [vmem:[#allocation2 + $0x100] sm:$0xff] %vm1230, %v7070
      %7156 = vst.msk [vmem:[#allocation2 + $0x118] sm:$0xff] %vm1230, %v7072
      %7157 = vst.msk [vmem:[#allocation2 + $0x130] sm:$0xff] %vm1230, %v7074
      %7158 = vst.msk [vmem:[#allocation2 + $0x148] sm:$0xff] %vm1230, %v7076
      %7159 = vst.msk [vmem:[#allocation2 + $0x160] sm:$0xff] %vm1230, %v7078
      %7160 = vst.msk [vmem:[#allocation2 + $0x178] sm:$0xff] %vm1230, %v7080
      %7161 = vst.msk [vmem:[#allocation2 + $0x190] sm:$0xff] %vm1230, %v7082
      %7162 = vst.msk [vmem:[#allocation2 + $0x1a8] sm:$0xff] %vm1230, %v7084
      %7163 = vst.msk [vmem:[#allocation2 + $0x1c0] sm:$0xff] %vm1230, %v7086
      %7164 = vst.msk [vmem:[#allocation2 + $0x1d8] sm:$0xff] %vm1230, %v7088
      %7165 = vst.msk [vmem:[#allocation2 + $0x1f0] sm:$0xff] %vm1230, %v7090
      %7166 = vst.msk [vmem:[#allocation2 + $0x208] sm:$0xff] %vm1230, %v7092
      %7167 = vst.msk [vmem:[#allocation2 + $0x220] sm:$0xff] %vm1230, %v7094
      %7168 = vst.msk [vmem:[#allocation2 + $0x238] sm:$0xff] %vm1230, %v7096
      %7169 = vst.msk [vmem:[#allocation2 + $0x250] sm:$0xff] %vm1230, %v7098
      %7170 = vst.msk [vmem:[#allocation2 + $0x268] sm:$0xff] %vm1230, %v7100
      %7171 = vst.msk [vmem:[#allocation2 + $0x280] sm:$0xff] %vm1230, %v7102
      %7172 = vst.msk [vmem:[#allocation2 + $0x298] sm:$0xff] %vm1230, %v7104
      %7173 = vst.msk [vmem:[#allocation2 + $0x2b0] sm:$0xff] %vm1230, %v7106
      %7174 = vst.msk [vmem:[#allocation2 + $0x2c8] sm:$0xff] %vm1230, %v7108
      %7175 = vst.msk [vmem:[#allocation2 + $0x2e0] sm:$0xff] %vm1230, %v7110
      %7176 = vst.msk [vmem:[#allocation2 + $0x2f8] sm:$0xff] %vm1230, %v7112
      %v7177 = vld [vmem:[%s6600 + $0x3] sm:$0xff]
      %v7178 = vld [vmem:[%s6600 + $0x13] sm:$0xff]
      %v7179 = vld [vmem:[%s6600 + $0x23] sm:$0xff]
      %v7180 = vld [vmem:[%s6600 + $0x33] sm:$0xff]
      %v7181 = vld [vmem:[%s6600 + $0xa3] sm:$0xff]
      %v7182 = vld [vmem:[%s6600 + $0xb3] sm:$0xff]
      %v7183 = vld [vmem:[%s6600 + $0xc3] sm:$0xff]
      %v7184 = vld [vmem:[%s6600 + $0xd3] sm:$0xff]
      %v7185 = vld [vmem:[%s6600 + $0x143] sm:$0xff]
      %v7186 = vld [vmem:[%s6600 + $0x153] sm:$0xff]
      %v7187 = vld [vmem:[%s6600 + $0x163] sm:$0xff]
      %v7188 = vld [vmem:[%s6600 + $0x173] sm:$0xff]
      %v7189 = vld [vmem:[%s6600 + $0x1e3] sm:$0xff]
      %v7190 = vld [vmem:[%s6600 + $0x1f3] sm:$0xff]
      %v7191 = vld [vmem:[%s6600 + $0x203] sm:$0xff]
      %v7192 = vld [vmem:[%s6600 + $0x213] sm:$0xff]
      %v7193 = vld [vmem:[%s6600 + $0x283] sm:$0xff]
      %v7194 = vld [vmem:[%s6600 + $0x293] sm:$0xff]
      %v7195 = vld [vmem:[%s6600 + $0x2a3] sm:$0xff]
      %v7196 = vld [vmem:[%s6600 + $0x2b3] sm:$0xff]
      %v7197 = vld [vmem:[%s6600 + $0x323] sm:$0xff]
      %v7198 = vld [vmem:[%s6600 + $0x333] sm:$0xff]
      %v7199 = vld [vmem:[%s6600 + $0x343] sm:$0xff]
      %v7200 = vld [vmem:[%s6600 + $0x353] sm:$0xff]
      %v7201 = vld [vmem:[%s6600 + $0x3c3] sm:$0xff]
      %v7202 = vld [vmem:[%s6600 + $0x3d3] sm:$0xff]
      %v7203 = vld [vmem:[%s6600 + $0x3e3] sm:$0xff]
      %v7204 = vld [vmem:[%s6600 + $0x3f3] sm:$0xff]
      %v7205 = vld [vmem:[%s6600 + $0x463] sm:$0xff]
      %v7206 = vld [vmem:[%s6600 + $0x473] sm:$0xff]
      %v7207 = vld [vmem:[%s6600 + $0x483] sm:$0xff]
      %v7208 = vld [vmem:[%s6600 + $0x493] sm:$0xff]
      %7241 = vrot.lane.b32.xlu0 %v7177, 48
      %v7242 = vpop.permute.xlu0 %7241
      %7243 = vrot.lane.b32.xlu0 %v7178, 48
      %v7244 = vpop.permute.xlu0 %7243
      %7245 = vrot.lane.b32.xlu0 %v7179, 48
      %v7246 = vpop.permute.xlu0 %7245
      %7247 = vrot.lane.b32.xlu0 %v7180, 48
      %v7248 = vpop.permute.xlu0 %7247
      %7249 = vrot.lane.b32.xlu0 %v7181, 48
      %v7250 = vpop.permute.xlu0 %7249
      %7251 = vrot.lane.b32.xlu0 %v7182, 48
      %v7252 = vpop.permute.xlu0 %7251
      %7253 = vrot.lane.b32.xlu0 %v7183, 48
      %v7254 = vpop.permute.xlu0 %7253
      %7255 = vrot.lane.b32.xlu0 %v7184, 48
      %v7256 = vpop.permute.xlu0 %7255
      %7257 = vrot.lane.b32.xlu0 %v7185, 48
      %v7258 = vpop.permute.xlu0 %7257
      %7259 = vrot.lane.b32.xlu0 %v7186, 48
      %v7260 = vpop.permute.xlu0 %7259
      %7261 = vrot.lane.b32.xlu0 %v7187, 48
      %v7262 = vpop.permute.xlu0 %7261
      %7263 = vrot.lane.b32.xlu0 %v7188, 48
      %v7264 = vpop.permute.xlu0 %7263
      %7265 = vrot.lane.b32.xlu0 %v7189, 48
      %v7266 = vpop.permute.xlu0 %7265
      %7267 = vrot.lane.b32.xlu0 %v7190, 48
      %v7268 = vpop.permute.xlu0 %7267
      %7269 = vrot.lane.b32.xlu0 %v7191, 48
      %v7270 = vpop.permute.xlu0 %7269
      %7271 = vrot.lane.b32.xlu0 %v7192, 48
      %v7272 = vpop.permute.xlu0 %7271
      %7273 = vrot.lane.b32.xlu0 %v7193, 48
      %v7274 = vpop.permute.xlu0 %7273
      %7275 = vrot.lane.b32.xlu0 %v7194, 48
      %v7276 = vpop.permute.xlu0 %7275
      %7277 = vrot.lane.b32.xlu0 %v7195, 48
      %v7278 = vpop.permute.xlu0 %7277
      %7279 = vrot.lane.b32.xlu0 %v7196, 48
      %v7280 = vpop.permute.xlu0 %7279
      %7281 = vrot.lane.b32.xlu0 %v7197, 48
      %v7282 = vpop.permute.xlu0 %7281
      %7283 = vrot.lane.b32.xlu0 %v7198, 48
      %v7284 = vpop.permute.xlu0 %7283
      %7285 = vrot.lane.b32.xlu0 %v7199, 48
      %v7286 = vpop.permute.xlu0 %7285
      %7287 = vrot.lane.b32.xlu0 %v7200, 48
      %v7288 = vpop.permute.xlu0 %7287
      %7289 = vrot.lane.b32.xlu0 %v7201, 48
      %v7290 = vpop.permute.xlu0 %7289
      %7291 = vrot.lane.b32.xlu0 %v7202, 48
      %v7292 = vpop.permute.xlu0 %7291
      %7293 = vrot.lane.b32.xlu0 %v7203, 48
      %v7294 = vpop.permute.xlu0 %7293
      %7295 = vrot.lane.b32.xlu0 %v7204, 48
      %v7296 = vpop.permute.xlu0 %7295
      %7297 = vrot.lane.b32.xlu0 %v7205, 48
      %v7298 = vpop.permute.xlu0 %7297
      %7299 = vrot.lane.b32.xlu0 %v7206, 48
      %v7300 = vpop.permute.xlu0 %7299
      %7301 = vrot.lane.b32.xlu0 %v7207, 48
      %v7302 = vpop.permute.xlu0 %7301
      %7303 = vrot.lane.b32.xlu0 %v7208, 48
      %v7304 = vpop.permute.xlu0 %7303
      %7337 = vst.msk [vmem:[#allocation2 + $0x10] sm:$0xff] %vm1423, %v7242
      %7338 = vst.msk [vmem:[#allocation2 + $0x28] sm:$0xff] %vm1423, %v7244
      %7339 = vst.msk [vmem:[#allocation2 + $0x40] sm:$0xff] %vm1423, %v7246
      %7340 = vst.msk [vmem:[#allocation2 + $0x58] sm:$0xff] %vm1423, %v7248
      %7341 = vst.msk [vmem:[#allocation2 + $0x70] sm:$0xff] %vm1423, %v7250
      %7342 = vst.msk [vmem:[#allocation2 + $0x88] sm:$0xff] %vm1423, %v7252
      %7343 = vst.msk [vmem:[#allocation2 + $0xa0] sm:$0xff] %vm1423, %v7254
      %7344 = vst.msk [vmem:[#allocation2 + $0xb8] sm:$0xff] %vm1423, %v7256
      %7345 = vst.msk [vmem:[#allocation2 + $0xd0] sm:$0xff] %vm1423, %v7258
      %7346 = vst.msk [vmem:[#allocation2 + $0xe8] sm:$0xff] %vm1423, %v7260
      %7347 = vst.msk [vmem:[#allocation2 + $0x100] sm:$0xff] %vm1423, %v7262
      %7348 = vst.msk [vmem:[#allocation2 + $0x118] sm:$0xff] %vm1423, %v7264
      %7349 = vst.msk [vmem:[#allocation2 + $0x130] sm:$0xff] %vm1423, %v7266
      %7350 = vst.msk [vmem:[#allocation2 + $0x148] sm:$0xff] %vm1423, %v7268
      %7351 = vst.msk [vmem:[#allocation2 + $0x160] sm:$0xff] %vm1423, %v7270
      %7352 = vst.msk [vmem:[#allocation2 + $0x178] sm:$0xff] %vm1423, %v7272
      %7353 = vst.msk [vmem:[#allocation2 + $0x190] sm:$0xff] %vm1423, %v7274
      %7354 = vst.msk [vmem:[#allocation2 + $0x1a8] sm:$0xff] %vm1423, %v7276
      %7355 = vst.msk [vmem:[#allocation2 + $0x1c0] sm:$0xff] %vm1423, %v7278
      %7356 = vst.msk [vmem:[#allocation2 + $0x1d8] sm:$0xff] %vm1423, %v7280
      %7357 = vst.msk [vmem:[#allocation2 + $0x1f0] sm:$0xff] %vm1423, %v7282
      %7358 = vst.msk [vmem:[#allocation2 + $0x208] sm:$0xff] %vm1423, %v7284
      %7359 = vst.msk [vmem:[#allocation2 + $0x220] sm:$0xff] %vm1423, %v7286
      %7360 = vst.msk [vmem:[#allocation2 + $0x238] sm:$0xff] %vm1423, %v7288
      %7361 = vst.msk [vmem:[#allocation2 + $0x250] sm:$0xff] %vm1423, %v7290
      %7362 = vst.msk [vmem:[#allocation2 + $0x268] sm:$0xff] %vm1423, %v7292
      %7363 = vst.msk [vmem:[#allocation2 + $0x280] sm:$0xff] %vm1423, %v7294
      %7364 = vst.msk [vmem:[#allocation2 + $0x298] sm:$0xff] %vm1423, %v7296
      %7365 = vst.msk [vmem:[#allocation2 + $0x2b0] sm:$0xff] %vm1423, %v7298
      %7366 = vst.msk [vmem:[#allocation2 + $0x2c8] sm:$0xff] %vm1423, %v7300
      %7367 = vst.msk [vmem:[#allocation2 + $0x2e0] sm:$0xff] %vm1423, %v7302
      %7368 = vst.msk [vmem:[#allocation2 + $0x2f8] sm:$0xff] %vm1423, %v7304
      %v7369 = vld [vmem:[%s6600 + $0x4] sm:$0xff]
      %v7370 = vld [vmem:[%s6600 + $0x14] sm:$0xff]
      %v7371 = vld [vmem:[%s6600 + $0x24] sm:$0xff]
      %v7372 = vld [vmem:[%s6600 + $0x34] sm:$0xff]
      %v7373 = vld [vmem:[%s6600 + $0xa4] sm:$0xff]
      %v7374 = vld [vmem:[%s6600 + $0xb4] sm:$0xff]
      %v7375 = vld [vmem:[%s6600 + $0xc4] sm:$0xff]
      %v7376 = vld [vmem:[%s6600 + $0xd4] sm:$0xff]
      %v7377 = vld [vmem:[%s6600 + $0x144] sm:$0xff]
      %v7378 = vld [vmem:[%s6600 + $0x154] sm:$0xff]
      %v7379 = vld [vmem:[%s6600 + $0x164] sm:$0xff]
      %v7380 = vld [vmem:[%s6600 + $0x174] sm:$0xff]
      %v7381 = vld [vmem:[%s6600 + $0x1e4] sm:$0xff]
      %v7382 = vld [vmem:[%s6600 + $0x1f4] sm:$0xff]
      %v7383 = vld [vmem:[%s6600 + $0x204] sm:$0xff]
      %v7384 = vld [vmem:[%s6600 + $0x214] sm:$0xff]
      %v7385 = vld [vmem:[%s6600 + $0x284] sm:$0xff]
      %v7386 = vld [vmem:[%s6600 + $0x294] sm:$0xff]
      %v7387 = vld [vmem:[%s6600 + $0x2a4] sm:$0xff]
      %v7388 = vld [vmem:[%s6600 + $0x2b4] sm:$0xff]
      %v7389 = vld [vmem:[%s6600 + $0x324] sm:$0xff]
      %v7390 = vld [vmem:[%s6600 + $0x334] sm:$0xff]
      %v7391 = vld [vmem:[%s6600 + $0x344] sm:$0xff]
      %v7392 = vld [vmem:[%s6600 + $0x354] sm:$0xff]
      %v7393 = vld [vmem:[%s6600 + $0x3c4] sm:$0xff]
      %v7394 = vld [vmem:[%s6600 + $0x3d4] sm:$0xff]
      %v7395 = vld [vmem:[%s6600 + $0x3e4] sm:$0xff]
      %v7396 = vld [vmem:[%s6600 + $0x3f4] sm:$0xff]
      %v7397 = vld [vmem:[%s6600 + $0x464] sm:$0xff]
      %v7398 = vld [vmem:[%s6600 + $0x474] sm:$0xff]
      %v7399 = vld [vmem:[%s6600 + $0x484] sm:$0xff]
      %v7400 = vld [vmem:[%s6600 + $0x494] sm:$0xff]
      %7433 = vrot.lane.b32.xlu0 %v7369, 56
      %v7434 = vpop.permute.xlu0 %7433
      %7435 = vrot.lane.b32.xlu0 %v7370, 56
      %v7436 = vpop.permute.xlu0 %7435
      %7437 = vrot.lane.b32.xlu0 %v7371, 56
      %v7438 = vpop.permute.xlu0 %7437
      %7439 = vrot.lane.b32.xlu0 %v7372, 56
      %v7440 = vpop.permute.xlu0 %7439
      %7441 = vrot.lane.b32.xlu0 %v7373, 56
      %v7442 = vpop.permute.xlu0 %7441
      %7443 = vrot.lane.b32.xlu0 %v7374, 56
      %v7444 = vpop.permute.xlu0 %7443
      %7445 = vrot.lane.b32.xlu0 %v7375, 56
      %v7446 = vpop.permute.xlu0 %7445
      %7447 = vrot.lane.b32.xlu0 %v7376, 56
      %v7448 = vpop.permute.xlu0 %7447
      %7449 = vrot.lane.b32.xlu0 %v7377, 56
      %v7450 = vpop.permute.xlu0 %7449
      %7451 = vrot.lane.b32.xlu0 %v7378, 56
      %v7452 = vpop.permute.xlu0 %7451
      %7453 = vrot.lane.b32.xlu0 %v7379, 56
      %v7454 = vpop.permute.xlu0 %7453
      %7455 = vrot.lane.b32.xlu0 %v7380, 56
      %v7456 = vpop.permute.xlu0 %7455
      %7457 = vrot.lane.b32.xlu0 %v7381, 56
      %v7458 = vpop.permute.xlu0 %7457
      %7459 = vrot.lane.b32.xlu0 %v7382, 56
      %v7460 = vpop.permute.xlu0 %7459
      %7461 = vrot.lane.b32.xlu0 %v7383, 56
      %v7462 = vpop.permute.xlu0 %7461
      %7463 = vrot.lane.b32.xlu0 %v7384, 56
      %v7464 = vpop.permute.xlu0 %7463
      %7465 = vrot.lane.b32.xlu0 %v7385, 56
      %v7466 = vpop.permute.xlu0 %7465
      %7467 = vrot.lane.b32.xlu0 %v7386, 56
      %v7468 = vpop.permute.xlu0 %7467
      %7469 = vrot.lane.b32.xlu0 %v7387, 56
      %v7470 = vpop.permute.xlu0 %7469
      %7471 = vrot.lane.b32.xlu0 %v7388, 56
      %v7472 = vpop.permute.xlu0 %7471
      %7473 = vrot.lane.b32.xlu0 %v7389, 56
      %v7474 = vpop.permute.xlu0 %7473
      %7475 = vrot.lane.b32.xlu0 %v7390, 56
      %v7476 = vpop.permute.xlu0 %7475
      %7477 = vrot.lane.b32.xlu0 %v7391, 56
      %v7478 = vpop.permute.xlu0 %7477
      %7479 = vrot.lane.b32.xlu0 %v7392, 56
      %v7480 = vpop.permute.xlu0 %7479
      %7481 = vrot.lane.b32.xlu0 %v7393, 56
      %v7482 = vpop.permute.xlu0 %7481
      %7483 = vrot.lane.b32.xlu0 %v7394, 56
      %v7484 = vpop.permute.xlu0 %7483
      %7485 = vrot.lane.b32.xlu0 %v7395, 56
      %v7486 = vpop.permute.xlu0 %7485
      %7487 = vrot.lane.b32.xlu0 %v7396, 56
      %v7488 = vpop.permute.xlu0 %7487
      %7489 = vrot.lane.b32.xlu0 %v7397, 56
      %v7490 = vpop.permute.xlu0 %7489
      %7491 = vrot.lane.b32.xlu0 %v7398, 56
      %v7492 = vpop.permute.xlu0 %7491
      %7493 = vrot.lane.b32.xlu0 %v7399, 56
      %v7494 = vpop.permute.xlu0 %7493
      %7495 = vrot.lane.b32.xlu0 %v7400, 56
      %v7496 = vpop.permute.xlu0 %7495
      %7529 = vst.msk [vmem:[#allocation2 + $0x10] sm:$0xff] %vm1616, %v7434
      %7530 = vst.msk [vmem:[#allocation2 + $0x28] sm:$0xff] %vm1616, %v7436
      %7531 = vst.msk [vmem:[#allocation2 + $0x40] sm:$0xff] %vm1616, %v7438
      %7532 = vst.msk [vmem:[#allocation2 + $0x58] sm:$0xff] %vm1616, %v7440
      %7533 = vst.msk [vmem:[#allocation2 + $0x70] sm:$0xff] %vm1616, %v7442
      %7534 = vst.msk [vmem:[#allocation2 + $0x88] sm:$0xff] %vm1616, %v7444
      %7535 = vst.msk [vmem:[#allocation2 + $0xa0] sm:$0xff] %vm1616, %v7446
      %7536 = vst.msk [vmem:[#allocation2 + $0xb8] sm:$0xff] %vm1616, %v7448
      %7537 = vst.msk [vmem:[#allocation2 + $0xd0] sm:$0xff] %vm1616, %v7450
      %7538 = vst.msk [vmem:[#allocation2 + $0xe8] sm:$0xff] %vm1616, %v7452
      %7539 = vst.msk [vmem:[#allocation2 + $0x100] sm:$0xff] %vm1616, %v7454
      %7540 = vst.msk [vmem:[#allocation2 + $0x118] sm:$0xff] %vm1616, %v7456
      %7541 = vst.msk [vmem:[#allocation2 + $0x130] sm:$0xff] %vm1616, %v7458
      %7542 = vst.msk [vmem:[#allocation2 + $0x148] sm:$0xff] %vm1616, %v7460
      %7543 = vst.msk [vmem:[#allocation2 + $0x160] sm:$0xff] %vm1616, %v7462
      %7544 = vst.msk [vmem:[#allocation2 + $0x178] sm:$0xff] %vm1616, %v7464
      %7545 = vst.msk [vmem:[#allocation2 + $0x190] sm:$0xff] %vm1616, %v7466
      %7546 = vst.msk [vmem:[#allocation2 + $0x1a8] sm:$0xff] %vm1616, %v7468
      %7547 = vst.msk [vmem:[#allocation2 + $0x1c0] sm:$0xff] %vm1616, %v7470
      %7548 = vst.msk [vmem:[#allocation2 + $0x1d8] sm:$0xff] %vm1616, %v7472
      %7549 = vst.msk [vmem:[#allocation2 + $0x1f0] sm:$0xff] %vm1616, %v7474
      %7550 = vst.msk [vmem:[#allocation2 + $0x208] sm:$0xff] %vm1616, %v7476
      %7551 = vst.msk [vmem:[#allocation2 + $0x220] sm:$0xff] %vm1616, %v7478
      %7552 = vst.msk [vmem:[#allocation2 + $0x238] sm:$0xff] %vm1616, %v7480
      %7553 = vst.msk [vmem:[#allocation2 + $0x250] sm:$0xff] %vm1616, %v7482
      %7554 = vst.msk [vmem:[#allocation2 + $0x268] sm:$0xff] %vm1616, %v7484
      %7555 = vst.msk [vmem:[#allocation2 + $0x280] sm:$0xff] %vm1616, %v7486
      %7556 = vst.msk [vmem:[#allocation2 + $0x298] sm:$0xff] %vm1616, %v7488
      %7557 = vst.msk [vmem:[#allocation2 + $0x2b0] sm:$0xff] %vm1616, %v7490
      %7558 = vst.msk [vmem:[#allocation2 + $0x2c8] sm:$0xff] %vm1616, %v7492
      %7559 = vst.msk [vmem:[#allocation2 + $0x2e0] sm:$0xff] %vm1616, %v7494
      %7560 = vst.msk [vmem:[#allocation2 + $0x2f8] sm:$0xff] %vm1616, %v7496
      %s7561 = sadd.s32 64, %s5764
      %s7562 = scalar_lea.vmem %s183, %s7561
      %v7563 = vld [vmem:[%s7562] sm:$0xff]
      %v7564 = vld [vmem:[%s7562 + $0x10] sm:$0xff]
      %v7565 = vld [vmem:[%s7562 + $0x20] sm:$0xff]
      %v7566 = vld [vmem:[%s7562 + $0x30] sm:$0xff]
      %v7567 = vld [vmem:[%s7562 + $0xa0] sm:$0xff]
      %v7568 = vld [vmem:[%s7562 + $0xb0] sm:$0xff]
      %v7569 = vld [vmem:[%s7562 + $0xc0] sm:$0xff]
      %v7570 = vld [vmem:[%s7562 + $0xd0] sm:$0xff]
      %v7571 = vld [vmem:[%s7562 + $0x140] sm:$0xff]
      %v7572 = vld [vmem:[%s7562 + $0x150] sm:$0xff]
      %v7573 = vld [vmem:[%s7562 + $0x160] sm:$0xff]
      %v7574 = vld [vmem:[%s7562 + $0x170] sm:$0xff]
      %v7575 = vld [vmem:[%s7562 + $0x1e0] sm:$0xff]
      %v7576 = vld [vmem:[%s7562 + $0x1f0] sm:$0xff]
      %v7577 = vld [vmem:[%s7562 + $0x200] sm:$0xff]
      %v7578 = vld [vmem:[%s7562 + $0x210] sm:$0xff]
      %v7579 = vld [vmem:[%s7562 + $0x280] sm:$0xff]
      %v7580 = vld [vmem:[%s7562 + $0x290] sm:$0xff]
      %v7581 = vld [vmem:[%s7562 + $0x2a0] sm:$0xff]
      %v7582 = vld [vmem:[%s7562 + $0x2b0] sm:$0xff]
      %v7583 = vld [vmem:[%s7562 + $0x320] sm:$0xff]
      %v7584 = vld [vmem:[%s7562 + $0x330] sm:$0xff]
      %v7585 = vld [vmem:[%s7562 + $0x340] sm:$0xff]
      %v7586 = vld [vmem:[%s7562 + $0x350] sm:$0xff]
      %v7587 = vld [vmem:[%s7562 + $0x3c0] sm:$0xff]
      %v7588 = vld [vmem:[%s7562 + $0x3d0] sm:$0xff]
      %v7589 = vld [vmem:[%s7562 + $0x3e0] sm:$0xff]
      %v7590 = vld [vmem:[%s7562 + $0x3f0] sm:$0xff]
      %v7591 = vld [vmem:[%s7562 + $0x460] sm:$0xff]
      %v7592 = vld [vmem:[%s7562 + $0x470] sm:$0xff]
      %v7593 = vld [vmem:[%s7562 + $0x480] sm:$0xff]
      %v7594 = vld [vmem:[%s7562 + $0x490] sm:$0xff]
      %7627 = vrot.lane.b32.xlu0 %v7563, 64
      %v7628 = vpop.permute.xlu0 %7627
      %7629 = vrot.lane.b32.xlu0 %v7564, 64
      %v7630 = vpop.permute.xlu0 %7629
      %7631 = vrot.lane.b32.xlu0 %v7565, 64
      %v7632 = vpop.permute.xlu0 %7631
      %7633 = vrot.lane.b32.xlu0 %v7566, 64
      %v7634 = vpop.permute.xlu0 %7633
      %7635 = vrot.lane.b32.xlu0 %v7567, 64
      %v7636 = vpop.permute.xlu0 %7635
      %7637 = vrot.lane.b32.xlu0 %v7568, 64
      %v7638 = vpop.permute.xlu0 %7637
      %7639 = vrot.lane.b32.xlu0 %v7569, 64
      %v7640 = vpop.permute.xlu0 %7639
      %7641 = vrot.lane.b32.xlu0 %v7570, 64
      %v7642 = vpop.permute.xlu0 %7641
      %7643 = vrot.lane.b32.xlu0 %v7571, 64
      %v7644 = vpop.permute.xlu0 %7643
      %7645 = vrot.lane.b32.xlu0 %v7572, 64
      %v7646 = vpop.permute.xlu0 %7645
      %7647 = vrot.lane.b32.xlu0 %v7573, 64
      %v7648 = vpop.permute.xlu0 %7647
      %7649 = vrot.lane.b32.xlu0 %v7574, 64
      %v7650 = vpop.permute.xlu0 %7649
      %7651 = vrot.lane.b32.xlu0 %v7575, 64
      %v7652 = vpop.permute.xlu0 %7651
      %7653 = vrot.lane.b32.xlu0 %v7576, 64
      %v7654 = vpop.permute.xlu0 %7653
      %7655 = vrot.lane.b32.xlu0 %v7577, 64
      %v7656 = vpop.permute.xlu0 %7655
      %7657 = vrot.lane.b32.xlu0 %v7578, 64
      %v7658 = vpop.permute.xlu0 %7657
      %7659 = vrot.lane.b32.xlu0 %v7579, 64
      %v7660 = vpop.permute.xlu0 %7659
      %7661 = vrot.lane.b32.xlu0 %v7580, 64
      %v7662 = vpop.permute.xlu0 %7661
      %7663 = vrot.lane.b32.xlu0 %v7581, 64
      %v7664 = vpop.permute.xlu0 %7663
      %7665 = vrot.lane.b32.xlu0 %v7582, 64
      %v7666 = vpop.permute.xlu0 %7665
      %7667 = vrot.lane.b32.xlu0 %v7583, 64
      %v7668 = vpop.permute.xlu0 %7667
      %7669 = vrot.lane.b32.xlu0 %v7584, 64
      %v7670 = vpop.permute.xlu0 %7669
      %7671 = vrot.lane.b32.xlu0 %v7585, 64
      %v7672 = vpop.permute.xlu0 %7671
      %7673 = vrot.lane.b32.xlu0 %v7586, 64
      %v7674 = vpop.permute.xlu0 %7673
      %7675 = vrot.lane.b32.xlu0 %v7587, 64
      %v7676 = vpop.permute.xlu0 %7675
      %7677 = vrot.lane.b32.xlu0 %v7588, 64
      %v7678 = vpop.permute.xlu0 %7677
      %7679 = vrot.lane.b32.xlu0 %v7589, 64
      %v7680 = vpop.permute.xlu0 %7679
      %7681 = vrot.lane.b32.xlu0 %v7590, 64
      %v7682 = vpop.permute.xlu0 %7681
      %7683 = vrot.lane.b32.xlu0 %v7591, 64
      %v7684 = vpop.permute.xlu0 %7683
      %7685 = vrot.lane.b32.xlu0 %v7592, 64
      %v7686 = vpop.permute.xlu0 %7685
      %7687 = vrot.lane.b32.xlu0 %v7593, 64
      %v7688 = vpop.permute.xlu0 %7687
      %7689 = vrot.lane.b32.xlu0 %v7594, 64
      %v7690 = vpop.permute.xlu0 %7689
      %7723 = vst.msk [vmem:[#allocation2 + $0x10] sm:$0xff] %vm1809, %v7628
      %7724 = vst.msk [vmem:[#allocation2 + $0x28] sm:$0xff] %vm1809, %v7630
      %7725 = vst.msk [vmem:[#allocation2 + $0x40] sm:$0xff] %vm1809, %v7632
      %7726 = vst.msk [vmem:[#allocation2 + $0x58] sm:$0xff] %vm1809, %v7634
      %7727 = vst.msk [vmem:[#allocation2 + $0x70] sm:$0xff] %vm1809, %v7636
      %7728 = vst.msk [vmem:[#allocation2 + $0x88] sm:$0xff] %vm1809, %v7638
      %7729 = vst.msk [vmem:[#allocation2 + $0xa0] sm:$0xff] %vm1809, %v7640
      %7730 = vst.msk [vmem:[#allocation2 + $0xb8] sm:$0xff] %vm1809, %v7642
      %7731 = vst.msk [vmem:[#allocation2 + $0xd0] sm:$0xff] %vm1809, %v7644
      %7732 = vst.msk [vmem:[#allocation2 + $0xe8] sm:$0xff] %vm1809, %v7646
      %7733 = vst.msk [vmem:[#allocation2 + $0x100] sm:$0xff] %vm1809, %v7648
      %7734 = vst.msk [vmem:[#allocation2 + $0x118] sm:$0xff] %vm1809, %v7650
      %7735 = vst.msk [vmem:[#allocation2 + $0x130] sm:$0xff] %vm1809, %v7652
      %7736 = vst.msk [vmem:[#allocation2 + $0x148] sm:$0xff] %vm1809, %v7654
      %7737 = vst.msk [vmem:[#allocation2 + $0x160] sm:$0xff] %vm1809, %v7656
      %7738 = vst.msk [vmem:[#allocation2 + $0x178] sm:$0xff] %vm1809, %v7658
      %7739 = vst.msk [vmem:[#allocation2 + $0x190] sm:$0xff] %vm1809, %v7660
      %7740 = vst.msk [vmem:[#allocation2 + $0x1a8] sm:$0xff] %vm1809, %v7662
      %7741 = vst.msk [vmem:[#allocation2 + $0x1c0] sm:$0xff] %vm1809, %v7664
      %7742 = vst.msk [vmem:[#allocation2 + $0x1d8] sm:$0xff] %vm1809, %v7666
      %7743 = vst.msk [vmem:[#allocation2 + $0x1f0] sm:$0xff] %vm1809, %v7668
      %7744 = vst.msk [vmem:[#allocation2 + $0x208] sm:$0xff] %vm1809, %v7670
      %7745 = vst.msk [vmem:[#allocation2 + $0x220] sm:$0xff] %vm1809, %v7672
      %7746 = vst.msk [vmem:[#allocation2 + $0x238] sm:$0xff] %vm1809, %v7674
      %7747 = vst.msk [vmem:[#allocation2 + $0x250] sm:$0xff] %vm1809, %v7676
      %7748 = vst.msk [vmem:[#allocation2 + $0x268] sm:$0xff] %vm1809, %v7678
      %7749 = vst.msk [vmem:[#allocation2 + $0x280] sm:$0xff] %vm1809, %v7680
      %7750 = vst.msk [vmem:[#allocation2 + $0x298] sm:$0xff] %vm1809, %v7682
      %7751 = vst.msk [vmem:[#allocation2 + $0x2b0] sm:$0xff] %vm1809, %v7684
      %7752 = vst.msk [vmem:[#allocation2 + $0x2c8] sm:$0xff] %vm1809, %v7686
      %7753 = vst.msk [vmem:[#allocation2 + $0x2e0] sm:$0xff] %vm1809, %v7688
      %7754 = vst.msk [vmem:[#allocation2 + $0x2f8] sm:$0xff] %vm1809, %v7690
      %v7755 = vld [vmem:[%s7562 + $0x1] sm:$0xff]
      %v7756 = vld [vmem:[%s7562 + $0x11] sm:$0xff]
      %v7757 = vld [vmem:[%s7562 + $0x21] sm:$0xff]
      %v7758 = vld [vmem:[%s7562 + $0x31] sm:$0xff]
      %v7759 = vld [vmem:[%s7562 + $0xa1] sm:$0xff]
      %v7760 = vld [vmem:[%s7562 + $0xb1] sm:$0xff]
      %v7761 = vld [vmem:[%s7562 + $0xc1] sm:$0xff]
      %v7762 = vld [vmem:[%s7562 + $0xd1] sm:$0xff]
      %v7763 = vld [vmem:[%s7562 + $0x141] sm:$0xff]
      %v7764 = vld [vmem:[%s7562 + $0x151] sm:$0xff]
      %v7765 = vld [vmem:[%s7562 + $0x161] sm:$0xff]
      %v7766 = vld [vmem:[%s7562 + $0x171] sm:$0xff]
      %v7767 = vld [vmem:[%s7562 + $0x1e1] sm:$0xff]
      %v7768 = vld [vmem:[%s7562 + $0x1f1] sm:$0xff]
      %v7769 = vld [vmem:[%s7562 + $0x201] sm:$0xff]
      %v7770 = vld [vmem:[%s7562 + $0x211] sm:$0xff]
      %v7771 = vld [vmem:[%s7562 + $0x281] sm:$0xff]
      %v7772 = vld [vmem:[%s7562 + $0x291] sm:$0xff]
      %v7773 = vld [vmem:[%s7562 + $0x2a1] sm:$0xff]
      %v7774 = vld [vmem:[%s7562 + $0x2b1] sm:$0xff]
      %v7775 = vld [vmem:[%s7562 + $0x321] sm:$0xff]
      %v7776 = vld [vmem:[%s7562 + $0x331] sm:$0xff]
      %v7777 = vld [vmem:[%s7562 + $0x341] sm:$0xff]
      %v7778 = vld [vmem:[%s7562 + $0x351] sm:$0xff]
      %v7779 = vld [vmem:[%s7562 + $0x3c1] sm:$0xff]
      %v7780 = vld [vmem:[%s7562 + $0x3d1] sm:$0xff]
      %v7781 = vld [vmem:[%s7562 + $0x3e1] sm:$0xff]
      %v7782 = vld [vmem:[%s7562 + $0x3f1] sm:$0xff]
      %v7783 = vld [vmem:[%s7562 + $0x461] sm:$0xff]
      %v7784 = vld [vmem:[%s7562 + $0x471] sm:$0xff]
      %v7785 = vld [vmem:[%s7562 + $0x481] sm:$0xff]
      %v7786 = vld [vmem:[%s7562 + $0x491] sm:$0xff]
      %7819 = vrot.lane.b32.xlu0 %v7755, 72
      %v7820 = vpop.permute.xlu0 %7819
      %7821 = vrot.lane.b32.xlu0 %v7756, 72
      %v7822 = vpop.permute.xlu0 %7821
      %7823 = vrot.lane.b32.xlu0 %v7757, 72
      %v7824 = vpop.permute.xlu0 %7823
      %7825 = vrot.lane.b32.xlu0 %v7758, 72
      %v7826 = vpop.permute.xlu0 %7825
      %7827 = vrot.lane.b32.xlu0 %v7759, 72
      %v7828 = vpop.permute.xlu0 %7827
      %7829 = vrot.lane.b32.xlu0 %v7760, 72
      %v7830 = vpop.permute.xlu0 %7829
      %7831 = vrot.lane.b32.xlu0 %v7761, 72
      %v7832 = vpop.permute.xlu0 %7831
      %7833 = vrot.lane.b32.xlu0 %v7762, 72
      %v7834 = vpop.permute.xlu0 %7833
      %7835 = vrot.lane.b32.xlu0 %v7763, 72
      %v7836 = vpop.permute.xlu0 %7835
      %7837 = vrot.lane.b32.xlu0 %v7764, 72
      %v7838 = vpop.permute.xlu0 %7837
      %7839 = vrot.lane.b32.xlu0 %v7765, 72
      %v7840 = vpop.permute.xlu0 %7839
      %7841 = vrot.lane.b32.xlu0 %v7766, 72
      %v7842 = vpop.permute.xlu0 %7841
      %7843 = vrot.lane.b32.xlu0 %v7767, 72
      %v7844 = vpop.permute.xlu0 %7843
      %7845 = vrot.lane.b32.xlu0 %v7768, 72
      %v7846 = vpop.permute.xlu0 %7845
      %7847 = vrot.lane.b32.xlu0 %v7769, 72
      %v7848 = vpop.permute.xlu0 %7847
      %7849 = vrot.lane.b32.xlu0 %v7770, 72
      %v7850 = vpop.permute.xlu0 %7849
      %7851 = vrot.lane.b32.xlu0 %v7771, 72
      %v7852 = vpop.permute.xlu0 %7851
      %7853 = vrot.lane.b32.xlu0 %v7772, 72
      %v7854 = vpop.permute.xlu0 %7853
      %7855 = vrot.lane.b32.xlu0 %v7773, 72
      %v7856 = vpop.permute.xlu0 %7855
      %7857 = vrot.lane.b32.xlu0 %v7774, 72
      %v7858 = vpop.permute.xlu0 %7857
      %7859 = vrot.lane.b32.xlu0 %v7775, 72
      %v7860 = vpop.permute.xlu0 %7859
      %7861 = vrot.lane.b32.xlu0 %v7776, 72
      %v7862 = vpop.permute.xlu0 %7861
      %7863 = vrot.lane.b32.xlu0 %v7777, 72
      %v7864 = vpop.permute.xlu0 %7863
      %7865 = vrot.lane.b32.xlu0 %v7778, 72
      %v7866 = vpop.permute.xlu0 %7865
      %7867 = vrot.lane.b32.xlu0 %v7779, 72
      %v7868 = vpop.permute.xlu0 %7867
      %7869 = vrot.lane.b32.xlu0 %v7780, 72
      %v7870 = vpop.permute.xlu0 %7869
      %7871 = vrot.lane.b32.xlu0 %v7781, 72
      %v7872 = vpop.permute.xlu0 %7871
      %7873 = vrot.lane.b32.xlu0 %v7782, 72
      %v7874 = vpop.permute.xlu0 %7873
      %7875 = vrot.lane.b32.xlu0 %v7783, 72
      %v7876 = vpop.permute.xlu0 %7875
      %7877 = vrot.lane.b32.xlu0 %v7784, 72
      %v7878 = vpop.permute.xlu0 %7877
      %7879 = vrot.lane.b32.xlu0 %v7785, 72
      %v7880 = vpop.permute.xlu0 %7879
      %7881 = vrot.lane.b32.xlu0 %v7786, 72
      %v7882 = vpop.permute.xlu0 %7881
      %7915 = vst.msk [vmem:[#allocation2 + $0x10] sm:$0xff] %vm2002, %v7820
      %7916 = vst.msk [vmem:[#allocation2 + $0x28] sm:$0xff] %vm2002, %v7822
      %7917 = vst.msk [vmem:[#allocation2 + $0x40] sm:$0xff] %vm2002, %v7824
      %7918 = vst.msk [vmem:[#allocation2 + $0x58] sm:$0xff] %vm2002, %v7826
      %7919 = vst.msk [vmem:[#allocation2 + $0x70] sm:$0xff] %vm2002, %v7828
      %7920 = vst.msk [vmem:[#allocation2 + $0x88] sm:$0xff] %vm2002, %v7830
      %7921 = vst.msk [vmem:[#allocation2 + $0xa0] sm:$0xff] %vm2002, %v7832
      %7922 = vst.msk [vmem:[#allocation2 + $0xb8] sm:$0xff] %vm2002, %v7834
      %7923 = vst.msk [vmem:[#allocation2 + $0xd0] sm:$0xff] %vm2002, %v7836
      %7924 = vst.msk [vmem:[#allocation2 + $0xe8] sm:$0xff] %vm2002, %v7838
      %7925 = vst.msk [vmem:[#allocation2 + $0x100] sm:$0xff] %vm2002, %v7840
      %7926 = vst.msk [vmem:[#allocation2 + $0x118] sm:$0xff] %vm2002, %v7842
      %7927 = vst.msk [vmem:[#allocation2 + $0x130] sm:$0xff] %vm2002, %v7844
      %7928 = vst.msk [vmem:[#allocation2 + $0x148] sm:$0xff] %vm2002, %v7846
      %7929 = vst.msk [vmem:[#allocation2 + $0x160] sm:$0xff] %vm2002, %v7848
      %7930 = vst.msk [vmem:[#allocation2 + $0x178] sm:$0xff] %vm2002, %v7850
      %7931 = vst.msk [vmem:[#allocation2 + $0x190] sm:$0xff] %vm2002, %v7852
      %7932 = vst.msk [vmem:[#allocation2 + $0x1a8] sm:$0xff] %vm2002, %v7854
      %7933 = vst.msk [vmem:[#allocation2 + $0x1c0] sm:$0xff] %vm2002, %v7856
      %7934 = vst.msk [vmem:[#allocation2 + $0x1d8] sm:$0xff] %vm2002, %v7858
      %7935 = vst.msk [vmem:[#allocation2 + $0x1f0] sm:$0xff] %vm2002, %v7860
      %7936 = vst.msk [vmem:[#allocation2 + $0x208] sm:$0xff] %vm2002, %v7862
      %7937 = vst.msk [vmem:[#allocation2 + $0x220] sm:$0xff] %vm2002, %v7864
      %7938 = vst.msk [vmem:[#allocation2 + $0x238] sm:$0xff] %vm2002, %v7866
      %7939 = vst.msk [vmem:[#allocation2 + $0x250] sm:$0xff] %vm2002, %v7868
      %7940 = vst.msk [vmem:[#allocation2 + $0x268] sm:$0xff] %vm2002, %v7870
      %7941 = vst.msk [vmem:[#allocation2 + $0x280] sm:$0xff] %vm2002, %v7872
      %7942 = vst.msk [vmem:[#allocation2 + $0x298] sm:$0xff] %vm2002, %v7874
      %7943 = vst.msk [vmem:[#allocation2 + $0x2b0] sm:$0xff] %vm2002, %v7876
      %7944 = vst.msk [vmem:[#allocation2 + $0x2c8] sm:$0xff] %vm2002, %v7878
      %7945 = vst.msk [vmem:[#allocation2 + $0x2e0] sm:$0xff] %vm2002, %v7880
      %7946 = vst.msk [vmem:[#allocation2 + $0x2f8] sm:$0xff] %vm2002, %v7882
      %v7947 = vld [vmem:[%s7562 + $0x2] sm:$0xff]
      %v7948 = vld [vmem:[%s7562 + $0x12] sm:$0xff]
      %v7949 = vld [vmem:[%s7562 + $0x22] sm:$0xff]
      %v7950 = vld [vmem:[%s7562 + $0x32] sm:$0xff]
      %v7951 = vld [vmem:[%s7562 + $0xa2] sm:$0xff]
      %v7952 = vld [vmem:[%s7562 + $0xb2] sm:$0xff]
      %v7953 = vld [vmem:[%s7562 + $0xc2] sm:$0xff]
      %v7954 = vld [vmem:[%s7562 + $0xd2] sm:$0xff]
      %v7955 = vld [vmem:[%s7562 + $0x142] sm:$0xff]
      %v7956 = vld [vmem:[%s7562 + $0x152] sm:$0xff]
      %v7957 = vld [vmem:[%s7562 + $0x162] sm:$0xff]
      %v7958 = vld [vmem:[%s7562 + $0x172] sm:$0xff]
      %v7959 = vld [vmem:[%s7562 + $0x1e2] sm:$0xff]
      %v7960 = vld [vmem:[%s7562 + $0x1f2] sm:$0xff]
      %v7961 = vld [vmem:[%s7562 + $0x202] sm:$0xff]
      %v7962 = vld [vmem:[%s7562 + $0x212] sm:$0xff]
      %v7963 = vld [vmem:[%s7562 + $0x282] sm:$0xff]
      %v7964 = vld [vmem:[%s7562 + $0x292] sm:$0xff]
      %v7965 = vld [vmem:[%s7562 + $0x2a2] sm:$0xff]
      %v7966 = vld [vmem:[%s7562 + $0x2b2] sm:$0xff]
      %v7967 = vld [vmem:[%s7562 + $0x322] sm:$0xff]
      %v7968 = vld [vmem:[%s7562 + $0x332] sm:$0xff]
      %v7969 = vld [vmem:[%s7562 + $0x342] sm:$0xff]
      %v7970 = vld [vmem:[%s7562 + $0x352] sm:$0xff]
      %v7971 = vld [vmem:[%s7562 + $0x3c2] sm:$0xff]
      %v7972 = vld [vmem:[%s7562 + $0x3d2] sm:$0xff]
      %v7973 = vld [vmem:[%s7562 + $0x3e2] sm:$0xff]
      %v7974 = vld [vmem:[%s7562 + $0x3f2] sm:$0xff]
      %v7975 = vld [vmem:[%s7562 + $0x462] sm:$0xff]
      %v7976 = vld [vmem:[%s7562 + $0x472] sm:$0xff]
      %v7977 = vld [vmem:[%s7562 + $0x482] sm:$0xff]
      %v7978 = vld [vmem:[%s7562 + $0x492] sm:$0xff]
      %8011 = vrot.lane.b32.xlu0 %v7947, 80
      %v8012 = vpop.permute.xlu0 %8011
      %8013 = vrot.lane.b32.xlu0 %v7948, 80
      %v8014 = vpop.permute.xlu0 %8013
      %8015 = vrot.lane.b32.xlu0 %v7949, 80
      %v8016 = vpop.permute.xlu0 %8015
      %8017 = vrot.lane.b32.xlu0 %v7950, 80
      %v8018 = vpop.permute.xlu0 %8017
      %8019 = vrot.lane.b32.xlu0 %v7951, 80
      %v8020 = vpop.permute.xlu0 %8019
      %8021 = vrot.lane.b32.xlu0 %v7952, 80
      %v8022 = vpop.permute.xlu0 %8021
      %8023 = vrot.lane.b32.xlu0 %v7953, 80
      %v8024 = vpop.permute.xlu0 %8023
      %8025 = vrot.lane.b32.xlu0 %v7954, 80
      %v8026 = vpop.permute.xlu0 %8025
      %8027 = vrot.lane.b32.xlu0 %v7955, 80
      %v8028 = vpop.permute.xlu0 %8027
      %8029 = vrot.lane.b32.xlu0 %v7956, 80
      %v8030 = vpop.permute.xlu0 %8029
      %8031 = vrot.lane.b32.xlu0 %v7957, 80
      %v8032 = vpop.permute.xlu0 %8031
      %8033 = vrot.lane.b32.xlu0 %v7958, 80
      %v8034 = vpop.permute.xlu0 %8033
      %8035 = vrot.lane.b32.xlu0 %v7959, 80
      %v8036 = vpop.permute.xlu0 %8035
      %8037 = vrot.lane.b32.xlu0 %v7960, 80
      %v8038 = vpop.permute.xlu0 %8037
      %8039 = vrot.lane.b32.xlu0 %v7961, 80
      %v8040 = vpop.permute.xlu0 %8039
      %8041 = vrot.lane.b32.xlu0 %v7962, 80
      %v8042 = vpop.permute.xlu0 %8041
      %8043 = vrot.lane.b32.xlu0 %v7963, 80
      %v8044 = vpop.permute.xlu0 %8043
      %8045 = vrot.lane.b32.xlu0 %v7964, 80
      %v8046 = vpop.permute.xlu0 %8045
      %8047 = vrot.lane.b32.xlu0 %v7965, 80
      %v8048 = vpop.permute.xlu0 %8047
      %8049 = vrot.lane.b32.xlu0 %v7966, 80
      %v8050 = vpop.permute.xlu0 %8049
      %8051 = vrot.lane.b32.xlu0 %v7967, 80
      %v8052 = vpop.permute.xlu0 %8051
      %8053 = vrot.lane.b32.xlu0 %v7968, 80
      %v8054 = vpop.permute.xlu0 %8053
      %8055 = vrot.lane.b32.xlu0 %v7969, 80
      %v8056 = vpop.permute.xlu0 %8055
      %8057 = vrot.lane.b32.xlu0 %v7970, 80
      %v8058 = vpop.permute.xlu0 %8057
      %8059 = vrot.lane.b32.xlu0 %v7971, 80
      %v8060 = vpop.permute.xlu0 %8059
      %8061 = vrot.lane.b32.xlu0 %v7972, 80
      %v8062 = vpop.permute.xlu0 %8061
      %8063 = vrot.lane.b32.xlu0 %v7973, 80
      %v8064 = vpop.permute.xlu0 %8063
      %8065 = vrot.lane.b32.xlu0 %v7974, 80
      %v8066 = vpop.permute.xlu0 %8065
      %8067 = vrot.lane.b32.xlu0 %v7975, 80
      %v8068 = vpop.permute.xlu0 %8067
      %8069 = vrot.lane.b32.xlu0 %v7976, 80
      %v8070 = vpop.permute.xlu0 %8069
      %8071 = vrot.lane.b32.xlu0 %v7977, 80
      %v8072 = vpop.permute.xlu0 %8071
      %8073 = vrot.lane.b32.xlu0 %v7978, 80
      %v8074 = vpop.permute.xlu0 %8073
      %8107 = vst.msk [vmem:[#allocation2 + $0x10] sm:$0xff] %vm2197, %v8012
      %8108 = vst.msk [vmem:[#allocation2 + $0x28] sm:$0xff] %vm2197, %v8014
      %8109 = vst.msk [vmem:[#allocation2 + $0x40] sm:$0xff] %vm2197, %v8016
      %8110 = vst.msk [vmem:[#allocation2 + $0x58] sm:$0xff] %vm2197, %v8018
      %8111 = vst.msk [vmem:[#allocation2 + $0x70] sm:$0xff] %vm2197, %v8020
      %8112 = vst.msk [vmem:[#allocation2 + $0x88] sm:$0xff] %vm2197, %v8022
      %8113 = vst.msk [vmem:[#allocation2 + $0xa0] sm:$0xff] %vm2197, %v8024
      %8114 = vst.msk [vmem:[#allocation2 + $0xb8] sm:$0xff] %vm2197, %v8026
      %8115 = vst.msk [vmem:[#allocation2 + $0xd0] sm:$0xff] %vm2197, %v8028
      %8116 = vst.msk [vmem:[#allocation2 + $0xe8] sm:$0xff] %vm2197, %v8030
      %8117 = vst.msk [vmem:[#allocation2 + $0x100] sm:$0xff] %vm2197, %v8032
      %8118 = vst.msk [vmem:[#allocation2 + $0x118] sm:$0xff] %vm2197, %v8034
      %8119 = vst.msk [vmem:[#allocation2 + $0x130] sm:$0xff] %vm2197, %v8036
      %8120 = vst.msk [vmem:[#allocation2 + $0x148] sm:$0xff] %vm2197, %v8038
      %8121 = vst.msk [vmem:[#allocation2 + $0x160] sm:$0xff] %vm2197, %v8040
      %8122 = vst.msk [vmem:[#allocation2 + $0x178] sm:$0xff] %vm2197, %v8042
      %8123 = vst.msk [vmem:[#allocation2 + $0x190] sm:$0xff] %vm2197, %v8044
      %8124 = vst.msk [vmem:[#allocation2 + $0x1a8] sm:$0xff] %vm2197, %v8046
      %8125 = vst.msk [vmem:[#allocation2 + $0x1c0] sm:$0xff] %vm2197, %v8048
      %8126 = vst.msk [vmem:[#allocation2 + $0x1d8] sm:$0xff] %vm2197, %v8050
      %8127 = vst.msk [vmem:[#allocation2 + $0x1f0] sm:$0xff] %vm2197, %v8052
      %8128 = vst.msk [vmem:[#allocation2 + $0x208] sm:$0xff] %vm2197, %v8054
      %8129 = vst.msk [vmem:[#allocation2 + $0x220] sm:$0xff] %vm2197, %v8056
      %8130 = vst.msk [vmem:[#allocation2 + $0x238] sm:$0xff] %vm2197, %v8058
      %8131 = vst.msk [vmem:[#allocation2 + $0x250] sm:$0xff] %vm2197, %v8060
      %8132 = vst.msk [vmem:[#allocation2 + $0x268] sm:$0xff] %vm2197, %v8062
      %8133 = vst.msk [vmem:[#allocation2 + $0x280] sm:$0xff] %vm2197, %v8064
      %8134 = vst.msk [vmem:[#allocation2 + $0x298] sm:$0xff] %vm2197, %v8066
      %8135 = vst.msk [vmem:[#allocation2 + $0x2b0] sm:$0xff] %vm2197, %v8068
      %8136 = vst.msk [vmem:[#allocation2 + $0x2c8] sm:$0xff] %vm2197, %v8070
      %8137 = vst.msk [vmem:[#allocation2 + $0x2e0] sm:$0xff] %vm2197, %v8072
      %8138 = vst.msk [vmem:[#allocation2 + $0x2f8] sm:$0xff] %vm2197, %v8074
      %v8139 = vld [vmem:[%s7562 + $0x3] sm:$0xff]
      %v8140 = vld [vmem:[%s7562 + $0x13] sm:$0xff]
      %v8141 = vld [vmem:[%s7562 + $0x23] sm:$0xff]
      %v8142 = vld [vmem:[%s7562 + $0x33] sm:$0xff]
      %v8143 = vld [vmem:[%s7562 + $0xa3] sm:$0xff]
      %v8144 = vld [vmem:[%s7562 + $0xb3] sm:$0xff]
      %v8145 = vld [vmem:[%s7562 + $0xc3] sm:$0xff]
      %v8146 = vld [vmem:[%s7562 + $0xd3] sm:$0xff]
      %v8147 = vld [vmem:[%s7562 + $0x143] sm:$0xff]
      %v8148 = vld [vmem:[%s7562 + $0x153] sm:$0xff]
      %v8149 = vld [vmem:[%s7562 + $0x163] sm:$0xff]
      %v8150 = vld [vmem:[%s7562 + $0x173] sm:$0xff]
      %v8151 = vld [vmem:[%s7562 + $0x1e3] sm:$0xff]
      %v8152 = vld [vmem:[%s7562 + $0x1f3] sm:$0xff]
      %v8153 = vld [vmem:[%s7562 + $0x203] sm:$0xff]
      %v8154 = vld [vmem:[%s7562 + $0x213] sm:$0xff]
      %v8155 = vld [vmem:[%s7562 + $0x283] sm:$0xff]
      %v8156 = vld [vmem:[%s7562 + $0x293] sm:$0xff]
      %v8157 = vld [vmem:[%s7562 + $0x2a3] sm:$0xff]
      %v8158 = vld [vmem:[%s7562 + $0x2b3] sm:$0xff]
      %v8159 = vld [vmem:[%s7562 + $0x323] sm:$0xff]
      %v8160 = vld [vmem:[%s7562 + $0x333] sm:$0xff]
      %v8161 = vld [vmem:[%s7562 + $0x343] sm:$0xff]
      %v8162 = vld [vmem:[%s7562 + $0x353] sm:$0xff]
      %v8163 = vld [vmem:[%s7562 + $0x3c3] sm:$0xff]
      %v8164 = vld [vmem:[%s7562 + $0x3d3] sm:$0xff]
      %v8165 = vld [vmem:[%s7562 + $0x3e3] sm:$0xff]
      %v8166 = vld [vmem:[%s7562 + $0x3f3] sm:$0xff]
      %v8167 = vld [vmem:[%s7562 + $0x463] sm:$0xff]
      %v8168 = vld [vmem:[%s7562 + $0x473] sm:$0xff]
      %v8169 = vld [vmem:[%s7562 + $0x483] sm:$0xff]
      %v8170 = vld [vmem:[%s7562 + $0x493] sm:$0xff]
      %8203 = vrot.lane.b32.xlu0 %v8139, 88
      %v8204 = vpop.permute.xlu0 %8203
      %8205 = vrot.lane.b32.xlu0 %v8140, 88
      %v8206 = vpop.permute.xlu0 %8205
      %8207 = vrot.lane.b32.xlu0 %v8141, 88
      %v8208 = vpop.permute.xlu0 %8207
      %8209 = vrot.lane.b32.xlu0 %v8142, 88
      %v8210 = vpop.permute.xlu0 %8209
      %8211 = vrot.lane.b32.xlu0 %v8143, 88
      %v8212 = vpop.permute.xlu0 %8211
      %8213 = vrot.lane.b32.xlu0 %v8144, 88
      %v8214 = vpop.permute.xlu0 %8213
      %8215 = vrot.lane.b32.xlu0 %v8145, 88
      %v8216 = vpop.permute.xlu0 %8215
      %8217 = vrot.lane.b32.xlu0 %v8146, 88
      %v8218 = vpop.permute.xlu0 %8217
      %8219 = vrot.lane.b32.xlu0 %v8147, 88
      %v8220 = vpop.permute.xlu0 %8219
      %8221 = vrot.lane.b32.xlu0 %v8148, 88
      %v8222 = vpop.permute.xlu0 %8221
      %8223 = vrot.lane.b32.xlu0 %v8149, 88
      %v8224 = vpop.permute.xlu0 %8223
      %8225 = vrot.lane.b32.xlu0 %v8150, 88
      %v8226 = vpop.permute.xlu0 %8225
      %8227 = vrot.lane.b32.xlu0 %v8151, 88
      %v8228 = vpop.permute.xlu0 %8227
      %8229 = vrot.lane.b32.xlu0 %v8152, 88
      %v8230 = vpop.permute.xlu0 %8229
      %8231 = vrot.lane.b32.xlu0 %v8153, 88
      %v8232 = vpop.permute.xlu0 %8231
      %8233 = vrot.lane.b32.xlu0 %v8154, 88
      %v8234 = vpop.permute.xlu0 %8233
      %8235 = vrot.lane.b32.xlu0 %v8155, 88
      %v8236 = vpop.permute.xlu0 %8235
      %8237 = vrot.lane.b32.xlu0 %v8156, 88
      %v8238 = vpop.permute.xlu0 %8237
      %8239 = vrot.lane.b32.xlu0 %v8157, 88
      %v8240 = vpop.permute.xlu0 %8239
      %8241 = vrot.lane.b32.xlu0 %v8158, 88
      %v8242 = vpop.permute.xlu0 %8241
      %8243 = vrot.lane.b32.xlu0 %v8159, 88
      %v8244 = vpop.permute.xlu0 %8243
      %8245 = vrot.lane.b32.xlu0 %v8160, 88
      %v8246 = vpop.permute.xlu0 %8245
      %8247 = vrot.lane.b32.xlu0 %v8161, 88
      %v8248 = vpop.permute.xlu0 %8247
      %8249 = vrot.lane.b32.xlu0 %v8162, 88
      %v8250 = vpop.permute.xlu0 %8249
      %8251 = vrot.lane.b32.xlu0 %v8163, 88
      %v8252 = vpop.permute.xlu0 %8251
      %8253 = vrot.lane.b32.xlu0 %v8164, 88
      %v8254 = vpop.permute.xlu0 %8253
      %8255 = vrot.lane.b32.xlu0 %v8165, 88
      %v8256 = vpop.permute.xlu0 %8255
      %8257 = vrot.lane.b32.xlu0 %v8166, 88
      %v8258 = vpop.permute.xlu0 %8257
      %8259 = vrot.lane.b32.xlu0 %v8167, 88
      %v8260 = vpop.permute.xlu0 %8259
      %8261 = vrot.lane.b32.xlu0 %v8168, 88
      %v8262 = vpop.permute.xlu0 %8261
      %8263 = vrot.lane.b32.xlu0 %v8169, 88
      %v8264 = vpop.permute.xlu0 %8263
      %8265 = vrot.lane.b32.xlu0 %v8170, 88
      %v8266 = vpop.permute.xlu0 %8265
      %8299 = vst.msk [vmem:[#allocation2 + $0x10] sm:$0xff] %vm2390, %v8204
      %8300 = vst.msk [vmem:[#allocation2 + $0x28] sm:$0xff] %vm2390, %v8206
      %8301 = vst.msk [vmem:[#allocation2 + $0x40] sm:$0xff] %vm2390, %v8208
      %8302 = vst.msk [vmem:[#allocation2 + $0x58] sm:$0xff] %vm2390, %v8210
      %8303 = vst.msk [vmem:[#allocation2 + $0x70] sm:$0xff] %vm2390, %v8212
      %8304 = vst.msk [vmem:[#allocation2 + $0x88] sm:$0xff] %vm2390, %v8214
      %8305 = vst.msk [vmem:[#allocation2 + $0xa0] sm:$0xff] %vm2390, %v8216
      %8306 = vst.msk [vmem:[#allocation2 + $0xb8] sm:$0xff] %vm2390, %v8218
      %8307 = vst.msk [vmem:[#allocation2 + $0xd0] sm:$0xff] %vm2390, %v8220
      %8308 = vst.msk [vmem:[#allocation2 + $0xe8] sm:$0xff] %vm2390, %v8222
      %8309 = vst.msk [vmem:[#allocation2 + $0x100] sm:$0xff] %vm2390, %v8224
      %8310 = vst.msk [vmem:[#allocation2 + $0x118] sm:$0xff] %vm2390, %v8226
      %8311 = vst.msk [vmem:[#allocation2 + $0x130] sm:$0xff] %vm2390, %v8228
      %8312 = vst.msk [vmem:[#allocation2 + $0x148] sm:$0xff] %vm2390, %v8230
      %8313 = vst.msk [vmem:[#allocation2 + $0x160] sm:$0xff] %vm2390, %v8232
      %8314 = vst.msk [vmem:[#allocation2 + $0x178] sm:$0xff] %vm2390, %v8234
      %8315 = vst.msk [vmem:[#allocation2 + $0x190] sm:$0xff] %vm2390, %v8236
      %8316 = vst.msk [vmem:[#allocation2 + $0x1a8] sm:$0xff] %vm2390, %v8238
      %8317 = vst.msk [vmem:[#allocation2 + $0x1c0] sm:$0xff] %vm2390, %v8240
      %8318 = vst.msk [vmem:[#allocation2 + $0x1d8] sm:$0xff] %vm2390, %v8242
      %8319 = vst.msk [vmem:[#allocation2 + $0x1f0] sm:$0xff] %vm2390, %v8244
      %8320 = vst.msk [vmem:[#allocation2 + $0x208] sm:$0xff] %vm2390, %v8246
      %8321 = vst.msk [vmem:[#allocation2 + $0x220] sm:$0xff] %vm2390, %v8248
      %8322 = vst.msk [vmem:[#allocation2 + $0x238] sm:$0xff] %vm2390, %v8250
      %8323 = vst.msk [vmem:[#allocation2 + $0x250] sm:$0xff] %vm2390, %v8252
      %8324 = vst.msk [vmem:[#allocation2 + $0x268] sm:$0xff] %vm2390, %v8254
      %8325 = vst.msk [vmem:[#allocation2 + $0x280] sm:$0xff] %vm2390, %v8256
      %8326 = vst.msk [vmem:[#allocation2 + $0x298] sm:$0xff] %vm2390, %v8258
      %8327 = vst.msk [vmem:[#allocation2 + $0x2b0] sm:$0xff] %vm2390, %v8260
      %8328 = vst.msk [vmem:[#allocation2 + $0x2c8] sm:$0xff] %vm2390, %v8262
      %8329 = vst.msk [vmem:[#allocation2 + $0x2e0] sm:$0xff] %vm2390, %v8264
      %8330 = vst.msk [vmem:[#allocation2 + $0x2f8] sm:$0xff] %vm2390, %v8266
      %v8331 = vld [vmem:[%s7562 + $0x4] sm:$0xff]
      %v8332 = vld [vmem:[%s7562 + $0x14] sm:$0xff]
      %v8333 = vld [vmem:[%s7562 + $0x24] sm:$0xff]
      %v8334 = vld [vmem:[%s7562 + $0x34] sm:$0xff]
      %v8335 = vld [vmem:[%s7562 + $0xa4] sm:$0xff]
      %v8336 = vld [vmem:[%s7562 + $0xb4] sm:$0xff]
      %v8337 = vld [vmem:[%s7562 + $0xc4] sm:$0xff]
      %v8338 = vld [vmem:[%s7562 + $0xd4] sm:$0xff]
      %v8339 = vld [vmem:[%s7562 + $0x144] sm:$0xff]
      %v8340 = vld [vmem:[%s7562 + $0x154] sm:$0xff]
      %v8341 = vld [vmem:[%s7562 + $0x164] sm:$0xff]
      %v8342 = vld [vmem:[%s7562 + $0x174] sm:$0xff]
      %v8343 = vld [vmem:[%s7562 + $0x1e4] sm:$0xff]
      %v8344 = vld [vmem:[%s7562 + $0x1f4] sm:$0xff]
      %v8345 = vld [vmem:[%s7562 + $0x204] sm:$0xff]
      %v8346 = vld [vmem:[%s7562 + $0x214] sm:$0xff]
      %v8347 = vld [vmem:[%s7562 + $0x284] sm:$0xff]
      %v8348 = vld [vmem:[%s7562 + $0x294] sm:$0xff]
      %v8349 = vld [vmem:[%s7562 + $0x2a4] sm:$0xff]
      %v8350 = vld [vmem:[%s7562 + $0x2b4] sm:$0xff]
      %v8351 = vld [vmem:[%s7562 + $0x324] sm:$0xff]
      %v8352 = vld [vmem:[%s7562 + $0x334] sm:$0xff]
      %v8353 = vld [vmem:[%s7562 + $0x344] sm:$0xff]
      %v8354 = vld [vmem:[%s7562 + $0x354] sm:$0xff]
      %v8355 = vld [vmem:[%s7562 + $0x3c4] sm:$0xff]
      %v8356 = vld [vmem:[%s7562 + $0x3d4] sm:$0xff]
      %v8357 = vld [vmem:[%s7562 + $0x3e4] sm:$0xff]
      %v8358 = vld [vmem:[%s7562 + $0x3f4] sm:$0xff]
      %v8359 = vld [vmem:[%s7562 + $0x464] sm:$0xff]
      %v8360 = vld [vmem:[%s7562 + $0x474] sm:$0xff]
      %v8361 = vld [vmem:[%s7562 + $0x484] sm:$0xff]
      %v8362 = vld [vmem:[%s7562 + $0x494] sm:$0xff]
      %8395 = vrot.lane.b32.xlu0 %v8331, 96
      %v8396 = vpop.permute.xlu0 %8395
      %8397 = vrot.lane.b32.xlu0 %v8332, 96
      %v8398 = vpop.permute.xlu0 %8397
      %8399 = vrot.lane.b32.xlu0 %v8333, 96
      %v8400 = vpop.permute.xlu0 %8399
      %8401 = vrot.lane.b32.xlu0 %v8334, 96
      %v8402 = vpop.permute.xlu0 %8401
      %8403 = vrot.lane.b32.xlu0 %v8335, 96
      %v8404 = vpop.permute.xlu0 %8403
      %8405 = vrot.lane.b32.xlu0 %v8336, 96
      %v8406 = vpop.permute.xlu0 %8405
      %8407 = vrot.lane.b32.xlu0 %v8337, 96
      %v8408 = vpop.permute.xlu0 %8407
      %8409 = vrot.lane.b32.xlu0 %v8338, 96
      %v8410 = vpop.permute.xlu0 %8409
      %8411 = vrot.lane.b32.xlu0 %v8339, 96
      %v8412 = vpop.permute.xlu0 %8411
      %8413 = vrot.lane.b32.xlu0 %v8340, 96
      %v8414 = vpop.permute.xlu0 %8413
      %8415 = vrot.lane.b32.xlu0 %v8341, 96
      %v8416 = vpop.permute.xlu0 %8415
      %8417 = vrot.lane.b32.xlu0 %v8342, 96
      %v8418 = vpop.permute.xlu0 %8417
      %8419 = vrot.lane.b32.xlu0 %v8343, 96
      %v8420 = vpop.permute.xlu0 %8419
      %8421 = vrot.lane.b32.xlu0 %v8344, 96
      %v8422 = vpop.permute.xlu0 %8421
      %8423 = vrot.lane.b32.xlu0 %v8345, 96
      %v8424 = vpop.permute.xlu0 %8423
      %8425 = vrot.lane.b32.xlu0 %v8346, 96
      %v8426 = vpop.permute.xlu0 %8425
      %8427 = vrot.lane.b32.xlu0 %v8347, 96
      %v8428 = vpop.permute.xlu0 %8427
      %8429 = vrot.lane.b32.xlu0 %v8348, 96
      %v8430 = vpop.permute.xlu0 %8429
      %8431 = vrot.lane.b32.xlu0 %v8349, 96
      %v8432 = vpop.permute.xlu0 %8431
      %8433 = vrot.lane.b32.xlu0 %v8350, 96
      %v8434 = vpop.permute.xlu0 %8433
      %8435 = vrot.lane.b32.xlu0 %v8351, 96
      %v8436 = vpop.permute.xlu0 %8435
      %8437 = vrot.lane.b32.xlu0 %v8352, 96
      %v8438 = vpop.permute.xlu0 %8437
      %8439 = vrot.lane.b32.xlu0 %v8353, 96
      %v8440 = vpop.permute.xlu0 %8439
      %8441 = vrot.lane.b32.xlu0 %v8354, 96
      %v8442 = vpop.permute.xlu0 %8441
      %8443 = vrot.lane.b32.xlu0 %v8355, 96
      %v8444 = vpop.permute.xlu0 %8443
      %8445 = vrot.lane.b32.xlu0 %v8356, 96
      %v8446 = vpop.permute.xlu0 %8445
      %8447 = vrot.lane.b32.xlu0 %v8357, 96
      %v8448 = vpop.permute.xlu0 %8447
      %8449 = vrot.lane.b32.xlu0 %v8358, 96
      %v8450 = vpop.permute.xlu0 %8449
      %8451 = vrot.lane.b32.xlu0 %v8359, 96
      %v8452 = vpop.permute.xlu0 %8451
      %8453 = vrot.lane.b32.xlu0 %v8360, 96
      %v8454 = vpop.permute.xlu0 %8453
      %8455 = vrot.lane.b32.xlu0 %v8361, 96
      %v8456 = vpop.permute.xlu0 %8455
      %8457 = vrot.lane.b32.xlu0 %v8362, 96
      %v8458 = vpop.permute.xlu0 %8457
      %8491 = vst.msk [vmem:[#allocation2 + $0x10] sm:$0xff] %vm2583, %v8396
      %8492 = vst.msk [vmem:[#allocation2 + $0x28] sm:$0xff] %vm2583, %v8398
      %8493 = vst.msk [vmem:[#allocation2 + $0x40] sm:$0xff] %vm2583, %v8400
      %8494 = vst.msk [vmem:[#allocation2 + $0x58] sm:$0xff] %vm2583, %v8402
      %8495 = vst.msk [vmem:[#allocation2 + $0x70] sm:$0xff] %vm2583, %v8404
      %8496 = vst.msk [vmem:[#allocation2 + $0x88] sm:$0xff] %vm2583, %v8406
      %8497 = vst.msk [vmem:[#allocation2 + $0xa0] sm:$0xff] %vm2583, %v8408
      %8498 = vst.msk [vmem:[#allocation2 + $0xb8] sm:$0xff] %vm2583, %v8410
      %8499 = vst.msk [vmem:[#allocation2 + $0xd0] sm:$0xff] %vm2583, %v8412
      %8500 = vst.msk [vmem:[#allocation2 + $0xe8] sm:$0xff] %vm2583, %v8414
      %8501 = vst.msk [vmem:[#allocation2 + $0x100] sm:$0xff] %vm2583, %v8416
      %8502 = vst.msk [vmem:[#allocation2 + $0x118] sm:$0xff] %vm2583, %v8418
      %8503 = vst.msk [vmem:[#allocation2 + $0x130] sm:$0xff] %vm2583, %v8420
      %8504 = vst.msk [vmem:[#allocation2 + $0x148] sm:$0xff] %vm2583, %v8422
      %8505 = vst.msk [vmem:[#allocation2 + $0x160] sm:$0xff] %vm2583, %v8424
      %8506 = vst.msk [vmem:[#allocation2 + $0x178] sm:$0xff] %vm2583, %v8426
      %8507 = vst.msk [vmem:[#allocation2 + $0x190] sm:$0xff] %vm2583, %v8428
      %8508 = vst.msk [vmem:[#allocation2 + $0x1a8] sm:$0xff] %vm2583, %v8430
      %8509 = vst.msk [vmem:[#allocation2 + $0x1c0] sm:$0xff] %vm2583, %v8432
      %8510 = vst.msk [vmem:[#allocation2 + $0x1d8] sm:$0xff] %vm2583, %v8434
      %8511 = vst.msk [vmem:[#allocation2 + $0x1f0] sm:$0xff] %vm2583, %v8436
      %8512 = vst.msk [vmem:[#allocation2 + $0x208] sm:$0xff] %vm2583, %v8438
      %8513 = vst.msk [vmem:[#allocation2 + $0x220] sm:$0xff] %vm2583, %v8440
      %8514 = vst.msk [vmem:[#allocation2 + $0x238] sm:$0xff] %vm2583, %v8442
      %8515 = vst.msk [vmem:[#allocation2 + $0x250] sm:$0xff] %vm2583, %v8444
      %8516 = vst.msk [vmem:[#allocation2 + $0x268] sm:$0xff] %vm2583, %v8446
      %8517 = vst.msk [vmem:[#allocation2 + $0x280] sm:$0xff] %vm2583, %v8448
      %8518 = vst.msk [vmem:[#allocation2 + $0x298] sm:$0xff] %vm2583, %v8450
      %8519 = vst.msk [vmem:[#allocation2 + $0x2b0] sm:$0xff] %vm2583, %v8452
      %8520 = vst.msk [vmem:[#allocation2 + $0x2c8] sm:$0xff] %vm2583, %v8454
      %8521 = vst.msk [vmem:[#allocation2 + $0x2e0] sm:$0xff] %vm2583, %v8456
      %8522 = vst.msk [vmem:[#allocation2 + $0x2f8] sm:$0xff] %vm2583, %v8458
      %v8523 = vld [vmem:[#allocation2] sm:$0xff]
      %v8524 = vld [vmem:[#allocation2 + $0x8] sm:$0xff]
      %v8525 = vld [vmem:[#allocation2 + $0x10] sm:$0xff]
      %v8526 = vld [vmem:[#allocation2 + $0x18] sm:$0xff]
      %v8527 = vld [vmem:[#allocation2 + $0x20] sm:$0xff]
      %v8528 = vld [vmem:[#allocation2 + $0x28] sm:$0xff]
      %v8529 = vld [vmem:[#allocation2 + $0x30] sm:$0xff]
      %v8530 = vld [vmem:[#allocation2 + $0x38] sm:$0xff]
      %v8531 = vld [vmem:[#allocation2 + $0x40] sm:$0xff]
      %v8532 = vld [vmem:[#allocation2 + $0x48] sm:$0xff]
      %v8533 = vld [vmem:[#allocation2 + $0x50] sm:$0xff]
      %v8534 = vld [vmem:[#allocation2 + $0x58] sm:$0xff]
      %v8535 = vld [vmem:[#allocation2 + $0x60] sm:$0xff]
      %v8536 = vld [vmem:[#allocation2 + $0x68] sm:$0xff]
      %v8537 = vld [vmem:[#allocation2 + $0x70] sm:$0xff]
      %v8538 = vld [vmem:[#allocation2 + $0x78] sm:$0xff]
      %v8539 = vld [vmem:[#allocation2 + $0x80] sm:$0xff]
      %v8540 = vld [vmem:[#allocation2 + $0x88] sm:$0xff]
      %v8541 = vld [vmem:[#allocation2 + $0x90] sm:$0xff]
      %v8542 = vld [vmem:[#allocation2 + $0x98] sm:$0xff]
      %v8543 = vld [vmem:[#allocation2 + $0xa0] sm:$0xff]
      %v8544 = vld [vmem:[#allocation2 + $0xa8] sm:$0xff]
      %v8545 = vld [vmem:[#allocation2 + $0xb0] sm:$0xff]
      %v8546 = vld [vmem:[#allocation2 + $0xb8] sm:$0xff]
      %v8547 = vld [vmem:[#allocation2 + $0xc0] sm:$0xff]
      %v8548 = vld [vmem:[#allocation2 + $0xc8] sm:$0xff]
      %v8549 = vld [vmem:[#allocation2 + $0xd0] sm:$0xff]
      %v8550 = vld [vmem:[#allocation2 + $0xd8] sm:$0xff]
      %v8551 = vld [vmem:[#allocation2 + $0xe0] sm:$0xff]
      %v8552 = vld [vmem:[#allocation2 + $0xe8] sm:$0xff]
      %v8553 = vld [vmem:[#allocation2 + $0xf0] sm:$0xff]
      %v8554 = vld [vmem:[#allocation2 + $0xf8] sm:$0xff]
      %v8555 = vld [vmem:[#allocation2 + $0x100] sm:$0xff]
      %v8556 = vld [vmem:[#allocation2 + $0x108] sm:$0xff]
      %v8557 = vld [vmem:[#allocation2 + $0x110] sm:$0xff]
      %v8558 = vld [vmem:[#allocation2 + $0x118] sm:$0xff]
      %v8559 = vld [vmem:[#allocation2 + $0x120] sm:$0xff]
      %v8560 = vld [vmem:[#allocation2 + $0x128] sm:$0xff]
      %v8561 = vld [vmem:[#allocation2 + $0x130] sm:$0xff]
      %v8562 = vld [vmem:[#allocation2 + $0x138] sm:$0xff]
      %v8563 = vld [vmem:[#allocation2 + $0x140] sm:$0xff]
      %v8564 = vld [vmem:[#allocation2 + $0x148] sm:$0xff]
      %v8565 = vld [vmem:[#allocation2 + $0x150] sm:$0xff]
      %v8566 = vld [vmem:[#allocation2 + $0x158] sm:$0xff]
      %v8567 = vld [vmem:[#allocation2 + $0x160] sm:$0xff]
      %v8568 = vld [vmem:[#allocation2 + $0x168] sm:$0xff]
      %v8569 = vld [vmem:[#allocation2 + $0x170] sm:$0xff]
      %v8570 = vld [vmem:[#allocation2 + $0x178] sm:$0xff]
      %v8571 = vld [vmem:[#allocation2 + $0x180] sm:$0xff]
      %v8572 = vld [vmem:[#allocation2 + $0x188] sm:$0xff]
      %v8573 = vld [vmem:[#allocation2 + $0x190] sm:$0xff]
      %v8574 = vld [vmem:[#allocation2 + $0x198] sm:$0xff]
      %v8575 = vld [vmem:[#allocation2 + $0x1a0] sm:$0xff]
      %v8576 = vld [vmem:[#allocation2 + $0x1a8] sm:$0xff]
      %v8577 = vld [vmem:[#allocation2 + $0x1b0] sm:$0xff]
      %v8578 = vld [vmem:[#allocation2 + $0x1b8] sm:$0xff]
      %v8579 = vld [vmem:[#allocation2 + $0x1c0] sm:$0xff]
      %v8580 = vld [vmem:[#allocation2 + $0x1c8] sm:$0xff]
      %v8581 = vld [vmem:[#allocation2 + $0x1d0] sm:$0xff]
      %v8582 = vld [vmem:[#allocation2 + $0x1d8] sm:$0xff]
      %v8583 = vld [vmem:[#allocation2 + $0x1e0] sm:$0xff]
      %v8584 = vld [vmem:[#allocation2 + $0x1e8] sm:$0xff]
      %v8585 = vld [vmem:[#allocation2 + $0x1f0] sm:$0xff]
      %v8586 = vld [vmem:[#allocation2 + $0x1f8] sm:$0xff]
      %v8587 = vld [vmem:[#allocation2 + $0x200] sm:$0xff]
      %v8588 = vld [vmem:[#allocation2 + $0x208] sm:$0xff]
      %v8589 = vld [vmem:[#allocation2 + $0x210] sm:$0xff]
      %v8590 = vld [vmem:[#allocation2 + $0x218] sm:$0xff]
      %v8591 = vld [vmem:[#allocation2 + $0x220] sm:$0xff]
      %v8592 = vld [vmem:[#allocation2 + $0x228] sm:$0xff]
      %v8593 = vld [vmem:[#allocation2 + $0x230] sm:$0xff]
      %v8594 = vld [vmem:[#allocation2 + $0x238] sm:$0xff]
      %v8595 = vld [vmem:[#allocation2 + $0x240] sm:$0xff]
      %v8596 = vld [vmem:[#allocation2 + $0x248] sm:$0xff]
      %v8597 = vld [vmem:[#allocation2 + $0x250] sm:$0xff]
      %v8598 = vld [vmem:[#allocation2 + $0x258] sm:$0xff]
      %v8599 = vld [vmem:[#allocation2 + $0x260] sm:$0xff]
      %v8600 = vld [vmem:[#allocation2 + $0x268] sm:$0xff]
      %v8601 = vld [vmem:[#allocation2 + $0x270] sm:$0xff]
      %v8602 = vld [vmem:[#allocation2 + $0x278] sm:$0xff]
      %v8603 = vld [vmem:[#allocation2 + $0x280] sm:$0xff]
      %v8604 = vld [vmem:[#allocation2 + $0x288] sm:$0xff]
      %v8605 = vld [vmem:[#allocation2 + $0x290] sm:$0xff]
      %v8606 = vld [vmem:[#allocation2 + $0x298] sm:$0xff]
      %v8607 = vld [vmem:[#allocation2 + $0x2a0] sm:$0xff]
      %v8608 = vld [vmem:[#allocation2 + $0x2a8] sm:$0xff]
      %v8609 = vld [vmem:[#allocation2 + $0x2b0] sm:$0xff]
      %v8610 = vld [vmem:[#allocation2 + $0x2b8] sm:$0xff]
      %v8611 = vld [vmem:[#allocation2 + $0x2c0] sm:$0xff]
      %v8612 = vld [vmem:[#allocation2 + $0x2c8] sm:$0xff]
      %v8613 = vld [vmem:[#allocation2 + $0x2d0] sm:$0xff]
      %v8614 = vld [vmem:[#allocation2 + $0x2d8] sm:$0xff]
      %v8615 = vld [vmem:[#allocation2 + $0x2e0] sm:$0xff]
      %v8616 = vld [vmem:[#allocation2 + $0x2e8] sm:$0xff]
      %v8617 = vld [vmem:[#allocation2 + $0x2f0] sm:$0xff]
      %v8618 = vld [vmem:[#allocation2 + $0x2f8] sm:$0xff]
      %v8619 = vld [vmem:[%s1] sm:$0xff]
      %v8620 = vld [vmem:[%s1 + $0x8] sm:$0xff]
      %v8621 = vld [vmem:[%s1 + $0x10] sm:$0xff]
      %v8622 = vld [vmem:[%s1 + $0x18] sm:$0xff]
      %v8623 = vld [vmem:[%s1 + $0x20] sm:$0xff]
      %v8624 = vld [vmem:[%s1 + $0x28] sm:$0xff]
      %v8625 = vld [vmem:[%s1 + $0x30] sm:$0xff]
      %v8626 = vld [vmem:[%s1 + $0x38] sm:$0xff]
      %v8627 = vld [vmem:[%s1 + $0x40] sm:$0xff]
      %v8628 = vld [vmem:[%s1 + $0x48] sm:$0xff]
      %v8629 = vld [vmem:[%s1 + $0x50] sm:$0xff]
      %v8630 = vld [vmem:[%s1 + $0x58] sm:$0xff]
      %v8631 = vld [vmem:[%s1 + $0x60] sm:$0xff]
      %v8632 = vld [vmem:[%s1 + $0x68] sm:$0xff]
      %v8633 = vld [vmem:[%s1 + $0x70] sm:$0xff]
      %v8634 = vld [vmem:[%s1 + $0x78] sm:$0xff]
      %v8635 = vld [vmem:[%s1 + $0x80] sm:$0xff]
      %v8636 = vld [vmem:[%s1 + $0x88] sm:$0xff]
      %v8637 = vld [vmem:[%s1 + $0x90] sm:$0xff]
      %v8638 = vld [vmem:[%s1 + $0x98] sm:$0xff]
      %v8639 = vld [vmem:[%s1 + $0xa0] sm:$0xff]
      %v8640 = vld [vmem:[%s1 + $0xa8] sm:$0xff]
      %v8641 = vld [vmem:[%s1 + $0xb0] sm:$0xff]
      %v8642 = vld [vmem:[%s1 + $0xb8] sm:$0xff]
      %v8643 = vld [vmem:[%s1 + $0xc0] sm:$0xff]
      %v8644 = vld [vmem:[%s1 + $0xc8] sm:$0xff]
      %v8645 = vld [vmem:[%s1 + $0xd0] sm:$0xff]
      %v8646 = vld [vmem:[%s1 + $0xd8] sm:$0xff]
      %v8647 = vld [vmem:[%s1 + $0xe0] sm:$0xff]
      %v8648 = vld [vmem:[%s1 + $0xe8] sm:$0xff]
      %v8649 = vld [vmem:[%s1 + $0xf0] sm:$0xff]
      %v8650 = vld [vmem:[%s1 + $0xf8] sm:$0xff]
      %v8651 = vld [vmem:[%s1 + $0x100] sm:$0xff]
      %v8652 = vld [vmem:[%s1 + $0x108] sm:$0xff]
      %v8653 = vld [vmem:[%s1 + $0x110] sm:$0xff]
      %v8654 = vld [vmem:[%s1 + $0x118] sm:$0xff]
      %v8655 = vld [vmem:[%s1 + $0x120] sm:$0xff]
      %v8656 = vld [vmem:[%s1 + $0x128] sm:$0xff]
      %v8657 = vld [vmem:[%s1 + $0x130] sm:$0xff]
      %v8658 = vld [vmem:[%s1 + $0x138] sm:$0xff]
      %v8659 = vld [vmem:[%s1 + $0x140] sm:$0xff]
      %v8660 = vld [vmem:[%s1 + $0x148] sm:$0xff]
      %v8661 = vld [vmem:[%s1 + $0x150] sm:$0xff]
      %v8662 = vld [vmem:[%s1 + $0x158] sm:$0xff]
      %v8663 = vld [vmem:[%s1 + $0x160] sm:$0xff]
      %v8664 = vld [vmem:[%s1 + $0x168] sm:$0xff]
      %v8665 = vld [vmem:[%s1 + $0x170] sm:$0xff]
      %v8666 = vld [vmem:[%s1 + $0x178] sm:$0xff]
      %v8667 = vld [vmem:[%s2] sm:$0x1]
      %v8669 = vlaneseq
      %v8670 = vshrl.u32 %v8669, 7
      %v8671 = vsub.s32 0, %v8670
      %v8672 = vrot.slane %v8667, %v8671
      %8674 = vmatprep.subr.mxu0 0.0
      %8675 = vmatpush1.msra.mxu0 %v8619
      %8676 = vmatprep.subr.mxu0 0.0
      %8677 = vmatpush1.msra.mxu0 %v8620
      %8678 = vmatprep.subr.mxu0 0.0
      %8679 = vmatpush1.msra.mxu0 %v8621
      %8680 = vmatprep.subr.mxu0 0.0
      %8681 = vmatpush1.msra.mxu0 %v8622
      %8682 = vmatprep.subr.mxu0 0.0
      %8683 = vmatpush1.msra.mxu0 %v8623
      %8684 = vmatprep.subr.mxu0 0.0
      %8685 = vmatpush1.msra.mxu0 %v8624
      %8686 = vmatprep.subr.mxu0 0.0
      %8687 = vmatpush1.msra.mxu0 %v8625
      %8688 = vmatprep.subr.mxu0 0.0
      %8689 = vmatpush1.msra.mxu0 %v8626
      %8690 = vmatprep.subr.mxu0 0.0
      %8691 = vmatpush1.msra.mxu0 %v8627
      %8692 = vmatprep.subr.mxu0 0.0
      %8693 = vmatpush1.msra.mxu0 %v8628
      %8694 = vmatprep.subr.mxu0 0.0
      %8695 = vmatpush1.msra.mxu0 %v8629
      %8696 = vmatprep.subr.mxu0 0.0
      %8697 = vmatpush1.msra.mxu0 %v8630
      %8698 = vmatprep.subr.mxu0 0.0
      %8699 = vmatpush1.msra.mxu0 %v8631
      %8700 = vmatprep.subr.mxu0 0.0
      %8701 = vmatpush1.msra.mxu0 %v8632
      %8702 = vmatprep.subr.mxu0 0.0
      %8703 = vmatpush1.msra.mxu0 %v8633
      %8704 = vmatprep.subr.mxu0 0.0
      %8705 = vmatpush1.msra.mxu0 %v8634
      %8706 = vmatprep.subr.mxu0 0.0
      %8707 = vmatpush1.msra.mxu0 %v8635
      %8708 = vmatprep.subr.mxu0 0.0
      %8709 = vmatpush1.msra.mxu0 %v8636
      %8710 = vmatprep.subr.mxu0 0.0
      %8711 = vmatpush1.msra.mxu0 %v8637
      %8712 = vmatprep.subr.mxu0 0.0
      %8713 = vmatpush1.msra.mxu0 %v8638
      %8714 = vmatprep.subr.mxu0 0.0
      %8715 = vmatpush1.msra.mxu0 %v8639
      %8716 = vmatprep.subr.mxu0 0.0
      %8717 = vmatpush1.msra.mxu0 %v8640
      %8718 = vmatprep.subr.mxu0 0.0
      %8719 = vmatpush1.msra.mxu0 %v8641
      %8720 = vmatprep.subr.mxu0 0.0
      %8721 = vmatpush1.msra.mxu0 %v8642
      %8722 = vmatprep.subr.mxu0 0.0
      %8723 = vmatpush1.msra.mxu0 %v8643
      %8724 = vmatprep.subr.mxu0 0.0
      %8725 = vmatpush1.msra.mxu0 %v8644
      %8726 = vmatprep.subr.mxu0 0.0
      %8727 = vmatpush1.msra.mxu0 %v8645
      %8728 = vmatprep.subr.mxu0 0.0
      %8729 = vmatpush1.msra.mxu0 %v8646
      %8730 = vmatprep.subr.mxu0 0.0
      %8731 = vmatpush1.msra.mxu0 %v8647
      %8732 = vmatprep.subr.mxu0 0.0
      %8733 = vmatpush1.msra.mxu0 %v8648
      %8734 = vmatprep.subr.mxu0 0.0
      %8735 = vmatpush1.msra.mxu0 %v8649
      %8736 = vmatprep.subr.mxu0 0.0
      %8737 = vmatpush1.msra.mxu0 %v8650
      %8738 = vmatprep.mubr.f32.mxu0 %v8524
      %8739 = vmatmul.mubr.f32.gmra.mrb[0].mxu0 %v8523
      %v8740 = vpop.f32.mrb[0].mxu0
      %v8741 = vadd.f32 %v8672, %v8740
      %v8742 = vpop.f32.mrb[0].mxu0
      %8743 = vmatprep.mubr.f32.mxu0 %v8527
      %8744 = vmatmul.mubr.f32.gmra.mrb[0].mxu0 %v8526
      %v8745 = vpop.f32.mrb[0].mxu0
      %v8746 = vadd.f32 %v8672, %v8745
      %v8747 = vpop.f32.mrb[0].mxu0
      %8748 = vmatprep.mubr.f32.mxu0 %v8530
      %8749 = vmatmul.mubr.f32.gmra.mrb[0].mxu0 %v8529
      %v8750 = vpop.f32.mrb[0].mxu0
      %v8751 = vadd.f32 %v8672, %v8750
      %v8752 = vpop.f32.mrb[0].mxu0
      %8753 = vmatprep.mubr.f32.mxu0 %v8533
      %8754 = vmatmul.mubr.f32.gmra.mrb[0].mxu0 %v8532
      %v8755 = vpop.f32.mrb[0].mxu0
      %v8756 = vadd.f32 %v8672, %v8755
      %v8757 = vpop.f32.mrb[0].mxu0
      %8758 = vmatprep.mubr.f32.mxu0 %v8536
      %8759 = vmatmul.mubr.f32.gmra.mrb[0].mxu0 %v8535
      %v8760 = vpop.f32.mrb[0].mxu0
      %v8761 = vadd.f32 %v8672, %v8760
      %v8762 = vpop.f32.mrb[0].mxu0
      %8763 = vmatprep.mubr.f32.mxu0 %v8539
      %8764 = vmatmul.mubr.f32.gmra.mrb[0].mxu0 %v8538
      %v8765 = vpop.f32.mrb[0].mxu0
      %v8766 = vadd.f32 %v8672, %v8765
      %v8767 = vpop.f32.mrb[0].mxu0
      %8768 = vmatprep.mubr.f32.mxu0 %v8542
      %8769 = vmatmul.mubr.f32.gmra.mrb[0].mxu0 %v8541
      %v8770 = vpop.f32.mrb[0].mxu0
      %v8771 = vadd.f32 %v8672, %v8770
      %v8772 = vpop.f32.mrb[0].mxu0
      %8773 = vmatprep.mubr.f32.mxu0 %v8545
      %8774 = vmatmul.mubr.f32.gmra.mrb[0].mxu0 %v8544
      %v8775 = vpop.f32.mrb[0].mxu0
      %v8776 = vadd.f32 %v8672, %v8775
      %v8777 = vpop.f32.mrb[0].mxu0
      %8778 = vmatprep.mubr.f32.mxu0 %v8548
      %8779 = vmatmul.mubr.f32.gmra.mrb[0].mxu0 %v8547
      %v8780 = vpop.f32.mrb[0].mxu0
      %v8781 = vadd.f32 %v8672, %v8780
      %v8782 = vpop.f32.mrb[0].mxu0
      %8783 = vmatprep.mubr.f32.mxu0 %v8551
      %8784 = vmatmul.mubr.f32.gmra.mrb[0].mxu0 %v8550
      %v8785 = vpop.f32.mrb[0].mxu0
      %v8786 = vadd.f32 %v8672, %v8785
      %v8787 = vpop.f32.mrb[0].mxu0
      %8788 = vmatprep.mubr.f32.mxu0 %v8554
      %8789 = vmatmul.mubr.f32.gmra.mrb[0].mxu0 %v8553
      %v8790 = vpop.f32.mrb[0].mxu0
      %v8791 = vadd.f32 %v8672, %v8790
      %v8792 = vpop.f32.mrb[0].mxu0
      %8793 = vmatprep.mubr.f32.mxu0 %v8557
      %8794 = vmatmul.mubr.f32.gmra.mrb[0].mxu0 %v8556
      %v8795 = vpop.f32.mrb[0].mxu0
      %v8796 = vadd.f32 %v8672, %v8795
      %v8797 = vpop.f32.mrb[0].mxu0
      %8798 = vmatprep.mubr.f32.mxu0 %v8560
      %8799 = vmatmul.mubr.f32.gmra.mrb[0].mxu0 %v8559
      %v8800 = vpop.f32.mrb[0].mxu0
      %v8801 = vadd.f32 %v8672, %v8800
      %v8802 = vpop.f32.mrb[0].mxu0
      %8803 = vmatprep.mubr.f32.mxu0 %v8563
      %8804 = vmatmul.mubr.f32.gmra.mrb[0].mxu0 %v8562
      %v8805 = vpop.f32.mrb[0].mxu0
      %v8806 = vadd.f32 %v8672, %v8805
      %v8807 = vpop.f32.mrb[0].mxu0
      %8808 = vmatprep.mubr.f32.mxu0 %v8566
      %8809 = vmatmul.mubr.f32.gmra.mrb[0].mxu0 %v8565
      %v8810 = vpop.f32.mrb[0].mxu0
      %v8811 = vadd.f32 %v8672, %v8810
      %v8812 = vpop.f32.mrb[0].mxu0
      %8813 = vmatprep.mubr.f32.mxu0 %v8569
      %8814 = vmatmul.mubr.f32.gmra.mrb[0].mxu0 %v8568
      %v8815 = vpop.f32.mrb[0].mxu0
      %v8816 = vadd.f32 %v8672, %v8815
      %v8817 = vpop.f32.mrb[0].mxu0
      %8818 = vmatprep.mubr.f32.mxu0 %v8572
      %8819 = vmatmul.mubr.f32.gmra.mrb[0].mxu0 %v8571
      %v8820 = vpop.f32.mrb[0].mxu0
      %v8821 = vadd.f32 %v8672, %v8820
      %v8822 = vpop.f32.mrb[0].mxu0
      %8823 = vmatprep.mubr.f32.mxu0 %v8575
      %8824 = vmatmul.mubr.f32.gmra.mrb[0].mxu0 %v8574
      %v8825 = vpop.f32.mrb[0].mxu0
      %v8826 = vadd.f32 %v8672, %v8825
      %v8827 = vpop.f32.mrb[0].mxu0
      %8828 = vmatprep.mubr.f32.mxu0 %v8578
      %8829 = vmatmul.mubr.f32.gmra.mrb[0].mxu0 %v8577
      %v8830 = vpop.f32.mrb[0].mxu0
      %v8831 = vadd.f32 %v8672, %v8830
      %v8832 = vpop.f32.mrb[0].mxu0
      %8833 = vmatprep.mubr.f32.mxu0 %v8581
      %8834 = vmatmul.mubr.f32.gmra.mrb[0].mxu0 %v8580
      %v8835 = vpop.f32.mrb[0].mxu0
      %v8836 = vadd.f32 %v8672, %v8835
      %v8837 = vpop.f32.mrb[0].mxu0
      %8838 = vmatprep.mubr.f32.mxu0 %v8584
      %8839 = vmatmul.mubr.f32.gmra.mrb[0].mxu0 %v8583
      %v8840 = vpop.f32.mrb[0].mxu0
      %v8841 = vadd.f32 %v8672, %v8840
      %v8842 = vpop.f32.mrb[0].mxu0
      %8843 = vmatprep.mubr.f32.mxu0 %v8587
      %8844 = vmatmul.mubr.f32.gmra.mrb[0].mxu0 %v8586
      %v8845 = vpop.f32.mrb[0].mxu0
      %v8846 = vadd.f32 %v8672, %v8845
      %v8847 = vpop.f32.mrb[0].mxu0
      %8848 = vmatprep.mubr.f32.mxu0 %v8590
      %8849 = vmatmul.mubr.f32.gmra.mrb[0].mxu0 %v8589
      %v8850 = vpop.f32.mrb[0].mxu0
      %v8851 = vadd.f32 %v8672, %v8850
      %v8852 = vpop.f32.mrb[0].mxu0
      %8853 = vmatprep.mubr.f32.mxu0 %v8593
      %8854 = vmatmul.mubr.f32.gmra.mrb[0].mxu0 %v8592
      %v8855 = vpop.f32.mrb[0].mxu0
      %v8856 = vadd.f32 %v8672, %v8855
      %v8857 = vpop.f32.mrb[0].mxu0
      %8858 = vmatprep.mubr.f32.mxu0 %v8596
      %8859 = vmatmul.mubr.f32.gmra.mrb[0].mxu0 %v8595
      %v8860 = vpop.f32.mrb[0].mxu0
      %v8861 = vadd.f32 %v8672, %v8860
      %v8862 = vpop.f32.mrb[0].mxu0
      %8863 = vmatprep.mubr.f32.mxu0 %v8599
      %8864 = vmatmul.mubr.f32.gmra.mrb[0].mxu0 %v8598
      %v8865 = vpop.f32.mrb[0].mxu0
      %v8866 = vadd.f32 %v8672, %v8865
      %v8867 = vpop.f32.mrb[0].mxu0
      %8868 = vmatprep.mubr.f32.mxu0 %v8602
      %8869 = vmatmul.mubr.f32.gmra.mrb[0].mxu0 %v8601
      %v8870 = vpop.f32.mrb[0].mxu0
      %v8871 = vadd.f32 %v8672, %v8870
      %v8872 = vpop.f32.mrb[0].mxu0
      %8873 = vmatprep.mubr.f32.mxu0 %v8605
      %8874 = vmatmul.mubr.f32.gmra.mrb[0].mxu0 %v8604
      %v8875 = vpop.f32.mrb[0].mxu0
      %v8876 = vadd.f32 %v8672, %v8875
      %v8877 = vpop.f32.mrb[0].mxu0
      %8878 = vmatprep.mubr.f32.mxu0 %v8608
      %8879 = vmatmul.mubr.f32.gmra.mrb[0].mxu0 %v8607
      %v8880 = vpop.f32.mrb[0].mxu0
      %v8881 = vadd.f32 %v8672, %v8880
      %v8882 = vpop.f32.mrb[0].mxu0
      %8883 = vmatprep.mubr.f32.mxu0 %v8611
      %8884 = vmatmul.mubr.f32.gmra.mrb[0].mxu0 %v8610
      %v8885 = vpop.f32.mrb[0].mxu0
      %v8886 = vadd.f32 %v8672, %v8885
      %v8887 = vpop.f32.mrb[0].mxu0
      %8888 = vmatprep.mubr.f32.mxu0 %v8614
      %8889 = vmatmul.mubr.f32.gmra.mrb[0].mxu0 %v8613
      %v8890 = vpop.f32.mrb[0].mxu0
      %v8891 = vadd.f32 %v8672, %v8890
      %v8892 = vpop.f32.mrb[0].mxu0
      %8893 = vmatprep.mubr.f32.mxu0 %v8617
      %8894 = vmatmul.mubr.f32.gmra.mrb[0].mxu0 %v8616
      %v8895 = vpop.f32.mrb[0].mxu0
      %v8896 = vadd.f32 %v8672, %v8895
      %v8897 = vpop.f32.mrb[0].mxu0
      %8898 = vdwg.mxu0
      %8899 = vmatprep.subr.mxu0 0.0
      %8900 = vmatpush1.msra.mxu0 %v8651
      %8901 = vmatprep.subr.mxu0 0.0
      %8902 = vmatpush1.msra.mxu0 %v8652
      %8903 = vmatprep.subr.mxu0 0.0
      %8904 = vmatpush1.msra.mxu0 %v8653
      %8905 = vmatprep.subr.mxu0 0.0
      %8906 = vmatpush1.msra.mxu0 %v8654
      %8907 = vmatprep.subr.mxu0 0.0
      %8908 = vmatpush1.msra.mxu0 %v8655
      %8909 = vmatprep.subr.mxu0 0.0
      %8910 = vmatpush1.msra.mxu0 %v8656
      %8911 = vmatprep.subr.mxu0 0.0
      %8912 = vmatpush1.msra.mxu0 %v8657
      %8913 = vmatprep.subr.mxu0 0.0
      %8914 = vmatpush1.msra.mxu0 %v8658
      %8915 = vmatprep.subr.mxu0 0.0
      %8916 = vmatpush1.msra.mxu0 %v8659
      %8917 = vmatprep.subr.mxu0 0.0
      %8918 = vmatpush1.msra.mxu0 %v8660
      %8919 = vmatprep.subr.mxu0 0.0
      %8920 = vmatpush1.msra.mxu0 %v8661
      %8921 = vmatprep.subr.mxu0 0.0
      %8922 = vmatpush1.msra.mxu0 %v8662
      %8923 = vmatprep.subr.mxu0 0.0
      %8924 = vmatpush1.msra.mxu0 %v8663
      %8925 = vmatprep.subr.mxu0 0.0
      %8926 = vmatpush1.msra.mxu0 %v8664
      %8927 = vmatprep.subr.mxu0 0.0
      %8928 = vmatpush1.msra.mxu0 %v8665
      %8929 = vmatprep.subr.mxu0 0.0
      %8930 = vmatpush1.msra.mxu0 %v8666
      %8931 = vmatprep.subr.mxu0 0.0
      %8932 = vmatpush1.msra.mxu0 0.0
      %8933 = vmatprep.subr.mxu0 0.0
      %8934 = vmatpush1.msra.mxu0 0.0
      %8935 = vmatprep.subr.mxu0 0.0
      %8936 = vmatpush1.msra.mxu0 0.0
      %8937 = vmatprep.subr.mxu0 0.0
      %8938 = vmatpush1.msra.mxu0 0.0
      %8939 = vmatprep.subr.mxu0 0.0
      %8940 = vmatpush1.msra.mxu0 0.0
      %8941 = vmatprep.subr.mxu0 0.0
      %8942 = vmatpush1.msra.mxu0 0.0
      %8943 = vmatprep.subr.mxu0 0.0
      %8944 = vmatpush1.msra.mxu0 0.0
      %8945 = vmatprep.subr.mxu0 0.0
      %8946 = vmatpush1.msra.mxu0 0.0
      %8947 = vmatprep.subr.mxu0 0.0
      %8948 = vmatpush1.msra.mxu0 0.0
      %8949 = vmatprep.subr.mxu0 0.0
      %8950 = vmatpush1.msra.mxu0 0.0
      %8951 = vmatprep.subr.mxu0 0.0
      %8952 = vmatpush1.msra.mxu0 0.0
      %8953 = vmatprep.subr.mxu0 0.0
      %8954 = vmatpush1.msra.mxu0 0.0
      %8955 = vmatprep.subr.mxu0 0.0
      %8956 = vmatpush1.msra.mxu0 0.0
      %8957 = vmatprep.subr.mxu0 0.0
      %8958 = vmatpush1.msra.mxu0 0.0
      %8959 = vmatprep.subr.mxu0 0.0
      %8960 = vmatpush1.msra.mxu0 0.0
      %8961 = vmatprep.subr.mxu0 0.0
      %8962 = vmatpush1.msra.mxu0 0.0
      %8963 = vmatprep.mubr.f32.mxu0 0.0
      %8964 = vmatmul.mubr.f32.gmra.mrb[0].mxu0 %v8525
      %v8965 = vpop.f32.mrb[0].mxu0
      %v8966 = vadd.f32 %v8741, %v8965
      %v8967 = vpop.f32.mrb[0].mxu0
      %8968 = vmatprep.mubr.f32.mxu0 0.0
      %8969 = vmatmul.mubr.f32.gmra.mrb[0].mxu0 %v8528
      %v8970 = vpop.f32.mrb[0].mxu0
      %v8971 = vadd.f32 %v8746, %v8970
      %v8972 = vpop.f32.mrb[0].mxu0
      %8973 = vmatprep.mubr.f32.mxu0 0.0
      %8974 = vmatmul.mubr.f32.gmra.mrb[0].mxu0 %v8531
      %v8975 = vpop.f32.mrb[0].mxu0
      %v8976 = vadd.f32 %v8751, %v8975
      %v8977 = vpop.f32.mrb[0].mxu0
      %8978 = vmatprep.mubr.f32.mxu0 0.0
      %8979 = vmatmul.mubr.f32.gmra.mrb[0].mxu0 %v8534
      %v8980 = vpop.f32.mrb[0].mxu0
      %v8981 = vadd.f32 %v8756, %v8980
      %v8982 = vpop.f32.mrb[0].mxu0
      %8983 = vmatprep.mubr.f32.mxu0 0.0
      %8984 = vmatmul.mubr.f32.gmra.mrb[0].mxu0 %v8537
      %v8985 = vpop.f32.mrb[0].mxu0
      %v8986 = vadd.f32 %v8761, %v8985
      %v8987 = vpop.f32.mrb[0].mxu0
      %8988 = vmatprep.mubr.f32.mxu0 0.0
      %8989 = vmatmul.mubr.f32.gmra.mrb[0].mxu0 %v8540
      %v8990 = vpop.f32.mrb[0].mxu0
      %v8991 = vadd.f32 %v8766, %v8990
      %v8992 = vpop.f32.mrb[0].mxu0
      %8993 = vmatprep.mubr.f32.mxu0 0.0
      %8994 = vmatmul.mubr.f32.gmra.mrb[0].mxu0 %v8543
      %v8995 = vpop.f32.mrb[0].mxu0
      %v8996 = vadd.f32 %v8771, %v8995
      %v8997 = vpop.f32.mrb[0].mxu0
      %8998 = vmatprep.mubr.f32.mxu0 0.0
      %8999 = vmatmul.mubr.f32.gmra.mrb[0].mxu0 %v8546
      %v9000 = vpop.f32.mrb[0].mxu0
      %v9001 = vadd.f32 %v8776, %v9000
      %v9002 = vpop.f32.mrb[0].mxu0
      %9003 = vmatprep.mubr.f32.mxu0 0.0
      %9004 = vmatmul.mubr.f32.gmra.mrb[0].mxu0 %v8549
      %v9005 = vpop.f32.mrb[0].mxu0
      %v9006 = vadd.f32 %v8781, %v9005
      %v9007 = vpop.f32.mrb[0].mxu0
      %9008 = vmatprep.mubr.f32.mxu0 0.0
      %9009 = vmatmul.mubr.f32.gmra.mrb[0].mxu0 %v8552
      %v9010 = vpop.f32.mrb[0].mxu0
      %v9011 = vadd.f32 %v8786, %v9010
      %v9012 = vpop.f32.mrb[0].mxu0
      %9013 = vmatprep.mubr.f32.mxu0 0.0
      %9014 = vmatmul.mubr.f32.gmra.mrb[0].mxu0 %v8555
      %v9015 = vpop.f32.mrb[0].mxu0
      %v9016 = vadd.f32 %v8791, %v9015
      %v9017 = vpop.f32.mrb[0].mxu0
      %9018 = vmatprep.mubr.f32.mxu0 0.0
      %9019 = vmatmul.mubr.f32.gmra.mrb[0].mxu0 %v8558
      %v9020 = vpop.f32.mrb[0].mxu0
      %v9021 = vadd.f32 %v8796, %v9020
      %v9022 = vpop.f32.mrb[0].mxu0
      %9023 = vmatprep.mubr.f32.mxu0 0.0
      %9024 = vmatmul.mubr.f32.gmra.mrb[0].mxu0 %v8561
      %v9025 = vpop.f32.mrb[0].mxu0
      %v9026 = vadd.f32 %v8801, %v9025
      %v9027 = vpop.f32.mrb[0].mxu0
      %9028 = vmatprep.mubr.f32.mxu0 0.0
      %9029 = vmatmul.mubr.f32.gmra.mrb[0].mxu0 %v8564
      %v9030 = vpop.f32.mrb[0].mxu0
      %v9031 = vadd.f32 %v8806, %v9030
      %v9032 = vpop.f32.mrb[0].mxu0
      %9033 = vmatprep.mubr.f32.mxu0 0.0
      %9034 = vmatmul.mubr.f32.gmra.mrb[0].mxu0 %v8567
      %v9035 = vpop.f32.mrb[0].mxu0
      %v9036 = vadd.f32 %v8811, %v9035
      %v9037 = vpop.f32.mrb[0].mxu0
      %9038 = vmatprep.mubr.f32.mxu0 0.0
      %9039 = vmatmul.mubr.f32.gmra.mrb[0].mxu0 %v8570
      %v9040 = vpop.f32.mrb[0].mxu0
      %v9041 = vadd.f32 %v8816, %v9040
      %v9042 = vpop.f32.mrb[0].mxu0
      %9043 = vmatprep.mubr.f32.mxu0 0.0
      %9044 = vmatmul.mubr.f32.gmra.mrb[0].mxu0 %v8573
      %v9045 = vpop.f32.mrb[0].mxu0
      %v9046 = vadd.f32 %v8821, %v9045
      %v9047 = vpop.f32.mrb[0].mxu0
      %9048 = vmatprep.mubr.f32.mxu0 0.0
      %9049 = vmatmul.mubr.f32.gmra.mrb[0].mxu0 %v8576
      %v9050 = vpop.f32.mrb[0].mxu0
      %v9051 = vadd.f32 %v8826, %v9050
      %v9052 = vpop.f32.mrb[0].mxu0
      %9053 = vmatprep.mubr.f32.mxu0 0.0
      %9054 = vmatmul.mubr.f32.gmra.mrb[0].mxu0 %v8579
      %v9055 = vpop.f32.mrb[0].mxu0
      %v9056 = vadd.f32 %v8831, %v9055
      %v9057 = vpop.f32.mrb[0].mxu0
      %9058 = vmatprep.mubr.f32.mxu0 0.0
      %9059 = vmatmul.mubr.f32.gmra.mrb[0].mxu0 %v8582
      %v9060 = vpop.f32.mrb[0].mxu0
      %v9061 = vadd.f32 %v8836, %v9060
      %v9062 = vpop.f32.mrb[0].mxu0
      %9063 = vmatprep.mubr.f32.mxu0 0.0
      %9064 = vmatmul.mubr.f32.gmra.mrb[0].mxu0 %v8585
      %v9065 = vpop.f32.mrb[0].mxu0
      %v9066 = vadd.f32 %v8841, %v9065
      %v9067 = vpop.f32.mrb[0].mxu0
      %9068 = vmatprep.mubr.f32.mxu0 0.0
      %9069 = vmatmul.mubr.f32.gmra.mrb[0].mxu0 %v8588
      %v9070 = vpop.f32.mrb[0].mxu0
      %v9071 = vadd.f32 %v8846, %v9070
      %v9072 = vpop.f32.mrb[0].mxu0
      %9073 = vmatprep.mubr.f32.mxu0 0.0
      %9074 = vmatmul.mubr.f32.gmra.mrb[0].mxu0 %v8591
      %v9075 = vpop.f32.mrb[0].mxu0
      %v9076 = vadd.f32 %v8851, %v9075
      %v9077 = vpop.f32.mrb[0].mxu0
      %9078 = vmatprep.mubr.f32.mxu0 0.0
      %9079 = vmatmul.mubr.f32.gmra.mrb[0].mxu0 %v8594
      %v9080 = vpop.f32.mrb[0].mxu0
      %v9081 = vadd.f32 %v8856, %v9080
      %v9082 = vpop.f32.mrb[0].mxu0
      %9083 = vmatprep.mubr.f32.mxu0 0.0
      %9084 = vmatmul.mubr.f32.gmra.mrb[0].mxu0 %v8597
      %v9085 = vpop.f32.mrb[0].mxu0
      %v9086 = vadd.f32 %v8861, %v9085
      %v9087 = vpop.f32.mrb[0].mxu0
      %9088 = vmatprep.mubr.f32.mxu0 0.0
      %9089 = vmatmul.mubr.f32.gmra.mrb[0].mxu0 %v8600
      %v9090 = vpop.f32.mrb[0].mxu0
      %v9091 = vadd.f32 %v8866, %v9090
      %v9092 = vpop.f32.mrb[0].mxu0
      %9093 = vmatprep.mubr.f32.mxu0 0.0
      %9094 = vmatmul.mubr.f32.gmra.mrb[0].mxu0 %v8603
      %v9095 = vpop.f32.mrb[0].mxu0
      %v9096 = vadd.f32 %v8871, %v9095
      %v9097 = vpop.f32.mrb[0].mxu0
      %9098 = vmatprep.mubr.f32.mxu0 0.0
      %9099 = vmatmul.mubr.f32.gmra.mrb[0].mxu0 %v8606
      %v9100 = vpop.f32.mrb[0].mxu0
      %v9101 = vadd.f32 %v8876, %v9100
      %v9102 = vpop.f32.mrb[0].mxu0
      %9103 = vmatprep.mubr.f32.mxu0 0.0
      %9104 = vmatmul.mubr.f32.gmra.mrb[0].mxu0 %v8609
      %v9105 = vpop.f32.mrb[0].mxu0
      %v9106 = vadd.f32 %v8881, %v9105
      %v9107 = vpop.f32.mrb[0].mxu0
      %9108 = vmatprep.mubr.f32.mxu0 0.0
      %9109 = vmatmul.mubr.f32.gmra.mrb[0].mxu0 %v8612
      %v9110 = vpop.f32.mrb[0].mxu0
      %v9111 = vadd.f32 %v8886, %v9110
      %v9112 = vpop.f32.mrb[0].mxu0
      %9113 = vmatprep.mubr.f32.mxu0 0.0
      %9114 = vmatmul.mubr.f32.gmra.mrb[0].mxu0 %v8615
      %v9115 = vpop.f32.mrb[0].mxu0
      %v9116 = vadd.f32 %v8891, %v9115
      %v9117 = vpop.f32.mrb[0].mxu0
      %9118 = vmatprep.mubr.f32.mxu0 0.0
      %9119 = vmatmul.mubr.f32.gmra.mrb[0].mxu0 %v8618
      %v9120 = vpop.f32.mrb[0].mxu0
      %v9121 = vadd.f32 %v8896, %v9120
      %v9122 = vpop.f32.mrb[0].mxu0
      %9123 = vdwg.mxu0
      %9124 = vst [vmem:[%s192] sm:$0xff] %v8966
      %9125 = vst [vmem:[%s192 + $0x8] sm:$0xff] %v8971
      %9126 = vst [vmem:[%s192 + $0x10] sm:$0xff] %v8976
      %9127 = vst [vmem:[%s192 + $0x18] sm:$0xff] %v8981
      %9128 = vst [vmem:[%s192 + $0x20] sm:$0xff] %v8986
      %9129 = vst [vmem:[%s192 + $0x28] sm:$0xff] %v8991
      %9130 = vst [vmem:[%s192 + $0x30] sm:$0xff] %v8996
      %9131 = vst [vmem:[%s192 + $0x38] sm:$0xff] %v9001
      %9132 = vst [vmem:[%s192 + $0x40] sm:$0xff] %v9006
      %9133 = vst [vmem:[%s192 + $0x48] sm:$0xff] %v9011
      %9134 = vst [vmem:[%s192 + $0x50] sm:$0xff] %v9016
      %9135 = vst [vmem:[%s192 + $0x58] sm:$0xff] %v9021
      %9136 = vst [vmem:[%s192 + $0x60] sm:$0xff] %v9026
      %9137 = vst [vmem:[%s192 + $0x68] sm:$0xff] %v9031
      %9138 = vst [vmem:[%s192 + $0x70] sm:$0xff] %v9036
      %9139 = vst [vmem:[%s192 + $0x78] sm:$0xff] %v9041
      %9140 = vst [vmem:[%s192 + $0x80] sm:$0xff] %v9046
      %9141 = vst [vmem:[%s192 + $0x88] sm:$0xff] %v9051
      %9142 = vst [vmem:[%s192 + $0x90] sm:$0xff] %v9056
      %9143 = vst [vmem:[%s192 + $0x98] sm:$0xff] %v9061
      %9144 = vst [vmem:[%s192 + $0xa0] sm:$0xff] %v9066
      %9145 = vst [vmem:[%s192 + $0xa8] sm:$0xff] %v9071
      %9146 = vst [vmem:[%s192 + $0xb0] sm:$0xff] %v9076
      %9147 = vst [vmem:[%s192 + $0xb8] sm:$0xff] %v9081
      %9148 = vst [vmem:[%s192 + $0xc0] sm:$0xff] %v9086
      %9149 = vst [vmem:[%s192 + $0xc8] sm:$0xff] %v9091
      %9150 = vst [vmem:[%s192 + $0xd0] sm:$0xff] %v9096
      %9151 = vst [vmem:[%s192 + $0xd8] sm:$0xff] %v9101
      %9152 = vst [vmem:[%s192 + $0xe0] sm:$0xff] %v9106
      %9153 = vst [vmem:[%s192 + $0xe8] sm:$0xff] %v9111
      %9154 = vst [vmem:[%s192 + $0xf0] sm:$0xff] %v9116
      %9155 = vst [vmem:[%s192 + $0xf8] sm:$0xff] %v9121
      %s9156 = smul.u32 32, %s19
      %p9157 = scmp.lt.s32.totalorder %s18, 1
      %s9158 = scalar_select %p9157, %s18, 1
      %p9159 = scmp.lt.s32.totalorder %s9156, 31
      %s9160 = scalar_select %p9159, %s9156, 31
      %s9161 = smul.addr %s9158, 32
      %s9162 = sadd.s32 %s9160, %s9161
      %s9163 = smul.addr %s9162, 8
      %s9164 = scalar_lea.vmem %s3, %s9163
      // Predicated region
      $region33: #{conv3d_z_valid.1} parent=31 // pred_check
        %p9165 = pneg %p114
      $region34: #{conv3d_z_valid.1} parent=31 // pred_check_branch
        %9167 = sbr.rel (%p9165) target = $region36
      $region35: #{conv3d_z_valid.1} parent=31 // pred_region
        %s9168 = smul.u32 32, %s19
      $region36: #{conv3d_z_valid.1} parent=31 // pred_fallthru
        _
    $region32: #{conv3d_z_valid.1} parent=5 // pred_fallthru
      _
    %p9169 = scmp.le.s32.totalorder 2, %s9
    // Predicated region
    $region37: #{conv3d_z_valid.1} parent=5 // pred_check
      %p9170 = pneg %p9169
    $region38: #{conv3d_z_valid.1} parent=5 // pred_check_branch
      %9172 = sbr.rel (%p9170) target = $region40
    $region39: #{conv3d_z_valid.1} parent=5 // pred_region
      %s9173 = ssub.s32 %s9, 2
      // Predicated region
      $region41: #{conv3d_z_valid.1} parent=39 // pred_check
        %p9174 = pneg %p120
      $region42: #{conv3d_z_valid.1} parent=39 // pred_check_branch
        %9176 = sbr.rel (%p9174) target = $region44
      $region43: #{conv3d_z_valid.1} parent=39 // pred_region
        %s9177 = smul.u32 32, %s21
        %p9178 = scmp.lt.s32.totalorder %s20, 1
        %s9179 = scalar_select %p9178, %s20, 1
        %p9180 = scmp.lt.s32.totalorder %s9177, 31
        %s9181 = scalar_select %p9180, %s9177, 31
        %s9182 = smul.addr %s9179, 32
        %s9183 = sadd.s32 %s9181, %s9182
        %s9184 = smul.addr %s9183, 8
        %s9185 = scalar_lea.vmem %s3, %s9184
      $region44: #{conv3d_z_valid.1} parent=39 // pred_fallthru
        _
    $region40: #{conv3d_z_valid.1} parent=5 // pred_fallthru
      _
  $region6: #{conv3d_z_valid.1} parent=0 // loop_footer
    %s13 = sadd.s32 1, %s9
  $region7: #{conv3d_z_valid.1} parent=0 // loop_footer_branch
    %8 = sbr.rel target = $region3
  $region8: #{conv3d_z_valid.1} parent=0 // loop_exit
    _

</llo_original>
